<compile_context>
chip_gen: v5e
topology: v5e:2x2
jax: 0.10.0
libtpu: 0.0.40
codegen_flags: <defaults>
</compile_context>

<pallas_src>
import numpy as np
import jax
import jax.numpy as jnp
from jax.experimental import pallas as pl
from jax.experimental.pallas import tpu as pltpu


# ----------------------------- numpy glue (anchors) -------------------------

def generate_anchor_base(base_size=16, ratios=(0.5, 1, 2), anchor_scales=(8, 16, 32)):
    py = base_size / 2.0
    px = base_size / 2.0
    anchor_base = np.zeros((len(ratios) * len(anchor_scales), 4), dtype=np.float32)
    for i in range(len(ratios)):
        for j in range(len(anchor_scales)):
            h = base_size * anchor_scales[j] * np.sqrt(ratios[i])
            w = base_size * anchor_scales[j] * np.sqrt(1.0 / ratios[i])
            index = i * len(anchor_scales) + j
            anchor_base[index, 0] = py - h / 2.0
            anchor_base[index, 1] = px - w / 2.0
            anchor_base[index, 2] = py + h / 2.0
            anchor_base[index, 3] = px + w / 2.0
    return anchor_base


def _enumerate_shifted_anchor(anchor_base, feat_stride, height, width):
    shift_y = np.arange(0, height * feat_stride, feat_stride)
    shift_x = np.arange(0, width * feat_stride, feat_stride)
    shift_x, shift_y = np.meshgrid(shift_x, shift_y)
    shift = np.stack((shift_y.ravel(), shift_x.ravel(),
                      shift_y.ravel(), shift_x.ravel()), axis=1)
    A = anchor_base.shape[0]
    K = shift.shape[0]
    anchor = anchor_base.reshape((1, A, 4)) + shift.reshape((1, K, 4)).transpose((1, 0, 2))
    anchor = anchor.reshape((K * A, 4)).astype(np.float32)
    return anchor


# ------------------------------- Pallas kernel ------------------------------

def _make_rpn_head_kernel(TH, W, Cin, Cmid):
    """TH: output rows (of the feature map) processed per grid step."""

    def kernel(x_ref, w1_ref, b1_ref, wh_ref, bh_ref, mask_ref, out_ref):
        # x_ref : (1, H+2, W+2, Cin)  bf16, whole padded image (VMEM-resident)
        # w1_ref: (9, Cin, Cmid)      bf16 conv taps
        # wh_ref: (Cmid, out_w)       bf16 fused head weights
        # out   : (1, TH*W, out_w)    f32 packed lane-dense slab
        t = pl.program_id(1)
        row0 = t * TH
        if TH % 8 == 0:
            row0 = pl.multiple_of(row0, 8)

        # conv 3x3 (pad=1) as 9 shifted, accumulating MXU matmuls (K=Cin each).
        acc = jnp.zeros((TH * W, Cmid), jnp.float32)
        for dy in range(3):
            for dx in range(3):
                xs = x_ref[0, pl.ds(row0 + dy, TH), dx:dx + W, :]
                xs = xs.reshape(TH * W, Cin)
                acc = acc + jnp.dot(xs, w1_ref[dy * 3 + dx],
                                    preferred_element_type=jnp.float32)

        h = acc + b1_ref[...]
        h = jnp.maximum(h, 0.01 * h)                     # leaky_relu(0.01), VALU

        # Fused 1x1 heads: [loc | bg/fg interleaved | (fg-bg) | pad] lanes.
        heads = jnp.dot(h.astype(wh_ref.dtype), wh_ref[...],
                        preferred_element_type=jnp.float32) + bh_ref[...]

        # fg-prob lanes hold d = sfg - sbg; 2-class softmax fg prob = sigmoid(d).
        # Mask the sigmoid INPUT so non-fg lanes see 0 (finite exp, no inf),
        # then blend: out = heads + mask*(sig - heads).  reciprocal -> EUP slot.
        mask = mask_ref[...]                             # (1, out_w) 0/1 f32
        z = heads * mask
        sig = pl.reciprocal(1.0 + jnp.exp(-z), approx=True)
        out_ref[0] = heads + mask * (sig - heads)        # one unmasked 128-lane store

    return kernel


def _pick_row_tile(H, W, target_rows=512):
    """Largest TH dividing H with TH*W rows per tile <= ~target and %8 == 0."""
    th = max(1, min(H, max(1, target_rows // max(W, 1))))
    while th > 1 and (H % th != 0 or (th * W) % 8 != 0):
        th -= 1
    if H % th != 0 or ((th * W) % 8 != 0 and th != H):
        th = H
    return th


def rpn_head_pallas(x_nchw, params, n_anchor, out_w, target_rows=512):
    """conv3x3 + leaky_relu + fused loc/score heads + fg softmax, one kernel.

    Returns (rpn_locs (N, H*W*A, 4), rpn_scores (N, H*W*A, 2),
             rpn_fg_scores (N, H*W*A)).
    """
    w1, b1, wh, bh, fg_mask = params
    N, Cin, H, W = x_nchw.shape
    Cmid = w1.shape[-1]
    HW = H * W
    A = n_anchor
    A4 = 4 * A

    TH = _pick_row_tile(H, W, target_rows)
    HT = H // TH

    # Host side only transposes to NHWC and materializes the +1 halo pad;
    # the im2col itself happens in-kernel (9 shifted matmuls).
    x = jnp.transpose(x_nchw, (0, 2, 3, 1)).astype(jnp.bfloat16)   # (N, H, W, Cin)
    xp = jnp.pad(x, ((0, 0), (1, 1), (1, 1), (0, 0)))              # (N, H+2, W+2, Cin)

    packed = pl.pallas_call(
        _make_rpn_head_kernel(TH, W, Cin, Cmid),
        out_shape=jax.ShapeDtypeStruct((N, HW, out_w), jnp.float32),
        grid_spec=pltpu.PrefetchScalarGridSpec(
            num_scalar_prefetch=0,
            grid=(N, HT),
            in_specs=[
                # whole padded image per batch element; index_map ignores the
                # row-tile axis so it is not re-DMA'd across tiles.
                pl.BlockSpec((1, H + 2, W + 2, Cin), lambda n, t: (n, 0, 0, 0)),
                # weights / biases / mask: constant index maps -> VMEM-resident.
                pl.BlockSpec((9, Cin, Cmid), lambda n, t: (0, 0, 0)),
                pl.BlockSpec((1, Cmid), lambda n, t: (0, 0)),
                pl.BlockSpec((Cmid, out_w), lambda n, t: (0, 0)),
                pl.BlockSpec((1, out_w), lambda n, t: (0, 0)),
                pl.BlockSpec((1, out_w), lambda n, t: (0, 0)),
            ],
            out_specs=pl.BlockSpec((1, TH * W, out_w), lambda n, t: (n, t, 0)),
        ),
        compiler_params=pltpu.CompilerParams(
            # both axes independent -> megacore sharding on v7x, no-op v5e/v6e.
            dimension_semantics=("parallel", "parallel"),
            # explicit VMEM budget (double-buffered image + output tiles +
            # weights + live intermediates) — fits v5e/v6e/v7x.
            vmem_limit_bytes=32 * 1024 * 1024,
        ),
    )(xp, w1, b1, wh, bh, fg_mask)

    # packed lanes: [loc(4A) | scores interleaved bg,fg (2A) | fg_prob(A) | pad]
    rpn_locs = packed[:, :, :A4].reshape(N, HW * A, 4)
    rpn_scores = packed[:, :, A4:A4 + 2 * A].reshape(N, HW * A, 2)
    rpn_fg_scores = packed[:, :, A4 + 2 * A:A4 + 3 * A].reshape(N, HW * A)
    return rpn_locs, rpn_scores, rpn_fg_scores


# ------------------------------ module wrapper -------------------------------

class RegionProposalNetworkPallas:
    def __init__(self, in_channels=16, mid_channels=32,
                 ratios=(0.5, 1, 2), anchor_scales=(8, 16, 32), feat_stride=16,
                 seed=0):
        self.anchor_base = generate_anchor_base(anchor_scales=anchor_scales,
                                                ratios=ratios)
        self.feat_stride = feat_stride
        A = self.anchor_base.shape[0]
        self.n_anchor = A

        # deterministic normal_init(mean=0, std=0.01), zero bias
        key = jax.random.PRNGKey(seed)
        k1, k2, k3 = jax.random.split(key, 3)
        # PyTorch conv weight layouts: (Cout, Cin, kh, kw)
        w_conv1 = 0.01 * jax.random.normal(k1, (mid_channels, in_channels, 3, 3), jnp.float32)
        w_score = 0.01 * jax.random.normal(k2, (A * 2, mid_channels, 1, 1), jnp.float32)
        w_loc = 0.01 * jax.random.normal(k3, (A * 4, mid_channels, 1, 1), jnp.float32)
        b_conv1 = jnp.zeros((mid_channels,), jnp.float32)
        b_score = jnp.zeros((A * 2,), jnp.float32)
        b_loc = jnp.zeros((A * 4,), jnp.float32)
        self.torch_params = (w_conv1, b_conv1, w_score, b_score, w_loc, b_loc)

        # ---- repack for the kernel ----
        # conv1 taps: w1_taps[dy*3+dx, ci, co] = w_conv1[co, ci, dy, dx]
        w1_taps = jnp.transpose(w_conv1, (2, 3, 1, 0)).reshape(9, in_channels, mid_channels)

        # fused 1x1 heads, padded to a lane-dense width (multiple of 128):
        #   [loc (4A) | scores in original interleaved bg/fg order (2A) |
        #    fg - bg logit (A) | zero pad]
        wloc_m = jnp.transpose(w_loc[:, :, 0, 0], (1, 0))            # (Cmid, 4A)
        wsc_m = jnp.transpose(w_score[:, :, 0, 0], (1, 0))           # (Cmid, 2A) bg0,fg0,...
        wbg = wsc_m[:, 0::2]
        wfg = wsc_m[:, 1::2]
        bbg = b_score[0::2]
        bfg = b_score[1::2]

        used = 7 * A
        out_w = max(128, ((used + 127) // 128) * 128)
        self.out_w = out_w

        w_heads = jnp.concatenate(
            [wloc_m, wsc_m, wfg - wbg,
             jnp.zeros((mid_channels, out_w - used), jnp.float32)], axis=1)
        b_heads = jnp.concatenate(
            [b_loc, b_score, bfg - bbg,
             jnp.zeros((out_w - used,), jnp.float32)])
        # 0/1 mask selecting the fg-prob lanes [6A, 7A)
        fg_mask = jnp.zeros((out_w,), jnp.float32).at[6 * A:7 * A].set(1.0)[None, :]

        self.kernel_params = (
            w1_taps.astype(jnp.bfloat16),
            b_conv1[None, :].astype(jnp.float32),
            w_heads.astype(jnp.bfloat16),
            b_heads[None, :].astype(jnp.float32),
            fg_mask,
        )

    def forward(self, x_nchw, img_size, scale=1.0):
        n, _, hh, ww = x_nchw.shape
        anchor = _enumerate_shifted_anchor(np.array(self.anchor_base),
                                           self.feat_stride, hh, ww)
        rpn_locs, rpn_scores, rpn_fg_scores = rpn_head_pallas(
            x_nchw, self.kernel_params, self.n_anchor, self.out_w)
        # TODO(synk): ProposalCreator (NMS-based roi generation) has no clean
        # Pallas equivalent and its source was not provided; rois/roi_indices
        # are returned empty and `scale` is unused.
        rois = np.zeros((0, 4), dtype=np.float32)
        roi_indices = np.zeros((0,), dtype=np.int32)
        return rpn_locs, rpn_scores, rpn_fg_scores, rois, roi_indices, anchor


# ------------------------------ pure-JAX reference ---------------------------

def _reference(x_nchw, torch_params, n_anchor):
    w_conv1, b_conv1, w_score, b_score, w_loc, b_loc = torch_params
    n, _, hh, ww = x_nchw.shape
    dn = ('NCHW', 'OIHW', 'NCHW')
    h = jax.lax.conv_general_dilated(x_nchw, w_conv1, (1, 1), 'SAME',
                                     dimension_numbers=dn) + b_conv1[None, :, None, None]
    h = jnp.where(h > 0, h, 0.01 * h)
    loc = jax.lax.conv_general_dilated(h, w_loc, (1, 1), 'VALID',
                                       dimension_numbers=dn) + b_loc[None, :, None, None]
    sc = jax.lax.conv_general_dilated(h, w_score, (1, 1), 'VALID',
                                      dimension_numbers=dn) + b_score[None, :, None, None]
    rpn_locs = jnp.transpose(loc, (0, 2, 3, 1)).reshape(n, -1, 4)
    rpn_scores_nhwc = jnp.transpose(sc, (0, 2, 3, 1))
    soft = jax.nn.softmax(rpn_scores_nhwc.reshape(n, hh, ww, n_anchor, 2), axis=4)
    rpn_fg = soft[:, :, :, :, 1].reshape(n, -1)
    rpn_scores = rpn_scores_nhwc.reshape(n, -1, 2)
    return rpn_locs, rpn_scores, rpn_fg


# ------------------------------------ main ------------------------------------

if __name__ == "__main__":
    N, Cin, H, W = 2, 16, 32, 32        # small, but exercises a (2, 2) grid
    Cmid = 32

    rpn = RegionProposalNetworkPallas(in_channels=Cin, mid_channels=Cmid, seed=0)

    key = jax.random.PRNGKey(0)
    x = jax.random.normal(key, (N, Cin, H, W), dtype=jnp.float32)
    img_size = (H * rpn.feat_stride, W * rpn.feat_stride)

    rpn_locs, rpn_scores, rpn_fg_scores, rois, roi_indices, anchor = rpn.forward(
        x, img_size, scale=1.0)
    jax.block_until_ready((rpn_locs, rpn_scores, rpn_fg_scores))

    # sanity check against a pure-JAX (lax.conv, f32) reference.
    # tolerances are relaxed because the kernel uses bf16 MXU inputs
    # (f32 accumulation) and an approx-reciprocal sigmoid.
    ref_locs, ref_scores, ref_fg = _reference(x, rpn.torch_params, rpn.n_anchor)
    assert rpn_locs.shape == (N, H * W * rpn.n_anchor, 4)
    assert rpn_scores.shape == (N, H * W * rpn.n_anchor, 2)
    assert rpn_fg_scores.shape == (N, H * W * rpn.n_anchor)
    assert anchor.shape == (H * W * rpn.n_anchor, 4)
    np.testing.assert_allclose(np.asarray(rpn_locs), np.asarray(ref_locs),
                               rtol=5e-2, atol=2e-3)
    np.testing.assert_allclose(np.asarray(rpn_scores), np.asarray(ref_scores),
                               rtol=5e-2, atol=2e-3)
    np.testing.assert_allclose(np.asarray(rpn_fg_scores), np.asarray(ref_fg),
                               rtol=5e-2, atol=2e-3)

    print("KERNEL_OK")
</pallas_src>

<mosaic_0001>
module attributes {stable_mosaic.version = 11 : i64} {
  func.func @kernel(%arg0: i32, %arg1: i32, %arg2: memref<1x34x34x16xbf16, #tpu.memory_space<vmem>>, %arg3: memref<9x16x32xbf16, #tpu.memory_space<vmem>>, %arg4: memref<1x32xf32, #tpu.memory_space<vmem>>, %arg5: memref<32x128xbf16, #tpu.memory_space<vmem>>, %arg6: memref<1x128xf32, #tpu.memory_space<vmem>>, %arg7: memref<1x128xf32, #tpu.memory_space<vmem>>, %arg8: memref<1x512x128xf32, #tpu.memory_space<vmem>>) attributes {dimension_semantics = [#tpu.dimension_semantics<parallel>, #tpu.dimension_semantics<parallel>], iteration_bounds = array<i64: 2, 2>, scalar_prefetch = 0 : i64, scratch_operands = 0 : i64, tpu.core_type = #tpu.core_type<tc>, window_params = [{transform_indices = @transform_0, window_bounds = array<i64: 1, 34, 34, 16>}, {pipeline_mode = #tpu.pipeline_mode<synchronous>, transform_indices = @transform_1, window_bounds = array<i64: 9, 16, 32>}, {pipeline_mode = #tpu.pipeline_mode<synchronous>, transform_indices = @transform_2, window_bounds = array<i64: 1, 32>}, {pipeline_mode = #tpu.pipeline_mode<synchronous>, transform_indices = @transform_3, window_bounds = array<i64: 32, 128>}, {pipeline_mode = #tpu.pipeline_mode<synchronous>, transform_indices = @transform_4, window_bounds = array<i64: 1, 128>}, {pipeline_mode = #tpu.pipeline_mode<synchronous>, transform_indices = @transform_5, window_bounds = array<i64: 1, 128>}, {transform_indices = @transform_6, window_bounds = array<i64: 1, 512, 128>}]} {
    %c16_i32 = arith.constant 16 : i32
    %0 = arith.muli %arg1, %c16_i32 : i32
    %1 = tpu.assume_multiple %0, 8 : i32
    %cst = arith.constant 0.000000e+00 : f32
    %2 = vector.broadcast %cst : f32 to vector<512x32xf32>
    %c0_i32 = arith.constant 0 : i32
    %3 = arith.addi %1, %c0_i32 : i32
    %c0 = arith.constant 0 : index
    %4 = arith.index_cast %3 : i32 to index
    %c0_0 = arith.constant 0 : index
    %c0_1 = arith.constant 0 : index
    %5 = vector.load %arg2[%c0, %4, %c0_0, %c0_1] : memref<1x34x34x16xbf16, #tpu.memory_space<vmem>>, vector<1x16x32x16xbf16>
    %6 = vector.shape_cast %5 : vector<1x16x32x16xbf16> to vector<16x32x16xbf16>
    %7 = vector.shape_cast %6 : vector<16x32x16xbf16> to vector<512x16xbf16>
    %c0_2 = arith.constant 0 : index
    %c0_3 = arith.constant 0 : index
    %c0_4 = arith.constant 0 : index
    %8 = vector.load %arg3[%c0_2, %c0_3, %c0_4] : memref<9x16x32xbf16, #tpu.memory_space<vmem>>, vector<1x16x32xbf16>
    %9 = vector.shape_cast %8 : vector<1x16x32xbf16> to vector<16x32xbf16>
    %cst_5 = arith.constant dense<0.000000e+00> : vector<512x32xf32>
    %10 = tpu.matmul %7, %9, %cst_5 {dimension_numbers = #tpu.dot_dimension_numbers<[1], [0], [0], [1], [0, 0, 1, 1], [], []>} : vector<512x16xbf16>, vector<16x32xbf16>, vector<512x32xf32> -> vector<512x32xf32>
    %11 = arith.addf %2, %10 : vector<512x32xf32>
    %c0_i32_6 = arith.constant 0 : i32
    %12 = arith.addi %1, %c0_i32_6 : i32
    %c0_7 = arith.constant 0 : index
    %13 = arith.index_cast %12 : i32 to index
    %c1 = arith.constant 1 : index
    %c0_8 = arith.constant 0 : index
    %14 = vector.load %arg2[%c0_7, %13, %c1, %c0_8] : memref<1x34x34x16xbf16, #tpu.memory_space<vmem>>, vector<1x16x32x16xbf16>
    %15 = vector.shape_cast %14 : vector<1x16x32x16xbf16> to vector<16x32x16xbf16>
    %16 = vector.shape_cast %15 : vector<16x32x16xbf16> to vector<512x16xbf16>
    %c1_9 = arith.constant 1 : index
    %c0_10 = arith.constant 0 : index
    %c0_11 = arith.constant 0 : index
    %17 = vector.load %arg3[%c1_9, %c0_10, %c0_11] : memref<9x16x32xbf16, #tpu.memory_space<vmem>>, vector<1x16x32xbf16>
    %18 = vector.shape_cast %17 : vector<1x16x32xbf16> to vector<16x32xbf16>
    %cst_12 = arith.constant dense<0.000000e+00> : vector<512x32xf32>
    %19 = tpu.matmul %16, %18, %cst_12 {dimension_numbers = #tpu.dot_dimension_numbers<[1], [0], [0], [1], [0, 0, 1, 1], [], []>} : vector<512x16xbf16>, vector<16x32xbf16>, vector<512x32xf32> -> vector<512x32xf32>
    %20 = arith.addf %11, %19 : vector<512x32xf32>
    %c0_i32_13 = arith.constant 0 : i32
    %21 = arith.addi %1, %c0_i32_13 : i32
    %c0_14 = arith.constant 0 : index
    %22 = arith.index_cast %21 : i32 to index
    %c2 = arith.constant 2 : index
    %c0_15 = arith.constant 0 : index
    %23 = vector.load %arg2[%c0_14, %22, %c2, %c0_15] : memref<1x34x34x16xbf16, #tpu.memory_space<vmem>>, vector<1x16x32x16xbf16>
    %24 = vector.shape_cast %23 : vector<1x16x32x16xbf16> to vector<16x32x16xbf16>
    %25 = vector.shape_cast %24 : vector<16x32x16xbf16> to vector<512x16xbf16>
    %c2_16 = arith.constant 2 : index
    %c0_17 = arith.constant 0 : index
    %c0_18 = arith.constant 0 : index
    %26 = vector.load %arg3[%c2_16, %c0_17, %c0_18] : memref<9x16x32xbf16, #tpu.memory_space<vmem>>, vector<1x16x32xbf16>
    %27 = vector.shape_cast %26 : vector<1x16x32xbf16> to vector<16x32xbf16>
    %cst_19 = arith.constant dense<0.000000e+00> : vector<512x32xf32>
    %28 = tpu.matmul %25, %27, %cst_19 {dimension_numbers = #tpu.dot_dimension_numbers<[1], [0], [0], [1], [0, 0, 1, 1], [], []>} : vector<512x16xbf16>, vector<16x32xbf16>, vector<512x32xf32> -> vector<512x32xf32>
    %29 = arith.addf %20, %28 : vector<512x32xf32>
    %c1_i32 = arith.constant 1 : i32
    %30 = arith.addi %1, %c1_i32 : i32
    %c0_20 = arith.constant 0 : index
    %31 = arith.index_cast %30 : i32 to index
    %c0_21 = arith.constant 0 : index
    %c0_22 = arith.constant 0 : index
    %32 = vector.load %arg2[%c0_20, %31, %c0_21, %c0_22] : memref<1x34x34x16xbf16, #tpu.memory_space<vmem>>, vector<1x16x32x16xbf16>
    %33 = vector.shape_cast %32 : vector<1x16x32x16xbf16> to vector<16x32x16xbf16>
    %34 = vector.shape_cast %33 : vector<16x32x16xbf16> to vector<512x16xbf16>
    %c3 = arith.constant 3 : index
    %c0_23 = arith.constant 0 : index
    %c0_24 = arith.constant 0 : index
    %35 = vector.load %arg3[%c3, %c0_23, %c0_24] : memref<9x16x32xbf16, #tpu.memory_space<vmem>>, vector<1x16x32xbf16>
    %36 = vector.shape_cast %35 : vector<1x16x32xbf16> to vector<16x32xbf16>
    %cst_25 = arith.constant dense<0.000000e+00> : vector<512x32xf32>
    %37 = tpu.matmul %34, %36, %cst_25 {dimension_numbers = #tpu.dot_dimension_numbers<[1], [0], [0], [1], [0, 0, 1, 1], [], []>} : vector<512x16xbf16>, vector<16x32xbf16>, vector<512x32xf32> -> vector<512x32xf32>
    %38 = arith.addf %29, %37 : vector<512x32xf32>
    %c1_i32_26 = arith.constant 1 : i32
    %39 = arith.addi %1, %c1_i32_26 : i32
    %c0_27 = arith.constant 0 : index
    %40 = arith.index_cast %39 : i32 to index
    %c1_28 = arith.constant 1 : index
    %c0_29 = arith.constant 0 : index
    %41 = vector.load %arg2[%c0_27, %40, %c1_28, %c0_29] : memref<1x34x34x16xbf16, #tpu.memory_space<vmem>>, vector<1x16x32x16xbf16>
    %42 = vector.shape_cast %41 : vector<1x16x32x16xbf16> to vector<16x32x16xbf16>
    %43 = vector.shape_cast %42 : vector<16x32x16xbf16> to vector<512x16xbf16>
    %c4 = arith.constant 4 : index
    %c0_30 = arith.constant 0 : index
    %c0_31 = arith.constant 0 : index
    %44 = vector.load %arg3[%c4, %c0_30, %c0_31] : memref<9x16x32xbf16, #tpu.memory_space<vmem>>, vector<1x16x32xbf16>
    %45 = vector.shape_cast %44 : vector<1x16x32xbf16> to vector<16x32xbf16>
    %cst_32 = arith.constant dense<0.000000e+00> : vector<512x32xf32>
    %46 = tpu.matmul %43, %45, %cst_32 {dimension_numbers = #tpu.dot_dimension_numbers<[1], [0], [0], [1], [0, 0, 1, 1], [], []>} : vector<512x16xbf16>, vector<16x32xbf16>, vector<512x32xf32> -> vector<512x32xf32>
    %47 = arith.addf %38, %46 : vector<512x32xf32>
    %c1_i32_33 = arith.constant 1 : i32
    %48 = arith.addi %1, %c1_i32_33 : i32
    %c0_34 = arith.constant 0 : index
    %49 = arith.index_cast %48 : i32 to index
    %c2_35 = arith.constant 2 : index
    %c0_36 = arith.constant 0 : index
    %50 = vector.load %arg2[%c0_34, %49, %c2_35, %c0_36] : memref<1x34x34x16xbf16, #tpu.memory_space<vmem>>, vector<1x16x32x16xbf16>
    %51 = vector.shape_cast %50 : vector<1x16x32x16xbf16> to vector<16x32x16xbf16>
    %52 = vector.shape_cast %51 : vector<16x32x16xbf16> to vector<512x16xbf16>
    %c5 = arith.constant 5 : index
    %c0_37 = arith.constant 0 : index
    %c0_38 = arith.constant 0 : index
    %53 = vector.load %arg3[%c5, %c0_37, %c0_38] : memref<9x16x32xbf16, #tpu.memory_space<vmem>>, vector<1x16x32xbf16>
    %54 = vector.shape_cast %53 : vector<1x16x32xbf16> to vector<16x32xbf16>
    %cst_39 = arith.constant dense<0.000000e+00> : vector<512x32xf32>
    %55 = tpu.matmul %52, %54, %cst_39 {dimension_numbers = #tpu.dot_dimension_numbers<[1], [0], [0], [1], [0, 0, 1, 1], [], []>} : vector<512x16xbf16>, vector<16x32xbf16>, vector<512x32xf32> -> vector<512x32xf32>
    %56 = arith.addf %47, %55 : vector<512x32xf32>
    %c2_i32 = arith.constant 2 : i32
    %57 = arith.addi %1, %c2_i32 : i32
    %c0_40 = arith.constant 0 : index
    %58 = arith.index_cast %57 : i32 to index
    %c0_41 = arith.constant 0 : index
    %c0_42 = arith.constant 0 : index
    %59 = vector.load %arg2[%c0_40, %58, %c0_41, %c0_42] : memref<1x34x34x16xbf16, #tpu.memory_space<vmem>>, vector<1x16x32x16xbf16>
    %60 = vector.shape_cast %59 : vector<1x16x32x16xbf16> to vector<16x32x16xbf16>
    %61 = vector.shape_cast %60 : vector<16x32x16xbf16> to vector<512x16xbf16>
    %c6 = arith.constant 6 : index
    %c0_43 = arith.constant 0 : index
    %c0_44 = arith.constant 0 : index
    %62 = vector.load %arg3[%c6, %c0_43, %c0_44] : memref<9x16x32xbf16, #tpu.memory_space<vmem>>, vector<1x16x32xbf16>
    %63 = vector.shape_cast %62 : vector<1x16x32xbf16> to vector<16x32xbf16>
    %cst_45 = arith.constant dense<0.000000e+00> : vector<512x32xf32>
    %64 = tpu.matmul %61, %63, %cst_45 {dimension_numbers = #tpu.dot_dimension_numbers<[1], [0], [0], [1], [0, 0, 1, 1], [], []>} : vector<512x16xbf16>, vector<16x32xbf16>, vector<512x32xf32> -> vector<512x32xf32>
    %65 = arith.addf %56, %64 : vector<512x32xf32>
    %c2_i32_46 = arith.constant 2 : i32
    %66 = arith.addi %1, %c2_i32_46 : i32
    %c0_47 = arith.constant 0 : index
    %67 = arith.index_cast %66 : i32 to index
    %c1_48 = arith.constant 1 : index
    %c0_49 = arith.constant 0 : index
    %68 = vector.load %arg2[%c0_47, %67, %c1_48, %c0_49] : memref<1x34x34x16xbf16, #tpu.memory_space<vmem>>, vector<1x16x32x16xbf16>
    %69 = vector.shape_cast %68 : vector<1x16x32x16xbf16> to vector<16x32x16xbf16>
    %70 = vector.shape_cast %69 : vector<16x32x16xbf16> to vector<512x16xbf16>
    %c7 = arith.constant 7 : index
    %c0_50 = arith.constant 0 : index
    %c0_51 = arith.constant 0 : index
    %71 = vector.load %arg3[%c7, %c0_50, %c0_51] : memref<9x16x32xbf16, #tpu.memory_space<vmem>>, vector<1x16x32xbf16>
    %72 = vector.shape_cast %71 : vector<1x16x32xbf16> to vector<16x32xbf16>
    %cst_52 = arith.constant dense<0.000000e+00> : vector<512x32xf32>
    %73 = tpu.matmul %70, %72, %cst_52 {dimension_numbers = #tpu.dot_dimension_numbers<[1], [0], [0], [1], [0, 0, 1, 1], [], []>} : vector<512x16xbf16>, vector<16x32xbf16>, vector<512x32xf32> -> vector<512x32xf32>
    %74 = arith.addf %65, %73 : vector<512x32xf32>
    %c2_i32_53 = arith.constant 2 : i32
    %75 = arith.addi %1, %c2_i32_53 : i32
    %c0_54 = arith.constant 0 : index
    %76 = arith.index_cast %75 : i32 to index
    %c2_55 = arith.constant 2 : index
    %c0_56 = arith.constant 0 : index
    %77 = vector.load %arg2[%c0_54, %76, %c2_55, %c0_56] : memref<1x34x34x16xbf16, #tpu.memory_space<vmem>>, vector<1x16x32x16xbf16>
    %78 = vector.shape_cast %77 : vector<1x16x32x16xbf16> to vector<16x32x16xbf16>
    %79 = vector.shape_cast %78 : vector<16x32x16xbf16> to vector<512x16xbf16>
    %c8 = arith.constant 8 : index
    %c0_57 = arith.constant 0 : index
    %c0_58 = arith.constant 0 : index
    %80 = vector.load %arg3[%c8, %c0_57, %c0_58] : memref<9x16x32xbf16, #tpu.memory_space<vmem>>, vector<1x16x32xbf16>
    %81 = vector.shape_cast %80 : vector<1x16x32xbf16> to vector<16x32xbf16>
    %cst_59 = arith.constant dense<0.000000e+00> : vector<512x32xf32>
    %82 = tpu.matmul %79, %81, %cst_59 {dimension_numbers = #tpu.dot_dimension_numbers<[1], [0], [0], [1], [0, 0, 1, 1], [], []>} : vector<512x16xbf16>, vector<16x32xbf16>, vector<512x32xf32> -> vector<512x32xf32>
    %83 = arith.addf %74, %82 : vector<512x32xf32>
    %c0_60 = arith.constant 0 : index
    %c0_61 = arith.constant 0 : index
    %84 = vector.load %arg4[%c0_60, %c0_61] : memref<1x32xf32, #tpu.memory_space<vmem>>, vector<1x32xf32>
    %85 = vector.broadcast %84 : vector<1x32xf32> to vector<512x32xf32>
    %86 = arith.addf %83, %85 : vector<512x32xf32>
    %cst_62 = arith.constant 0.00999999977 : f32
    %87 = vector.broadcast %cst_62 : f32 to vector<512x32xf32>
    %88 = arith.mulf %87, %86 : vector<512x32xf32>
    %89 = arith.maximumf %86, %88 : vector<512x32xf32>
    %90 = arith.truncf %89 : vector<512x32xf32> to vector<512x32xbf16>
    %c0_63 = arith.constant 0 : index
    %c0_64 = arith.constant 0 : index
    %91 = vector.load %arg5[%c0_63, %c0_64] : memref<32x128xbf16, #tpu.memory_space<vmem>>, vector<32x128xbf16>
    %cst_65 = arith.constant dense<0.000000e+00> : vector<512x128xf32>
    %92 = tpu.matmul %90, %91, %cst_65 {dimension_numbers = #tpu.dot_dimension_numbers<[1], [0], [0], [1], [0, 0, 1, 1], [], []>} : vector<512x32xbf16>, vector<32x128xbf16>, vector<512x128xf32> -> vector<512x128xf32>
    %c0_66 = arith.constant 0 : index
    %c0_67 = arith.constant 0 : index
    %93 = vector.load %arg6[%c0_66, %c0_67] : memref<1x128xf32, #tpu.memory_space<vmem>>, vector<1x128xf32>
    %94 = vector.broadcast %93 : vector<1x128xf32> to vector<512x128xf32>
    %95 = arith.addf %92, %94 : vector<512x128xf32>
    %c0_68 = arith.constant 0 : index
    %c0_69 = arith.constant 0 : index
    %96 = vector.load %arg7[%c0_68, %c0_69] : memref<1x128xf32, #tpu.memory_space<vmem>>, vector<1x128xf32>
    %97 = vector.broadcast %96 : vector<1x128xf32> to vector<512x128xf32>
    %98 = arith.mulf %95, %97 : vector<512x128xf32>
    %cst_70 = arith.constant 0.000000e+00 : f32
    %99 = vector.broadcast %cst_70 : f32 to vector<512x128xf32>
    %100 = arith.subf %99, %98 : vector<512x128xf32>
    %101 = math.exp %100 : vector<512x128xf32>
    %cst_71 = arith.constant 1.000000e+00 : f32
    %102 = vector.broadcast %cst_71 : f32 to vector<512x128xf32>
    %103 = arith.addf %102, %101 : vector<512x128xf32>
    %104 = tpu.reciprocal %103 {approx = true} : vector<512x128xf32> -> vector<512x128xf32>
    %105 = arith.subf %104, %95 : vector<512x128xf32>
    %106 = vector.broadcast %96 : vector<1x128xf32> to vector<512x128xf32>
    %107 = arith.mulf %106, %105 : vector<512x128xf32>
    %108 = arith.addf %95, %107 : vector<512x128xf32>
    %c0_72 = arith.constant 0 : index
    %c0_73 = arith.constant 0 : index
    %c0_74 = arith.constant 0 : index
    %109 = vector.load %arg8[%c0_72, %c0_73, %c0_74] : memref<1x512x128xf32, #tpu.memory_space<vmem>>, vector<1x512x128xf32>
    %110 = vector.shape_cast %109 : vector<1x512x128xf32> to vector<512x128xf32>
    %111 = vector.shape_cast %108 : vector<512x128xf32> to vector<1x512x128xf32>
    tpu.vector_store %arg8[%c0_72, %c0_73, %c0_74], %111 {strides = array<i32>} : memref<1x512x128xf32, #tpu.memory_space<vmem>>, vector<1x512x128xf32>,
    return
  }
  func.func @transform_0(%arg0: i32, %arg1: i32) -> (i32, i32, i32, i32) {
    %c0_i32 = arith.constant 0 : i32
    %c0_i32_0 = arith.constant 0 : i32
    %c0_i32_1 = arith.constant 0 : i32
    %c0_i32_2 = arith.constant 0 : i32
    return %arg0, %c0_i32, %c0_i32_0, %c0_i32_1 : i32, i32, i32, i32
  }
  func.func @transform_1(%arg0: i32, %arg1: i32) -> (i32, i32, i32) {
    %c0_i32 = arith.constant 0 : i32
    %c0_i32_0 = arith.constant 0 : i32
    %c0_i32_1 = arith.constant 0 : i32
    %c0_i32_2 = arith.constant 0 : i32
    return %c0_i32, %c0_i32_0, %c0_i32_1 : i32, i32, i32
  }
  func.func @transform_2(%arg0: i32, %arg1: i32) -> (i32, i32) {
    %c0_i32 = arith.constant 0 : i32
    %c0_i32_0 = arith.constant 0 : i32
    %c0_i32_1 = arith.constant 0 : i32
    return %c0_i32, %c0_i32_0 : i32, i32
  }
  func.func @transform_3(%arg0: i32, %arg1: i32) -> (i32, i32) {
    %c0_i32 = arith.constant 0 : i32
    %c0_i32_0 = arith.constant 0 : i32
    %c0_i32_1 = arith.constant 0 : i32
    return %c0_i32, %c0_i32_0 : i32, i32
  }
  func.func @transform_4(%arg0: i32, %arg1: i32) -> (i32, i32) {
    %c0_i32 = arith.constant 0 : i32
    %c0_i32_0 = arith.constant 0 : i32
    %c0_i32_1 = arith.constant 0 : i32
    return %c0_i32, %c0_i32_0 : i32, i32
  }
  func.func @transform_5(%arg0: i32, %arg1: i32) -> (i32, i32) {
    %c0_i32 = arith.constant 0 : i32
    %c0_i32_0 = arith.constant 0 : i32
    %c0_i32_1 = arith.constant 0 : i32
    return %c0_i32, %c0_i32_0 : i32, i32
  }
  func.func @transform_6(%arg0: i32, %arg1: i32) -> (i32, i32, i32) {
    %c0_i32 = arith.constant 0 : i32
    %c0_i32_0 = arith.constant 0 : i32
    return %arg0, %arg1, %c0_i32 : i32, i32, i32
  }
}

</mosaic_0001>

<llo_original>
// kernel: tpu_custom_call.1
$region0: #{tpu_custom_call.1}
  #allocation0 [shape = 'u32[]', space=smem, size = 0x4, offset = 0x4, fixed_abs, tag = 'smem constant byte address 0x4 - core index']
  #allocation1 [shape = 'u32[72,128]{1,0:T(1,128)}', space=vmem, size = 0x9000, scoped, tag = 'internal scratch']
  %s0 = inlined_call_operand.vmem [shape: bf16[2,34,34,16], index: 0, kind: input, shape index: {}]
  %s1 = inlined_call_operand.vmem [shape: bf16[9,16,32], index: 1, kind: input, shape index: {}]
  %s2 = inlined_call_operand.vmem [shape: f32[1,32], index: 2, kind: input, shape index: {}]
  %s3 = inlined_call_operand.vmem [shape: bf16[32,128], index: 3, kind: input, shape index: {}]
  %s4 = inlined_call_operand.vmem [shape: f32[1,128], index: 4, kind: input, shape index: {}]
  %s5 = inlined_call_operand.vmem [shape: f32[1,128], index: 5, kind: input, shape index: {}]
  %s6 = inlined_call_operand.hbm [shape: f32[2,1024,128], index: 6, kind: output, shape index: {}]
  %s7 = sld [smem:[#allocation0]]
  $region57: #{tpu_custom_call.1} parent=0
    _
  %s9 = ssub.s32 1, %s7
  %s10 = scalar_select 0, %s9, %s7
  $region1: #{tpu_custom_call.1} parent=0
    #allocation2 [shape = 'u8[524288]{0}', space=vmem, size = 0x80000, scoped, tag = 'output window, operand 0']
    #allocation3 [shape = 's32[2]{0}', space=sflag, size = 0x8, scoped, tag = 'scoped memory for tpu_custom_call.1']
    %11 = vsyncpa [#allocation3], 0
    %s12 = scalar_lea.sflag [#allocation3], 1
    %13 = vsyncpa %s12, 0
    loop: start=0, step=1, limit=6
    $region2: #{tpu_custom_call.1} parent=1 // loop_pre_header
      _
    $region3: #{tpu_custom_call.1} parent=1 // loop_header
      %s15 = sphi 0, %s19
      %p16 = scmp.ge.s32.totalorder %s15, 6
      %s22 = sphi 0, %s34
      %s23 = sphi 0, %s30
      %s24 = sphi 0, %s22
      %s25 = sphi 0, %s23
      %s26 = sphi 0, %s24
      %s27 = sphi 0, %s25
      %s37 = sphi 0, %s39
      %s40 = sphi 0, %s37
      %s41 = sphi 0, %s40
      %s57 = sphi 0, %s41
      %s61 = sphi 0, %s61
      %s63 = sphi 0, %s61
      %s64 = sphi 0, %s63
      %s78 = sphi 0, %s64
      %s82 = sphi 0, %s82
      %s84 = sphi 0, %s82
      %s85 = sphi 0, %s84
      %s99 = sphi 0, %s85
      %s103 = sphi 0, %s103
      %s105 = sphi 0, %s103
      %s106 = sphi 0, %s105
      %s120 = sphi 0, %s106
      %s124 = sphi 0, %s124
      %s126 = sphi 0, %s124
      %s127 = sphi 0, %s126
      %s141 = sphi 0, %s127
      %s145 = sphi 0, %s145
      %s147 = sphi 0, %s145
      %s148 = sphi 0, %s147
      %s162 = sphi 0, %s148
      %s170 = sphi 0, %s172
      %s173 = sphi 0, %s170
      %s174 = sphi 0, %s173
      %s190 = sphi 0, %s174
    $region4: #{tpu_custom_call.1} parent=1 // loop_header_branch
      %18 = sbr.rel (%p16) target = $region8
    $region5: #{tpu_custom_call.1} parent=1 // loop_body
      %s20 = ssub.s32 %s15, 1
      %s21 = ssub.s32 %s15, 2
      %s28 = sadd.s32 1, %s23
      %p29 = scmp.ge.s32.totalorder %s28, 2
      %s30 = scalar_select %p29, 0, %s28
      %s31 = sadd.s32 1, %s22
      %s32 = scalar_select %p29, %s31, %s22
      %p33 = scmp.ge.s32.totalorder %s32, 2
      %s34 = scalar_select %p33, 0, %s32
      %s35 = ssub.s32 %s22, %s34
      %p36 = scmp.eq.s32.totalorder %s35, 0
      %s38 = sadd.s32 %s37, 1
      %s39 = scalar_select %p36, %s37, %s38
      %p42 = pneg %p36
      %p43 = scmp.eq.s32.totalorder %s15, 3
      %p44 = por %p42, %p43
      %p45 = scmp.ne.s32.totalorder %s37, %s40
      %p46 = scmp.eq.s32.totalorder %s15, 0
      %p47 = por %p45, %p46
      %p48 = scmp.ne.s32.totalorder %s37, %s40
      %p49 = scmp.eq.s32.totalorder %s20, 3
      %p50 = por %p48, %p49
      %p51 = scmp.ne.s32.totalorder %s40, %s41
      %p52 = scmp.eq.s32.totalorder %s20, 0
      %p53 = por %p51, %p52
      %p54 = scmp.ne.s32.totalorder %s40, %s41
      %p55 = scmp.eq.s32.totalorder %s21, 3
      %p56 = por %p54, %p55
      %p58 = scmp.ne.s32.totalorder %s41, %s57
      %p59 = scmp.eq.s32.totalorder %s21, 0
      %p60 = por %p58, %p59
      %s62 = sadd.s32 %s61, 1
      %p65 = scmp.eq.s32.totalorder %s15, 3
      %p66 = scmp.ne.s32.totalorder %s61, %s63
      %p67 = scmp.eq.s32.totalorder %s15, 0
      %p68 = por %p66, %p67
      %p69 = scmp.ne.s32.totalorder %s61, %s63
      %p70 = scmp.eq.s32.totalorder %s20, 3
      %p71 = por %p69, %p70
      %p72 = scmp.ne.s32.totalorder %s63, %s64
      %p73 = scmp.eq.s32.totalorder %s20, 0
      %p74 = por %p72, %p73
      %p75 = scmp.ne.s32.totalorder %s63, %s64
      %p76 = scmp.eq.s32.totalorder %s21, 3
      %p77 = por %p75, %p76
      %p79 = scmp.ne.s32.totalorder %s64, %s78
      %p80 = scmp.eq.s32.totalorder %s21, 0
      %p81 = por %p79, %p80
      %s83 = sadd.s32 %s82, 1
      %p86 = scmp.eq.s32.totalorder %s15, 3
      %p87 = scmp.ne.s32.totalorder %s82, %s84
      %p88 = scmp.eq.s32.totalorder %s15, 0
      %p89 = por %p87, %p88
      %p90 = scmp.ne.s32.totalorder %s82, %s84
      %p91 = scmp.eq.s32.totalorder %s20, 3
      %p92 = por %p90, %p91
      %p93 = scmp.ne.s32.totalorder %s84, %s85
      %p94 = scmp.eq.s32.totalorder %s20, 0
      %p95 = por %p93, %p94
      %p96 = scmp.ne.s32.totalorder %s84, %s85
      %p97 = scmp.eq.s32.totalorder %s21, 3
      %p98 = por %p96, %p97
      %p100 = scmp.ne.s32.totalorder %s85, %s99
      %p101 = scmp.eq.s32.totalorder %s21, 0
      %p102 = por %p100, %p101
      %s104 = sadd.s32 %s103, 1
      %p107 = scmp.eq.s32.totalorder %s15, 3
      %p108 = scmp.ne.s32.totalorder %s103, %s105
      %p109 = scmp.eq.s32.totalorder %s15, 0
      %p110 = por %p108, %p109
      %p111 = scmp.ne.s32.totalorder %s103, %s105
      %p112 = scmp.eq.s32.totalorder %s20, 3
      %p113 = por %p111, %p112
      %p114 = scmp.ne.s32.totalorder %s105, %s106
      %p115 = scmp.eq.s32.totalorder %s20, 0
      %p116 = por %p114, %p115
      %p117 = scmp.ne.s32.totalorder %s105, %s106
      %p118 = scmp.eq.s32.totalorder %s21, 3
      %p119 = por %p117, %p118
      %p121 = scmp.ne.s32.totalorder %s106, %s120
      %p122 = scmp.eq.s32.totalorder %s21, 0
      %p123 = por %p121, %p122
      %s125 = sadd.s32 %s124, 1
      %p128 = scmp.eq.s32.totalorder %s15, 3
      %p129 = scmp.ne.s32.totalorder %s124, %s126
      %p130 = scmp.eq.s32.totalorder %s15, 0
      %p131 = por %p129, %p130
      %p132 = scmp.ne.s32.totalorder %s124, %s126
      %p133 = scmp.eq.s32.totalorder %s20, 3
      %p134 = por %p132, %p133
      %p135 = scmp.ne.s32.totalorder %s126, %s127
      %p136 = scmp.eq.s32.totalorder %s20, 0
      %p137 = por %p135, %p136
      %p138 = scmp.ne.s32.totalorder %s126, %s127
      %p139 = scmp.eq.s32.totalorder %s21, 3
      %p140 = por %p138, %p139
      %p142 = scmp.ne.s32.totalorder %s127, %s141
      %p143 = scmp.eq.s32.totalorder %s21, 0
      %p144 = por %p142, %p143
      %s146 = sadd.s32 %s145, 1
      %p149 = scmp.eq.s32.totalorder %s15, 3
      %p150 = scmp.ne.s32.totalorder %s145, %s147
      %p151 = scmp.eq.s32.totalorder %s15, 0
      %p152 = por %p150, %p151
      %p153 = scmp.ne.s32.totalorder %s145, %s147
      %p154 = scmp.eq.s32.totalorder %s20, 3
      %p155 = por %p153, %p154
      %p156 = scmp.ne.s32.totalorder %s147, %s148
      %p157 = scmp.eq.s32.totalorder %s20, 0
      %p158 = por %p156, %p157
      %p159 = scmp.ne.s32.totalorder %s147, %s148
      %p160 = scmp.eq.s32.totalorder %s21, 3
      %p161 = por %p159, %p160
      %p163 = scmp.ne.s32.totalorder %s148, %s162
      %p164 = scmp.eq.s32.totalorder %s21, 0
      %p165 = por %p163, %p164
      %s166 = ssub.s32 %s22, %s34
      %s167 = ssub.s32 %s23, %s30
      %s168 = sor.u32 %s166, %s167
      %p169 = scmp.eq.s32.totalorder %s168, 0
      %s171 = sadd.s32 %s170, 1
      %s172 = scalar_select %p169, %s170, %s171
      %p175 = pneg %p169
      %p176 = scmp.eq.s32.totalorder %s15, 3
      %p177 = por %p175, %p176
      %p178 = scmp.ne.s32.totalorder %s170, %s173
      %p179 = scmp.eq.s32.totalorder %s15, 0
      %p180 = por %p178, %p179
      %p181 = scmp.ne.s32.totalorder %s170, %s173
      %p182 = scmp.eq.s32.totalorder %s20, 3
      %p183 = por %p181, %p182
      %p184 = scmp.ne.s32.totalorder %s173, %s174
      %p185 = scmp.eq.s32.totalorder %s20, 0
      %p186 = por %p184, %p185
      %p187 = scmp.ne.s32.totalorder %s173, %s174
      %p188 = scmp.eq.s32.totalorder %s21, 3
      %p189 = por %p187, %p188
      %p191 = scmp.ne.s32.totalorder %s174, %s190
      %p192 = scmp.eq.s32.totalorder %s21, 0
      %p193 = por %p191, %p192
      %p194 = scmp.le.s32.totalorder 1, %s15
      %p195 = scmp.lt.s32.totalorder %s15, 5
      %p196 = pnand %p194, %p195
      %p197 = pneg %p196
      // Predicated region
      $region9: #{tpu_custom_call.1} parent=5 // pred_check
        _
      $region10: #{tpu_custom_call.1} parent=5 // pred_check_branch
        %199 = sbr.rel (%p196) target = $region12
      $region11: #{tpu_custom_call.1} parent=5 // pred_region
        %s200 = ssub.s32 %s15, 1
        // Predicated region
        $region13: #{tpu_custom_call.1} parent=11 // pred_check
          %p201 = pneg %p74
        $region14: #{tpu_custom_call.1} parent=11 // pred_check_branch
          %203 = sbr.rel (%p201) target = $region16
        $region15: #{tpu_custom_call.1} parent=11 // pred_region
          _
        $region16: #{tpu_custom_call.1} parent=11 // pred_fallthru
          _
        // Predicated region
        $region17: #{tpu_custom_call.1} parent=11 // pred_check
          %p204 = pneg %p95
        $region18: #{tpu_custom_call.1} parent=11 // pred_check_branch
          %206 = sbr.rel (%p204) target = $region20
        $region19: #{tpu_custom_call.1} parent=11 // pred_region
          _
        $region20: #{tpu_custom_call.1} parent=11 // pred_fallthru
          _
        // Predicated region
        $region21: #{tpu_custom_call.1} parent=11 // pred_check
          %p207 = pneg %p116
        $region22: #{tpu_custom_call.1} parent=11 // pred_check_branch
          %209 = sbr.rel (%p207) target = $region24
        $region23: #{tpu_custom_call.1} parent=11 // pred_region
          _
        $region24: #{tpu_custom_call.1} parent=11 // pred_fallthru
          _
        // Predicated region
        $region25: #{tpu_custom_call.1} parent=11 // pred_check
          %p210 = pneg %p137
        $region26: #{tpu_custom_call.1} parent=11 // pred_check_branch
          %212 = sbr.rel (%p210) target = $region28
        $region27: #{tpu_custom_call.1} parent=11 // pred_region
          _
        $region28: #{tpu_custom_call.1} parent=11 // pred_fallthru
          _
        // Predicated region
        $region29: #{tpu_custom_call.1} parent=11 // pred_check
          %p213 = pneg %p158
        $region30: #{tpu_custom_call.1} parent=11 // pred_check_branch
          %215 = sbr.rel (%p213) target = $region32
        $region31: #{tpu_custom_call.1} parent=11 // pred_region
          _
        $region32: #{tpu_custom_call.1} parent=11 // pred_fallthru
          _
      $region12: #{tpu_custom_call.1} parent=5 // pred_fallthru
        _
      %p216 = scmp.lt.s32.totalorder %s15, 4
      // Predicated region
      $region33: #{tpu_custom_call.1} parent=5 // pred_check
        %p217 = pneg %p216
      $region34: #{tpu_custom_call.1} parent=5 // pred_check_branch
        %219 = sbr.rel (%p217) target = $region36
      $region35: #{tpu_custom_call.1} parent=5 // pred_region
        // Predicated region
        $region37: #{tpu_custom_call.1} parent=35 // pred_check
          %p220 = pneg %p47
        $region38: #{tpu_custom_call.1} parent=35 // pred_check_branch
          %222 = sbr.rel (%p220) target = $region40
        $region39: #{tpu_custom_call.1} parent=35 // pred_region
          %p223 = scmp.lt.s32.totalorder %s22, 1
          %s224 = scalar_select %p223, %s22, 1
          %s225 = smul.addr %s224, 170
          %s226 = smul.addr %s225, 4
          %s227 = scalar_lea.vmem %s0, %s226
        $region40: #{tpu_custom_call.1} parent=35 // pred_fallthru
          _
      $region36: #{tpu_custom_call.1} parent=5 // pred_fallthru
        _
      %p228 = scmp.le.s32.totalorder 1, %s15
      %p229 = scmp.lt.s32.totalorder %s15, 5
      %p230 = pnand %p228, %p229
      %p231 = pneg %p230
      // Predicated region
      $region41: #{tpu_custom_call.1} parent=5 // pred_check
        _
      $region42: #{tpu_custom_call.1} parent=5 // pred_check_branch
        %233 = sbr.rel (%p230) target = $region44
      $region43: #{tpu_custom_call.1} parent=5 // pred_region
        %s234 = ssub.s32 %s15, 1
        %p235 = scmp.lt.s32.totalorder %s24, 1
        %s236 = scalar_select %p235, %s24, 1
        %s237 = smul.addr %s236, 170
        %s238 = smul.addr %s237, 4
        %s239 = scalar_lea.vmem %s0, %s238
        %p240 = pneg %p53
        %p241 = pneg %p50
        %p242 = pneg %p74
        %p243 = pneg %p71
        %p244 = pneg %p95
        %p245 = pneg %p92
        %p246 = pneg %p116
        %p247 = pneg %p113
        %p248 = pneg %p137
        %p249 = pneg %p134
        %p250 = pneg %p158
        %p251 = pneg %p155
        %p252 = pneg %p186
        %p253 = pneg %p183
        %s254 = sand.u32 %s173, 1
        %s255 = scalar_lea.sflag [#allocation3], %s254
        %s256 = sand.u32 %s173, 1
        %s257 = smul.addr %s256, 512
        %s258 = scalar_lea.vmem [#allocation2], %s257
        %p259 = scmp.lt.s32.totalorder %s24, 1
        %s260 = scalar_select %p259, %s24, 1
        %s261 = smul.addr %s260, 170
        %s262 = smul.addr %s261, 4
        %s263 = scalar_lea.vmem %s0, %s262
        %s264 = smul.u32 64, %s25
        %s266 = smul.u32 %s25, 16
        %s267 = smul.u32 %s266, 5
        %s268 = smul.addr %s267, 4
        %s269 = scalar_lea.vmem %s263, %s268
        %v270 = vld [vmem:[%s269] sm:$0xf]
        %v271 = vld [vmem:[%s269 + $0x4] sm:$0xf]
        %v272 = vld [vmem:[%s269 + $0x8] sm:$0xf]
        %v273 = vld [vmem:[%s269 + $0xc] sm:$0xf]
        %v274 = vld [vmem:[%s269 + $0x14] sm:$0xf]
        %v275 = vld [vmem:[%s269 + $0x18] sm:$0xf]
        %v276 = vld [vmem:[%s269 + $0x1c] sm:$0xf]
        %v277 = vld [vmem:[%s269 + $0x20] sm:$0xf]
        %v278 = vld [vmem:[%s269 + $0x28] sm:$0xf]
        %v279 = vld [vmem:[%s269 + $0x2c] sm:$0xf]
        %v280 = vld [vmem:[%s269 + $0x30] sm:$0xf]
        %v281 = vld [vmem:[%s269 + $0x34] sm:$0xf]
        %v282 = vld [vmem:[%s269 + $0x3c] sm:$0xf]
        %v283 = vld [vmem:[%s269 + $0x40] sm:$0xf]
        %v284 = vld [vmem:[%s269 + $0x44] sm:$0xf]
        %v285 = vld [vmem:[%s269 + $0x48] sm:$0xf]
        %v286 = vld [vmem:[%s269 + $0x50] sm:$0xf]
        %v287 = vld [vmem:[%s269 + $0x54] sm:$0xf]
        %v288 = vld [vmem:[%s269 + $0x58] sm:$0xf]
        %v289 = vld [vmem:[%s269 + $0x5c] sm:$0xf]
        %v290 = vld [vmem:[%s269 + $0x64] sm:$0xf]
        %v291 = vld [vmem:[%s269 + $0x68] sm:$0xf]
        %v292 = vld [vmem:[%s269 + $0x6c] sm:$0xf]
        %v293 = vld [vmem:[%s269 + $0x70] sm:$0xf]
        %v294 = vld [vmem:[%s269 + $0x78] sm:$0xf]
        %v295 = vld [vmem:[%s269 + $0x7c] sm:$0xf]
        %v296 = vld [vmem:[%s269 + $0x80] sm:$0xf]
        %v297 = vld [vmem:[%s269 + $0x84] sm:$0xf]
        %v298 = vld [vmem:[%s269 + $0x8c] sm:$0xf]
        %v299 = vld [vmem:[%s269 + $0x90] sm:$0xf]
        %v300 = vld [vmem:[%s269 + $0x94] sm:$0xf]
        %v301 = vld [vmem:[%s269 + $0x98] sm:$0xf]
        %v302 = vld [vmem:[%s269 + $0xa0] sm:$0xf]
        %v303 = vld [vmem:[%s269 + $0xa4] sm:$0xf]
        %v304 = vld [vmem:[%s269 + $0xa8] sm:$0xf]
        %v305 = vld [vmem:[%s269 + $0xac] sm:$0xf]
        %v306 = vld [vmem:[%s269 + $0xb4] sm:$0xf]
        %v307 = vld [vmem:[%s269 + $0xb8] sm:$0xf]
        %v308 = vld [vmem:[%s269 + $0xbc] sm:$0xf]
        %v309 = vld [vmem:[%s269 + $0xc0] sm:$0xf]
        %v310 = vld [vmem:[%s269 + $0xc8] sm:$0xf]
        %v311 = vld [vmem:[%s269 + $0xcc] sm:$0xf]
        %v312 = vld [vmem:[%s269 + $0xd0] sm:$0xf]
        %v313 = vld [vmem:[%s269 + $0xd4] sm:$0xf]
        %v314 = vld [vmem:[%s269 + $0xdc] sm:$0xf]
        %v315 = vld [vmem:[%s269 + $0xe0] sm:$0xf]
        %v316 = vld [vmem:[%s269 + $0xe4] sm:$0xf]
        %v317 = vld [vmem:[%s269 + $0xe8] sm:$0xf]
        %v318 = vld [vmem:[%s269 + $0xf0] sm:$0xf]
        %v319 = vld [vmem:[%s269 + $0xf4] sm:$0xf]
        %v320 = vld [vmem:[%s269 + $0xf8] sm:$0xf]
        %v321 = vld [vmem:[%s269 + $0xfc] sm:$0xf]
        %v322 = vld [vmem:[%s269 + $0x104] sm:$0xf]
        %v323 = vld [vmem:[%s269 + $0x108] sm:$0xf]
        %v324 = vld [vmem:[%s269 + $0x10c] sm:$0xf]
        %v325 = vld [vmem:[%s269 + $0x110] sm:$0xf]
        %v326 = vld [vmem:[%s269 + $0x118] sm:$0xf]
        %v327 = vld [vmem:[%s269 + $0x11c] sm:$0xf]
        %v328 = vld [vmem:[%s269 + $0x120] sm:$0xf]
        %v329 = vld [vmem:[%s269 + $0x124] sm:$0xf]
        %v330 = vld [vmem:[%s269 + $0x12c] sm:$0xf]
        %v331 = vld [vmem:[%s269 + $0x130] sm:$0xf]
        %v332 = vld [vmem:[%s269 + $0x134] sm:$0xf]
        %v333 = vld [vmem:[%s269 + $0x138] sm:$0xf]
        %v334 = vld [vmem:[%s1] sm:$0xf]
        %v335 = vld [vmem:[%s1 + $0x4] sm:$0xf]
        %v336 = vld [vmem:[%s269 + $0x10] sm:$0x1]
        %v337 = vld [vmem:[%s269 + $0x24] sm:$0x1]
        %v338 = vld [vmem:[%s269 + $0x38] sm:$0x1]
        %v339 = vld [vmem:[%s269 + $0x4c] sm:$0x1]
        %v340 = vld [vmem:[%s269 + $0x60] sm:$0x1]
        %v341 = vld [vmem:[%s269 + $0x74] sm:$0x1]
        %v342 = vld [vmem:[%s269 + $0x88] sm:$0x1]
        %v343 = vld [vmem:[%s269 + $0x9c] sm:$0x1]
        %v344 = vld [vmem:[%s269 + $0xb0] sm:$0x1]
        %v345 = vld [vmem:[%s269 + $0xc4] sm:$0x1]
        %v346 = vld [vmem:[%s269 + $0xd8] sm:$0x1]
        %v347 = vld [vmem:[%s269 + $0xec] sm:$0x1]
        %v348 = vld [vmem:[%s269 + $0x100] sm:$0x1]
        %v349 = vld [vmem:[%s269 + $0x114] sm:$0x1]
        %v350 = vld [vmem:[%s269 + $0x128] sm:$0x1]
        %v351 = vld [vmem:[%s269 + $0x13c] sm:$0x1]
        %vm352 = vsmask.f32 3328
        %vm353 = vsmask.f32 7440
        %vm354 = vmor %vm352, %vm353
        %v356 = vshrl.u32 %v270, 16
        %v358 = vrot.slane %v356, 4
        %v359 = vshll.u32 %v270, 16
        %v361 = vrot.slane %v359, 5
        %v362 = vor.u32 %v358, %v361
        %v363 = vrot.slane %v362, 4
        %v365 = vshll.u32 %v271, 16
        %v367 = vrot.slane %v365, 5
        %v368 = vsel %vm354, %v363, %v367
        %v369 = vshrl.u32 %v271, 16
        %v371 = vrot.slane %v369, 4
        %v372 = vor.u32 %v371, %v367
        %v373 = vrot.slane %v372, 4
        %v375 = vshll.u32 %v272, 16
        %v377 = vrot.slane %v375, 5
        %v378 = vsel %vm354, %v373, %v377
        %v379 = vshrl.u32 %v272, 16
        %v381 = vrot.slane %v379, 4
        %v382 = vor.u32 %v381, %v377
        %v383 = vrot.slane %v382, 4
        %v385 = vshll.u32 %v273, 16
        %v387 = vrot.slane %v385, 5
        %v388 = vsel %vm354, %v383, %v387
        %v389 = vshrl.u32 %v273, 16
        %v391 = vrot.slane %v389, 4
        %v392 = vor.u32 %v391, %v387
        %v393 = vrot.slane %v392, 4
        %v395 = vshll.u32 %v336, 16
        %v397 = vrot.slane %v395, 5
        %v398 = vsel %vm354, %v393, %v397
        %v400 = vshrl.u32 %v274, 16
        %v402 = vrot.slane %v400, 4
        %v403 = vshll.u32 %v274, 16
        %v405 = vrot.slane %v403, 5
        %v406 = vor.u32 %v402, %v405
        %v407 = vrot.slane %v406, 4
        %v409 = vshll.u32 %v275, 16
        %v411 = vrot.slane %v409, 5
        %v412 = vsel %vm354, %v407, %v411
        %v413 = vshrl.u32 %v275, 16
        %v415 = vrot.slane %v413, 4
        %v416 = vor.u32 %v415, %v411
        %v417 = vrot.slane %v416, 4
        %v419 = vshll.u32 %v276, 16
        %v421 = vrot.slane %v419, 5
        %v422 = vsel %vm354, %v417, %v421
        %v423 = vshrl.u32 %v276, 16
        %v425 = vrot.slane %v423, 4
        %v426 = vor.u32 %v425, %v421
        %v427 = vrot.slane %v426, 4
        %v429 = vshll.u32 %v277, 16
        %v431 = vrot.slane %v429, 5
        %v432 = vsel %vm354, %v427, %v431
        %v433 = vshrl.u32 %v277, 16
        %v435 = vrot.slane %v433, 4
        %v436 = vor.u32 %v435, %v431
        %v437 = vrot.slane %v436, 4
        %v439 = vshll.u32 %v337, 16
        %v441 = vrot.slane %v439, 5
        %v442 = vsel %vm354, %v437, %v441
        %v444 = vshrl.u32 %v278, 16
        %v446 = vrot.slane %v444, 4
        %v447 = vshll.u32 %v278, 16
        %v449 = vrot.slane %v447, 5
        %v450 = vor.u32 %v446, %v449
        %v451 = vrot.slane %v450, 4
        %v453 = vshll.u32 %v279, 16
        %v455 = vrot.slane %v453, 5
        %v456 = vsel %vm354, %v451, %v455
        %v457 = vshrl.u32 %v279, 16
        %v459 = vrot.slane %v457, 4
        %v460 = vor.u32 %v459, %v455
        %v461 = vrot.slane %v460, 4
        %v463 = vshll.u32 %v280, 16
        %v465 = vrot.slane %v463, 5
        %v466 = vsel %vm354, %v461, %v465
        %v467 = vshrl.u32 %v280, 16
        %v469 = vrot.slane %v467, 4
        %v470 = vor.u32 %v469, %v465
        %v471 = vrot.slane %v470, 4
        %v473 = vshll.u32 %v281, 16
        %v475 = vrot.slane %v473, 5
        %v476 = vsel %vm354, %v471, %v475
        %v477 = vshrl.u32 %v281, 16
        %v479 = vrot.slane %v477, 4
        %v480 = vor.u32 %v479, %v475
        %v481 = vrot.slane %v480, 4
        %v483 = vshll.u32 %v338, 16
        %v485 = vrot.slane %v483, 5
        %v486 = vsel %vm354, %v481, %v485
        %v488 = vshrl.u32 %v282, 16
        %v490 = vrot.slane %v488, 4
        %v491 = vshll.u32 %v282, 16
        %v493 = vrot.slane %v491, 5
        %v494 = vor.u32 %v490, %v493
        %v495 = vrot.slane %v494, 4
        %v497 = vshll.u32 %v283, 16
        %v499 = vrot.slane %v497, 5
        %v500 = vsel %vm354, %v495, %v499
        %v501 = vshrl.u32 %v283, 16
        %v503 = vrot.slane %v501, 4
        %v504 = vor.u32 %v503, %v499
        %v505 = vrot.slane %v504, 4
        %v507 = vshll.u32 %v284, 16
        %v509 = vrot.slane %v507, 5
        %v510 = vsel %vm354, %v505, %v509
        %v511 = vshrl.u32 %v284, 16
        %v513 = vrot.slane %v511, 4
        %v514 = vor.u32 %v513, %v509
        %v515 = vrot.slane %v514, 4
        %v517 = vshll.u32 %v285, 16
        %v519 = vrot.slane %v517, 5
        %v520 = vsel %vm354, %v515, %v519
        %v521 = vshrl.u32 %v285, 16
        %v523 = vrot.slane %v521, 4
        %v524 = vor.u32 %v523, %v519
        %v525 = vrot.slane %v524, 4
        %v527 = vshll.u32 %v339, 16
        %v529 = vrot.slane %v527, 5
        %v530 = vsel %vm354, %v525, %v529
        %v532 = vshrl.u32 %v286, 16
        %v534 = vrot.slane %v532, 4
        %v535 = vshll.u32 %v286, 16
        %v537 = vrot.slane %v535, 5
        %v538 = vor.u32 %v534, %v537
        %v539 = vrot.slane %v538, 4
        %v541 = vshll.u32 %v287, 16
        %v543 = vrot.slane %v541, 5
        %v544 = vsel %vm354, %v539, %v543
        %v545 = vshrl.u32 %v287, 16
        %v547 = vrot.slane %v545, 4
        %v548 = vor.u32 %v547, %v543
        %v549 = vrot.slane %v548, 4
        %v551 = vshll.u32 %v288, 16
        %v553 = vrot.slane %v551, 5
        %v554 = vsel %vm354, %v549, %v553
        %v555 = vshrl.u32 %v288, 16
        %v557 = vrot.slane %v555, 4
        %v558 = vor.u32 %v557, %v553
        %v559 = vrot.slane %v558, 4
        %v561 = vshll.u32 %v289, 16
        %v563 = vrot.slane %v561, 5
        %v564 = vsel %vm354, %v559, %v563
        %v565 = vshrl.u32 %v289, 16
        %v567 = vrot.slane %v565, 4
        %v568 = vor.u32 %v567, %v563
        %v569 = vrot.slane %v568, 4
        %v571 = vshll.u32 %v340, 16
        %v573 = vrot.slane %v571, 5
        %v574 = vsel %vm354, %v569, %v573
        %v576 = vshrl.u32 %v290, 16
        %v578 = vrot.slane %v576, 4
        %v579 = vshll.u32 %v290, 16
        %v581 = vrot.slane %v579, 5
        %v582 = vor.u32 %v578, %v581
        %v583 = vrot.slane %v582, 4
        %v585 = vshll.u32 %v291, 16
        %v587 = vrot.slane %v585, 5
        %v588 = vsel %vm354, %v583, %v587
        %v589 = vshrl.u32 %v291, 16
        %v591 = vrot.slane %v589, 4
        %v592 = vor.u32 %v591, %v587
        %v593 = vrot.slane %v592, 4
        %v595 = vshll.u32 %v292, 16
        %v597 = vrot.slane %v595, 5
        %v598 = vsel %vm354, %v593, %v597
        %v599 = vshrl.u32 %v292, 16
        %v601 = vrot.slane %v599, 4
        %v602 = vor.u32 %v601, %v597
        %v603 = vrot.slane %v602, 4
        %v605 = vshll.u32 %v293, 16
        %v607 = vrot.slane %v605, 5
        %v608 = vsel %vm354, %v603, %v607
        %v609 = vshrl.u32 %v293, 16
        %v611 = vrot.slane %v609, 4
        %v612 = vor.u32 %v611, %v607
        %v613 = vrot.slane %v612, 4
        %v615 = vshll.u32 %v341, 16
        %v617 = vrot.slane %v615, 5
        %v618 = vsel %vm354, %v613, %v617
        %v620 = vshrl.u32 %v294, 16
        %v622 = vrot.slane %v620, 4
        %v623 = vshll.u32 %v294, 16
        %v625 = vrot.slane %v623, 5
        %v626 = vor.u32 %v622, %v625
        %v627 = vrot.slane %v626, 4
        %v629 = vshll.u32 %v295, 16
        %v631 = vrot.slane %v629, 5
        %v632 = vsel %vm354, %v627, %v631
        %v633 = vshrl.u32 %v295, 16
        %v635 = vrot.slane %v633, 4
        %v636 = vor.u32 %v635, %v631
        %v637 = vrot.slane %v636, 4
        %v639 = vshll.u32 %v296, 16
        %v641 = vrot.slane %v639, 5
        %v642 = vsel %vm354, %v637, %v641
        %v643 = vshrl.u32 %v296, 16
        %v645 = vrot.slane %v643, 4
        %v646 = vor.u32 %v645, %v641
        %v647 = vrot.slane %v646, 4
        %v649 = vshll.u32 %v297, 16
        %v651 = vrot.slane %v649, 5
        %v652 = vsel %vm354, %v647, %v651
        %v653 = vshrl.u32 %v297, 16
        %v655 = vrot.slane %v653, 4
        %v656 = vor.u32 %v655, %v651
        %v657 = vrot.slane %v656, 4
        %v659 = vshll.u32 %v342, 16
        %v661 = vrot.slane %v659, 5
        %v662 = vsel %vm354, %v657, %v661
        %v664 = vshrl.u32 %v298, 16
        %v666 = vrot.slane %v664, 4
        %v667 = vshll.u32 %v298, 16
        %v669 = vrot.slane %v667, 5
        %v670 = vor.u32 %v666, %v669
        %v671 = vrot.slane %v670, 4
        %v673 = vshll.u32 %v299, 16
        %v675 = vrot.slane %v673, 5
        %v676 = vsel %vm354, %v671, %v675
        %v677 = vshrl.u32 %v299, 16
        %v679 = vrot.slane %v677, 4
        %v680 = vor.u32 %v679, %v675
        %v681 = vrot.slane %v680, 4
        %v683 = vshll.u32 %v300, 16
        %v685 = vrot.slane %v683, 5
        %v686 = vsel %vm354, %v681, %v685
        %v687 = vshrl.u32 %v300, 16
        %v689 = vrot.slane %v687, 4
        %v690 = vor.u32 %v689, %v685
        %v691 = vrot.slane %v690, 4
        %v693 = vshll.u32 %v301, 16
        %v695 = vrot.slane %v693, 5
        %v696 = vsel %vm354, %v691, %v695
        %v697 = vshrl.u32 %v301, 16
        %v699 = vrot.slane %v697, 4
        %v700 = vor.u32 %v699, %v695
        %v701 = vrot.slane %v700, 4
        %v703 = vshll.u32 %v343, 16
        %v705 = vrot.slane %v703, 5
        %v706 = vsel %vm354, %v701, %v705
        %v708 = vshrl.u32 %v302, 16
        %v710 = vrot.slane %v708, 4
        %v711 = vshll.u32 %v302, 16
        %v713 = vrot.slane %v711, 5
        %v714 = vor.u32 %v710, %v713
        %v715 = vrot.slane %v714, 4
        %v717 = vshll.u32 %v303, 16
        %v719 = vrot.slane %v717, 5
        %v720 = vsel %vm354, %v715, %v719
        %v721 = vshrl.u32 %v303, 16
        %v723 = vrot.slane %v721, 4
        %v724 = vor.u32 %v723, %v719
        %v725 = vrot.slane %v724, 4
        %v727 = vshll.u32 %v304, 16
        %v729 = vrot.slane %v727, 5
        %v730 = vsel %vm354, %v725, %v729
        %v731 = vshrl.u32 %v304, 16
        %v733 = vrot.slane %v731, 4
        %v734 = vor.u32 %v733, %v729
        %v735 = vrot.slane %v734, 4
        %v737 = vshll.u32 %v305, 16
        %v739 = vrot.slane %v737, 5
        %v740 = vsel %vm354, %v735, %v739
        %v741 = vshrl.u32 %v305, 16
        %v743 = vrot.slane %v741, 4
        %v744 = vor.u32 %v743, %v739
        %v745 = vrot.slane %v744, 4
        %v747 = vshll.u32 %v344, 16
        %v749 = vrot.slane %v747, 5
        %v750 = vsel %vm354, %v745, %v749
        %v752 = vshrl.u32 %v306, 16
        %v754 = vrot.slane %v752, 4
        %v755 = vshll.u32 %v306, 16
        %v757 = vrot.slane %v755, 5
        %v758 = vor.u32 %v754, %v757
        %v759 = vrot.slane %v758, 4
        %v761 = vshll.u32 %v307, 16
        %v763 = vrot.slane %v761, 5
        %v764 = vsel %vm354, %v759, %v763
        %v765 = vshrl.u32 %v307, 16
        %v767 = vrot.slane %v765, 4
        %v768 = vor.u32 %v767, %v763
        %v769 = vrot.slane %v768, 4
        %v771 = vshll.u32 %v308, 16
        %v773 = vrot.slane %v771, 5
        %v774 = vsel %vm354, %v769, %v773
        %v775 = vshrl.u32 %v308, 16
        %v777 = vrot.slane %v775, 4
        %v778 = vor.u32 %v777, %v773
        %v779 = vrot.slane %v778, 4
        %v781 = vshll.u32 %v309, 16
        %v783 = vrot.slane %v781, 5
        %v784 = vsel %vm354, %v779, %v783
        %v785 = vshrl.u32 %v309, 16
        %v787 = vrot.slane %v785, 4
        %v788 = vor.u32 %v787, %v783
        %v789 = vrot.slane %v788, 4
        %v791 = vshll.u32 %v345, 16
        %v793 = vrot.slane %v791, 5
        %v794 = vsel %vm354, %v789, %v793
        %v796 = vshrl.u32 %v310, 16
        %v798 = vrot.slane %v796, 4
        %v799 = vshll.u32 %v310, 16
        %v801 = vrot.slane %v799, 5
        %v802 = vor.u32 %v798, %v801
        %v803 = vrot.slane %v802, 4
        %v805 = vshll.u32 %v311, 16
        %v807 = vrot.slane %v805, 5
        %v808 = vsel %vm354, %v803, %v807
        %v809 = vshrl.u32 %v311, 16
        %v811 = vrot.slane %v809, 4
        %v812 = vor.u32 %v811, %v807
        %v813 = vrot.slane %v812, 4
        %v815 = vshll.u32 %v312, 16
        %v817 = vrot.slane %v815, 5
        %v818 = vsel %vm354, %v813, %v817
        %v819 = vshrl.u32 %v312, 16
        %v821 = vrot.slane %v819, 4
        %v822 = vor.u32 %v821, %v817
        %v823 = vrot.slane %v822, 4
        %v825 = vshll.u32 %v313, 16
        %v827 = vrot.slane %v825, 5
        %v828 = vsel %vm354, %v823, %v827
        %v829 = vshrl.u32 %v313, 16
        %v831 = vrot.slane %v829, 4
        %v832 = vor.u32 %v831, %v827
        %v833 = vrot.slane %v832, 4
        %v835 = vshll.u32 %v346, 16
        %v837 = vrot.slane %v835, 5
        %v838 = vsel %vm354, %v833, %v837
        %v840 = vshrl.u32 %v314, 16
        %v842 = vrot.slane %v840, 4
        %v843 = vshll.u32 %v314, 16
        %v845 = vrot.slane %v843, 5
        %v846 = vor.u32 %v842, %v845
        %v847 = vrot.slane %v846, 4
        %v849 = vshll.u32 %v315, 16
        %v851 = vrot.slane %v849, 5
        %v852 = vsel %vm354, %v847, %v851
        %v853 = vshrl.u32 %v315, 16
        %v855 = vrot.slane %v853, 4
        %v856 = vor.u32 %v855, %v851
        %v857 = vrot.slane %v856, 4
        %v859 = vshll.u32 %v316, 16
        %v861 = vrot.slane %v859, 5
        %v862 = vsel %vm354, %v857, %v861
        %v863 = vshrl.u32 %v316, 16
        %v865 = vrot.slane %v863, 4
        %v866 = vor.u32 %v865, %v861
        %v867 = vrot.slane %v866, 4
        %v869 = vshll.u32 %v317, 16
        %v871 = vrot.slane %v869, 5
        %v872 = vsel %vm354, %v867, %v871
        %v873 = vshrl.u32 %v317, 16
        %v875 = vrot.slane %v873, 4
        %v876 = vor.u32 %v875, %v871
        %v877 = vrot.slane %v876, 4
        %v879 = vshll.u32 %v347, 16
        %v881 = vrot.slane %v879, 5
        %v882 = vsel %vm354, %v877, %v881
        %v884 = vshrl.u32 %v318, 16
        %v886 = vrot.slane %v884, 4
        %v887 = vshll.u32 %v318, 16
        %v889 = vrot.slane %v887, 5
        %v890 = vor.u32 %v886, %v889
        %v891 = vrot.slane %v890, 4
        %v893 = vshll.u32 %v319, 16
        %v895 = vrot.slane %v893, 5
        %v896 = vsel %vm354, %v891, %v895
        %v897 = vshrl.u32 %v319, 16
        %v899 = vrot.slane %v897, 4
        %v900 = vor.u32 %v899, %v895
        %v901 = vrot.slane %v900, 4
        %v903 = vshll.u32 %v320, 16
        %v905 = vrot.slane %v903, 5
        %v906 = vsel %vm354, %v901, %v905
        %v907 = vshrl.u32 %v320, 16
        %v909 = vrot.slane %v907, 4
        %v910 = vor.u32 %v909, %v905
        %v911 = vrot.slane %v910, 4
        %v913 = vshll.u32 %v321, 16
        %v915 = vrot.slane %v913, 5
        %v916 = vsel %vm354, %v911, %v915
        %v917 = vshrl.u32 %v321, 16
        %v919 = vrot.slane %v917, 4
        %v920 = vor.u32 %v919, %v915
        %v921 = vrot.slane %v920, 4
        %v923 = vshll.u32 %v348, 16
        %v925 = vrot.slane %v923, 5
        %v926 = vsel %vm354, %v921, %v925
        %v928 = vshrl.u32 %v322, 16
        %v930 = vrot.slane %v928, 4
        %v931 = vshll.u32 %v322, 16
        %v933 = vrot.slane %v931, 5
        %v934 = vor.u32 %v930, %v933
        %v935 = vrot.slane %v934, 4
        %v937 = vshll.u32 %v323, 16
        %v939 = vrot.slane %v937, 5
        %v940 = vsel %vm354, %v935, %v939
        %v941 = vshrl.u32 %v323, 16
        %v943 = vrot.slane %v941, 4
        %v944 = vor.u32 %v943, %v939
        %v945 = vrot.slane %v944, 4
        %v947 = vshll.u32 %v324, 16
        %v949 = vrot.slane %v947, 5
        %v950 = vsel %vm354, %v945, %v949
        %v951 = vshrl.u32 %v324, 16
        %v953 = vrot.slane %v951, 4
        %v954 = vor.u32 %v953, %v949
        %v955 = vrot.slane %v954, 4
        %v957 = vshll.u32 %v325, 16
        %v959 = vrot.slane %v957, 5
        %v960 = vsel %vm354, %v955, %v959
        %v961 = vshrl.u32 %v325, 16
        %v963 = vrot.slane %v961, 4
        %v964 = vor.u32 %v963, %v959
        %v965 = vrot.slane %v964, 4
        %v967 = vshll.u32 %v349, 16
        %v969 = vrot.slane %v967, 5
        %v970 = vsel %vm354, %v965, %v969
        %v972 = vshrl.u32 %v326, 16
        %v974 = vrot.slane %v972, 4
        %v975 = vshll.u32 %v326, 16
        %v977 = vrot.slane %v975, 5
        %v978 = vor.u32 %v974, %v977
        %v979 = vrot.slane %v978, 4
        %v981 = vshll.u32 %v327, 16
        %v983 = vrot.slane %v981, 5
        %v984 = vsel %vm354, %v979, %v983
        %v985 = vshrl.u32 %v327, 16
        %v987 = vrot.slane %v985, 4
        %v988 = vor.u32 %v987, %v983
        %v989 = vrot.slane %v988, 4
        %v991 = vshll.u32 %v328, 16
        %v993 = vrot.slane %v991, 5
        %v994 = vsel %vm354, %v989, %v993
        %v995 = vshrl.u32 %v328, 16
        %v997 = vrot.slane %v995, 4
        %v998 = vor.u32 %v997, %v993
        %v999 = vrot.slane %v998, 4
        %v1001 = vshll.u32 %v329, 16
        %v1003 = vrot.slane %v1001, 5
        %v1004 = vsel %vm354, %v999, %v1003
        %v1005 = vshrl.u32 %v329, 16
        %v1007 = vrot.slane %v1005, 4
        %v1008 = vor.u32 %v1007, %v1003
        %v1009 = vrot.slane %v1008, 4
        %v1011 = vshll.u32 %v350, 16
        %v1013 = vrot.slane %v1011, 5
        %v1014 = vsel %vm354, %v1009, %v1013
        %v1016 = vshrl.u32 %v330, 16
        %v1018 = vrot.slane %v1016, 4
        %v1019 = vshll.u32 %v330, 16
        %v1021 = vrot.slane %v1019, 5
        %v1022 = vor.u32 %v1018, %v1021
        %v1023 = vrot.slane %v1022, 4
        %v1025 = vshll.u32 %v331, 16
        %v1027 = vrot.slane %v1025, 5
        %v1028 = vsel %vm354, %v1023, %v1027
        %v1029 = vshrl.u32 %v331, 16
        %v1031 = vrot.slane %v1029, 4
        %v1032 = vor.u32 %v1031, %v1027
        %v1033 = vrot.slane %v1032, 4
        %v1035 = vshll.u32 %v332, 16
        %v1037 = vrot.slane %v1035, 5
        %v1038 = vsel %vm354, %v1033, %v1037
        %v1039 = vshrl.u32 %v332, 16
        %v1041 = vrot.slane %v1039, 4
        %v1042 = vor.u32 %v1041, %v1037
        %v1043 = vrot.slane %v1042, 4
        %v1045 = vshll.u32 %v333, 16
        %v1047 = vrot.slane %v1045, 5
        %v1048 = vsel %vm354, %v1043, %v1047
        %v1049 = vshrl.u32 %v333, 16
        %v1051 = vrot.slane %v1049, 4
        %v1052 = vor.u32 %v1051, %v1047
        %v1053 = vrot.slane %v1052, 4
        %v1055 = vshll.u32 %v351, 16
        %v1057 = vrot.slane %v1055, 5
        %v1058 = vsel %vm354, %v1053, %v1057
        %s1059 = scalar_lea.vmem %s1, 8
        %v1060 = vld [vmem:[%s1059] sm:$0xf]
        %v1061 = vld [vmem:[%s1059 + $0x4] sm:$0xf]
        %v1062 = vunpack.c.l.b16 %v368
        %v1063 = vunpack.c.l.b16 %v378
        %v1064 = vunpack.c.l.b16 %v388
        %v1065 = vunpack.c.l.b16 %v398
        %v1066 = vunpack.c.l.b16 %v412
        %v1067 = vunpack.c.l.b16 %v422
        %v1068 = vunpack.c.l.b16 %v432
        %v1069 = vunpack.c.l.b16 %v442
        %v1070 = vunpack.c.l.b16 %v456
        %v1071 = vunpack.c.l.b16 %v466
        %v1072 = vunpack.c.l.b16 %v476
        %v1073 = vunpack.c.l.b16 %v486
        %v1074 = vunpack.c.l.b16 %v500
        %v1075 = vunpack.c.l.b16 %v510
        %v1076 = vunpack.c.l.b16 %v520
        %v1077 = vunpack.c.l.b16 %v530
        %v1078 = vunpack.c.l.b16 %v544
        %v1079 = vunpack.c.l.b16 %v554
        %v1080 = vunpack.c.l.b16 %v564
        %v1081 = vunpack.c.l.b16 %v574
        %v1082 = vunpack.c.l.b16 %v588
        %v1083 = vunpack.c.l.b16 %v598
        %v1084 = vunpack.c.l.b16 %v608
        %v1085 = vunpack.c.l.b16 %v618
        %v1086 = vunpack.c.l.b16 %v632
        %v1087 = vunpack.c.l.b16 %v642
        %v1088 = vunpack.c.l.b16 %v652
        %v1089 = vunpack.c.l.b16 %v662
        %v1090 = vunpack.c.l.b16 %v676
        %v1091 = vunpack.c.l.b16 %v686
        %v1092 = vunpack.c.l.b16 %v696
        %v1093 = vunpack.c.l.b16 %v706
        %v1094 = vunpack.c.l.b16 %v720
        %v1095 = vunpack.c.l.b16 %v730
        %v1096 = vunpack.c.l.b16 %v740
        %v1097 = vunpack.c.l.b16 %v750
        %v1098 = vunpack.c.l.b16 %v764
        %v1099 = vunpack.c.l.b16 %v774
        %v1100 = vunpack.c.l.b16 %v784
        %v1101 = vunpack.c.l.b16 %v794
        %v1102 = vunpack.c.l.b16 %v808
        %v1103 = vunpack.c.l.b16 %v818
        %v1104 = vunpack.c.l.b16 %v828
        %v1105 = vunpack.c.l.b16 %v838
        %v1106 = vunpack.c.l.b16 %v852
        %v1107 = vunpack.c.l.b16 %v862
        %v1108 = vunpack.c.l.b16 %v872
        %v1109 = vunpack.c.l.b16 %v882
        %v1110 = vunpack.c.l.b16 %v896
        %v1111 = vunpack.c.l.b16 %v906
        %v1112 = vunpack.c.l.b16 %v916
        %v1113 = vunpack.c.l.b16 %v926
        %v1114 = vunpack.c.l.b16 %v940
        %v1115 = vunpack.c.l.b16 %v950
        %v1116 = vunpack.c.l.b16 %v960
        %v1117 = vunpack.c.l.b16 %v970
        %v1118 = vunpack.c.l.b16 %v984
        %v1119 = vunpack.c.l.b16 %v994
        %v1120 = vunpack.c.l.b16 %v1004
        %v1121 = vunpack.c.l.b16 %v1014
        %v1122 = vunpack.c.l.b16 %v1028
        %v1123 = vunpack.c.l.b16 %v1038
        %v1124 = vunpack.c.l.b16 %v1048
        %v1125 = vunpack.c.l.b16 %v1058
        %v1126 = vpack.c.b16 %v1063, %v1062
        %v1127 = vpack.c.b16 %v1065, %v1064
        %v1128 = vpack.c.b16 %v1067, %v1066
        %v1129 = vpack.c.b16 %v1069, %v1068
        %v1130 = vpack.c.b16 %v1071, %v1070
        %v1131 = vpack.c.b16 %v1073, %v1072
        %v1132 = vpack.c.b16 %v1075, %v1074
        %v1133 = vpack.c.b16 %v1077, %v1076
        %v1134 = vpack.c.b16 %v1079, %v1078
        %v1135 = vpack.c.b16 %v1081, %v1080
        %v1136 = vpack.c.b16 %v1083, %v1082
        %v1137 = vpack.c.b16 %v1085, %v1084
        %v1138 = vpack.c.b16 %v1087, %v1086
        %v1139 = vpack.c.b16 %v1089, %v1088
        %v1140 = vpack.c.b16 %v1091, %v1090
        %v1141 = vpack.c.b16 %v1093, %v1092
        %v1142 = vpack.c.b16 %v1095, %v1094
        %v1143 = vpack.c.b16 %v1097, %v1096
        %v1144 = vpack.c.b16 %v1099, %v1098
        %v1145 = vpack.c.b16 %v1101, %v1100
        %v1146 = vpack.c.b16 %v1103, %v1102
        %v1147 = vpack.c.b16 %v1105, %v1104
        %v1148 = vpack.c.b16 %v1107, %v1106
        %v1149 = vpack.c.b16 %v1109, %v1108
        %v1150 = vpack.c.b16 %v1111, %v1110
        %v1151 = vpack.c.b16 %v1113, %v1112
        %v1152 = vpack.c.b16 %v1115, %v1114
        %v1153 = vpack.c.b16 %v1117, %v1116
        %v1154 = vpack.c.b16 %v1119, %v1118
        %v1155 = vpack.c.b16 %v1121, %v1120
        %v1156 = vpack.c.b16 %v1123, %v1122
        %v1157 = vpack.c.b16 %v1125, %v1124
        %v1160 = vunpack.c.l.b16 %v1060
        %v1161 = vunpack.c.l.b16 %v1061
        %v1162 = vpack.c.b16 %v1161, %v1160
        %vm1164 = vcmask 130048
        %v1166 = vsel %vm1164, %v1126, 0
        %v1169 = vsel %vm1164, %v1127, 0
        %v1172 = vsel %vm1164, %v1128, 0
        %v1175 = vsel %vm1164, %v1129, 0
        %v1178 = vsel %vm1164, %v1130, 0
        %v1181 = vsel %vm1164, %v1131, 0
        %v1184 = vsel %vm1164, %v1132, 0
        %v1187 = vsel %vm1164, %v1133, 0
        %v1190 = vsel %vm1164, %v1134, 0
        %v1193 = vsel %vm1164, %v1135, 0
        %v1196 = vsel %vm1164, %v1136, 0
        %v1199 = vsel %vm1164, %v1137, 0
        %v1202 = vsel %vm1164, %v1138, 0
        %v1205 = vsel %vm1164, %v1139, 0
        %v1208 = vsel %vm1164, %v1140, 0
        %v1211 = vsel %vm1164, %v1141, 0
        %v1214 = vsel %vm1164, %v1142, 0
        %v1217 = vsel %vm1164, %v1143, 0
        %v1220 = vsel %vm1164, %v1144, 0
        %v1223 = vsel %vm1164, %v1145, 0
        %v1226 = vsel %vm1164, %v1146, 0
        %v1229 = vsel %vm1164, %v1147, 0
        %v1232 = vsel %vm1164, %v1148, 0
        %v1235 = vsel %vm1164, %v1149, 0
        %v1238 = vsel %vm1164, %v1150, 0
        %v1241 = vsel %vm1164, %v1151, 0
        %v1244 = vsel %vm1164, %v1152, 0
        %v1247 = vsel %vm1164, %v1153, 0
        %v1250 = vsel %vm1164, %v1154, 0
        %v1253 = vsel %vm1164, %v1155, 0
        %v1256 = vsel %vm1164, %v1156, 0
        %v1259 = vsel %vm1164, %v1157, 0
        %1261 = vmatpush.bf16.msra.mxu0 0
        %1262 = vmatpush.bf16.msra.mxu0 0
        %1263 = vmatpush.bf16.msra.mxu0 0
        %1264 = vmatpush.bf16.msra.mxu0 0
        %1265 = vmatpush.bf16.msra.mxu0 0
        %1266 = vmatpush.bf16.msra.mxu0 0
        %1267 = vmatpush.bf16.msra.mxu0 0
        %1268 = vmatpush.bf16.msra.mxu0 %v1162
        %1269 = vmatmul.bf16.gmra.mxu0 %v1166
        %v1270 = vpop.f32.mrf.mxu0
        %v1271 = vadd.f32 0.0, %v1270
        %v1272 = vpop.f32.mrf.mxu0
        %v1273 = vadd.f32 0.0, %v1272
        %1274 = vmatmul.bf16.gmra.mxu0 %v1169
        %v1275 = vpop.f32.mrf.mxu0
        %v1276 = vadd.f32 0.0, %v1275
        %v1277 = vpop.f32.mrf.mxu0
        %v1278 = vadd.f32 0.0, %v1277
        %1279 = vmatmul.bf16.gmra.mxu0 %v1172
        %v1280 = vpop.f32.mrf.mxu0
        %v1281 = vadd.f32 0.0, %v1280
        %v1282 = vpop.f32.mrf.mxu0
        %v1283 = vadd.f32 0.0, %v1282
        %1284 = vmatmul.bf16.gmra.mxu0 %v1175
        %v1285 = vpop.f32.mrf.mxu0
        %v1286 = vadd.f32 0.0, %v1285
        %v1287 = vpop.f32.mrf.mxu0
        %v1288 = vadd.f32 0.0, %v1287
        %1289 = vmatmul.bf16.gmra.mxu0 %v1178
        %v1290 = vpop.f32.mrf.mxu0
        %v1291 = vadd.f32 0.0, %v1290
        %v1292 = vpop.f32.mrf.mxu0
        %v1293 = vadd.f32 0.0, %v1292
        %1294 = vmatmul.bf16.gmra.mxu0 %v1181
        %v1295 = vpop.f32.mrf.mxu0
        %v1296 = vadd.f32 0.0, %v1295
        %v1297 = vpop.f32.mrf.mxu0
        %v1298 = vadd.f32 0.0, %v1297
        %1299 = vmatmul.bf16.gmra.mxu0 %v1184
        %v1300 = vpop.f32.mrf.mxu0
        %v1301 = vadd.f32 0.0, %v1300
        %v1302 = vpop.f32.mrf.mxu0
        %v1303 = vadd.f32 0.0, %v1302
        %1304 = vmatmul.bf16.gmra.mxu0 %v1187
        %v1305 = vpop.f32.mrf.mxu0
        %v1306 = vadd.f32 0.0, %v1305
        %v1307 = vpop.f32.mrf.mxu0
        %v1308 = vadd.f32 0.0, %v1307
        %1309 = vmatmul.bf16.gmra.mxu0 %v1190
        %v1310 = vpop.f32.mrf.mxu0
        %v1311 = vadd.f32 0.0, %v1310
        %v1312 = vpop.f32.mrf.mxu0
        %v1313 = vadd.f32 0.0, %v1312
        %1314 = vmatmul.bf16.gmra.mxu0 %v1193
        %v1315 = vpop.f32.mrf.mxu0
        %v1316 = vadd.f32 0.0, %v1315
        %v1317 = vpop.f32.mrf.mxu0
        %v1318 = vadd.f32 0.0, %v1317
        %1319 = vmatmul.bf16.gmra.mxu0 %v1196
        %v1320 = vpop.f32.mrf.mxu0
        %v1321 = vadd.f32 0.0, %v1320
        %v1322 = vpop.f32.mrf.mxu0
        %v1323 = vadd.f32 0.0, %v1322
        %1324 = vmatmul.bf16.gmra.mxu0 %v1199
        %v1325 = vpop.f32.mrf.mxu0
        %v1326 = vadd.f32 0.0, %v1325
        %v1327 = vpop.f32.mrf.mxu0
        %v1328 = vadd.f32 0.0, %v1327
        %1329 = vmatmul.bf16.gmra.mxu0 %v1202
        %v1330 = vpop.f32.mrf.mxu0
        %v1331 = vadd.f32 0.0, %v1330
        %v1332 = vpop.f32.mrf.mxu0
        %v1333 = vadd.f32 0.0, %v1332
        %1334 = vmatmul.bf16.gmra.mxu0 %v1205
        %v1335 = vpop.f32.mrf.mxu0
        %v1336 = vadd.f32 0.0, %v1335
        %v1337 = vpop.f32.mrf.mxu0
        %v1338 = vadd.f32 0.0, %v1337
        %1339 = vmatmul.bf16.gmra.mxu0 %v1208
        %v1340 = vpop.f32.mrf.mxu0
        %v1341 = vadd.f32 0.0, %v1340
        %v1342 = vpop.f32.mrf.mxu0
        %v1343 = vadd.f32 0.0, %v1342
        %1344 = vmatmul.bf16.gmra.mxu0 %v1211
        %v1345 = vpop.f32.mrf.mxu0
        %v1346 = vadd.f32 0.0, %v1345
        %v1347 = vpop.f32.mrf.mxu0
        %v1348 = vadd.f32 0.0, %v1347
        %1349 = vmatmul.bf16.gmra.mxu0 %v1214
        %v1350 = vpop.f32.mrf.mxu0
        %v1351 = vadd.f32 0.0, %v1350
        %v1352 = vpop.f32.mrf.mxu0
        %v1353 = vadd.f32 0.0, %v1352
        %1354 = vmatmul.bf16.gmra.mxu0 %v1217
        %v1355 = vpop.f32.mrf.mxu0
        %v1356 = vadd.f32 0.0, %v1355
        %v1357 = vpop.f32.mrf.mxu0
        %v1358 = vadd.f32 0.0, %v1357
        %1359 = vmatmul.bf16.gmra.mxu0 %v1220
        %v1360 = vpop.f32.mrf.mxu0
        %v1361 = vadd.f32 0.0, %v1360
        %v1362 = vpop.f32.mrf.mxu0
        %v1363 = vadd.f32 0.0, %v1362
        %1364 = vmatmul.bf16.gmra.mxu0 %v1223
        %v1365 = vpop.f32.mrf.mxu0
        %v1366 = vadd.f32 0.0, %v1365
        %v1367 = vpop.f32.mrf.mxu0
        %v1368 = vadd.f32 0.0, %v1367
        %1369 = vmatmul.bf16.gmra.mxu0 %v1226
        %v1370 = vpop.f32.mrf.mxu0
        %v1371 = vadd.f32 0.0, %v1370
        %v1372 = vpop.f32.mrf.mxu0
        %v1373 = vadd.f32 0.0, %v1372
        %1374 = vmatmul.bf16.gmra.mxu0 %v1229
        %v1375 = vpop.f32.mrf.mxu0
        %v1376 = vadd.f32 0.0, %v1375
        %v1377 = vpop.f32.mrf.mxu0
        %v1378 = vadd.f32 0.0, %v1377
        %1379 = vmatmul.bf16.gmra.mxu0 %v1232
        %v1380 = vpop.f32.mrf.mxu0
        %v1381 = vadd.f32 0.0, %v1380
        %v1382 = vpop.f32.mrf.mxu0
        %v1383 = vadd.f32 0.0, %v1382
        %1384 = vmatmul.bf16.gmra.mxu0 %v1235
        %v1385 = vpop.f32.mrf.mxu0
        %v1386 = vadd.f32 0.0, %v1385
        %v1387 = vpop.f32.mrf.mxu0
        %v1388 = vadd.f32 0.0, %v1387
        %1389 = vmatmul.bf16.gmra.mxu0 %v1238
        %v1390 = vpop.f32.mrf.mxu0
        %v1391 = vadd.f32 0.0, %v1390
        %v1392 = vpop.f32.mrf.mxu0
        %v1393 = vadd.f32 0.0, %v1392
        %1394 = vmatmul.bf16.gmra.mxu0 %v1241
        %v1395 = vpop.f32.mrf.mxu0
        %v1396 = vadd.f32 0.0, %v1395
        %v1397 = vpop.f32.mrf.mxu0
        %v1398 = vadd.f32 0.0, %v1397
        %1399 = vmatmul.bf16.gmra.mxu0 %v1244
        %v1400 = vpop.f32.mrf.mxu0
        %v1401 = vadd.f32 0.0, %v1400
        %v1402 = vpop.f32.mrf.mxu0
        %v1403 = vadd.f32 0.0, %v1402
        %1404 = vmatmul.bf16.gmra.mxu0 %v1247
        %v1405 = vpop.f32.mrf.mxu0
        %v1406 = vadd.f32 0.0, %v1405
        %v1407 = vpop.f32.mrf.mxu0
        %v1408 = vadd.f32 0.0, %v1407
        %1409 = vmatmul.bf16.gmra.mxu0 %v1250
        %v1410 = vpop.f32.mrf.mxu0
        %v1411 = vadd.f32 0.0, %v1410
        %v1412 = vpop.f32.mrf.mxu0
        %v1413 = vadd.f32 0.0, %v1412
        %1414 = vmatmul.bf16.gmra.mxu0 %v1253
        %v1415 = vpop.f32.mrf.mxu0
        %v1416 = vadd.f32 0.0, %v1415
        %v1417 = vpop.f32.mrf.mxu0
        %v1418 = vadd.f32 0.0, %v1417
        %1419 = vmatmul.bf16.gmra.mxu0 %v1256
        %v1420 = vpop.f32.mrf.mxu0
        %v1421 = vadd.f32 0.0, %v1420
        %v1422 = vpop.f32.mrf.mxu0
        %v1423 = vadd.f32 0.0, %v1422
        %1424 = vmatmul.bf16.gmra.mxu0 %v1259
        %v1425 = vpop.f32.mrf.mxu0
        %v1426 = vadd.f32 0.0, %v1425
        %v1427 = vpop.f32.mrf.mxu0
        %v1428 = vadd.f32 0.0, %v1427
        %1429 = vdwg.mxu0
        %v1494 = vunpack.c.l.b16 %v270
        %v1495 = vunpack.c.l.b16 %v271
        %v1496 = vunpack.c.l.b16 %v272
        %v1497 = vunpack.c.l.b16 %v273
        %v1498 = vunpack.c.l.b16 %v274
        %v1499 = vunpack.c.l.b16 %v275
        %v1500 = vunpack.c.l.b16 %v276
        %v1501 = vunpack.c.l.b16 %v277
        %v1502 = vunpack.c.l.b16 %v278
        %v1503 = vunpack.c.l.b16 %v279
        %v1504 = vunpack.c.l.b16 %v280
        %v1505 = vunpack.c.l.b16 %v281
        %v1506 = vunpack.c.l.b16 %v282
        %v1507 = vunpack.c.l.b16 %v283
        %v1508 = vunpack.c.l.b16 %v284
        %v1509 = vunpack.c.l.b16 %v285
        %v1510 = vunpack.c.l.b16 %v286
        %v1511 = vunpack.c.l.b16 %v287
        %v1512 = vunpack.c.l.b16 %v288
        %v1513 = vunpack.c.l.b16 %v289
        %v1514 = vunpack.c.l.b16 %v290
        %v1515 = vunpack.c.l.b16 %v291
        %v1516 = vunpack.c.l.b16 %v292
        %v1517 = vunpack.c.l.b16 %v293
        %v1518 = vunpack.c.l.b16 %v294
        %v1519 = vunpack.c.l.b16 %v295
        %v1520 = vunpack.c.l.b16 %v296
        %v1521 = vunpack.c.l.b16 %v297
        %v1522 = vunpack.c.l.b16 %v298
        %v1523 = vunpack.c.l.b16 %v299
        %v1524 = vunpack.c.l.b16 %v300
        %v1525 = vunpack.c.l.b16 %v301
        %v1526 = vunpack.c.l.b16 %v302
        %v1527 = vunpack.c.l.b16 %v303
        %v1528 = vunpack.c.l.b16 %v304
        %v1529 = vunpack.c.l.b16 %v305
        %v1530 = vunpack.c.l.b16 %v306
        %v1531 = vunpack.c.l.b16 %v307
        %v1532 = vunpack.c.l.b16 %v308
        %v1533 = vunpack.c.l.b16 %v309
        %v1534 = vunpack.c.l.b16 %v310
        %v1535 = vunpack.c.l.b16 %v311
        %v1536 = vunpack.c.l.b16 %v312
        %v1537 = vunpack.c.l.b16 %v313
        %v1538 = vunpack.c.l.b16 %v314
        %v1539 = vunpack.c.l.b16 %v315
        %v1540 = vunpack.c.l.b16 %v316
        %v1541 = vunpack.c.l.b16 %v317
        %v1542 = vunpack.c.l.b16 %v318
        %v1543 = vunpack.c.l.b16 %v319
        %v1544 = vunpack.c.l.b16 %v320
        %v1545 = vunpack.c.l.b16 %v321
        %v1546 = vunpack.c.l.b16 %v322
        %v1547 = vunpack.c.l.b16 %v323
        %v1548 = vunpack.c.l.b16 %v324
        %v1549 = vunpack.c.l.b16 %v325
        %v1550 = vunpack.c.l.b16 %v326
        %v1551 = vunpack.c.l.b16 %v327
        %v1552 = vunpack.c.l.b16 %v328
        %v1553 = vunpack.c.l.b16 %v329
        %v1554 = vunpack.c.l.b16 %v330
        %v1555 = vunpack.c.l.b16 %v331
        %v1556 = vunpack.c.l.b16 %v332
        %v1557 = vunpack.c.l.b16 %v333
        %v1558 = vpack.c.b16 %v1495, %v1494
        %v1559 = vpack.c.b16 %v1497, %v1496
        %v1560 = vpack.c.b16 %v1499, %v1498
        %v1561 = vpack.c.b16 %v1501, %v1500
        %v1562 = vpack.c.b16 %v1503, %v1502
        %v1563 = vpack.c.b16 %v1505, %v1504
        %v1564 = vpack.c.b16 %v1507, %v1506
        %v1565 = vpack.c.b16 %v1509, %v1508
        %v1566 = vpack.c.b16 %v1511, %v1510
        %v1567 = vpack.c.b16 %v1513, %v1512
        %v1568 = vpack.c.b16 %v1515, %v1514
        %v1569 = vpack.c.b16 %v1517, %v1516
        %v1570 = vpack.c.b16 %v1519, %v1518
        %v1571 = vpack.c.b16 %v1521, %v1520
        %v1572 = vpack.c.b16 %v1523, %v1522
        %v1573 = vpack.c.b16 %v1525, %v1524
        %v1574 = vpack.c.b16 %v1527, %v1526
        %v1575 = vpack.c.b16 %v1529, %v1528
        %v1576 = vpack.c.b16 %v1531, %v1530
        %v1577 = vpack.c.b16 %v1533, %v1532
        %v1578 = vpack.c.b16 %v1535, %v1534
        %v1579 = vpack.c.b16 %v1537, %v1536
        %v1580 = vpack.c.b16 %v1539, %v1538
        %v1581 = vpack.c.b16 %v1541, %v1540
        %v1582 = vpack.c.b16 %v1543, %v1542
        %v1583 = vpack.c.b16 %v1545, %v1544
        %v1584 = vpack.c.b16 %v1547, %v1546
        %v1585 = vpack.c.b16 %v1549, %v1548
        %v1586 = vpack.c.b16 %v1551, %v1550
        %v1587 = vpack.c.b16 %v1553, %v1552
        %v1588 = vpack.c.b16 %v1555, %v1554
        %v1589 = vpack.c.b16 %v1557, %v1556
        %v1592 = vunpack.c.l.b16 %v334
        %v1593 = vunpack.c.l.b16 %v335
        %v1594 = vpack.c.b16 %v1593, %v1592
        %v1597 = vsel %vm1164, %v1558, 0
        %v1600 = vsel %vm1164, %v1559, 0
        %v1603 = vsel %vm1164, %v1560, 0
        %v1606 = vsel %vm1164, %v1561, 0
        %v1609 = vsel %vm1164, %v1562, 0
        %v1612 = vsel %vm1164, %v1563, 0
        %v1615 = vsel %vm1164, %v1564, 0
        %v1618 = vsel %vm1164, %v1565, 0
        %v1621 = vsel %vm1164, %v1566, 0
        %v1624 = vsel %vm1164, %v1567, 0
        %v1627 = vsel %vm1164, %v1568, 0
        %v1630 = vsel %vm1164, %v1569, 0
        %v1633 = vsel %vm1164, %v1570, 0
        %v1636 = vsel %vm1164, %v1571, 0
        %v1639 = vsel %vm1164, %v1572, 0
        %v1642 = vsel %vm1164, %v1573, 0
        %v1645 = vsel %vm1164, %v1574, 0
        %v1648 = vsel %vm1164, %v1575, 0
        %v1651 = vsel %vm1164, %v1576, 0
        %v1654 = vsel %vm1164, %v1577, 0
        %v1657 = vsel %vm1164, %v1578, 0
        %v1660 = vsel %vm1164, %v1579, 0
        %v1663 = vsel %vm1164, %v1580, 0
        %v1666 = vsel %vm1164, %v1581, 0
        %v1669 = vsel %vm1164, %v1582, 0
        %v1672 = vsel %vm1164, %v1583, 0
        %v1675 = vsel %vm1164, %v1584, 0
        %v1678 = vsel %vm1164, %v1585, 0
        %v1681 = vsel %vm1164, %v1586, 0
        %v1684 = vsel %vm1164, %v1587, 0
        %v1687 = vsel %vm1164, %v1588, 0
        %v1690 = vsel %vm1164, %v1589, 0
        %1692 = vmatpush.bf16.msra.mxu0 0
        %1693 = vmatpush.bf16.msra.mxu0 0
        %1694 = vmatpush.bf16.msra.mxu0 0
        %1695 = vmatpush.bf16.msra.mxu0 0
        %1696 = vmatpush.bf16.msra.mxu0 0
        %1697 = vmatpush.bf16.msra.mxu0 0
        %1698 = vmatpush.bf16.msra.mxu0 0
        %1699 = vmatpush.bf16.msra.mxu0 %v1594
        %1700 = vmatmul.bf16.gmra.mxu0 %v1597
        %v1701 = vpop.f32.mrf.mxu0
        %v1702 = vadd.f32 %v1271, %v1701
        %v1703 = vpop.f32.mrf.mxu0
        %v1704 = vadd.f32 %v1273, %v1703
        %1705 = vmatmul.bf16.gmra.mxu0 %v1600
        %v1706 = vpop.f32.mrf.mxu0
        %v1707 = vadd.f32 %v1276, %v1706
        %v1708 = vpop.f32.mrf.mxu0
        %v1709 = vadd.f32 %v1278, %v1708
        %1710 = vmatmul.bf16.gmra.mxu0 %v1603
        %v1711 = vpop.f32.mrf.mxu0
        %v1712 = vadd.f32 %v1281, %v1711
        %v1713 = vpop.f32.mrf.mxu0
        %v1714 = vadd.f32 %v1283, %v1713
        %1715 = vmatmul.bf16.gmra.mxu0 %v1606
        %v1716 = vpop.f32.mrf.mxu0
        %v1717 = vadd.f32 %v1286, %v1716
        %v1718 = vpop.f32.mrf.mxu0
        %v1719 = vadd.f32 %v1288, %v1718
        %1720 = vmatmul.bf16.gmra.mxu0 %v1609
        %v1721 = vpop.f32.mrf.mxu0
        %v1722 = vadd.f32 %v1291, %v1721
        %v1723 = vpop.f32.mrf.mxu0
        %v1724 = vadd.f32 %v1293, %v1723
        %1725 = vmatmul.bf16.gmra.mxu0 %v1612
        %v1726 = vpop.f32.mrf.mxu0
        %v1727 = vadd.f32 %v1296, %v1726
        %v1728 = vpop.f32.mrf.mxu0
        %v1729 = vadd.f32 %v1298, %v1728
        %1730 = vmatmul.bf16.gmra.mxu0 %v1615
        %v1731 = vpop.f32.mrf.mxu0
        %v1732 = vadd.f32 %v1301, %v1731
        %v1733 = vpop.f32.mrf.mxu0
        %v1734 = vadd.f32 %v1303, %v1733
        %1735 = vmatmul.bf16.gmra.mxu0 %v1618
        %v1736 = vpop.f32.mrf.mxu0
        %v1737 = vadd.f32 %v1306, %v1736
        %v1738 = vpop.f32.mrf.mxu0
        %v1739 = vadd.f32 %v1308, %v1738
        %1740 = vmatmul.bf16.gmra.mxu0 %v1621
        %v1741 = vpop.f32.mrf.mxu0
        %v1742 = vadd.f32 %v1311, %v1741
        %v1743 = vpop.f32.mrf.mxu0
        %v1744 = vadd.f32 %v1313, %v1743
        %1745 = vmatmul.bf16.gmra.mxu0 %v1624
        %v1746 = vpop.f32.mrf.mxu0
        %v1747 = vadd.f32 %v1316, %v1746
        %v1748 = vpop.f32.mrf.mxu0
        %v1749 = vadd.f32 %v1318, %v1748
        %1750 = vmatmul.bf16.gmra.mxu0 %v1627
        %v1751 = vpop.f32.mrf.mxu0
        %v1752 = vadd.f32 %v1321, %v1751
        %v1753 = vpop.f32.mrf.mxu0
        %v1754 = vadd.f32 %v1323, %v1753
        %1755 = vmatmul.bf16.gmra.mxu0 %v1630
        %v1756 = vpop.f32.mrf.mxu0
        %v1757 = vadd.f32 %v1326, %v1756
        %v1758 = vpop.f32.mrf.mxu0
        %v1759 = vadd.f32 %v1328, %v1758
        %1760 = vmatmul.bf16.gmra.mxu0 %v1633
        %v1761 = vpop.f32.mrf.mxu0
        %v1762 = vadd.f32 %v1331, %v1761
        %v1763 = vpop.f32.mrf.mxu0
        %v1764 = vadd.f32 %v1333, %v1763
        %1765 = vmatmul.bf16.gmra.mxu0 %v1636
        %v1766 = vpop.f32.mrf.mxu0
        %v1767 = vadd.f32 %v1336, %v1766
        %v1768 = vpop.f32.mrf.mxu0
        %v1769 = vadd.f32 %v1338, %v1768
        %1770 = vmatmul.bf16.gmra.mxu0 %v1639
        %v1771 = vpop.f32.mrf.mxu0
        %v1772 = vadd.f32 %v1341, %v1771
        %v1773 = vpop.f32.mrf.mxu0
        %v1774 = vadd.f32 %v1343, %v1773
        %1775 = vmatmul.bf16.gmra.mxu0 %v1642
        %v1776 = vpop.f32.mrf.mxu0
        %v1777 = vadd.f32 %v1346, %v1776
        %v1778 = vpop.f32.mrf.mxu0
        %v1779 = vadd.f32 %v1348, %v1778
        %1780 = vmatmul.bf16.gmra.mxu0 %v1645
        %v1781 = vpop.f32.mrf.mxu0
        %v1782 = vadd.f32 %v1351, %v1781
        %v1783 = vpop.f32.mrf.mxu0
        %v1784 = vadd.f32 %v1353, %v1783
        %1785 = vmatmul.bf16.gmra.mxu0 %v1648
        %v1786 = vpop.f32.mrf.mxu0
        %v1787 = vadd.f32 %v1356, %v1786
        %v1788 = vpop.f32.mrf.mxu0
        %v1789 = vadd.f32 %v1358, %v1788
        %1790 = vmatmul.bf16.gmra.mxu0 %v1651
        %v1791 = vpop.f32.mrf.mxu0
        %v1792 = vadd.f32 %v1361, %v1791
        %v1793 = vpop.f32.mrf.mxu0
        %v1794 = vadd.f32 %v1363, %v1793
        %1795 = vmatmul.bf16.gmra.mxu0 %v1654
        %v1796 = vpop.f32.mrf.mxu0
        %v1797 = vadd.f32 %v1366, %v1796
        %v1798 = vpop.f32.mrf.mxu0
        %v1799 = vadd.f32 %v1368, %v1798
        %1800 = vmatmul.bf16.gmra.mxu0 %v1657
        %v1801 = vpop.f32.mrf.mxu0
        %v1802 = vadd.f32 %v1371, %v1801
        %v1803 = vpop.f32.mrf.mxu0
        %v1804 = vadd.f32 %v1373, %v1803
        %1805 = vmatmul.bf16.gmra.mxu0 %v1660
        %v1806 = vpop.f32.mrf.mxu0
        %v1807 = vadd.f32 %v1376, %v1806
        %v1808 = vpop.f32.mrf.mxu0
        %v1809 = vadd.f32 %v1378, %v1808
        %1810 = vmatmul.bf16.gmra.mxu0 %v1663
        %v1811 = vpop.f32.mrf.mxu0
        %v1812 = vadd.f32 %v1381, %v1811
        %v1813 = vpop.f32.mrf.mxu0
        %v1814 = vadd.f32 %v1383, %v1813
        %1815 = vmatmul.bf16.gmra.mxu0 %v1666
        %v1816 = vpop.f32.mrf.mxu0
        %v1817 = vadd.f32 %v1386, %v1816
        %v1818 = vpop.f32.mrf.mxu0
        %v1819 = vadd.f32 %v1388, %v1818
        %1820 = vmatmul.bf16.gmra.mxu0 %v1669
        %v1821 = vpop.f32.mrf.mxu0
        %v1822 = vadd.f32 %v1391, %v1821
        %v1823 = vpop.f32.mrf.mxu0
        %v1824 = vadd.f32 %v1393, %v1823
        %1825 = vmatmul.bf16.gmra.mxu0 %v1672
        %v1826 = vpop.f32.mrf.mxu0
        %v1827 = vadd.f32 %v1396, %v1826
        %v1828 = vpop.f32.mrf.mxu0
        %v1829 = vadd.f32 %v1398, %v1828
        %1830 = vmatmul.bf16.gmra.mxu0 %v1675
        %v1831 = vpop.f32.mrf.mxu0
        %v1832 = vadd.f32 %v1401, %v1831
        %v1833 = vpop.f32.mrf.mxu0
        %v1834 = vadd.f32 %v1403, %v1833
        %1835 = vmatmul.bf16.gmra.mxu0 %v1678
        %v1836 = vpop.f32.mrf.mxu0
        %v1837 = vadd.f32 %v1406, %v1836
        %v1838 = vpop.f32.mrf.mxu0
        %v1839 = vadd.f32 %v1408, %v1838
        %1840 = vmatmul.bf16.gmra.mxu0 %v1681
        %v1841 = vpop.f32.mrf.mxu0
        %v1842 = vadd.f32 %v1411, %v1841
        %v1843 = vpop.f32.mrf.mxu0
        %v1844 = vadd.f32 %v1413, %v1843
        %1845 = vmatmul.bf16.gmra.mxu0 %v1684
        %v1846 = vpop.f32.mrf.mxu0
        %v1847 = vadd.f32 %v1416, %v1846
        %v1848 = vpop.f32.mrf.mxu0
        %v1849 = vadd.f32 %v1418, %v1848
        %1850 = vmatmul.bf16.gmra.mxu0 %v1687
        %v1851 = vpop.f32.mrf.mxu0
        %v1852 = vadd.f32 %v1421, %v1851
        %v1853 = vpop.f32.mrf.mxu0
        %v1854 = vadd.f32 %v1423, %v1853
        %1855 = vmatmul.bf16.gmra.mxu0 %v1690
        %v1856 = vpop.f32.mrf.mxu0
        %v1857 = vadd.f32 %v1426, %v1856
        %v1858 = vpop.f32.mrf.mxu0
        %v1859 = vadd.f32 %v1428, %v1858
        %1860 = vdwg.mxu0
        %v1861 = vld [vmem:[%s269] sm:$0xe]
        %v1862 = vld [vmem:[%s269 + $0x14] sm:$0xe]
        %v1863 = vld [vmem:[%s269 + $0x28] sm:$0xe]
        %v1864 = vld [vmem:[%s269 + $0x3c] sm:$0xe]
        %v1865 = vld [vmem:[%s269 + $0x50] sm:$0xe]
        %v1866 = vld [vmem:[%s269 + $0x64] sm:$0xe]
        %v1867 = vld [vmem:[%s269 + $0x78] sm:$0xe]
        %v1868 = vld [vmem:[%s269 + $0x8c] sm:$0xe]
        %v1869 = vld [vmem:[%s269 + $0xa0] sm:$0xe]
        %v1870 = vld [vmem:[%s269 + $0xb4] sm:$0xe]
        %v1871 = vld [vmem:[%s269 + $0xc8] sm:$0xe]
        %v1872 = vld [vmem:[%s269 + $0xdc] sm:$0xe]
        %v1873 = vld [vmem:[%s269 + $0xf0] sm:$0xe]
        %v1874 = vld [vmem:[%s269 + $0x104] sm:$0xe]
        %v1875 = vld [vmem:[%s269 + $0x118] sm:$0xe]
        %v1876 = vld [vmem:[%s269 + $0x12c] sm:$0xe]
        %vm1909 = vcmask 1042432
        %vm1910 = vcmask 1046532
        %vm1911 = vmor %vm1909, %vm1910
        %v1912 = vrot.slane %v1861, 5
        %v1913 = vrot.slane %v1912, 4
        %v1914 = vrot.slane %v271, 5
        %v1915 = vsel %vm1911, %v1913, %v1914
        %v1916 = vrot.slane %v1914, 4
        %v1917 = vrot.slane %v272, 5
        %v1918 = vsel %vm1911, %v1916, %v1917
        %v1919 = vrot.slane %v1917, 4
        %v1920 = vrot.slane %v273, 5
        %v1921 = vsel %vm1911, %v1919, %v1920
        %v1922 = vrot.slane %v1920, 4
        %v1923 = vrot.slane %v336, 5
        %v1924 = vsel %vm1911, %v1922, %v1923
        %v1925 = vrot.slane %v1862, 5
        %v1926 = vrot.slane %v1925, 4
        %v1927 = vrot.slane %v275, 5
        %v1928 = vsel %vm1911, %v1926, %v1927
        %v1929 = vrot.slane %v1927, 4
        %v1930 = vrot.slane %v276, 5
        %v1931 = vsel %vm1911, %v1929, %v1930
        %v1932 = vrot.slane %v1930, 4
        %v1933 = vrot.slane %v277, 5
        %v1934 = vsel %vm1911, %v1932, %v1933
        %v1935 = vrot.slane %v1933, 4
        %v1936 = vrot.slane %v337, 5
        %v1937 = vsel %vm1911, %v1935, %v1936
        %v1938 = vrot.slane %v1863, 5
        %v1939 = vrot.slane %v1938, 4
        %v1940 = vrot.slane %v279, 5
        %v1941 = vsel %vm1911, %v1939, %v1940
        %v1942 = vrot.slane %v1940, 4
        %v1943 = vrot.slane %v280, 5
        %v1944 = vsel %vm1911, %v1942, %v1943
        %v1945 = vrot.slane %v1943, 4
        %v1946 = vrot.slane %v281, 5
        %v1947 = vsel %vm1911, %v1945, %v1946
        %v1948 = vrot.slane %v1946, 4
        %v1949 = vrot.slane %v338, 5
        %v1950 = vsel %vm1911, %v1948, %v1949
        %v1951 = vrot.slane %v1864, 5
        %v1952 = vrot.slane %v1951, 4
        %v1953 = vrot.slane %v283, 5
        %v1954 = vsel %vm1911, %v1952, %v1953
        %v1955 = vrot.slane %v1953, 4
        %v1956 = vrot.slane %v284, 5
        %v1957 = vsel %vm1911, %v1955, %v1956
        %v1958 = vrot.slane %v1956, 4
        %v1959 = vrot.slane %v285, 5
        %v1960 = vsel %vm1911, %v1958, %v1959
        %v1961 = vrot.slane %v1959, 4
        %v1962 = vrot.slane %v339, 5
        %v1963 = vsel %vm1911, %v1961, %v1962
        %v1964 = vrot.slane %v1865, 5
        %v1965 = vrot.slane %v1964, 4
        %v1966 = vrot.slane %v287, 5
        %v1967 = vsel %vm1911, %v1965, %v1966
        %v1968 = vrot.slane %v1966, 4
        %v1969 = vrot.slane %v288, 5
        %v1970 = vsel %vm1911, %v1968, %v1969
        %v1971 = vrot.slane %v1969, 4
        %v1972 = vrot.slane %v289, 5
        %v1973 = vsel %vm1911, %v1971, %v1972
        %v1974 = vrot.slane %v1972, 4
        %v1975 = vrot.slane %v340, 5
        %v1976 = vsel %vm1911, %v1974, %v1975
        %v1977 = vrot.slane %v1866, 5
        %v1978 = vrot.slane %v1977, 4
        %v1979 = vrot.slane %v291, 5
        %v1980 = vsel %vm1911, %v1978, %v1979
        %v1981 = vrot.slane %v1979, 4
        %v1982 = vrot.slane %v292, 5
        %v1983 = vsel %vm1911, %v1981, %v1982
        %v1984 = vrot.slane %v1982, 4
        %v1985 = vrot.slane %v293, 5
        %v1986 = vsel %vm1911, %v1984, %v1985
        %v1987 = vrot.slane %v1985, 4
        %v1988 = vrot.slane %v341, 5
        %v1989 = vsel %vm1911, %v1987, %v1988
        %v1990 = vrot.slane %v1867, 5
        %v1991 = vrot.slane %v1990, 4
        %v1992 = vrot.slane %v295, 5
        %v1993 = vsel %vm1911, %v1991, %v1992
        %v1994 = vrot.slane %v1992, 4
        %v1995 = vrot.slane %v296, 5
        %v1996 = vsel %vm1911, %v1994, %v1995
        %v1997 = vrot.slane %v1995, 4
        %v1998 = vrot.slane %v297, 5
        %v1999 = vsel %vm1911, %v1997, %v1998
        %v2000 = vrot.slane %v1998, 4
        %v2001 = vrot.slane %v342, 5
        %v2002 = vsel %vm1911, %v2000, %v2001
        %v2003 = vrot.slane %v1868, 5
        %v2004 = vrot.slane %v2003, 4
        %v2005 = vrot.slane %v299, 5
        %v2006 = vsel %vm1911, %v2004, %v2005
        %v2007 = vrot.slane %v2005, 4
        %v2008 = vrot.slane %v300, 5
        %v2009 = vsel %vm1911, %v2007, %v2008
        %v2010 = vrot.slane %v2008, 4
        %v2011 = vrot.slane %v301, 5
        %v2012 = vsel %vm1911, %v2010, %v2011
        %v2013 = vrot.slane %v2011, 4
        %v2014 = vrot.slane %v343, 5
        %v2015 = vsel %vm1911, %v2013, %v2014
        %v2016 = vrot.slane %v1869, 5
        %v2017 = vrot.slane %v2016, 4
        %v2018 = vrot.slane %v303, 5
        %v2019 = vsel %vm1911, %v2017, %v2018
        %v2020 = vrot.slane %v2018, 4
        %v2021 = vrot.slane %v304, 5
        %v2022 = vsel %vm1911, %v2020, %v2021
        %v2023 = vrot.slane %v2021, 4
        %v2024 = vrot.slane %v305, 5
        %v2025 = vsel %vm1911, %v2023, %v2024
        %v2026 = vrot.slane %v2024, 4
        %v2027 = vrot.slane %v344, 5
        %v2028 = vsel %vm1911, %v2026, %v2027
        %v2029 = vrot.slane %v1870, 5
        %v2030 = vrot.slane %v2029, 4
        %v2031 = vrot.slane %v307, 5
        %v2032 = vsel %vm1911, %v2030, %v2031
        %v2033 = vrot.slane %v2031, 4
        %v2034 = vrot.slane %v308, 5
        %v2035 = vsel %vm1911, %v2033, %v2034
        %v2036 = vrot.slane %v2034, 4
        %v2037 = vrot.slane %v309, 5
        %v2038 = vsel %vm1911, %v2036, %v2037
        %v2039 = vrot.slane %v2037, 4
        %v2040 = vrot.slane %v345, 5
        %v2041 = vsel %vm1911, %v2039, %v2040
        %v2042 = vrot.slane %v1871, 5
        %v2043 = vrot.slane %v2042, 4
        %v2044 = vrot.slane %v311, 5
        %v2045 = vsel %vm1911, %v2043, %v2044
        %v2046 = vrot.slane %v2044, 4
        %v2047 = vrot.slane %v312, 5
        %v2048 = vsel %vm1911, %v2046, %v2047
        %v2049 = vrot.slane %v2047, 4
        %v2050 = vrot.slane %v313, 5
        %v2051 = vsel %vm1911, %v2049, %v2050
        %v2052 = vrot.slane %v2050, 4
        %v2053 = vrot.slane %v346, 5
        %v2054 = vsel %vm1911, %v2052, %v2053
        %v2055 = vrot.slane %v1872, 5
        %v2056 = vrot.slane %v2055, 4
        %v2057 = vrot.slane %v315, 5
        %v2058 = vsel %vm1911, %v2056, %v2057
        %v2059 = vrot.slane %v2057, 4
        %v2060 = vrot.slane %v316, 5
        %v2061 = vsel %vm1911, %v2059, %v2060
        %v2062 = vrot.slane %v2060, 4
        %v2063 = vrot.slane %v317, 5
        %v2064 = vsel %vm1911, %v2062, %v2063
        %v2065 = vrot.slane %v2063, 4
        %v2066 = vrot.slane %v347, 5
        %v2067 = vsel %vm1911, %v2065, %v2066
        %v2068 = vrot.slane %v1873, 5
        %v2069 = vrot.slane %v2068, 4
        %v2070 = vrot.slane %v319, 5
        %v2071 = vsel %vm1911, %v2069, %v2070
        %v2072 = vrot.slane %v2070, 4
        %v2073 = vrot.slane %v320, 5
        %v2074 = vsel %vm1911, %v2072, %v2073
        %v2075 = vrot.slane %v2073, 4
        %v2076 = vrot.slane %v321, 5
        %v2077 = vsel %vm1911, %v2075, %v2076
        %v2078 = vrot.slane %v2076, 4
        %v2079 = vrot.slane %v348, 5
        %v2080 = vsel %vm1911, %v2078, %v2079
        %v2081 = vrot.slane %v1874, 5
        %v2082 = vrot.slane %v2081, 4
        %v2083 = vrot.slane %v323, 5
        %v2084 = vsel %vm1911, %v2082, %v2083
        %v2085 = vrot.slane %v2083, 4
        %v2086 = vrot.slane %v324, 5
        %v2087 = vsel %vm1911, %v2085, %v2086
        %v2088 = vrot.slane %v2086, 4
        %v2089 = vrot.slane %v325, 5
        %v2090 = vsel %vm1911, %v2088, %v2089
        %v2091 = vrot.slane %v2089, 4
        %v2092 = vrot.slane %v349, 5
        %v2093 = vsel %vm1911, %v2091, %v2092
        %v2094 = vrot.slane %v1875, 5
        %v2095 = vrot.slane %v2094, 4
        %v2096 = vrot.slane %v327, 5
        %v2097 = vsel %vm1911, %v2095, %v2096
        %v2098 = vrot.slane %v2096, 4
        %v2099 = vrot.slane %v328, 5
        %v2100 = vsel %vm1911, %v2098, %v2099
        %v2101 = vrot.slane %v2099, 4
        %v2102 = vrot.slane %v329, 5
        %v2103 = vsel %vm1911, %v2101, %v2102
        %v2104 = vrot.slane %v2102, 4
        %v2105 = vrot.slane %v350, 5
        %v2106 = vsel %vm1911, %v2104, %v2105
        %v2107 = vrot.slane %v1876, 5
        %v2108 = vrot.slane %v2107, 4
        %v2109 = vrot.slane %v331, 5
        %v2110 = vsel %vm1911, %v2108, %v2109
        %v2111 = vrot.slane %v2109, 4
        %v2112 = vrot.slane %v332, 5
        %v2113 = vsel %vm1911, %v2111, %v2112
        %v2114 = vrot.slane %v2112, 4
        %v2115 = vrot.slane %v333, 5
        %v2116 = vsel %vm1911, %v2114, %v2115
        %v2117 = vrot.slane %v2115, 4
        %v2118 = vrot.slane %v351, 5
        %v2119 = vsel %vm1911, %v2117, %v2118
        %s2120 = scalar_lea.vmem %s1, 16
        %v2121 = vld [vmem:[%s2120] sm:$0xf]
        %v2122 = vld [vmem:[%s2120 + $0x4] sm:$0xf]
        %v2123 = vunpack.c.l.b16 %v1915
        %v2124 = vunpack.c.l.b16 %v1918
        %v2125 = vunpack.c.l.b16 %v1921
        %v2126 = vunpack.c.l.b16 %v1924
        %v2127 = vunpack.c.l.b16 %v1928
        %v2128 = vunpack.c.l.b16 %v1931
        %v2129 = vunpack.c.l.b16 %v1934
        %v2130 = vunpack.c.l.b16 %v1937
        %v2131 = vunpack.c.l.b16 %v1941
        %v2132 = vunpack.c.l.b16 %v1944
        %v2133 = vunpack.c.l.b16 %v1947
        %v2134 = vunpack.c.l.b16 %v1950
        %v2135 = vunpack.c.l.b16 %v1954
        %v2136 = vunpack.c.l.b16 %v1957
        %v2137 = vunpack.c.l.b16 %v1960
        %v2138 = vunpack.c.l.b16 %v1963
        %v2139 = vunpack.c.l.b16 %v1967
        %v2140 = vunpack.c.l.b16 %v1970
        %v2141 = vunpack.c.l.b16 %v1973
        %v2142 = vunpack.c.l.b16 %v1976
        %v2143 = vunpack.c.l.b16 %v1980
        %v2144 = vunpack.c.l.b16 %v1983
        %v2145 = vunpack.c.l.b16 %v1986
        %v2146 = vunpack.c.l.b16 %v1989
        %v2147 = vunpack.c.l.b16 %v1993
        %v2148 = vunpack.c.l.b16 %v1996
        %v2149 = vunpack.c.l.b16 %v1999
        %v2150 = vunpack.c.l.b16 %v2002
        %v2151 = vunpack.c.l.b16 %v2006
        %v2152 = vunpack.c.l.b16 %v2009
        %v2153 = vunpack.c.l.b16 %v2012
        %v2154 = vunpack.c.l.b16 %v2015
        %v2155 = vunpack.c.l.b16 %v2019
        %v2156 = vunpack.c.l.b16 %v2022
        %v2157 = vunpack.c.l.b16 %v2025
        %v2158 = vunpack.c.l.b16 %v2028
        %v2159 = vunpack.c.l.b16 %v2032
        %v2160 = vunpack.c.l.b16 %v2035
        %v2161 = vunpack.c.l.b16 %v2038
        %v2162 = vunpack.c.l.b16 %v2041
        %v2163 = vunpack.c.l.b16 %v2045
        %v2164 = vunpack.c.l.b16 %v2048
        %v2165 = vunpack.c.l.b16 %v2051
        %v2166 = vunpack.c.l.b16 %v2054
        %v2167 = vunpack.c.l.b16 %v2058
        %v2168 = vunpack.c.l.b16 %v2061
        %v2169 = vunpack.c.l.b16 %v2064
        %v2170 = vunpack.c.l.b16 %v2067
        %v2171 = vunpack.c.l.b16 %v2071
        %v2172 = vunpack.c.l.b16 %v2074
        %v2173 = vunpack.c.l.b16 %v2077
        %v2174 = vunpack.c.l.b16 %v2080
        %v2175 = vunpack.c.l.b16 %v2084
        %v2176 = vunpack.c.l.b16 %v2087
        %v2177 = vunpack.c.l.b16 %v2090
        %v2178 = vunpack.c.l.b16 %v2093
        %v2179 = vunpack.c.l.b16 %v2097
        %v2180 = vunpack.c.l.b16 %v2100
        %v2181 = vunpack.c.l.b16 %v2103
        %v2182 = vunpack.c.l.b16 %v2106
        %v2183 = vunpack.c.l.b16 %v2110
        %v2184 = vunpack.c.l.b16 %v2113
        %v2185 = vunpack.c.l.b16 %v2116
        %v2186 = vunpack.c.l.b16 %v2119
        %v2187 = vpack.c.b16 %v2124, %v2123
        %v2188 = vpack.c.b16 %v2126, %v2125
        %v2189 = vpack.c.b16 %v2128, %v2127
        %v2190 = vpack.c.b16 %v2130, %v2129
        %v2191 = vpack.c.b16 %v2132, %v2131
        %v2192 = vpack.c.b16 %v2134, %v2133
        %v2193 = vpack.c.b16 %v2136, %v2135
        %v2194 = vpack.c.b16 %v2138, %v2137
        %v2195 = vpack.c.b16 %v2140, %v2139
        %v2196 = vpack.c.b16 %v2142, %v2141
        %v2197 = vpack.c.b16 %v2144, %v2143
        %v2198 = vpack.c.b16 %v2146, %v2145
        %v2199 = vpack.c.b16 %v2148, %v2147
        %v2200 = vpack.c.b16 %v2150, %v2149
        %v2201 = vpack.c.b16 %v2152, %v2151
        %v2202 = vpack.c.b16 %v2154, %v2153
        %v2203 = vpack.c.b16 %v2156, %v2155
        %v2204 = vpack.c.b16 %v2158, %v2157
        %v2205 = vpack.c.b16 %v2160, %v2159
        %v2206 = vpack.c.b16 %v2162, %v2161
        %v2207 = vpack.c.b16 %v2164, %v2163
        %v2208 = vpack.c.b16 %v2166, %v2165
        %v2209 = vpack.c.b16 %v2168, %v2167
        %v2210 = vpack.c.b16 %v2170, %v2169
        %v2211 = vpack.c.b16 %v2172, %v2171
        %v2212 = vpack.c.b16 %v2174, %v2173
        %v2213 = vpack.c.b16 %v2176, %v2175
        %v2214 = vpack.c.b16 %v2178, %v2177
        %v2215 = vpack.c.b16 %v2180, %v2179
        %v2216 = vpack.c.b16 %v2182, %v2181
        %v2217 = vpack.c.b16 %v2184, %v2183
        %v2218 = vpack.c.b16 %v2186, %v2185
        %v2221 = vunpack.c.l.b16 %v2121
        %v2222 = vunpack.c.l.b16 %v2122
        %v2223 = vpack.c.b16 %v2222, %v2221
        %v2226 = vsel %vm1164, %v2187, 0
        %v2229 = vsel %vm1164, %v2188, 0
        %v2232 = vsel %vm1164, %v2189, 0
        %v2235 = vsel %vm1164, %v2190, 0
        %v2238 = vsel %vm1164, %v2191, 0
        %v2241 = vsel %vm1164, %v2192, 0
        %v2244 = vsel %vm1164, %v2193, 0
        %v2247 = vsel %vm1164, %v2194, 0
        %v2250 = vsel %vm1164, %v2195, 0
        %v2253 = vsel %vm1164, %v2196, 0
        %v2256 = vsel %vm1164, %v2197, 0
        %v2259 = vsel %vm1164, %v2198, 0
        %v2262 = vsel %vm1164, %v2199, 0
        %v2265 = vsel %vm1164, %v2200, 0
        %v2268 = vsel %vm1164, %v2201, 0
        %v2271 = vsel %vm1164, %v2202, 0
        %v2274 = vsel %vm1164, %v2203, 0
        %v2277 = vsel %vm1164, %v2204, 0
        %v2280 = vsel %vm1164, %v2205, 0
        %v2283 = vsel %vm1164, %v2206, 0
        %v2286 = vsel %vm1164, %v2207, 0
        %v2289 = vsel %vm1164, %v2208, 0
        %v2292 = vsel %vm1164, %v2209, 0
        %v2295 = vsel %vm1164, %v2210, 0
        %v2298 = vsel %vm1164, %v2211, 0
        %v2301 = vsel %vm1164, %v2212, 0
        %v2304 = vsel %vm1164, %v2213, 0
        %v2307 = vsel %vm1164, %v2214, 0
        %v2310 = vsel %vm1164, %v2215, 0
        %v2313 = vsel %vm1164, %v2216, 0
        %v2316 = vsel %vm1164, %v2217, 0
        %v2319 = vsel %vm1164, %v2218, 0
        %2321 = vmatpush.bf16.msra.mxu0 0
        %2322 = vmatpush.bf16.msra.mxu0 0
        %2323 = vmatpush.bf16.msra.mxu0 0
        %2324 = vmatpush.bf16.msra.mxu0 0
        %2325 = vmatpush.bf16.msra.mxu0 0
        %2326 = vmatpush.bf16.msra.mxu0 0
        %2327 = vmatpush.bf16.msra.mxu0 0
        %2328 = vmatpush.bf16.msra.mxu0 %v2223
        %2329 = vmatmul.bf16.gmra.mxu0 %v2226
        %v2330 = vpop.f32.mrf.mxu0
        %v2331 = vadd.f32 0.0, %v2330
        %v2332 = vpop.f32.mrf.mxu0
        %v2333 = vadd.f32 0.0, %v2332
        %2334 = vmatmul.bf16.gmra.mxu0 %v2229
        %v2335 = vpop.f32.mrf.mxu0
        %v2336 = vadd.f32 0.0, %v2335
        %v2337 = vpop.f32.mrf.mxu0
        %v2338 = vadd.f32 0.0, %v2337
        %2339 = vmatmul.bf16.gmra.mxu0 %v2232
        %v2340 = vpop.f32.mrf.mxu0
        %v2341 = vadd.f32 0.0, %v2340
        %v2342 = vpop.f32.mrf.mxu0
        %v2343 = vadd.f32 0.0, %v2342
        %2344 = vmatmul.bf16.gmra.mxu0 %v2235
        %v2345 = vpop.f32.mrf.mxu0
        %v2346 = vadd.f32 0.0, %v2345
        %v2347 = vpop.f32.mrf.mxu0
        %v2348 = vadd.f32 0.0, %v2347
        %2349 = vmatmul.bf16.gmra.mxu0 %v2238
        %v2350 = vpop.f32.mrf.mxu0
        %v2351 = vadd.f32 0.0, %v2350
        %v2352 = vpop.f32.mrf.mxu0
        %v2353 = vadd.f32 0.0, %v2352
        %2354 = vmatmul.bf16.gmra.mxu0 %v2241
        %v2355 = vpop.f32.mrf.mxu0
        %v2356 = vadd.f32 0.0, %v2355
        %v2357 = vpop.f32.mrf.mxu0
        %v2358 = vadd.f32 0.0, %v2357
        %2359 = vmatmul.bf16.gmra.mxu0 %v2244
        %v2360 = vpop.f32.mrf.mxu0
        %v2361 = vadd.f32 0.0, %v2360
        %v2362 = vpop.f32.mrf.mxu0
        %v2363 = vadd.f32 0.0, %v2362
        %2364 = vmatmul.bf16.gmra.mxu0 %v2247
        %v2365 = vpop.f32.mrf.mxu0
        %v2366 = vadd.f32 0.0, %v2365
        %v2367 = vpop.f32.mrf.mxu0
        %v2368 = vadd.f32 0.0, %v2367
        %2369 = vmatmul.bf16.gmra.mxu0 %v2250
        %v2370 = vpop.f32.mrf.mxu0
        %v2371 = vadd.f32 0.0, %v2370
        %v2372 = vpop.f32.mrf.mxu0
        %v2373 = vadd.f32 0.0, %v2372
        %2374 = vmatmul.bf16.gmra.mxu0 %v2253
        %v2375 = vpop.f32.mrf.mxu0
        %v2376 = vadd.f32 0.0, %v2375
        %v2377 = vpop.f32.mrf.mxu0
        %v2378 = vadd.f32 0.0, %v2377
        %2379 = vmatmul.bf16.gmra.mxu0 %v2256
        %v2380 = vpop.f32.mrf.mxu0
        %v2381 = vadd.f32 0.0, %v2380
        %v2382 = vpop.f32.mrf.mxu0
        %v2383 = vadd.f32 0.0, %v2382
        %2384 = vmatmul.bf16.gmra.mxu0 %v2259
        %v2385 = vpop.f32.mrf.mxu0
        %v2386 = vadd.f32 0.0, %v2385
        %v2387 = vpop.f32.mrf.mxu0
        %v2388 = vadd.f32 0.0, %v2387
        %2389 = vmatmul.bf16.gmra.mxu0 %v2262
        %v2390 = vpop.f32.mrf.mxu0
        %v2391 = vadd.f32 0.0, %v2390
        %v2392 = vpop.f32.mrf.mxu0
        %v2393 = vadd.f32 0.0, %v2392
        %2394 = vmatmul.bf16.gmra.mxu0 %v2265
        %v2395 = vpop.f32.mrf.mxu0
        %v2396 = vadd.f32 0.0, %v2395
        %v2397 = vpop.f32.mrf.mxu0
        %v2398 = vadd.f32 0.0, %v2397
        %2399 = vmatmul.bf16.gmra.mxu0 %v2268
        %v2400 = vpop.f32.mrf.mxu0
        %v2401 = vadd.f32 0.0, %v2400
        %v2402 = vpop.f32.mrf.mxu0
        %v2403 = vadd.f32 0.0, %v2402
        %2404 = vmatmul.bf16.gmra.mxu0 %v2271
        %v2405 = vpop.f32.mrf.mxu0
        %v2406 = vadd.f32 0.0, %v2405
        %v2407 = vpop.f32.mrf.mxu0
        %v2408 = vadd.f32 0.0, %v2407
        %2409 = vmatmul.bf16.gmra.mxu0 %v2274
        %v2410 = vpop.f32.mrf.mxu0
        %v2411 = vadd.f32 0.0, %v2410
        %v2412 = vpop.f32.mrf.mxu0
        %v2413 = vadd.f32 0.0, %v2412
        %2414 = vmatmul.bf16.gmra.mxu0 %v2277
        %v2415 = vpop.f32.mrf.mxu0
        %v2416 = vadd.f32 0.0, %v2415
        %v2417 = vpop.f32.mrf.mxu0
        %v2418 = vadd.f32 0.0, %v2417
        %2419 = vmatmul.bf16.gmra.mxu0 %v2280
        %v2420 = vpop.f32.mrf.mxu0
        %v2421 = vadd.f32 0.0, %v2420
        %v2422 = vpop.f32.mrf.mxu0
        %v2423 = vadd.f32 0.0, %v2422
        %2424 = vmatmul.bf16.gmra.mxu0 %v2283
        %v2425 = vpop.f32.mrf.mxu0
        %v2426 = vadd.f32 0.0, %v2425
        %v2427 = vpop.f32.mrf.mxu0
        %v2428 = vadd.f32 0.0, %v2427
        %2429 = vmatmul.bf16.gmra.mxu0 %v2286
        %v2430 = vpop.f32.mrf.mxu0
        %v2431 = vadd.f32 0.0, %v2430
        %v2432 = vpop.f32.mrf.mxu0
        %v2433 = vadd.f32 0.0, %v2432
        %2434 = vmatmul.bf16.gmra.mxu0 %v2289
        %v2435 = vpop.f32.mrf.mxu0
        %v2436 = vadd.f32 0.0, %v2435
        %v2437 = vpop.f32.mrf.mxu0
        %v2438 = vadd.f32 0.0, %v2437
        %2439 = vmatmul.bf16.gmra.mxu0 %v2292
        %v2440 = vpop.f32.mrf.mxu0
        %v2441 = vadd.f32 0.0, %v2440
        %v2442 = vpop.f32.mrf.mxu0
        %v2443 = vadd.f32 0.0, %v2442
        %2444 = vmatmul.bf16.gmra.mxu0 %v2295
        %v2445 = vpop.f32.mrf.mxu0
        %v2446 = vadd.f32 0.0, %v2445
        %v2447 = vpop.f32.mrf.mxu0
        %v2448 = vadd.f32 0.0, %v2447
        %2449 = vmatmul.bf16.gmra.mxu0 %v2298
        %v2450 = vpop.f32.mrf.mxu0
        %v2451 = vadd.f32 0.0, %v2450
        %v2452 = vpop.f32.mrf.mxu0
        %v2453 = vadd.f32 0.0, %v2452
        %2454 = vmatmul.bf16.gmra.mxu0 %v2301
        %v2455 = vpop.f32.mrf.mxu0
        %v2456 = vadd.f32 0.0, %v2455
        %v2457 = vpop.f32.mrf.mxu0
        %v2458 = vadd.f32 0.0, %v2457
        %2459 = vmatmul.bf16.gmra.mxu0 %v2304
        %v2460 = vpop.f32.mrf.mxu0
        %v2461 = vadd.f32 0.0, %v2460
        %v2462 = vpop.f32.mrf.mxu0
        %v2463 = vadd.f32 0.0, %v2462
        %2464 = vmatmul.bf16.gmra.mxu0 %v2307
        %v2465 = vpop.f32.mrf.mxu0
        %v2466 = vadd.f32 0.0, %v2465
        %v2467 = vpop.f32.mrf.mxu0
        %v2468 = vadd.f32 0.0, %v2467
        %2469 = vmatmul.bf16.gmra.mxu0 %v2310
        %v2470 = vpop.f32.mrf.mxu0
        %v2471 = vadd.f32 0.0, %v2470
        %v2472 = vpop.f32.mrf.mxu0
        %v2473 = vadd.f32 0.0, %v2472
        %2474 = vmatmul.bf16.gmra.mxu0 %v2313
        %v2475 = vpop.f32.mrf.mxu0
        %v2476 = vadd.f32 0.0, %v2475
        %v2477 = vpop.f32.mrf.mxu0
        %v2478 = vadd.f32 0.0, %v2477
        %2479 = vmatmul.bf16.gmra.mxu0 %v2316
        %v2480 = vpop.f32.mrf.mxu0
        %v2481 = vadd.f32 0.0, %v2480
        %v2482 = vpop.f32.mrf.mxu0
        %v2483 = vadd.f32 0.0, %v2482
        %2484 = vmatmul.bf16.gmra.mxu0 %v2319
        %v2485 = vpop.f32.mrf.mxu0
        %v2486 = vadd.f32 0.0, %v2485
        %v2487 = vpop.f32.mrf.mxu0
        %v2488 = vadd.f32 0.0, %v2487
        %2489 = vdwg.mxu0
        %v2490 = vadd.f32 %v1702, %v2331
        %v2491 = vadd.f32 %v1704, %v2333
        %v2492 = vadd.f32 %v1707, %v2336
        %v2493 = vadd.f32 %v1709, %v2338
        %v2494 = vadd.f32 %v1712, %v2341
        %v2495 = vadd.f32 %v1714, %v2343
        %v2496 = vadd.f32 %v1717, %v2346
        %v2497 = vadd.f32 %v1719, %v2348
        %v2498 = vadd.f32 %v1722, %v2351
        %v2499 = vadd.f32 %v1724, %v2353
        %v2500 = vadd.f32 %v1727, %v2356
        %v2501 = vadd.f32 %v1729, %v2358
        %v2502 = vadd.f32 %v1732, %v2361
        %v2503 = vadd.f32 %v1734, %v2363
        %v2504 = vadd.f32 %v1737, %v2366
        %v2505 = vadd.f32 %v1739, %v2368
        %v2506 = vadd.f32 %v1742, %v2371
        %v2507 = vadd.f32 %v1744, %v2373
        %v2508 = vadd.f32 %v1747, %v2376
        %v2509 = vadd.f32 %v1749, %v2378
        %v2510 = vadd.f32 %v1752, %v2381
        %v2511 = vadd.f32 %v1754, %v2383
        %v2512 = vadd.f32 %v1757, %v2386
        %v2513 = vadd.f32 %v1759, %v2388
        %v2514 = vadd.f32 %v1762, %v2391
        %v2515 = vadd.f32 %v1764, %v2393
        %v2516 = vadd.f32 %v1767, %v2396
        %v2517 = vadd.f32 %v1769, %v2398
        %v2518 = vadd.f32 %v1772, %v2401
        %v2519 = vadd.f32 %v1774, %v2403
        %v2520 = vadd.f32 %v1777, %v2406
        %v2521 = vadd.f32 %v1779, %v2408
        %v2522 = vadd.f32 %v1782, %v2411
        %v2523 = vadd.f32 %v1784, %v2413
        %v2524 = vadd.f32 %v1787, %v2416
        %v2525 = vadd.f32 %v1789, %v2418
        %v2526 = vadd.f32 %v1792, %v2421
        %v2527 = vadd.f32 %v1794, %v2423
        %v2528 = vadd.f32 %v1797, %v2426
        %v2529 = vadd.f32 %v1799, %v2428
        %v2530 = vadd.f32 %v1802, %v2431
        %v2531 = vadd.f32 %v1804, %v2433
        %v2532 = vadd.f32 %v1807, %v2436
        %v2533 = vadd.f32 %v1809, %v2438
        %v2534 = vadd.f32 %v1812, %v2441
        %v2535 = vadd.f32 %v1814, %v2443
        %v2536 = vadd.f32 %v1817, %v2446
        %v2537 = vadd.f32 %v1819, %v2448
        %v2538 = vadd.f32 %v1822, %v2451
        %v2539 = vadd.f32 %v1824, %v2453
        %v2540 = vadd.f32 %v1827, %v2456
        %v2541 = vadd.f32 %v1829, %v2458
        %v2542 = vadd.f32 %v1832, %v2461
        %v2543 = vadd.f32 %v1834, %v2463
        %v2544 = vadd.f32 %v1837, %v2466
        %v2545 = vadd.f32 %v1839, %v2468
        %v2546 = vadd.f32 %v1842, %v2471
        %v2547 = vadd.f32 %v1844, %v2473
        %v2548 = vadd.f32 %v1847, %v2476
        %v2549 = vadd.f32 %v1849, %v2478
        %v2550 = vadd.f32 %v1852, %v2481
        %v2551 = vadd.f32 %v1854, %v2483
        %v2552 = vadd.f32 %v1857, %v2486
        %v2553 = vadd.f32 %v1859, %v2488
        %s2554 = sadd.s32 %s266, 1
        %s2555 = smul.u32 %s2554, 5
        %s2556 = smul.addr %s2555, 4
        %s2557 = scalar_lea.vmem %s263, %s2556
        %v2558 = vld [vmem:[%s2557] sm:$0xf]
        %v2559 = vld [vmem:[%s2557 + $0x4] sm:$0xf]
        %v2560 = vld [vmem:[%s2557 + $0x8] sm:$0xf]
        %v2561 = vld [vmem:[%s2557 + $0xc] sm:$0xf]
        %v2562 = vld [vmem:[%s2557 + $0x14] sm:$0xf]
        %v2563 = vld [vmem:[%s2557 + $0x18] sm:$0xf]
        %v2564 = vld [vmem:[%s2557 + $0x1c] sm:$0xf]
        %v2565 = vld [vmem:[%s2557 + $0x20] sm:$0xf]
        %v2566 = vld [vmem:[%s2557 + $0x28] sm:$0xf]
        %v2567 = vld [vmem:[%s2557 + $0x2c] sm:$0xf]
        %v2568 = vld [vmem:[%s2557 + $0x30] sm:$0xf]
        %v2569 = vld [vmem:[%s2557 + $0x34] sm:$0xf]
        %v2570 = vld [vmem:[%s2557 + $0x3c] sm:$0xf]
        %v2571 = vld [vmem:[%s2557 + $0x40] sm:$0xf]
        %v2572 = vld [vmem:[%s2557 + $0x44] sm:$0xf]
        %v2573 = vld [vmem:[%s2557 + $0x48] sm:$0xf]
        %v2574 = vld [vmem:[%s2557 + $0x50] sm:$0xf]
        %v2575 = vld [vmem:[%s2557 + $0x54] sm:$0xf]
        %v2576 = vld [vmem:[%s2557 + $0x58] sm:$0xf]
        %v2577 = vld [vmem:[%s2557 + $0x5c] sm:$0xf]
        %v2578 = vld [vmem:[%s2557 + $0x64] sm:$0xf]
        %v2579 = vld [vmem:[%s2557 + $0x68] sm:$0xf]
        %v2580 = vld [vmem:[%s2557 + $0x6c] sm:$0xf]
        %v2581 = vld [vmem:[%s2557 + $0x70] sm:$0xf]
        %v2582 = vld [vmem:[%s2557 + $0x78] sm:$0xf]
        %v2583 = vld [vmem:[%s2557 + $0x7c] sm:$0xf]
        %v2584 = vld [vmem:[%s2557 + $0x80] sm:$0xf]
        %v2585 = vld [vmem:[%s2557 + $0x84] sm:$0xf]
        %v2586 = vld [vmem:[%s2557 + $0x8c] sm:$0xf]
        %v2587 = vld [vmem:[%s2557 + $0x90] sm:$0xf]
        %v2588 = vld [vmem:[%s2557 + $0x94] sm:$0xf]
        %v2589 = vld [vmem:[%s2557 + $0x98] sm:$0xf]
        %v2590 = vld [vmem:[%s2557 + $0xa0] sm:$0xf]
        %v2591 = vld [vmem:[%s2557 + $0xa4] sm:$0xf]
        %v2592 = vld [vmem:[%s2557 + $0xa8] sm:$0xf]
        %v2593 = vld [vmem:[%s2557 + $0xac] sm:$0xf]
        %v2594 = vld [vmem:[%s2557 + $0xb4] sm:$0xf]
        %v2595 = vld [vmem:[%s2557 + $0xb8] sm:$0xf]
        %v2596 = vld [vmem:[%s2557 + $0xbc] sm:$0xf]
        %v2597 = vld [vmem:[%s2557 + $0xc0] sm:$0xf]
        %v2598 = vld [vmem:[%s2557 + $0xc8] sm:$0xf]
        %v2599 = vld [vmem:[%s2557 + $0xcc] sm:$0xf]
        %v2600 = vld [vmem:[%s2557 + $0xd0] sm:$0xf]
        %v2601 = vld [vmem:[%s2557 + $0xd4] sm:$0xf]
        %v2602 = vld [vmem:[%s2557 + $0xdc] sm:$0xf]
        %v2603 = vld [vmem:[%s2557 + $0xe0] sm:$0xf]
        %v2604 = vld [vmem:[%s2557 + $0xe4] sm:$0xf]
        %v2605 = vld [vmem:[%s2557 + $0xe8] sm:$0xf]
        %v2606 = vld [vmem:[%s2557 + $0xf0] sm:$0xf]
        %v2607 = vld [vmem:[%s2557 + $0xf4] sm:$0xf]
        %v2608 = vld [vmem:[%s2557 + $0xf8] sm:$0xf]
        %v2609 = vld [vmem:[%s2557 + $0xfc] sm:$0xf]
        %v2610 = vld [vmem:[%s2557 + $0x104] sm:$0xf]
        %v2611 = vld [vmem:[%s2557 + $0x108] sm:$0xf]
        %v2612 = vld [vmem:[%s2557 + $0x10c] sm:$0xf]
        %v2613 = vld [vmem:[%s2557 + $0x110] sm:$0xf]
        %v2614 = vld [vmem:[%s2557 + $0x118] sm:$0xf]
        %v2615 = vld [vmem:[%s2557 + $0x11c] sm:$0xf]
        %v2616 = vld [vmem:[%s2557 + $0x120] sm:$0xf]
        %v2617 = vld [vmem:[%s2557 + $0x124] sm:$0xf]
        %v2618 = vld [vmem:[%s2557 + $0x12c] sm:$0xf]
        %v2619 = vld [vmem:[%s2557 + $0x130] sm:$0xf]
        %v2620 = vld [vmem:[%s2557 + $0x134] sm:$0xf]
        %v2621 = vld [vmem:[%s2557 + $0x138] sm:$0xf]
        %s2622 = scalar_lea.vmem %s1, 24
        %v2623 = vld [vmem:[%s2622] sm:$0xf]
        %v2624 = vld [vmem:[%s2622 + $0x4] sm:$0xf]
        %v2689 = vunpack.c.l.b16 %v2558
        %v2690 = vunpack.c.l.b16 %v2559
        %v2691 = vunpack.c.l.b16 %v2560
        %v2692 = vunpack.c.l.b16 %v2561
        %v2693 = vunpack.c.l.b16 %v2562
        %v2694 = vunpack.c.l.b16 %v2563
        %v2695 = vunpack.c.l.b16 %v2564
        %v2696 = vunpack.c.l.b16 %v2565
        %v2697 = vunpack.c.l.b16 %v2566
        %v2698 = vunpack.c.l.b16 %v2567
        %v2699 = vunpack.c.l.b16 %v2568
        %v2700 = vunpack.c.l.b16 %v2569
        %v2701 = vunpack.c.l.b16 %v2570
        %v2702 = vunpack.c.l.b16 %v2571
        %v2703 = vunpack.c.l.b16 %v2572
        %v2704 = vunpack.c.l.b16 %v2573
        %v2705 = vunpack.c.l.b16 %v2574
        %v2706 = vunpack.c.l.b16 %v2575
        %v2707 = vunpack.c.l.b16 %v2576
        %v2708 = vunpack.c.l.b16 %v2577
        %v2709 = vunpack.c.l.b16 %v2578
        %v2710 = vunpack.c.l.b16 %v2579
        %v2711 = vunpack.c.l.b16 %v2580
        %v2712 = vunpack.c.l.b16 %v2581
        %v2713 = vunpack.c.l.b16 %v2582
        %v2714 = vunpack.c.l.b16 %v2583
        %v2715 = vunpack.c.l.b16 %v2584
        %v2716 = vunpack.c.l.b16 %v2585
        %v2717 = vunpack.c.l.b16 %v2586
        %v2718 = vunpack.c.l.b16 %v2587
        %v2719 = vunpack.c.l.b16 %v2588
        %v2720 = vunpack.c.l.b16 %v2589
        %v2721 = vunpack.c.l.b16 %v2590
        %v2722 = vunpack.c.l.b16 %v2591
        %v2723 = vunpack.c.l.b16 %v2592
        %v2724 = vunpack.c.l.b16 %v2593
        %v2725 = vunpack.c.l.b16 %v2594
        %v2726 = vunpack.c.l.b16 %v2595
        %v2727 = vunpack.c.l.b16 %v2596
        %v2728 = vunpack.c.l.b16 %v2597
        %v2729 = vunpack.c.l.b16 %v2598
        %v2730 = vunpack.c.l.b16 %v2599
        %v2731 = vunpack.c.l.b16 %v2600
        %v2732 = vunpack.c.l.b16 %v2601
        %v2733 = vunpack.c.l.b16 %v2602
        %v2734 = vunpack.c.l.b16 %v2603
        %v2735 = vunpack.c.l.b16 %v2604
        %v2736 = vunpack.c.l.b16 %v2605
        %v2737 = vunpack.c.l.b16 %v2606
        %v2738 = vunpack.c.l.b16 %v2607
        %v2739 = vunpack.c.l.b16 %v2608
        %v2740 = vunpack.c.l.b16 %v2609
        %v2741 = vunpack.c.l.b16 %v2610
        %v2742 = vunpack.c.l.b16 %v2611
        %v2743 = vunpack.c.l.b16 %v2612
        %v2744 = vunpack.c.l.b16 %v2613
        %v2745 = vunpack.c.l.b16 %v2614
        %v2746 = vunpack.c.l.b16 %v2615
        %v2747 = vunpack.c.l.b16 %v2616
        %v2748 = vunpack.c.l.b16 %v2617
        %v2749 = vunpack.c.l.b16 %v2618
        %v2750 = vunpack.c.l.b16 %v2619
        %v2751 = vunpack.c.l.b16 %v2620
        %v2752 = vunpack.c.l.b16 %v2621
        %v2753 = vpack.c.b16 %v2690, %v2689
        %v2754 = vpack.c.b16 %v2692, %v2691
        %v2755 = vpack.c.b16 %v2694, %v2693
        %v2756 = vpack.c.b16 %v2696, %v2695
        %v2757 = vpack.c.b16 %v2698, %v2697
        %v2758 = vpack.c.b16 %v2700, %v2699
        %v2759 = vpack.c.b16 %v2702, %v2701
        %v2760 = vpack.c.b16 %v2704, %v2703
        %v2761 = vpack.c.b16 %v2706, %v2705
        %v2762 = vpack.c.b16 %v2708, %v2707
        %v2763 = vpack.c.b16 %v2710, %v2709
        %v2764 = vpack.c.b16 %v2712, %v2711
        %v2765 = vpack.c.b16 %v2714, %v2713
        %v2766 = vpack.c.b16 %v2716, %v2715
        %v2767 = vpack.c.b16 %v2718, %v2717
        %v2768 = vpack.c.b16 %v2720, %v2719
        %v2769 = vpack.c.b16 %v2722, %v2721
        %v2770 = vpack.c.b16 %v2724, %v2723
        %v2771 = vpack.c.b16 %v2726, %v2725
        %v2772 = vpack.c.b16 %v2728, %v2727
        %v2773 = vpack.c.b16 %v2730, %v2729
        %v2774 = vpack.c.b16 %v2732, %v2731
        %v2775 = vpack.c.b16 %v2734, %v2733
        %v2776 = vpack.c.b16 %v2736, %v2735
        %v2777 = vpack.c.b16 %v2738, %v2737
        %v2778 = vpack.c.b16 %v2740, %v2739
        %v2779 = vpack.c.b16 %v2742, %v2741
        %v2780 = vpack.c.b16 %v2744, %v2743
        %v2781 = vpack.c.b16 %v2746, %v2745
        %v2782 = vpack.c.b16 %v2748, %v2747
        %v2783 = vpack.c.b16 %v2750, %v2749
        %v2784 = vpack.c.b16 %v2752, %v2751
        %v2787 = vunpack.c.l.b16 %v2623
        %v2788 = vunpack.c.l.b16 %v2624
        %v2789 = vpack.c.b16 %v2788, %v2787
        %v2792 = vsel %vm1164, %v2753, 0
        %v2795 = vsel %vm1164, %v2754, 0
        %v2798 = vsel %vm1164, %v2755, 0
        %v2801 = vsel %vm1164, %v2756, 0
        %v2804 = vsel %vm1164, %v2757, 0
        %v2807 = vsel %vm1164, %v2758, 0
        %v2810 = vsel %vm1164, %v2759, 0
        %v2813 = vsel %vm1164, %v2760, 0
        %v2816 = vsel %vm1164, %v2761, 0
        %v2819 = vsel %vm1164, %v2762, 0
        %v2822 = vsel %vm1164, %v2763, 0
        %v2825 = vsel %vm1164, %v2764, 0
        %v2828 = vsel %vm1164, %v2765, 0
        %v2831 = vsel %vm1164, %v2766, 0
        %v2834 = vsel %vm1164, %v2767, 0
        %v2837 = vsel %vm1164, %v2768, 0
        %v2840 = vsel %vm1164, %v2769, 0
        %v2843 = vsel %vm1164, %v2770, 0
        %v2846 = vsel %vm1164, %v2771, 0
        %v2849 = vsel %vm1164, %v2772, 0
        %v2852 = vsel %vm1164, %v2773, 0
        %v2855 = vsel %vm1164, %v2774, 0
        %v2858 = vsel %vm1164, %v2775, 0
        %v2861 = vsel %vm1164, %v2776, 0
        %v2864 = vsel %vm1164, %v2777, 0
        %v2867 = vsel %vm1164, %v2778, 0
        %v2870 = vsel %vm1164, %v2779, 0
        %v2873 = vsel %vm1164, %v2780, 0
        %v2876 = vsel %vm1164, %v2781, 0
        %v2879 = vsel %vm1164, %v2782, 0
        %v2882 = vsel %vm1164, %v2783, 0
        %v2885 = vsel %vm1164, %v2784, 0
        %2887 = vmatpush.bf16.msra.mxu0 0
        %2888 = vmatpush.bf16.msra.mxu0 0
        %2889 = vmatpush.bf16.msra.mxu0 0
        %2890 = vmatpush.bf16.msra.mxu0 0
        %2891 = vmatpush.bf16.msra.mxu0 0
        %2892 = vmatpush.bf16.msra.mxu0 0
        %2893 = vmatpush.bf16.msra.mxu0 0
        %2894 = vmatpush.bf16.msra.mxu0 %v2789
        %2895 = vmatmul.bf16.gmra.mxu0 %v2792
        %v2896 = vpop.f32.mrf.mxu0
        %v2897 = vadd.f32 0.0, %v2896
        %v2898 = vpop.f32.mrf.mxu0
        %v2899 = vadd.f32 0.0, %v2898
        %2900 = vmatmul.bf16.gmra.mxu0 %v2795
        %v2901 = vpop.f32.mrf.mxu0
        %v2902 = vadd.f32 0.0, %v2901
        %v2903 = vpop.f32.mrf.mxu0
        %v2904 = vadd.f32 0.0, %v2903
        %2905 = vmatmul.bf16.gmra.mxu0 %v2798
        %v2906 = vpop.f32.mrf.mxu0
        %v2907 = vadd.f32 0.0, %v2906
        %v2908 = vpop.f32.mrf.mxu0
        %v2909 = vadd.f32 0.0, %v2908
        %2910 = vmatmul.bf16.gmra.mxu0 %v2801
        %v2911 = vpop.f32.mrf.mxu0
        %v2912 = vadd.f32 0.0, %v2911
        %v2913 = vpop.f32.mrf.mxu0
        %v2914 = vadd.f32 0.0, %v2913
        %2915 = vmatmul.bf16.gmra.mxu0 %v2804
        %v2916 = vpop.f32.mrf.mxu0
        %v2917 = vadd.f32 0.0, %v2916
        %v2918 = vpop.f32.mrf.mxu0
        %v2919 = vadd.f32 0.0, %v2918
        %2920 = vmatmul.bf16.gmra.mxu0 %v2807
        %v2921 = vpop.f32.mrf.mxu0
        %v2922 = vadd.f32 0.0, %v2921
        %v2923 = vpop.f32.mrf.mxu0
        %v2924 = vadd.f32 0.0, %v2923
        %2925 = vmatmul.bf16.gmra.mxu0 %v2810
        %v2926 = vpop.f32.mrf.mxu0
        %v2927 = vadd.f32 0.0, %v2926
        %v2928 = vpop.f32.mrf.mxu0
        %v2929 = vadd.f32 0.0, %v2928
        %2930 = vmatmul.bf16.gmra.mxu0 %v2813
        %v2931 = vpop.f32.mrf.mxu0
        %v2932 = vadd.f32 0.0, %v2931
        %v2933 = vpop.f32.mrf.mxu0
        %v2934 = vadd.f32 0.0, %v2933
        %2935 = vmatmul.bf16.gmra.mxu0 %v2816
        %v2936 = vpop.f32.mrf.mxu0
        %v2937 = vadd.f32 0.0, %v2936
        %v2938 = vpop.f32.mrf.mxu0
        %v2939 = vadd.f32 0.0, %v2938
        %2940 = vmatmul.bf16.gmra.mxu0 %v2819
        %v2941 = vpop.f32.mrf.mxu0
        %v2942 = vadd.f32 0.0, %v2941
        %v2943 = vpop.f32.mrf.mxu0
        %v2944 = vadd.f32 0.0, %v2943
        %2945 = vmatmul.bf16.gmra.mxu0 %v2822
        %v2946 = vpop.f32.mrf.mxu0
        %v2947 = vadd.f32 0.0, %v2946
        %v2948 = vpop.f32.mrf.mxu0
        %v2949 = vadd.f32 0.0, %v2948
        %2950 = vmatmul.bf16.gmra.mxu0 %v2825
        %v2951 = vpop.f32.mrf.mxu0
        %v2952 = vadd.f32 0.0, %v2951
        %v2953 = vpop.f32.mrf.mxu0
        %v2954 = vadd.f32 0.0, %v2953
        %2955 = vmatmul.bf16.gmra.mxu0 %v2828
        %v2956 = vpop.f32.mrf.mxu0
        %v2957 = vadd.f32 0.0, %v2956
        %v2958 = vpop.f32.mrf.mxu0
        %v2959 = vadd.f32 0.0, %v2958
        %2960 = vmatmul.bf16.gmra.mxu0 %v2831
        %v2961 = vpop.f32.mrf.mxu0
        %v2962 = vadd.f32 0.0, %v2961
        %v2963 = vpop.f32.mrf.mxu0
        %v2964 = vadd.f32 0.0, %v2963
        %2965 = vmatmul.bf16.gmra.mxu0 %v2834
        %v2966 = vpop.f32.mrf.mxu0
        %v2967 = vadd.f32 0.0, %v2966
        %v2968 = vpop.f32.mrf.mxu0
        %v2969 = vadd.f32 0.0, %v2968
        %2970 = vmatmul.bf16.gmra.mxu0 %v2837
        %v2971 = vpop.f32.mrf.mxu0
        %v2972 = vadd.f32 0.0, %v2971
        %v2973 = vpop.f32.mrf.mxu0
        %v2974 = vadd.f32 0.0, %v2973
        %2975 = vmatmul.bf16.gmra.mxu0 %v2840
        %v2976 = vpop.f32.mrf.mxu0
        %v2977 = vadd.f32 0.0, %v2976
        %v2978 = vpop.f32.mrf.mxu0
        %v2979 = vadd.f32 0.0, %v2978
        %2980 = vmatmul.bf16.gmra.mxu0 %v2843
        %v2981 = vpop.f32.mrf.mxu0
        %v2982 = vadd.f32 0.0, %v2981
        %v2983 = vpop.f32.mrf.mxu0
        %v2984 = vadd.f32 0.0, %v2983
        %2985 = vmatmul.bf16.gmra.mxu0 %v2846
        %v2986 = vpop.f32.mrf.mxu0
        %v2987 = vadd.f32 0.0, %v2986
        %v2988 = vpop.f32.mrf.mxu0
        %v2989 = vadd.f32 0.0, %v2988
        %2990 = vmatmul.bf16.gmra.mxu0 %v2849
        %v2991 = vpop.f32.mrf.mxu0
        %v2992 = vadd.f32 0.0, %v2991
        %v2993 = vpop.f32.mrf.mxu0
        %v2994 = vadd.f32 0.0, %v2993
        %2995 = vmatmul.bf16.gmra.mxu0 %v2852
        %v2996 = vpop.f32.mrf.mxu0
        %v2997 = vadd.f32 0.0, %v2996
        %v2998 = vpop.f32.mrf.mxu0
        %v2999 = vadd.f32 0.0, %v2998
        %3000 = vmatmul.bf16.gmra.mxu0 %v2855
        %v3001 = vpop.f32.mrf.mxu0
        %v3002 = vadd.f32 0.0, %v3001
        %v3003 = vpop.f32.mrf.mxu0
        %v3004 = vadd.f32 0.0, %v3003
        %3005 = vmatmul.bf16.gmra.mxu0 %v2858
        %v3006 = vpop.f32.mrf.mxu0
        %v3007 = vadd.f32 0.0, %v3006
        %v3008 = vpop.f32.mrf.mxu0
        %v3009 = vadd.f32 0.0, %v3008
        %3010 = vmatmul.bf16.gmra.mxu0 %v2861
        %v3011 = vpop.f32.mrf.mxu0
        %v3012 = vadd.f32 0.0, %v3011
        %v3013 = vpop.f32.mrf.mxu0
        %v3014 = vadd.f32 0.0, %v3013
        %3015 = vmatmul.bf16.gmra.mxu0 %v2864
        %v3016 = vpop.f32.mrf.mxu0
        %v3017 = vadd.f32 0.0, %v3016
        %v3018 = vpop.f32.mrf.mxu0
        %v3019 = vadd.f32 0.0, %v3018
        %3020 = vmatmul.bf16.gmra.mxu0 %v2867
        %v3021 = vpop.f32.mrf.mxu0
        %v3022 = vadd.f32 0.0, %v3021
        %v3023 = vpop.f32.mrf.mxu0
        %v3024 = vadd.f32 0.0, %v3023
        %3025 = vmatmul.bf16.gmra.mxu0 %v2870
        %v3026 = vpop.f32.mrf.mxu0
        %v3027 = vadd.f32 0.0, %v3026
        %v3028 = vpop.f32.mrf.mxu0
        %v3029 = vadd.f32 0.0, %v3028
        %3030 = vmatmul.bf16.gmra.mxu0 %v2873
        %v3031 = vpop.f32.mrf.mxu0
        %v3032 = vadd.f32 0.0, %v3031
        %v3033 = vpop.f32.mrf.mxu0
        %v3034 = vadd.f32 0.0, %v3033
        %3035 = vmatmul.bf16.gmra.mxu0 %v2876
        %v3036 = vpop.f32.mrf.mxu0
        %v3037 = vadd.f32 0.0, %v3036
        %v3038 = vpop.f32.mrf.mxu0
        %v3039 = vadd.f32 0.0, %v3038
        %3040 = vmatmul.bf16.gmra.mxu0 %v2879
        %v3041 = vpop.f32.mrf.mxu0
        %v3042 = vadd.f32 0.0, %v3041
        %v3043 = vpop.f32.mrf.mxu0
        %v3044 = vadd.f32 0.0, %v3043
        %3045 = vmatmul.bf16.gmra.mxu0 %v2882
        %v3046 = vpop.f32.mrf.mxu0
        %v3047 = vadd.f32 0.0, %v3046
        %v3048 = vpop.f32.mrf.mxu0
        %v3049 = vadd.f32 0.0, %v3048
        %3050 = vmatmul.bf16.gmra.mxu0 %v2885
        %v3051 = vpop.f32.mrf.mxu0
        %v3052 = vadd.f32 0.0, %v3051
        %v3053 = vpop.f32.mrf.mxu0
        %v3054 = vadd.f32 0.0, %v3053
        %3055 = vdwg.mxu0
        %v3056 = vadd.f32 %v2490, %v2897
        %v3057 = vadd.f32 %v2491, %v2899
        %v3058 = vadd.f32 %v2492, %v2902
        %v3059 = vadd.f32 %v2493, %v2904
        %v3060 = vadd.f32 %v2494, %v2907
        %v3061 = vadd.f32 %v2495, %v2909
        %v3062 = vadd.f32 %v2496, %v2912
        %v3063 = vadd.f32 %v2497, %v2914
        %v3064 = vadd.f32 %v2498, %v2917
        %v3065 = vadd.f32 %v2499, %v2919
        %v3066 = vadd.f32 %v2500, %v2922
        %v3067 = vadd.f32 %v2501, %v2924
        %v3068 = vadd.f32 %v2502, %v2927
        %v3069 = vadd.f32 %v2503, %v2929
        %v3070 = vadd.f32 %v2504, %v2932
        %v3071 = vadd.f32 %v2505, %v2934
        %v3072 = vadd.f32 %v2506, %v2937
        %v3073 = vadd.f32 %v2507, %v2939
        %v3074 = vadd.f32 %v2508, %v2942
        %v3075 = vadd.f32 %v2509, %v2944
        %v3076 = vadd.f32 %v2510, %v2947
        %v3077 = vadd.f32 %v2511, %v2949
        %v3078 = vadd.f32 %v2512, %v2952
        %v3079 = vadd.f32 %v2513, %v2954
        %v3080 = vadd.f32 %v2514, %v2957
        %v3081 = vadd.f32 %v2515, %v2959
        %v3082 = vadd.f32 %v2516, %v2962
        %v3083 = vadd.f32 %v2517, %v2964
        %v3084 = vadd.f32 %v2518, %v2967
        %v3085 = vadd.f32 %v2519, %v2969
        %v3086 = vadd.f32 %v2520, %v2972
        %v3087 = vadd.f32 %v2521, %v2974
        %v3088 = vadd.f32 %v2522, %v2977
        %v3089 = vadd.f32 %v2523, %v2979
        %v3090 = vadd.f32 %v2524, %v2982
        %v3091 = vadd.f32 %v2525, %v2984
        %v3092 = vadd.f32 %v2526, %v2987
        %v3093 = vadd.f32 %v2527, %v2989
        %v3094 = vadd.f32 %v2528, %v2992
        %v3095 = vadd.f32 %v2529, %v2994
        %v3096 = vadd.f32 %v2530, %v2997
        %v3097 = vadd.f32 %v2531, %v2999
        %v3098 = vadd.f32 %v2532, %v3002
        %v3099 = vadd.f32 %v2533, %v3004
        %v3100 = vadd.f32 %v2534, %v3007
        %v3101 = vadd.f32 %v2535, %v3009
        %v3102 = vadd.f32 %v2536, %v3012
        %v3103 = vadd.f32 %v2537, %v3014
        %v3104 = vadd.f32 %v2538, %v3017
        %v3105 = vadd.f32 %v2539, %v3019
        %v3106 = vadd.f32 %v2540, %v3022
        %v3107 = vadd.f32 %v2541, %v3024
        %v3108 = vadd.f32 %v2542, %v3027
        %v3109 = vadd.f32 %v2543, %v3029
        %v3110 = vadd.f32 %v2544, %v3032
        %v3111 = vadd.f32 %v2545, %v3034
        %v3112 = vadd.f32 %v2546, %v3037
        %v3113 = vadd.f32 %v2547, %v3039
        %v3114 = vadd.f32 %v2548, %v3042
        %v3115 = vadd.f32 %v2549, %v3044
        %v3116 = vadd.f32 %v2550, %v3047
        %v3117 = vadd.f32 %v2551, %v3049
        %v3118 = vadd.f32 %v2552, %v3052
        %v3119 = vadd.f32 %v2553, %v3054
        %v3120 = vld [vmem:[%s2557] sm:$0xf]
        %v3121 = vld [vmem:[%s2557 + $0x4] sm:$0xf]
        %v3122 = vld [vmem:[%s2557 + $0x8] sm:$0xf]
        %v3123 = vld [vmem:[%s2557 + $0xc] sm:$0xf]
        %v3124 = vld [vmem:[%s2557 + $0x10] sm:$0x1]
        %v3125 = vld [vmem:[%s2557 + $0x14] sm:$0xf]
        %v3126 = vld [vmem:[%s2557 + $0x18] sm:$0xf]
        %v3127 = vld [vmem:[%s2557 + $0x1c] sm:$0xf]
        %v3128 = vld [vmem:[%s2557 + $0x20] sm:$0xf]
        %v3129 = vld [vmem:[%s2557 + $0x24] sm:$0x1]
        %v3130 = vld [vmem:[%s2557 + $0x28] sm:$0xf]
        %v3131 = vld [vmem:[%s2557 + $0x2c] sm:$0xf]
        %v3132 = vld [vmem:[%s2557 + $0x30] sm:$0xf]
        %v3133 = vld [vmem:[%s2557 + $0x34] sm:$0xf]
        %v3134 = vld [vmem:[%s2557 + $0x38] sm:$0x1]
        %v3135 = vld [vmem:[%s2557 + $0x3c] sm:$0xf]
        %v3136 = vld [vmem:[%s2557 + $0x40] sm:$0xf]
        %v3137 = vld [vmem:[%s2557 + $0x44] sm:$0xf]
        %v3138 = vld [vmem:[%s2557 + $0x48] sm:$0xf]
        %v3139 = vld [vmem:[%s2557 + $0x4c] sm:$0x1]
        %v3140 = vld [vmem:[%s2557 + $0x50] sm:$0xf]
        %v3141 = vld [vmem:[%s2557 + $0x54] sm:$0xf]
        %v3142 = vld [vmem:[%s2557 + $0x58] sm:$0xf]
        %v3143 = vld [vmem:[%s2557 + $0x5c] sm:$0xf]
        %v3144 = vld [vmem:[%s2557 + $0x60] sm:$0x1]
        %v3145 = vld [vmem:[%s2557 + $0x64] sm:$0xf]
        %v3146 = vld [vmem:[%s2557 + $0x68] sm:$0xf]
        %v3147 = vld [vmem:[%s2557 + $0x6c] sm:$0xf]
        %v3148 = vld [vmem:[%s2557 + $0x70] sm:$0xf]
        %v3149 = vld [vmem:[%s2557 + $0x74] sm:$0x1]
        %v3150 = vld [vmem:[%s2557 + $0x78] sm:$0xf]
        %v3151 = vld [vmem:[%s2557 + $0x7c] sm:$0xf]
        %v3152 = vld [vmem:[%s2557 + $0x80] sm:$0xf]
        %v3153 = vld [vmem:[%s2557 + $0x84] sm:$0xf]
        %v3154 = vld [vmem:[%s2557 + $0x88] sm:$0x1]
        %v3155 = vld [vmem:[%s2557 + $0x8c] sm:$0xf]
        %v3156 = vld [vmem:[%s2557 + $0x90] sm:$0xf]
        %v3157 = vld [vmem:[%s2557 + $0x94] sm:$0xf]
        %v3158 = vld [vmem:[%s2557 + $0x98] sm:$0xf]
        %v3159 = vld [vmem:[%s2557 + $0x9c] sm:$0x1]
        %v3160 = vld [vmem:[%s2557 + $0xa0] sm:$0xf]
        %v3161 = vld [vmem:[%s2557 + $0xa4] sm:$0xf]
        %v3162 = vld [vmem:[%s2557 + $0xa8] sm:$0xf]
        %v3163 = vld [vmem:[%s2557 + $0xac] sm:$0xf]
        %v3164 = vld [vmem:[%s2557 + $0xb0] sm:$0x1]
        %v3165 = vld [vmem:[%s2557 + $0xb4] sm:$0xf]
        %v3166 = vld [vmem:[%s2557 + $0xb8] sm:$0xf]
        %v3167 = vld [vmem:[%s2557 + $0xbc] sm:$0xf]
        %v3168 = vld [vmem:[%s2557 + $0xc0] sm:$0xf]
        %v3169 = vld [vmem:[%s2557 + $0xc4] sm:$0x1]
        %v3170 = vld [vmem:[%s2557 + $0xc8] sm:$0xf]
        %v3171 = vld [vmem:[%s2557 + $0xcc] sm:$0xf]
        %v3172 = vld [vmem:[%s2557 + $0xd0] sm:$0xf]
        %v3173 = vld [vmem:[%s2557 + $0xd4] sm:$0xf]
        %v3174 = vld [vmem:[%s2557 + $0xd8] sm:$0x1]
        %v3175 = vld [vmem:[%s2557 + $0xdc] sm:$0xf]
        %v3176 = vld [vmem:[%s2557 + $0xe0] sm:$0xf]
        %v3177 = vld [vmem:[%s2557 + $0xe4] sm:$0xf]
        %v3178 = vld [vmem:[%s2557 + $0xe8] sm:$0xf]
        %v3179 = vld [vmem:[%s2557 + $0xec] sm:$0x1]
        %v3180 = vld [vmem:[%s2557 + $0xf0] sm:$0xf]
        %v3181 = vld [vmem:[%s2557 + $0xf4] sm:$0xf]
        %v3182 = vld [vmem:[%s2557 + $0xf8] sm:$0xf]
        %v3183 = vld [vmem:[%s2557 + $0xfc] sm:$0xf]
        %v3184 = vld [vmem:[%s2557 + $0x100] sm:$0x1]
        %v3185 = vld [vmem:[%s2557 + $0x104] sm:$0xf]
        %v3186 = vld [vmem:[%s2557 + $0x108] sm:$0xf]
        %v3187 = vld [vmem:[%s2557 + $0x10c] sm:$0xf]
        %v3188 = vld [vmem:[%s2557 + $0x110] sm:$0xf]
        %v3189 = vld [vmem:[%s2557 + $0x114] sm:$0x1]
        %v3190 = vld [vmem:[%s2557 + $0x118] sm:$0xf]
        %v3191 = vld [vmem:[%s2557 + $0x11c] sm:$0xf]
        %v3192 = vld [vmem:[%s2557 + $0x120] sm:$0xf]
        %v3193 = vld [vmem:[%s2557 + $0x124] sm:$0xf]
        %v3194 = vld [vmem:[%s2557 + $0x128] sm:$0x1]
        %v3195 = vld [vmem:[%s2557 + $0x12c] sm:$0xf]
        %v3196 = vld [vmem:[%s2557 + $0x130] sm:$0xf]
        %v3197 = vld [vmem:[%s2557 + $0x134] sm:$0xf]
        %v3198 = vld [vmem:[%s2557 + $0x138] sm:$0xf]
        %v3199 = vld [vmem:[%s2557 + $0x13c] sm:$0x1]
        %v3201 = vshrl.u32 %v3120, 16
        %v3203 = vrot.slane %v3201, 4
        %v3204 = vshll.u32 %v3120, 16
        %v3206 = vrot.slane %v3204, 5
        %v3207 = vor.u32 %v3203, %v3206
        %v3208 = vrot.slane %v3207, 4
        %v3210 = vshll.u32 %v3121, 16
        %v3212 = vrot.slane %v3210, 5
        %v3213 = vsel %vm354, %v3208, %v3212
        %v3214 = vshrl.u32 %v3121, 16
        %v3216 = vrot.slane %v3214, 4
        %v3217 = vor.u32 %v3216, %v3212
        %v3218 = vrot.slane %v3217, 4
        %v3220 = vshll.u32 %v3122, 16
        %v3222 = vrot.slane %v3220, 5
        %v3223 = vsel %vm354, %v3218, %v3222
        %v3224 = vshrl.u32 %v3122, 16
        %v3226 = vrot.slane %v3224, 4
        %v3227 = vor.u32 %v3226, %v3222
        %v3228 = vrot.slane %v3227, 4
        %v3230 = vshll.u32 %v3123, 16
        %v3232 = vrot.slane %v3230, 5
        %v3233 = vsel %vm354, %v3228, %v3232
        %v3234 = vshrl.u32 %v3123, 16
        %v3236 = vrot.slane %v3234, 4
        %v3237 = vor.u32 %v3236, %v3232
        %v3238 = vrot.slane %v3237, 4
        %v3240 = vshll.u32 %v3124, 16
        %v3242 = vrot.slane %v3240, 5
        %v3243 = vsel %vm354, %v3238, %v3242
        %v3245 = vshrl.u32 %v3125, 16
        %v3247 = vrot.slane %v3245, 4
        %v3248 = vshll.u32 %v3125, 16
        %v3250 = vrot.slane %v3248, 5
        %v3251 = vor.u32 %v3247, %v3250
        %v3252 = vrot.slane %v3251, 4
        %v3254 = vshll.u32 %v3126, 16
        %v3256 = vrot.slane %v3254, 5
        %v3257 = vsel %vm354, %v3252, %v3256
        %v3258 = vshrl.u32 %v3126, 16
        %v3260 = vrot.slane %v3258, 4
        %v3261 = vor.u32 %v3260, %v3256
        %v3262 = vrot.slane %v3261, 4
        %v3264 = vshll.u32 %v3127, 16
        %v3266 = vrot.slane %v3264, 5
        %v3267 = vsel %vm354, %v3262, %v3266
        %v3268 = vshrl.u32 %v3127, 16
        %v3270 = vrot.slane %v3268, 4
        %v3271 = vor.u32 %v3270, %v3266
        %v3272 = vrot.slane %v3271, 4
        %v3274 = vshll.u32 %v3128, 16
        %v3276 = vrot.slane %v3274, 5
        %v3277 = vsel %vm354, %v3272, %v3276
        %v3278 = vshrl.u32 %v3128, 16
        %v3280 = vrot.slane %v3278, 4
        %v3281 = vor.u32 %v3280, %v3276
        %v3282 = vrot.slane %v3281, 4
        %v3284 = vshll.u32 %v3129, 16
        %v3286 = vrot.slane %v3284, 5
        %v3287 = vsel %vm354, %v3282, %v3286
        %v3289 = vshrl.u32 %v3130, 16
        %v3291 = vrot.slane %v3289, 4
        %v3292 = vshll.u32 %v3130, 16
        %v3294 = vrot.slane %v3292, 5
        %v3295 = vor.u32 %v3291, %v3294
        %v3296 = vrot.slane %v3295, 4
        %v3298 = vshll.u32 %v3131, 16
        %v3300 = vrot.slane %v3298, 5
        %v3301 = vsel %vm354, %v3296, %v3300
        %v3302 = vshrl.u32 %v3131, 16
        %v3304 = vrot.slane %v3302, 4
        %v3305 = vor.u32 %v3304, %v3300
        %v3306 = vrot.slane %v3305, 4
        %v3308 = vshll.u32 %v3132, 16
        %v3310 = vrot.slane %v3308, 5
        %v3311 = vsel %vm354, %v3306, %v3310
        %v3312 = vshrl.u32 %v3132, 16
        %v3314 = vrot.slane %v3312, 4
        %v3315 = vor.u32 %v3314, %v3310
        %v3316 = vrot.slane %v3315, 4
        %v3318 = vshll.u32 %v3133, 16
        %v3320 = vrot.slane %v3318, 5
        %v3321 = vsel %vm354, %v3316, %v3320
        %v3322 = vshrl.u32 %v3133, 16
        %v3324 = vrot.slane %v3322, 4
        %v3325 = vor.u32 %v3324, %v3320
        %v3326 = vrot.slane %v3325, 4
        %v3328 = vshll.u32 %v3134, 16
        %v3330 = vrot.slane %v3328, 5
        %v3331 = vsel %vm354, %v3326, %v3330
        %v3333 = vshrl.u32 %v3135, 16
        %v3335 = vrot.slane %v3333, 4
        %v3336 = vshll.u32 %v3135, 16
        %v3338 = vrot.slane %v3336, 5
        %v3339 = vor.u32 %v3335, %v3338
        %v3340 = vrot.slane %v3339, 4
        %v3342 = vshll.u32 %v3136, 16
        %v3344 = vrot.slane %v3342, 5
        %v3345 = vsel %vm354, %v3340, %v3344
        %v3346 = vshrl.u32 %v3136, 16
        %v3348 = vrot.slane %v3346, 4
        %v3349 = vor.u32 %v3348, %v3344
        %v3350 = vrot.slane %v3349, 4
        %v3352 = vshll.u32 %v3137, 16
        %v3354 = vrot.slane %v3352, 5
        %v3355 = vsel %vm354, %v3350, %v3354
        %v3356 = vshrl.u32 %v3137, 16
        %v3358 = vrot.slane %v3356, 4
        %v3359 = vor.u32 %v3358, %v3354
        %v3360 = vrot.slane %v3359, 4
        %v3362 = vshll.u32 %v3138, 16
        %v3364 = vrot.slane %v3362, 5
        %v3365 = vsel %vm354, %v3360, %v3364
        %v3366 = vshrl.u32 %v3138, 16
        %v3368 = vrot.slane %v3366, 4
        %v3369 = vor.u32 %v3368, %v3364
        %v3370 = vrot.slane %v3369, 4
        %v3372 = vshll.u32 %v3139, 16
        %v3374 = vrot.slane %v3372, 5
        %v3375 = vsel %vm354, %v3370, %v3374
        %v3377 = vshrl.u32 %v3140, 16
        %v3379 = vrot.slane %v3377, 4
        %v3380 = vshll.u32 %v3140, 16
        %v3382 = vrot.slane %v3380, 5
        %v3383 = vor.u32 %v3379, %v3382
        %v3384 = vrot.slane %v3383, 4
        %v3386 = vshll.u32 %v3141, 16
        %v3388 = vrot.slane %v3386, 5
        %v3389 = vsel %vm354, %v3384, %v3388
        %v3390 = vshrl.u32 %v3141, 16
        %v3392 = vrot.slane %v3390, 4
        %v3393 = vor.u32 %v3392, %v3388
        %v3394 = vrot.slane %v3393, 4
        %v3396 = vshll.u32 %v3142, 16
        %v3398 = vrot.slane %v3396, 5
        %v3399 = vsel %vm354, %v3394, %v3398
        %v3400 = vshrl.u32 %v3142, 16
        %v3402 = vrot.slane %v3400, 4
        %v3403 = vor.u32 %v3402, %v3398
        %v3404 = vrot.slane %v3403, 4
        %v3406 = vshll.u32 %v3143, 16
        %v3408 = vrot.slane %v3406, 5
        %v3409 = vsel %vm354, %v3404, %v3408
        %v3410 = vshrl.u32 %v3143, 16
        %v3412 = vrot.slane %v3410, 4
        %v3413 = vor.u32 %v3412, %v3408
        %v3414 = vrot.slane %v3413, 4
        %v3416 = vshll.u32 %v3144, 16
        %v3418 = vrot.slane %v3416, 5
        %v3419 = vsel %vm354, %v3414, %v3418
        %v3421 = vshrl.u32 %v3145, 16
        %v3423 = vrot.slane %v3421, 4
        %v3424 = vshll.u32 %v3145, 16
        %v3426 = vrot.slane %v3424, 5
        %v3427 = vor.u32 %v3423, %v3426
        %v3428 = vrot.slane %v3427, 4
        %v3430 = vshll.u32 %v3146, 16
        %v3432 = vrot.slane %v3430, 5
        %v3433 = vsel %vm354, %v3428, %v3432
        %v3434 = vshrl.u32 %v3146, 16
        %v3436 = vrot.slane %v3434, 4
        %v3437 = vor.u32 %v3436, %v3432
        %v3438 = vrot.slane %v3437, 4
        %v3440 = vshll.u32 %v3147, 16
        %v3442 = vrot.slane %v3440, 5
        %v3443 = vsel %vm354, %v3438, %v3442
        %v3444 = vshrl.u32 %v3147, 16
        %v3446 = vrot.slane %v3444, 4
        %v3447 = vor.u32 %v3446, %v3442
        %v3448 = vrot.slane %v3447, 4
        %v3450 = vshll.u32 %v3148, 16
        %v3452 = vrot.slane %v3450, 5
        %v3453 = vsel %vm354, %v3448, %v3452
        %v3454 = vshrl.u32 %v3148, 16
        %v3456 = vrot.slane %v3454, 4
        %v3457 = vor.u32 %v3456, %v3452
        %v3458 = vrot.slane %v3457, 4
        %v3460 = vshll.u32 %v3149, 16
        %v3462 = vrot.slane %v3460, 5
        %v3463 = vsel %vm354, %v3458, %v3462
        %v3465 = vshrl.u32 %v3150, 16
        %v3467 = vrot.slane %v3465, 4
        %v3468 = vshll.u32 %v3150, 16
        %v3470 = vrot.slane %v3468, 5
        %v3471 = vor.u32 %v3467, %v3470
        %v3472 = vrot.slane %v3471, 4
        %v3474 = vshll.u32 %v3151, 16
        %v3476 = vrot.slane %v3474, 5
        %v3477 = vsel %vm354, %v3472, %v3476
        %v3478 = vshrl.u32 %v3151, 16
        %v3480 = vrot.slane %v3478, 4
        %v3481 = vor.u32 %v3480, %v3476
        %v3482 = vrot.slane %v3481, 4
        %v3484 = vshll.u32 %v3152, 16
        %v3486 = vrot.slane %v3484, 5
        %v3487 = vsel %vm354, %v3482, %v3486
        %v3488 = vshrl.u32 %v3152, 16
        %v3490 = vrot.slane %v3488, 4
        %v3491 = vor.u32 %v3490, %v3486
        %v3492 = vrot.slane %v3491, 4
        %v3494 = vshll.u32 %v3153, 16
        %v3496 = vrot.slane %v3494, 5
        %v3497 = vsel %vm354, %v3492, %v3496
        %v3498 = vshrl.u32 %v3153, 16
        %v3500 = vrot.slane %v3498, 4
        %v3501 = vor.u32 %v3500, %v3496
        %v3502 = vrot.slane %v3501, 4
        %v3504 = vshll.u32 %v3154, 16
        %v3506 = vrot.slane %v3504, 5
        %v3507 = vsel %vm354, %v3502, %v3506
        %v3509 = vshrl.u32 %v3155, 16
        %v3511 = vrot.slane %v3509, 4
        %v3512 = vshll.u32 %v3155, 16
        %v3514 = vrot.slane %v3512, 5
        %v3515 = vor.u32 %v3511, %v3514
        %v3516 = vrot.slane %v3515, 4
        %v3518 = vshll.u32 %v3156, 16
        %v3520 = vrot.slane %v3518, 5
        %v3521 = vsel %vm354, %v3516, %v3520
        %v3522 = vshrl.u32 %v3156, 16
        %v3524 = vrot.slane %v3522, 4
        %v3525 = vor.u32 %v3524, %v3520
        %v3526 = vrot.slane %v3525, 4
        %v3528 = vshll.u32 %v3157, 16
        %v3530 = vrot.slane %v3528, 5
        %v3531 = vsel %vm354, %v3526, %v3530
        %v3532 = vshrl.u32 %v3157, 16
        %v3534 = vrot.slane %v3532, 4
        %v3535 = vor.u32 %v3534, %v3530
        %v3536 = vrot.slane %v3535, 4
        %v3538 = vshll.u32 %v3158, 16
        %v3540 = vrot.slane %v3538, 5
        %v3541 = vsel %vm354, %v3536, %v3540
        %v3542 = vshrl.u32 %v3158, 16
        %v3544 = vrot.slane %v3542, 4
        %v3545 = vor.u32 %v3544, %v3540
        %v3546 = vrot.slane %v3545, 4
        %v3548 = vshll.u32 %v3159, 16
        %v3550 = vrot.slane %v3548, 5
        %v3551 = vsel %vm354, %v3546, %v3550
        %v3553 = vshrl.u32 %v3160, 16
        %v3555 = vrot.slane %v3553, 4
        %v3556 = vshll.u32 %v3160, 16
        %v3558 = vrot.slane %v3556, 5
        %v3559 = vor.u32 %v3555, %v3558
        %v3560 = vrot.slane %v3559, 4
        %v3562 = vshll.u32 %v3161, 16
        %v3564 = vrot.slane %v3562, 5
        %v3565 = vsel %vm354, %v3560, %v3564
        %v3566 = vshrl.u32 %v3161, 16
        %v3568 = vrot.slane %v3566, 4
        %v3569 = vor.u32 %v3568, %v3564
        %v3570 = vrot.slane %v3569, 4
        %v3572 = vshll.u32 %v3162, 16
        %v3574 = vrot.slane %v3572, 5
        %v3575 = vsel %vm354, %v3570, %v3574
        %v3576 = vshrl.u32 %v3162, 16
        %v3578 = vrot.slane %v3576, 4
        %v3579 = vor.u32 %v3578, %v3574
        %v3580 = vrot.slane %v3579, 4
        %v3582 = vshll.u32 %v3163, 16
        %v3584 = vrot.slane %v3582, 5
        %v3585 = vsel %vm354, %v3580, %v3584
        %v3586 = vshrl.u32 %v3163, 16
        %v3588 = vrot.slane %v3586, 4
        %v3589 = vor.u32 %v3588, %v3584
        %v3590 = vrot.slane %v3589, 4
        %v3592 = vshll.u32 %v3164, 16
        %v3594 = vrot.slane %v3592, 5
        %v3595 = vsel %vm354, %v3590, %v3594
        %v3597 = vshrl.u32 %v3165, 16
        %v3599 = vrot.slane %v3597, 4
        %v3600 = vshll.u32 %v3165, 16
        %v3602 = vrot.slane %v3600, 5
        %v3603 = vor.u32 %v3599, %v3602
        %v3604 = vrot.slane %v3603, 4
        %v3606 = vshll.u32 %v3166, 16
        %v3608 = vrot.slane %v3606, 5
        %v3609 = vsel %vm354, %v3604, %v3608
        %v3610 = vshrl.u32 %v3166, 16
        %v3612 = vrot.slane %v3610, 4
        %v3613 = vor.u32 %v3612, %v3608
        %v3614 = vrot.slane %v3613, 4
        %v3616 = vshll.u32 %v3167, 16
        %v3618 = vrot.slane %v3616, 5
        %v3619 = vsel %vm354, %v3614, %v3618
        %v3620 = vshrl.u32 %v3167, 16
        %v3622 = vrot.slane %v3620, 4
        %v3623 = vor.u32 %v3622, %v3618
        %v3624 = vrot.slane %v3623, 4
        %v3626 = vshll.u32 %v3168, 16
        %v3628 = vrot.slane %v3626, 5
        %v3629 = vsel %vm354, %v3624, %v3628
        %v3630 = vshrl.u32 %v3168, 16
        %v3632 = vrot.slane %v3630, 4
        %v3633 = vor.u32 %v3632, %v3628
        %v3634 = vrot.slane %v3633, 4
        %v3636 = vshll.u32 %v3169, 16
        %v3638 = vrot.slane %v3636, 5
        %v3639 = vsel %vm354, %v3634, %v3638
        %v3641 = vshrl.u32 %v3170, 16
        %v3643 = vrot.slane %v3641, 4
        %v3644 = vshll.u32 %v3170, 16
        %v3646 = vrot.slane %v3644, 5
        %v3647 = vor.u32 %v3643, %v3646
        %v3648 = vrot.slane %v3647, 4
        %v3650 = vshll.u32 %v3171, 16
        %v3652 = vrot.slane %v3650, 5
        %v3653 = vsel %vm354, %v3648, %v3652
        %v3654 = vshrl.u32 %v3171, 16
        %v3656 = vrot.slane %v3654, 4
        %v3657 = vor.u32 %v3656, %v3652
        %v3658 = vrot.slane %v3657, 4
        %v3660 = vshll.u32 %v3172, 16
        %v3662 = vrot.slane %v3660, 5
        %v3663 = vsel %vm354, %v3658, %v3662
        %v3664 = vshrl.u32 %v3172, 16
        %v3666 = vrot.slane %v3664, 4
        %v3667 = vor.u32 %v3666, %v3662
        %v3668 = vrot.slane %v3667, 4
        %v3670 = vshll.u32 %v3173, 16
        %v3672 = vrot.slane %v3670, 5
        %v3673 = vsel %vm354, %v3668, %v3672
        %v3674 = vshrl.u32 %v3173, 16
        %v3676 = vrot.slane %v3674, 4
        %v3677 = vor.u32 %v3676, %v3672
        %v3678 = vrot.slane %v3677, 4
        %v3680 = vshll.u32 %v3174, 16
        %v3682 = vrot.slane %v3680, 5
        %v3683 = vsel %vm354, %v3678, %v3682
        %v3685 = vshrl.u32 %v3175, 16
        %v3687 = vrot.slane %v3685, 4
        %v3688 = vshll.u32 %v3175, 16
        %v3690 = vrot.slane %v3688, 5
        %v3691 = vor.u32 %v3687, %v3690
        %v3692 = vrot.slane %v3691, 4
        %v3694 = vshll.u32 %v3176, 16
        %v3696 = vrot.slane %v3694, 5
        %v3697 = vsel %vm354, %v3692, %v3696
        %v3698 = vshrl.u32 %v3176, 16
        %v3700 = vrot.slane %v3698, 4
        %v3701 = vor.u32 %v3700, %v3696
        %v3702 = vrot.slane %v3701, 4
        %v3704 = vshll.u32 %v3177, 16
        %v3706 = vrot.slane %v3704, 5
        %v3707 = vsel %vm354, %v3702, %v3706
        %v3708 = vshrl.u32 %v3177, 16
        %v3710 = vrot.slane %v3708, 4
        %v3711 = vor.u32 %v3710, %v3706
        %v3712 = vrot.slane %v3711, 4
        %v3714 = vshll.u32 %v3178, 16
        %v3716 = vrot.slane %v3714, 5
        %v3717 = vsel %vm354, %v3712, %v3716
        %v3718 = vshrl.u32 %v3178, 16
        %v3720 = vrot.slane %v3718, 4
        %v3721 = vor.u32 %v3720, %v3716
        %v3722 = vrot.slane %v3721, 4
        %v3724 = vshll.u32 %v3179, 16
        %v3726 = vrot.slane %v3724, 5
        %v3727 = vsel %vm354, %v3722, %v3726
        %v3729 = vshrl.u32 %v3180, 16
        %v3731 = vrot.slane %v3729, 4
        %v3732 = vshll.u32 %v3180, 16
        %v3734 = vrot.slane %v3732, 5
        %v3735 = vor.u32 %v3731, %v3734
        %v3736 = vrot.slane %v3735, 4
        %v3738 = vshll.u32 %v3181, 16
        %v3740 = vrot.slane %v3738, 5
        %v3741 = vsel %vm354, %v3736, %v3740
        %v3742 = vshrl.u32 %v3181, 16
        %v3744 = vrot.slane %v3742, 4
        %v3745 = vor.u32 %v3744, %v3740
        %v3746 = vrot.slane %v3745, 4
        %v3748 = vshll.u32 %v3182, 16
        %v3750 = vrot.slane %v3748, 5
        %v3751 = vsel %vm354, %v3746, %v3750
        %v3752 = vshrl.u32 %v3182, 16
        %v3754 = vrot.slane %v3752, 4
        %v3755 = vor.u32 %v3754, %v3750
        %v3756 = vrot.slane %v3755, 4
        %v3758 = vshll.u32 %v3183, 16
        %v3760 = vrot.slane %v3758, 5
        %v3761 = vsel %vm354, %v3756, %v3760
        %v3762 = vshrl.u32 %v3183, 16
        %v3764 = vrot.slane %v3762, 4
        %v3765 = vor.u32 %v3764, %v3760
        %v3766 = vrot.slane %v3765, 4
        %v3768 = vshll.u32 %v3184, 16
        %v3770 = vrot.slane %v3768, 5
        %v3771 = vsel %vm354, %v3766, %v3770
        %v3773 = vshrl.u32 %v3185, 16
        %v3775 = vrot.slane %v3773, 4
        %v3776 = vshll.u32 %v3185, 16
        %v3778 = vrot.slane %v3776, 5
        %v3779 = vor.u32 %v3775, %v3778
        %v3780 = vrot.slane %v3779, 4
        %v3782 = vshll.u32 %v3186, 16
        %v3784 = vrot.slane %v3782, 5
        %v3785 = vsel %vm354, %v3780, %v3784
        %v3786 = vshrl.u32 %v3186, 16
        %v3788 = vrot.slane %v3786, 4
        %v3789 = vor.u32 %v3788, %v3784
        %v3790 = vrot.slane %v3789, 4
        %v3792 = vshll.u32 %v3187, 16
        %v3794 = vrot.slane %v3792, 5
        %v3795 = vsel %vm354, %v3790, %v3794
        %v3796 = vshrl.u32 %v3187, 16
        %v3798 = vrot.slane %v3796, 4
        %v3799 = vor.u32 %v3798, %v3794
        %v3800 = vrot.slane %v3799, 4
        %v3802 = vshll.u32 %v3188, 16
        %v3804 = vrot.slane %v3802, 5
        %v3805 = vsel %vm354, %v3800, %v3804
        %v3806 = vshrl.u32 %v3188, 16
        %v3808 = vrot.slane %v3806, 4
        %v3809 = vor.u32 %v3808, %v3804
        %v3810 = vrot.slane %v3809, 4
        %v3812 = vshll.u32 %v3189, 16
        %v3814 = vrot.slane %v3812, 5
        %v3815 = vsel %vm354, %v3810, %v3814
        %v3817 = vshrl.u32 %v3190, 16
        %v3819 = vrot.slane %v3817, 4
        %v3820 = vshll.u32 %v3190, 16
        %v3822 = vrot.slane %v3820, 5
        %v3823 = vor.u32 %v3819, %v3822
        %v3824 = vrot.slane %v3823, 4
        %v3826 = vshll.u32 %v3191, 16
        %v3828 = vrot.slane %v3826, 5
        %v3829 = vsel %vm354, %v3824, %v3828
        %v3830 = vshrl.u32 %v3191, 16
        %v3832 = vrot.slane %v3830, 4
        %v3833 = vor.u32 %v3832, %v3828
        %v3834 = vrot.slane %v3833, 4
        %v3836 = vshll.u32 %v3192, 16
        %v3838 = vrot.slane %v3836, 5
        %v3839 = vsel %vm354, %v3834, %v3838
        %v3840 = vshrl.u32 %v3192, 16
        %v3842 = vrot.slane %v3840, 4
        %v3843 = vor.u32 %v3842, %v3838
        %v3844 = vrot.slane %v3843, 4
        %v3846 = vshll.u32 %v3193, 16
        %v3848 = vrot.slane %v3846, 5
        %v3849 = vsel %vm354, %v3844, %v3848
        %v3850 = vshrl.u32 %v3193, 16
        %v3852 = vrot.slane %v3850, 4
        %v3853 = vor.u32 %v3852, %v3848
        %v3854 = vrot.slane %v3853, 4
        %v3856 = vshll.u32 %v3194, 16
        %v3858 = vrot.slane %v3856, 5
        %v3859 = vsel %vm354, %v3854, %v3858
        %v3861 = vshrl.u32 %v3195, 16
        %v3863 = vrot.slane %v3861, 4
        %v3864 = vshll.u32 %v3195, 16
        %v3866 = vrot.slane %v3864, 5
        %v3867 = vor.u32 %v3863, %v3866
        %v3868 = vrot.slane %v3867, 4
        %v3870 = vshll.u32 %v3196, 16
        %v3872 = vrot.slane %v3870, 5
        %v3873 = vsel %vm354, %v3868, %v3872
        %v3874 = vshrl.u32 %v3196, 16
        %v3876 = vrot.slane %v3874, 4
        %v3877 = vor.u32 %v3876, %v3872
        %v3878 = vrot.slane %v3877, 4
        %v3880 = vshll.u32 %v3197, 16
        %v3882 = vrot.slane %v3880, 5
        %v3883 = vsel %vm354, %v3878, %v3882
        %v3884 = vshrl.u32 %v3197, 16
        %v3886 = vrot.slane %v3884, 4
        %v3887 = vor.u32 %v3886, %v3882
        %v3888 = vrot.slane %v3887, 4
        %v3890 = vshll.u32 %v3198, 16
        %v3892 = vrot.slane %v3890, 5
        %v3893 = vsel %vm354, %v3888, %v3892
        %v3894 = vshrl.u32 %v3198, 16
        %v3896 = vrot.slane %v3894, 4
        %v3897 = vor.u32 %v3896, %v3892
        %v3898 = vrot.slane %v3897, 4
        %v3900 = vshll.u32 %v3199, 16
        %v3902 = vrot.slane %v3900, 5
        %v3903 = vsel %vm354, %v3898, %v3902
        %s3904 = scalar_lea.vmem %s1, 32
        %v3905 = vld [vmem:[%s3904] sm:$0xf]
        %v3906 = vld [vmem:[%s3904 + $0x4] sm:$0xf]
        %v3907 = vunpack.c.l.b16 %v3213
        %v3908 = vunpack.c.l.b16 %v3223
        %v3909 = vunpack.c.l.b16 %v3233
        %v3910 = vunpack.c.l.b16 %v3243
        %v3911 = vunpack.c.l.b16 %v3257
        %v3912 = vunpack.c.l.b16 %v3267
        %v3913 = vunpack.c.l.b16 %v3277
        %v3914 = vunpack.c.l.b16 %v3287
        %v3915 = vunpack.c.l.b16 %v3301
        %v3916 = vunpack.c.l.b16 %v3311
        %v3917 = vunpack.c.l.b16 %v3321
        %v3918 = vunpack.c.l.b16 %v3331
        %v3919 = vunpack.c.l.b16 %v3345
        %v3920 = vunpack.c.l.b16 %v3355
        %v3921 = vunpack.c.l.b16 %v3365
        %v3922 = vunpack.c.l.b16 %v3375
        %v3923 = vunpack.c.l.b16 %v3389
        %v3924 = vunpack.c.l.b16 %v3399
        %v3925 = vunpack.c.l.b16 %v3409
        %v3926 = vunpack.c.l.b16 %v3419
        %v3927 = vunpack.c.l.b16 %v3433
        %v3928 = vunpack.c.l.b16 %v3443
        %v3929 = vunpack.c.l.b16 %v3453
        %v3930 = vunpack.c.l.b16 %v3463
        %v3931 = vunpack.c.l.b16 %v3477
        %v3932 = vunpack.c.l.b16 %v3487
        %v3933 = vunpack.c.l.b16 %v3497
        %v3934 = vunpack.c.l.b16 %v3507
        %v3935 = vunpack.c.l.b16 %v3521
        %v3936 = vunpack.c.l.b16 %v3531
        %v3937 = vunpack.c.l.b16 %v3541
        %v3938 = vunpack.c.l.b16 %v3551
        %v3939 = vunpack.c.l.b16 %v3565
        %v3940 = vunpack.c.l.b16 %v3575
        %v3941 = vunpack.c.l.b16 %v3585
        %v3942 = vunpack.c.l.b16 %v3595
        %v3943 = vunpack.c.l.b16 %v3609
        %v3944 = vunpack.c.l.b16 %v3619
        %v3945 = vunpack.c.l.b16 %v3629
        %v3946 = vunpack.c.l.b16 %v3639
        %v3947 = vunpack.c.l.b16 %v3653
        %v3948 = vunpack.c.l.b16 %v3663
        %v3949 = vunpack.c.l.b16 %v3673
        %v3950 = vunpack.c.l.b16 %v3683
        %v3951 = vunpack.c.l.b16 %v3697
        %v3952 = vunpack.c.l.b16 %v3707
        %v3953 = vunpack.c.l.b16 %v3717
        %v3954 = vunpack.c.l.b16 %v3727
        %v3955 = vunpack.c.l.b16 %v3741
        %v3956 = vunpack.c.l.b16 %v3751
        %v3957 = vunpack.c.l.b16 %v3761
        %v3958 = vunpack.c.l.b16 %v3771
        %v3959 = vunpack.c.l.b16 %v3785
        %v3960 = vunpack.c.l.b16 %v3795
        %v3961 = vunpack.c.l.b16 %v3805
        %v3962 = vunpack.c.l.b16 %v3815
        %v3963 = vunpack.c.l.b16 %v3829
        %v3964 = vunpack.c.l.b16 %v3839
        %v3965 = vunpack.c.l.b16 %v3849
        %v3966 = vunpack.c.l.b16 %v3859
        %v3967 = vunpack.c.l.b16 %v3873
        %v3968 = vunpack.c.l.b16 %v3883
        %v3969 = vunpack.c.l.b16 %v3893
        %v3970 = vunpack.c.l.b16 %v3903
        %v3971 = vpack.c.b16 %v3908, %v3907
        %v3972 = vpack.c.b16 %v3910, %v3909
        %v3973 = vpack.c.b16 %v3912, %v3911
        %v3974 = vpack.c.b16 %v3914, %v3913
        %v3975 = vpack.c.b16 %v3916, %v3915
        %v3976 = vpack.c.b16 %v3918, %v3917
        %v3977 = vpack.c.b16 %v3920, %v3919
        %v3978 = vpack.c.b16 %v3922, %v3921
        %v3979 = vpack.c.b16 %v3924, %v3923
        %v3980 = vpack.c.b16 %v3926, %v3925
        %v3981 = vpack.c.b16 %v3928, %v3927
        %v3982 = vpack.c.b16 %v3930, %v3929
        %v3983 = vpack.c.b16 %v3932, %v3931
        %v3984 = vpack.c.b16 %v3934, %v3933
        %v3985 = vpack.c.b16 %v3936, %v3935
        %v3986 = vpack.c.b16 %v3938, %v3937
        %v3987 = vpack.c.b16 %v3940, %v3939
        %v3988 = vpack.c.b16 %v3942, %v3941
        %v3989 = vpack.c.b16 %v3944, %v3943
        %v3990 = vpack.c.b16 %v3946, %v3945
        %v3991 = vpack.c.b16 %v3948, %v3947
        %v3992 = vpack.c.b16 %v3950, %v3949
        %v3993 = vpack.c.b16 %v3952, %v3951
        %v3994 = vpack.c.b16 %v3954, %v3953
        %v3995 = vpack.c.b16 %v3956, %v3955
        %v3996 = vpack.c.b16 %v3958, %v3957
        %v3997 = vpack.c.b16 %v3960, %v3959
        %v3998 = vpack.c.b16 %v3962, %v3961
        %v3999 = vpack.c.b16 %v3964, %v3963
        %v4000 = vpack.c.b16 %v3966, %v3965
        %v4001 = vpack.c.b16 %v3968, %v3967
        %v4002 = vpack.c.b16 %v3970, %v3969
        %v4005 = vunpack.c.l.b16 %v3905
        %v4006 = vunpack.c.l.b16 %v3906
        %v4007 = vpack.c.b16 %v4006, %v4005
        %v4010 = vsel %vm1164, %v3971, 0
        %v4013 = vsel %vm1164, %v3972, 0
        %v4016 = vsel %vm1164, %v3973, 0
        %v4019 = vsel %vm1164, %v3974, 0
        %v4022 = vsel %vm1164, %v3975, 0
        %v4025 = vsel %vm1164, %v3976, 0
        %v4028 = vsel %vm1164, %v3977, 0
        %v4031 = vsel %vm1164, %v3978, 0
        %v4034 = vsel %vm1164, %v3979, 0
        %v4037 = vsel %vm1164, %v3980, 0
        %v4040 = vsel %vm1164, %v3981, 0
        %v4043 = vsel %vm1164, %v3982, 0
        %v4046 = vsel %vm1164, %v3983, 0
        %v4049 = vsel %vm1164, %v3984, 0
        %v4052 = vsel %vm1164, %v3985, 0
        %v4055 = vsel %vm1164, %v3986, 0
        %v4058 = vsel %vm1164, %v3987, 0
        %v4061 = vsel %vm1164, %v3988, 0
        %v4064 = vsel %vm1164, %v3989, 0
        %v4067 = vsel %vm1164, %v3990, 0
        %v4070 = vsel %vm1164, %v3991, 0
        %v4073 = vsel %vm1164, %v3992, 0
        %v4076 = vsel %vm1164, %v3993, 0
        %v4079 = vsel %vm1164, %v3994, 0
        %v4082 = vsel %vm1164, %v3995, 0
        %v4085 = vsel %vm1164, %v3996, 0
        %v4088 = vsel %vm1164, %v3997, 0
        %v4091 = vsel %vm1164, %v3998, 0
        %v4094 = vsel %vm1164, %v3999, 0
        %v4097 = vsel %vm1164, %v4000, 0
        %v4100 = vsel %vm1164, %v4001, 0
        %v4103 = vsel %vm1164, %v4002, 0
        %4105 = vmatpush.bf16.msra.mxu0 0
        %4106 = vmatpush.bf16.msra.mxu0 0
        %4107 = vmatpush.bf16.msra.mxu0 0
        %4108 = vmatpush.bf16.msra.mxu0 0
        %4109 = vmatpush.bf16.msra.mxu0 0
        %4110 = vmatpush.bf16.msra.mxu0 0
        %4111 = vmatpush.bf16.msra.mxu0 0
        %4112 = vmatpush.bf16.msra.mxu0 %v4007
        %4113 = vmatmul.bf16.gmra.mxu0 %v4010
        %v4114 = vpop.f32.mrf.mxu0
        %v4115 = vadd.f32 0.0, %v4114
        %v4116 = vpop.f32.mrf.mxu0
        %v4117 = vadd.f32 0.0, %v4116
        %4118 = vmatmul.bf16.gmra.mxu0 %v4013
        %v4119 = vpop.f32.mrf.mxu0
        %v4120 = vadd.f32 0.0, %v4119
        %v4121 = vpop.f32.mrf.mxu0
        %v4122 = vadd.f32 0.0, %v4121
        %4123 = vmatmul.bf16.gmra.mxu0 %v4016
        %v4124 = vpop.f32.mrf.mxu0
        %v4125 = vadd.f32 0.0, %v4124
        %v4126 = vpop.f32.mrf.mxu0
        %v4127 = vadd.f32 0.0, %v4126
        %4128 = vmatmul.bf16.gmra.mxu0 %v4019
        %v4129 = vpop.f32.mrf.mxu0
        %v4130 = vadd.f32 0.0, %v4129
        %v4131 = vpop.f32.mrf.mxu0
        %v4132 = vadd.f32 0.0, %v4131
        %4133 = vmatmul.bf16.gmra.mxu0 %v4022
        %v4134 = vpop.f32.mrf.mxu0
        %v4135 = vadd.f32 0.0, %v4134
        %v4136 = vpop.f32.mrf.mxu0
        %v4137 = vadd.f32 0.0, %v4136
        %4138 = vmatmul.bf16.gmra.mxu0 %v4025
        %v4139 = vpop.f32.mrf.mxu0
        %v4140 = vadd.f32 0.0, %v4139
        %v4141 = vpop.f32.mrf.mxu0
        %v4142 = vadd.f32 0.0, %v4141
        %4143 = vmatmul.bf16.gmra.mxu0 %v4028
        %v4144 = vpop.f32.mrf.mxu0
        %v4145 = vadd.f32 0.0, %v4144
        %v4146 = vpop.f32.mrf.mxu0
        %v4147 = vadd.f32 0.0, %v4146
        %4148 = vmatmul.bf16.gmra.mxu0 %v4031
        %v4149 = vpop.f32.mrf.mxu0
        %v4150 = vadd.f32 0.0, %v4149
        %v4151 = vpop.f32.mrf.mxu0
        %v4152 = vadd.f32 0.0, %v4151
        %4153 = vmatmul.bf16.gmra.mxu0 %v4034
        %v4154 = vpop.f32.mrf.mxu0
        %v4155 = vadd.f32 0.0, %v4154
        %v4156 = vpop.f32.mrf.mxu0
        %v4157 = vadd.f32 0.0, %v4156
        %4158 = vmatmul.bf16.gmra.mxu0 %v4037
        %v4159 = vpop.f32.mrf.mxu0
        %v4160 = vadd.f32 0.0, %v4159
        %v4161 = vpop.f32.mrf.mxu0
        %v4162 = vadd.f32 0.0, %v4161
        %4163 = vmatmul.bf16.gmra.mxu0 %v4040
        %v4164 = vpop.f32.mrf.mxu0
        %v4165 = vadd.f32 0.0, %v4164
        %v4166 = vpop.f32.mrf.mxu0
        %v4167 = vadd.f32 0.0, %v4166
        %4168 = vmatmul.bf16.gmra.mxu0 %v4043
        %v4169 = vpop.f32.mrf.mxu0
        %v4170 = vadd.f32 0.0, %v4169
        %v4171 = vpop.f32.mrf.mxu0
        %v4172 = vadd.f32 0.0, %v4171
        %4173 = vmatmul.bf16.gmra.mxu0 %v4046
        %v4174 = vpop.f32.mrf.mxu0
        %v4175 = vadd.f32 0.0, %v4174
        %v4176 = vpop.f32.mrf.mxu0
        %v4177 = vadd.f32 0.0, %v4176
        %4178 = vmatmul.bf16.gmra.mxu0 %v4049
        %v4179 = vpop.f32.mrf.mxu0
        %v4180 = vadd.f32 0.0, %v4179
        %v4181 = vpop.f32.mrf.mxu0
        %v4182 = vadd.f32 0.0, %v4181
        %4183 = vmatmul.bf16.gmra.mxu0 %v4052
        %v4184 = vpop.f32.mrf.mxu0
        %v4185 = vadd.f32 0.0, %v4184
        %v4186 = vpop.f32.mrf.mxu0
        %v4187 = vadd.f32 0.0, %v4186
        %4188 = vmatmul.bf16.gmra.mxu0 %v4055
        %v4189 = vpop.f32.mrf.mxu0
        %v4190 = vadd.f32 0.0, %v4189
        %v4191 = vpop.f32.mrf.mxu0
        %v4192 = vadd.f32 0.0, %v4191
        %4193 = vmatmul.bf16.gmra.mxu0 %v4058
        %v4194 = vpop.f32.mrf.mxu0
        %v4195 = vadd.f32 0.0, %v4194
        %v4196 = vpop.f32.mrf.mxu0
        %v4197 = vadd.f32 0.0, %v4196
        %4198 = vmatmul.bf16.gmra.mxu0 %v4061
        %v4199 = vpop.f32.mrf.mxu0
        %v4200 = vadd.f32 0.0, %v4199
        %v4201 = vpop.f32.mrf.mxu0
        %v4202 = vadd.f32 0.0, %v4201
        %4203 = vmatmul.bf16.gmra.mxu0 %v4064
        %v4204 = vpop.f32.mrf.mxu0
        %v4205 = vadd.f32 0.0, %v4204
        %v4206 = vpop.f32.mrf.mxu0
        %v4207 = vadd.f32 0.0, %v4206
        %4208 = vmatmul.bf16.gmra.mxu0 %v4067
        %v4209 = vpop.f32.mrf.mxu0
        %v4210 = vadd.f32 0.0, %v4209
        %v4211 = vpop.f32.mrf.mxu0
        %v4212 = vadd.f32 0.0, %v4211
        %4213 = vmatmul.bf16.gmra.mxu0 %v4070
        %v4214 = vpop.f32.mrf.mxu0
        %v4215 = vadd.f32 0.0, %v4214
        %v4216 = vpop.f32.mrf.mxu0
        %v4217 = vadd.f32 0.0, %v4216
        %4218 = vmatmul.bf16.gmra.mxu0 %v4073
        %v4219 = vpop.f32.mrf.mxu0
        %v4220 = vadd.f32 0.0, %v4219
        %v4221 = vpop.f32.mrf.mxu0
        %v4222 = vadd.f32 0.0, %v4221
        %4223 = vmatmul.bf16.gmra.mxu0 %v4076
        %v4224 = vpop.f32.mrf.mxu0
        %v4225 = vadd.f32 0.0, %v4224
        %v4226 = vpop.f32.mrf.mxu0
        %v4227 = vadd.f32 0.0, %v4226
        %4228 = vmatmul.bf16.gmra.mxu0 %v4079
        %v4229 = vpop.f32.mrf.mxu0
        %v4230 = vadd.f32 0.0, %v4229
        %v4231 = vpop.f32.mrf.mxu0
        %v4232 = vadd.f32 0.0, %v4231
        %4233 = vmatmul.bf16.gmra.mxu0 %v4082
        %v4234 = vpop.f32.mrf.mxu0
        %v4235 = vadd.f32 0.0, %v4234
        %v4236 = vpop.f32.mrf.mxu0
        %v4237 = vadd.f32 0.0, %v4236
        %4238 = vmatmul.bf16.gmra.mxu0 %v4085
        %v4239 = vpop.f32.mrf.mxu0
        %v4240 = vadd.f32 0.0, %v4239
        %v4241 = vpop.f32.mrf.mxu0
        %v4242 = vadd.f32 0.0, %v4241
        %4243 = vmatmul.bf16.gmra.mxu0 %v4088
        %v4244 = vpop.f32.mrf.mxu0
        %v4245 = vadd.f32 0.0, %v4244
        %v4246 = vpop.f32.mrf.mxu0
        %v4247 = vadd.f32 0.0, %v4246
        %4248 = vmatmul.bf16.gmra.mxu0 %v4091
        %v4249 = vpop.f32.mrf.mxu0
        %v4250 = vadd.f32 0.0, %v4249
        %v4251 = vpop.f32.mrf.mxu0
        %v4252 = vadd.f32 0.0, %v4251
        %4253 = vmatmul.bf16.gmra.mxu0 %v4094
        %v4254 = vpop.f32.mrf.mxu0
        %v4255 = vadd.f32 0.0, %v4254
        %v4256 = vpop.f32.mrf.mxu0
        %v4257 = vadd.f32 0.0, %v4256
        %4258 = vmatmul.bf16.gmra.mxu0 %v4097
        %v4259 = vpop.f32.mrf.mxu0
        %v4260 = vadd.f32 0.0, %v4259
        %v4261 = vpop.f32.mrf.mxu0
        %v4262 = vadd.f32 0.0, %v4261
        %4263 = vmatmul.bf16.gmra.mxu0 %v4100
        %v4264 = vpop.f32.mrf.mxu0
        %v4265 = vadd.f32 0.0, %v4264
        %v4266 = vpop.f32.mrf.mxu0
        %v4267 = vadd.f32 0.0, %v4266
        %4268 = vmatmul.bf16.gmra.mxu0 %v4103
        %v4269 = vpop.f32.mrf.mxu0
        %v4270 = vadd.f32 0.0, %v4269
        %v4271 = vpop.f32.mrf.mxu0
        %v4272 = vadd.f32 0.0, %v4271
        %4273 = vdwg.mxu0
        %v4274 = vadd.f32 %v3056, %v4115
        %v4275 = vadd.f32 %v3057, %v4117
        %v4276 = vadd.f32 %v3058, %v4120
        %v4277 = vadd.f32 %v3059, %v4122
        %v4278 = vadd.f32 %v3060, %v4125
        %v4279 = vadd.f32 %v3061, %v4127
        %v4280 = vadd.f32 %v3062, %v4130
        %v4281 = vadd.f32 %v3063, %v4132
        %v4282 = vadd.f32 %v3064, %v4135
        %v4283 = vadd.f32 %v3065, %v4137
        %v4284 = vadd.f32 %v3066, %v4140
        %v4285 = vadd.f32 %v3067, %v4142
        %v4286 = vadd.f32 %v3068, %v4145
        %v4287 = vadd.f32 %v3069, %v4147
        %v4288 = vadd.f32 %v3070, %v4150
        %v4289 = vadd.f32 %v3071, %v4152
        %v4290 = vadd.f32 %v3072, %v4155
        %v4291 = vadd.f32 %v3073, %v4157
        %v4292 = vadd.f32 %v3074, %v4160
        %v4293 = vadd.f32 %v3075, %v4162
        %v4294 = vadd.f32 %v3076, %v4165
        %v4295 = vadd.f32 %v3077, %v4167
        %v4296 = vadd.f32 %v3078, %v4170
        %v4297 = vadd.f32 %v3079, %v4172
        %v4298 = vadd.f32 %v3080, %v4175
        %v4299 = vadd.f32 %v3081, %v4177
        %v4300 = vadd.f32 %v3082, %v4180
        %v4301 = vadd.f32 %v3083, %v4182
        %v4302 = vadd.f32 %v3084, %v4185
        %v4303 = vadd.f32 %v3085, %v4187
        %v4304 = vadd.f32 %v3086, %v4190
        %v4305 = vadd.f32 %v3087, %v4192
        %v4306 = vadd.f32 %v3088, %v4195
        %v4307 = vadd.f32 %v3089, %v4197
        %v4308 = vadd.f32 %v3090, %v4200
        %v4309 = vadd.f32 %v3091, %v4202
        %v4310 = vadd.f32 %v3092, %v4205
        %v4311 = vadd.f32 %v3093, %v4207
        %v4312 = vadd.f32 %v3094, %v4210
        %v4313 = vadd.f32 %v3095, %v4212
        %v4314 = vadd.f32 %v3096, %v4215
        %v4315 = vadd.f32 %v3097, %v4217
        %v4316 = vadd.f32 %v3098, %v4220
        %v4317 = vadd.f32 %v3099, %v4222
        %v4318 = vadd.f32 %v3100, %v4225
        %v4319 = vadd.f32 %v3101, %v4227
        %v4320 = vadd.f32 %v3102, %v4230
        %v4321 = vadd.f32 %v3103, %v4232
        %v4322 = vadd.f32 %v3104, %v4235
        %v4323 = vadd.f32 %v3105, %v4237
        %v4324 = vadd.f32 %v3106, %v4240
        %v4325 = vadd.f32 %v3107, %v4242
        %v4326 = vadd.f32 %v3108, %v4245
        %v4327 = vadd.f32 %v3109, %v4247
        %v4328 = vadd.f32 %v3110, %v4250
        %v4329 = vadd.f32 %v3111, %v4252
        %v4330 = vadd.f32 %v3112, %v4255
        %v4331 = vadd.f32 %v3113, %v4257
        %v4332 = vadd.f32 %v3114, %v4260
        %v4333 = vadd.f32 %v3115, %v4262
        %v4334 = vadd.f32 %v3116, %v4265
        %v4335 = vadd.f32 %v3117, %v4267
        %v4336 = vadd.f32 %v3118, %v4270
        %v4337 = vadd.f32 %v3119, %v4272
        %v4338 = vld [vmem:[%s2557] sm:$0xe]
        %v4339 = vld [vmem:[%s2557 + $0x14] sm:$0xe]
        %v4340 = vld [vmem:[%s2557 + $0x28] sm:$0xe]
        %v4341 = vld [vmem:[%s2557 + $0x3c] sm:$0xe]
        %v4342 = vld [vmem:[%s2557 + $0x50] sm:$0xe]
        %v4343 = vld [vmem:[%s2557 + $0x64] sm:$0xe]
        %v4344 = vld [vmem:[%s2557 + $0x78] sm:$0xe]
        %v4345 = vld [vmem:[%s2557 + $0x8c] sm:$0xe]
        %v4346 = vld [vmem:[%s2557 + $0xa0] sm:$0xe]
        %v4347 = vld [vmem:[%s2557 + $0xb4] sm:$0xe]
        %v4348 = vld [vmem:[%s2557 + $0xc8] sm:$0xe]
        %v4349 = vld [vmem:[%s2557 + $0xdc] sm:$0xe]
        %v4350 = vld [vmem:[%s2557 + $0xf0] sm:$0xe]
        %v4351 = vld [vmem:[%s2557 + $0x104] sm:$0xe]
        %v4352 = vld [vmem:[%s2557 + $0x118] sm:$0xe]
        %v4353 = vld [vmem:[%s2557 + $0x12c] sm:$0xe]
        %v4434 = vrot.slane %v4338, 5
        %v4435 = vrot.slane %v4434, 4
        %v4436 = vrot.slane %v3121, 5
        %v4437 = vsel %vm1911, %v4435, %v4436
        %v4438 = vrot.slane %v4436, 4
        %v4439 = vrot.slane %v3122, 5
        %v4440 = vsel %vm1911, %v4438, %v4439
        %v4441 = vrot.slane %v4439, 4
        %v4442 = vrot.slane %v3123, 5
        %v4443 = vsel %vm1911, %v4441, %v4442
        %v4444 = vrot.slane %v4442, 4
        %v4445 = vrot.slane %v3124, 5
        %v4446 = vsel %vm1911, %v4444, %v4445
        %v4447 = vrot.slane %v4339, 5
        %v4448 = vrot.slane %v4447, 4
        %v4449 = vrot.slane %v3126, 5
        %v4450 = vsel %vm1911, %v4448, %v4449
        %v4451 = vrot.slane %v4449, 4
        %v4452 = vrot.slane %v3127, 5
        %v4453 = vsel %vm1911, %v4451, %v4452
        %v4454 = vrot.slane %v4452, 4
        %v4455 = vrot.slane %v3128, 5
        %v4456 = vsel %vm1911, %v4454, %v4455
        %v4457 = vrot.slane %v4455, 4
        %v4458 = vrot.slane %v3129, 5
        %v4459 = vsel %vm1911, %v4457, %v4458
        %v4460 = vrot.slane %v4340, 5
        %v4461 = vrot.slane %v4460, 4
        %v4462 = vrot.slane %v3131, 5
        %v4463 = vsel %vm1911, %v4461, %v4462
        %v4464 = vrot.slane %v4462, 4
        %v4465 = vrot.slane %v3132, 5
        %v4466 = vsel %vm1911, %v4464, %v4465
        %v4467 = vrot.slane %v4465, 4
        %v4468 = vrot.slane %v3133, 5
        %v4469 = vsel %vm1911, %v4467, %v4468
        %v4470 = vrot.slane %v4468, 4
        %v4471 = vrot.slane %v3134, 5
        %v4472 = vsel %vm1911, %v4470, %v4471
        %v4473 = vrot.slane %v4341, 5
        %v4474 = vrot.slane %v4473, 4
        %v4475 = vrot.slane %v3136, 5
        %v4476 = vsel %vm1911, %v4474, %v4475
        %v4477 = vrot.slane %v4475, 4
        %v4478 = vrot.slane %v3137, 5
        %v4479 = vsel %vm1911, %v4477, %v4478
        %v4480 = vrot.slane %v4478, 4
        %v4481 = vrot.slane %v3138, 5
        %v4482 = vsel %vm1911, %v4480, %v4481
        %v4483 = vrot.slane %v4481, 4
        %v4484 = vrot.slane %v3139, 5
        %v4485 = vsel %vm1911, %v4483, %v4484
        %v4486 = vrot.slane %v4342, 5
        %v4487 = vrot.slane %v4486, 4
        %v4488 = vrot.slane %v3141, 5
        %v4489 = vsel %vm1911, %v4487, %v4488
        %v4490 = vrot.slane %v4488, 4
        %v4491 = vrot.slane %v3142, 5
        %v4492 = vsel %vm1911, %v4490, %v4491
        %v4493 = vrot.slane %v4491, 4
        %v4494 = vrot.slane %v3143, 5
        %v4495 = vsel %vm1911, %v4493, %v4494
        %v4496 = vrot.slane %v4494, 4
        %v4497 = vrot.slane %v3144, 5
        %v4498 = vsel %vm1911, %v4496, %v4497
        %v4499 = vrot.slane %v4343, 5
        %v4500 = vrot.slane %v4499, 4
        %v4501 = vrot.slane %v3146, 5
        %v4502 = vsel %vm1911, %v4500, %v4501
        %v4503 = vrot.slane %v4501, 4
        %v4504 = vrot.slane %v3147, 5
        %v4505 = vsel %vm1911, %v4503, %v4504
        %v4506 = vrot.slane %v4504, 4
        %v4507 = vrot.slane %v3148, 5
        %v4508 = vsel %vm1911, %v4506, %v4507
        %v4509 = vrot.slane %v4507, 4
        %v4510 = vrot.slane %v3149, 5
        %v4511 = vsel %vm1911, %v4509, %v4510
        %v4512 = vrot.slane %v4344, 5
        %v4513 = vrot.slane %v4512, 4
        %v4514 = vrot.slane %v3151, 5
        %v4515 = vsel %vm1911, %v4513, %v4514
        %v4516 = vrot.slane %v4514, 4
        %v4517 = vrot.slane %v3152, 5
        %v4518 = vsel %vm1911, %v4516, %v4517
        %v4519 = vrot.slane %v4517, 4
        %v4520 = vrot.slane %v3153, 5
        %v4521 = vsel %vm1911, %v4519, %v4520
        %v4522 = vrot.slane %v4520, 4
        %v4523 = vrot.slane %v3154, 5
        %v4524 = vsel %vm1911, %v4522, %v4523
        %v4525 = vrot.slane %v4345, 5
        %v4526 = vrot.slane %v4525, 4
        %v4527 = vrot.slane %v3156, 5
        %v4528 = vsel %vm1911, %v4526, %v4527
        %v4529 = vrot.slane %v4527, 4
        %v4530 = vrot.slane %v3157, 5
        %v4531 = vsel %vm1911, %v4529, %v4530
        %v4532 = vrot.slane %v4530, 4
        %v4533 = vrot.slane %v3158, 5
        %v4534 = vsel %vm1911, %v4532, %v4533
        %v4535 = vrot.slane %v4533, 4
        %v4536 = vrot.slane %v3159, 5
        %v4537 = vsel %vm1911, %v4535, %v4536
        %v4538 = vrot.slane %v4346, 5
        %v4539 = vrot.slane %v4538, 4
        %v4540 = vrot.slane %v3161, 5
        %v4541 = vsel %vm1911, %v4539, %v4540
        %v4542 = vrot.slane %v4540, 4
        %v4543 = vrot.slane %v3162, 5
        %v4544 = vsel %vm1911, %v4542, %v4543
        %v4545 = vrot.slane %v4543, 4
        %v4546 = vrot.slane %v3163, 5
        %v4547 = vsel %vm1911, %v4545, %v4546
        %v4548 = vrot.slane %v4546, 4
        %v4549 = vrot.slane %v3164, 5
        %v4550 = vsel %vm1911, %v4548, %v4549
        %v4551 = vrot.slane %v4347, 5
        %v4552 = vrot.slane %v4551, 4
        %v4553 = vrot.slane %v3166, 5
        %v4554 = vsel %vm1911, %v4552, %v4553
        %v4555 = vrot.slane %v4553, 4
        %v4556 = vrot.slane %v3167, 5
        %v4557 = vsel %vm1911, %v4555, %v4556
        %v4558 = vrot.slane %v4556, 4
        %v4559 = vrot.slane %v3168, 5
        %v4560 = vsel %vm1911, %v4558, %v4559
        %v4561 = vrot.slane %v4559, 4
        %v4562 = vrot.slane %v3169, 5
        %v4563 = vsel %vm1911, %v4561, %v4562
        %v4564 = vrot.slane %v4348, 5
        %v4565 = vrot.slane %v4564, 4
        %v4566 = vrot.slane %v3171, 5
        %v4567 = vsel %vm1911, %v4565, %v4566
        %v4568 = vrot.slane %v4566, 4
        %v4569 = vrot.slane %v3172, 5
        %v4570 = vsel %vm1911, %v4568, %v4569
        %v4571 = vrot.slane %v4569, 4
        %v4572 = vrot.slane %v3173, 5
        %v4573 = vsel %vm1911, %v4571, %v4572
        %v4574 = vrot.slane %v4572, 4
        %v4575 = vrot.slane %v3174, 5
        %v4576 = vsel %vm1911, %v4574, %v4575
        %v4577 = vrot.slane %v4349, 5
        %v4578 = vrot.slane %v4577, 4
        %v4579 = vrot.slane %v3176, 5
        %v4580 = vsel %vm1911, %v4578, %v4579
        %v4581 = vrot.slane %v4579, 4
        %v4582 = vrot.slane %v3177, 5
        %v4583 = vsel %vm1911, %v4581, %v4582
        %v4584 = vrot.slane %v4582, 4
        %v4585 = vrot.slane %v3178, 5
        %v4586 = vsel %vm1911, %v4584, %v4585
        %v4587 = vrot.slane %v4585, 4
        %v4588 = vrot.slane %v3179, 5
        %v4589 = vsel %vm1911, %v4587, %v4588
        %v4590 = vrot.slane %v4350, 5
        %v4591 = vrot.slane %v4590, 4
        %v4592 = vrot.slane %v3181, 5
        %v4593 = vsel %vm1911, %v4591, %v4592
        %v4594 = vrot.slane %v4592, 4
        %v4595 = vrot.slane %v3182, 5
        %v4596 = vsel %vm1911, %v4594, %v4595
        %v4597 = vrot.slane %v4595, 4
        %v4598 = vrot.slane %v3183, 5
        %v4599 = vsel %vm1911, %v4597, %v4598
        %v4600 = vrot.slane %v4598, 4
        %v4601 = vrot.slane %v3184, 5
        %v4602 = vsel %vm1911, %v4600, %v4601
        %v4603 = vrot.slane %v4351, 5
        %v4604 = vrot.slane %v4603, 4
        %v4605 = vrot.slane %v3186, 5
        %v4606 = vsel %vm1911, %v4604, %v4605
        %v4607 = vrot.slane %v4605, 4
        %v4608 = vrot.slane %v3187, 5
        %v4609 = vsel %vm1911, %v4607, %v4608
        %v4610 = vrot.slane %v4608, 4
        %v4611 = vrot.slane %v3188, 5
        %v4612 = vsel %vm1911, %v4610, %v4611
        %v4613 = vrot.slane %v4611, 4
        %v4614 = vrot.slane %v3189, 5
        %v4615 = vsel %vm1911, %v4613, %v4614
        %v4616 = vrot.slane %v4352, 5
        %v4617 = vrot.slane %v4616, 4
        %v4618 = vrot.slane %v3191, 5
        %v4619 = vsel %vm1911, %v4617, %v4618
        %v4620 = vrot.slane %v4618, 4
        %v4621 = vrot.slane %v3192, 5
        %v4622 = vsel %vm1911, %v4620, %v4621
        %v4623 = vrot.slane %v4621, 4
        %v4624 = vrot.slane %v3193, 5
        %v4625 = vsel %vm1911, %v4623, %v4624
        %v4626 = vrot.slane %v4624, 4
        %v4627 = vrot.slane %v3194, 5
        %v4628 = vsel %vm1911, %v4626, %v4627
        %v4629 = vrot.slane %v4353, 5
        %v4630 = vrot.slane %v4629, 4
        %v4631 = vrot.slane %v3196, 5
        %v4632 = vsel %vm1911, %v4630, %v4631
        %v4633 = vrot.slane %v4631, 4
        %v4634 = vrot.slane %v3197, 5
        %v4635 = vsel %vm1911, %v4633, %v4634
        %v4636 = vrot.slane %v4634, 4
        %v4637 = vrot.slane %v3198, 5
        %v4638 = vsel %vm1911, %v4636, %v4637
        %v4639 = vrot.slane %v4637, 4
        %v4640 = vrot.slane %v3199, 5
        %v4641 = vsel %vm1911, %v4639, %v4640
        %s4642 = scalar_lea.vmem %s1, 40
        %v4643 = vld [vmem:[%s4642] sm:$0xf]
        %v4644 = vld [vmem:[%s4642 + $0x4] sm:$0xf]
        %v4645 = vunpack.c.l.b16 %v4437
        %v4646 = vunpack.c.l.b16 %v4440
        %v4647 = vunpack.c.l.b16 %v4443
        %v4648 = vunpack.c.l.b16 %v4446
        %v4649 = vunpack.c.l.b16 %v4450
        %v4650 = vunpack.c.l.b16 %v4453
        %v4651 = vunpack.c.l.b16 %v4456
        %v4652 = vunpack.c.l.b16 %v4459
        %v4653 = vunpack.c.l.b16 %v4463
        %v4654 = vunpack.c.l.b16 %v4466
        %v4655 = vunpack.c.l.b16 %v4469
        %v4656 = vunpack.c.l.b16 %v4472
        %v4657 = vunpack.c.l.b16 %v4476
        %v4658 = vunpack.c.l.b16 %v4479
        %v4659 = vunpack.c.l.b16 %v4482
        %v4660 = vunpack.c.l.b16 %v4485
        %v4661 = vunpack.c.l.b16 %v4489
        %v4662 = vunpack.c.l.b16 %v4492
        %v4663 = vunpack.c.l.b16 %v4495
        %v4664 = vunpack.c.l.b16 %v4498
        %v4665 = vunpack.c.l.b16 %v4502
        %v4666 = vunpack.c.l.b16 %v4505
        %v4667 = vunpack.c.l.b16 %v4508
        %v4668 = vunpack.c.l.b16 %v4511
        %v4669 = vunpack.c.l.b16 %v4515
        %v4670 = vunpack.c.l.b16 %v4518
        %v4671 = vunpack.c.l.b16 %v4521
        %v4672 = vunpack.c.l.b16 %v4524
        %v4673 = vunpack.c.l.b16 %v4528
        %v4674 = vunpack.c.l.b16 %v4531
        %v4675 = vunpack.c.l.b16 %v4534
        %v4676 = vunpack.c.l.b16 %v4537
        %v4677 = vunpack.c.l.b16 %v4541
        %v4678 = vunpack.c.l.b16 %v4544
        %v4679 = vunpack.c.l.b16 %v4547
        %v4680 = vunpack.c.l.b16 %v4550
        %v4681 = vunpack.c.l.b16 %v4554
        %v4682 = vunpack.c.l.b16 %v4557
        %v4683 = vunpack.c.l.b16 %v4560
        %v4684 = vunpack.c.l.b16 %v4563
        %v4685 = vunpack.c.l.b16 %v4567
        %v4686 = vunpack.c.l.b16 %v4570
        %v4687 = vunpack.c.l.b16 %v4573
        %v4688 = vunpack.c.l.b16 %v4576
        %v4689 = vunpack.c.l.b16 %v4580
        %v4690 = vunpack.c.l.b16 %v4583
        %v4691 = vunpack.c.l.b16 %v4586
        %v4692 = vunpack.c.l.b16 %v4589
        %v4693 = vunpack.c.l.b16 %v4593
        %v4694 = vunpack.c.l.b16 %v4596
        %v4695 = vunpack.c.l.b16 %v4599
        %v4696 = vunpack.c.l.b16 %v4602
        %v4697 = vunpack.c.l.b16 %v4606
        %v4698 = vunpack.c.l.b16 %v4609
        %v4699 = vunpack.c.l.b16 %v4612
        %v4700 = vunpack.c.l.b16 %v4615
        %v4701 = vunpack.c.l.b16 %v4619
        %v4702 = vunpack.c.l.b16 %v4622
        %v4703 = vunpack.c.l.b16 %v4625
        %v4704 = vunpack.c.l.b16 %v4628
        %v4705 = vunpack.c.l.b16 %v4632
        %v4706 = vunpack.c.l.b16 %v4635
        %v4707 = vunpack.c.l.b16 %v4638
        %v4708 = vunpack.c.l.b16 %v4641
        %v4709 = vpack.c.b16 %v4646, %v4645
        %v4710 = vpack.c.b16 %v4648, %v4647
        %v4711 = vpack.c.b16 %v4650, %v4649
        %v4712 = vpack.c.b16 %v4652, %v4651
        %v4713 = vpack.c.b16 %v4654, %v4653
        %v4714 = vpack.c.b16 %v4656, %v4655
        %v4715 = vpack.c.b16 %v4658, %v4657
        %v4716 = vpack.c.b16 %v4660, %v4659
        %v4717 = vpack.c.b16 %v4662, %v4661
        %v4718 = vpack.c.b16 %v4664, %v4663
        %v4719 = vpack.c.b16 %v4666, %v4665
        %v4720 = vpack.c.b16 %v4668, %v4667
        %v4721 = vpack.c.b16 %v4670, %v4669
        %v4722 = vpack.c.b16 %v4672, %v4671
        %v4723 = vpack.c.b16 %v4674, %v4673
        %v4724 = vpack.c.b16 %v4676, %v4675
        %v4725 = vpack.c.b16 %v4678, %v4677
        %v4726 = vpack.c.b16 %v4680, %v4679
        %v4727 = vpack.c.b16 %v4682, %v4681
        %v4728 = vpack.c.b16 %v4684, %v4683
        %v4729 = vpack.c.b16 %v4686, %v4685
        %v4730 = vpack.c.b16 %v4688, %v4687
        %v4731 = vpack.c.b16 %v4690, %v4689
        %v4732 = vpack.c.b16 %v4692, %v4691
        %v4733 = vpack.c.b16 %v4694, %v4693
        %v4734 = vpack.c.b16 %v4696, %v4695
        %v4735 = vpack.c.b16 %v4698, %v4697
        %v4736 = vpack.c.b16 %v4700, %v4699
        %v4737 = vpack.c.b16 %v4702, %v4701
        %v4738 = vpack.c.b16 %v4704, %v4703
        %v4739 = vpack.c.b16 %v4706, %v4705
        %v4740 = vpack.c.b16 %v4708, %v4707
        %v4743 = vunpack.c.l.b16 %v4643
        %v4744 = vunpack.c.l.b16 %v4644
        %v4745 = vpack.c.b16 %v4744, %v4743
        %v4748 = vsel %vm1164, %v4709, 0
        %v4751 = vsel %vm1164, %v4710, 0
        %v4754 = vsel %vm1164, %v4711, 0
        %v4757 = vsel %vm1164, %v4712, 0
        %v4760 = vsel %vm1164, %v4713, 0
        %v4763 = vsel %vm1164, %v4714, 0
        %v4766 = vsel %vm1164, %v4715, 0
        %v4769 = vsel %vm1164, %v4716, 0
        %v4772 = vsel %vm1164, %v4717, 0
        %v4775 = vsel %vm1164, %v4718, 0
        %v4778 = vsel %vm1164, %v4719, 0
        %v4781 = vsel %vm1164, %v4720, 0
        %v4784 = vsel %vm1164, %v4721, 0
        %v4787 = vsel %vm1164, %v4722, 0
        %v4790 = vsel %vm1164, %v4723, 0
        %v4793 = vsel %vm1164, %v4724, 0
        %v4796 = vsel %vm1164, %v4725, 0
        %v4799 = vsel %vm1164, %v4726, 0
        %v4802 = vsel %vm1164, %v4727, 0
        %v4805 = vsel %vm1164, %v4728, 0
        %v4808 = vsel %vm1164, %v4729, 0
        %v4811 = vsel %vm1164, %v4730, 0
        %v4814 = vsel %vm1164, %v4731, 0
        %v4817 = vsel %vm1164, %v4732, 0
        %v4820 = vsel %vm1164, %v4733, 0
        %v4823 = vsel %vm1164, %v4734, 0
        %v4826 = vsel %vm1164, %v4735, 0
        %v4829 = vsel %vm1164, %v4736, 0
        %v4832 = vsel %vm1164, %v4737, 0
        %v4835 = vsel %vm1164, %v4738, 0
        %v4838 = vsel %vm1164, %v4739, 0
        %v4841 = vsel %vm1164, %v4740, 0
        %4843 = vmatpush.bf16.msra.mxu0 0
        %4844 = vmatpush.bf16.msra.mxu0 0
        %4845 = vmatpush.bf16.msra.mxu0 0
        %4846 = vmatpush.bf16.msra.mxu0 0
        %4847 = vmatpush.bf16.msra.mxu0 0
        %4848 = vmatpush.bf16.msra.mxu0 0
        %4849 = vmatpush.bf16.msra.mxu0 0
        %4850 = vmatpush.bf16.msra.mxu0 %v4745
        %4851 = vmatmul.bf16.gmra.mxu0 %v4748
        %v4852 = vpop.f32.mrf.mxu0
        %v4853 = vadd.f32 0.0, %v4852
        %v4854 = vpop.f32.mrf.mxu0
        %v4855 = vadd.f32 0.0, %v4854
        %4856 = vmatmul.bf16.gmra.mxu0 %v4751
        %v4857 = vpop.f32.mrf.mxu0
        %v4858 = vadd.f32 0.0, %v4857
        %v4859 = vpop.f32.mrf.mxu0
        %v4860 = vadd.f32 0.0, %v4859
        %4861 = vmatmul.bf16.gmra.mxu0 %v4754
        %v4862 = vpop.f32.mrf.mxu0
        %v4863 = vadd.f32 0.0, %v4862
        %v4864 = vpop.f32.mrf.mxu0
        %v4865 = vadd.f32 0.0, %v4864
        %4866 = vmatmul.bf16.gmra.mxu0 %v4757
        %v4867 = vpop.f32.mrf.mxu0
        %v4868 = vadd.f32 0.0, %v4867
        %v4869 = vpop.f32.mrf.mxu0
        %v4870 = vadd.f32 0.0, %v4869
        %4871 = vmatmul.bf16.gmra.mxu0 %v4760
        %v4872 = vpop.f32.mrf.mxu0
        %v4873 = vadd.f32 0.0, %v4872
        %v4874 = vpop.f32.mrf.mxu0
        %v4875 = vadd.f32 0.0, %v4874
        %4876 = vmatmul.bf16.gmra.mxu0 %v4763
        %v4877 = vpop.f32.mrf.mxu0
        %v4878 = vadd.f32 0.0, %v4877
        %v4879 = vpop.f32.mrf.mxu0
        %v4880 = vadd.f32 0.0, %v4879
        %4881 = vmatmul.bf16.gmra.mxu0 %v4766
        %v4882 = vpop.f32.mrf.mxu0
        %v4883 = vadd.f32 0.0, %v4882
        %v4884 = vpop.f32.mrf.mxu0
        %v4885 = vadd.f32 0.0, %v4884
        %4886 = vmatmul.bf16.gmra.mxu0 %v4769
        %v4887 = vpop.f32.mrf.mxu0
        %v4888 = vadd.f32 0.0, %v4887
        %v4889 = vpop.f32.mrf.mxu0
        %v4890 = vadd.f32 0.0, %v4889
        %4891 = vmatmul.bf16.gmra.mxu0 %v4772
        %v4892 = vpop.f32.mrf.mxu0
        %v4893 = vadd.f32 0.0, %v4892
        %v4894 = vpop.f32.mrf.mxu0
        %v4895 = vadd.f32 0.0, %v4894
        %4896 = vmatmul.bf16.gmra.mxu0 %v4775
        %v4897 = vpop.f32.mrf.mxu0
        %v4898 = vadd.f32 0.0, %v4897
        %v4899 = vpop.f32.mrf.mxu0
        %v4900 = vadd.f32 0.0, %v4899
        %4901 = vmatmul.bf16.gmra.mxu0 %v4778
        %v4902 = vpop.f32.mrf.mxu0
        %v4903 = vadd.f32 0.0, %v4902
        %v4904 = vpop.f32.mrf.mxu0
        %v4905 = vadd.f32 0.0, %v4904
        %4906 = vmatmul.bf16.gmra.mxu0 %v4781
        %v4907 = vpop.f32.mrf.mxu0
        %v4908 = vadd.f32 0.0, %v4907
        %v4909 = vpop.f32.mrf.mxu0
        %v4910 = vadd.f32 0.0, %v4909
        %4911 = vmatmul.bf16.gmra.mxu0 %v4784
        %v4912 = vpop.f32.mrf.mxu0
        %v4913 = vadd.f32 0.0, %v4912
        %v4914 = vpop.f32.mrf.mxu0
        %v4915 = vadd.f32 0.0, %v4914
        %4916 = vmatmul.bf16.gmra.mxu0 %v4787
        %v4917 = vpop.f32.mrf.mxu0
        %v4918 = vadd.f32 0.0, %v4917
        %v4919 = vpop.f32.mrf.mxu0
        %v4920 = vadd.f32 0.0, %v4919
        %4921 = vmatmul.bf16.gmra.mxu0 %v4790
        %v4922 = vpop.f32.mrf.mxu0
        %v4923 = vadd.f32 0.0, %v4922
        %v4924 = vpop.f32.mrf.mxu0
        %v4925 = vadd.f32 0.0, %v4924
        %4926 = vmatmul.bf16.gmra.mxu0 %v4793
        %v4927 = vpop.f32.mrf.mxu0
        %v4928 = vadd.f32 0.0, %v4927
        %v4929 = vpop.f32.mrf.mxu0
        %v4930 = vadd.f32 0.0, %v4929
        %4931 = vmatmul.bf16.gmra.mxu0 %v4796
        %v4932 = vpop.f32.mrf.mxu0
        %v4933 = vadd.f32 0.0, %v4932
        %v4934 = vpop.f32.mrf.mxu0
        %v4935 = vadd.f32 0.0, %v4934
        %4936 = vmatmul.bf16.gmra.mxu0 %v4799
        %v4937 = vpop.f32.mrf.mxu0
        %v4938 = vadd.f32 0.0, %v4937
        %v4939 = vpop.f32.mrf.mxu0
        %v4940 = vadd.f32 0.0, %v4939
        %4941 = vmatmul.bf16.gmra.mxu0 %v4802
        %v4942 = vpop.f32.mrf.mxu0
        %v4943 = vadd.f32 0.0, %v4942
        %v4944 = vpop.f32.mrf.mxu0
        %v4945 = vadd.f32 0.0, %v4944
        %4946 = vmatmul.bf16.gmra.mxu0 %v4805
        %v4947 = vpop.f32.mrf.mxu0
        %v4948 = vadd.f32 0.0, %v4947
        %v4949 = vpop.f32.mrf.mxu0
        %v4950 = vadd.f32 0.0, %v4949
        %4951 = vmatmul.bf16.gmra.mxu0 %v4808
        %v4952 = vpop.f32.mrf.mxu0
        %v4953 = vadd.f32 0.0, %v4952
        %v4954 = vpop.f32.mrf.mxu0
        %v4955 = vadd.f32 0.0, %v4954
        %4956 = vmatmul.bf16.gmra.mxu0 %v4811
        %v4957 = vpop.f32.mrf.mxu0
        %v4958 = vadd.f32 0.0, %v4957
        %v4959 = vpop.f32.mrf.mxu0
        %v4960 = vadd.f32 0.0, %v4959
        %4961 = vmatmul.bf16.gmra.mxu0 %v4814
        %v4962 = vpop.f32.mrf.mxu0
        %v4963 = vadd.f32 0.0, %v4962
        %v4964 = vpop.f32.mrf.mxu0
        %v4965 = vadd.f32 0.0, %v4964
        %4966 = vmatmul.bf16.gmra.mxu0 %v4817
        %v4967 = vpop.f32.mrf.mxu0
        %v4968 = vadd.f32 0.0, %v4967
        %v4969 = vpop.f32.mrf.mxu0
        %v4970 = vadd.f32 0.0, %v4969
        %4971 = vmatmul.bf16.gmra.mxu0 %v4820
        %v4972 = vpop.f32.mrf.mxu0
        %v4973 = vadd.f32 0.0, %v4972
        %v4974 = vpop.f32.mrf.mxu0
        %v4975 = vadd.f32 0.0, %v4974
        %4976 = vmatmul.bf16.gmra.mxu0 %v4823
        %v4977 = vpop.f32.mrf.mxu0
        %v4978 = vadd.f32 0.0, %v4977
        %v4979 = vpop.f32.mrf.mxu0
        %v4980 = vadd.f32 0.0, %v4979
        %4981 = vmatmul.bf16.gmra.mxu0 %v4826
        %v4982 = vpop.f32.mrf.mxu0
        %v4983 = vadd.f32 0.0, %v4982
        %v4984 = vpop.f32.mrf.mxu0
        %v4985 = vadd.f32 0.0, %v4984
        %4986 = vmatmul.bf16.gmra.mxu0 %v4829
        %v4987 = vpop.f32.mrf.mxu0
        %v4988 = vadd.f32 0.0, %v4987
        %v4989 = vpop.f32.mrf.mxu0
        %v4990 = vadd.f32 0.0, %v4989
        %4991 = vmatmul.bf16.gmra.mxu0 %v4832
        %v4992 = vpop.f32.mrf.mxu0
        %v4993 = vadd.f32 0.0, %v4992
        %v4994 = vpop.f32.mrf.mxu0
        %v4995 = vadd.f32 0.0, %v4994
        %4996 = vmatmul.bf16.gmra.mxu0 %v4835
        %v4997 = vpop.f32.mrf.mxu0
        %v4998 = vadd.f32 0.0, %v4997
        %v4999 = vpop.f32.mrf.mxu0
        %v5000 = vadd.f32 0.0, %v4999
        %5001 = vmatmul.bf16.gmra.mxu0 %v4838
        %v5002 = vpop.f32.mrf.mxu0
        %v5003 = vadd.f32 0.0, %v5002
        %v5004 = vpop.f32.mrf.mxu0
        %v5005 = vadd.f32 0.0, %v5004
        %5006 = vmatmul.bf16.gmra.mxu0 %v4841
        %v5007 = vpop.f32.mrf.mxu0
        %v5008 = vadd.f32 0.0, %v5007
        %v5009 = vpop.f32.mrf.mxu0
        %v5010 = vadd.f32 0.0, %v5009
        %5011 = vdwg.mxu0
        %v5012 = vadd.f32 %v4274, %v4853
        %v5013 = vadd.f32 %v4275, %v4855
        %v5014 = vadd.f32 %v4276, %v4858
        %v5015 = vadd.f32 %v4277, %v4860
        %v5016 = vadd.f32 %v4278, %v4863
        %v5017 = vadd.f32 %v4279, %v4865
        %v5018 = vadd.f32 %v4280, %v4868
        %v5019 = vadd.f32 %v4281, %v4870
        %v5020 = vadd.f32 %v4282, %v4873
        %v5021 = vadd.f32 %v4283, %v4875
        %v5022 = vadd.f32 %v4284, %v4878
        %v5023 = vadd.f32 %v4285, %v4880
        %v5024 = vadd.f32 %v4286, %v4883
        %v5025 = vadd.f32 %v4287, %v4885
        %v5026 = vadd.f32 %v4288, %v4888
        %v5027 = vadd.f32 %v4289, %v4890
        %v5028 = vadd.f32 %v4290, %v4893
        %v5029 = vadd.f32 %v4291, %v4895
        %v5030 = vadd.f32 %v4292, %v4898
        %v5031 = vadd.f32 %v4293, %v4900
        %v5032 = vadd.f32 %v4294, %v4903
        %v5033 = vadd.f32 %v4295, %v4905
        %v5034 = vadd.f32 %v4296, %v4908
        %v5035 = vadd.f32 %v4297, %v4910
        %v5036 = vadd.f32 %v4298, %v4913
        %v5037 = vadd.f32 %v4299, %v4915
        %v5038 = vadd.f32 %v4300, %v4918
        %v5039 = vadd.f32 %v4301, %v4920
        %v5040 = vadd.f32 %v4302, %v4923
        %v5041 = vadd.f32 %v4303, %v4925
        %v5042 = vadd.f32 %v4304, %v4928
        %v5043 = vadd.f32 %v4305, %v4930
        %v5044 = vadd.f32 %v4306, %v4933
        %v5045 = vadd.f32 %v4307, %v4935
        %v5046 = vadd.f32 %v4308, %v4938
        %v5047 = vadd.f32 %v4309, %v4940
        %v5048 = vadd.f32 %v4310, %v4943
        %v5049 = vadd.f32 %v4311, %v4945
        %v5050 = vadd.f32 %v4312, %v4948
        %v5051 = vadd.f32 %v4313, %v4950
        %v5052 = vadd.f32 %v4314, %v4953
        %v5053 = vadd.f32 %v4315, %v4955
        %v5054 = vadd.f32 %v4316, %v4958
        %v5055 = vadd.f32 %v4317, %v4960
        %v5056 = vadd.f32 %v4318, %v4963
        %v5057 = vadd.f32 %v4319, %v4965
        %v5058 = vadd.f32 %v4320, %v4968
        %v5059 = vadd.f32 %v4321, %v4970
        %v5060 = vadd.f32 %v4322, %v4973
        %v5061 = vadd.f32 %v4323, %v4975
        %v5062 = vadd.f32 %v4324, %v4978
        %v5063 = vadd.f32 %v4325, %v4980
        %v5064 = vadd.f32 %v4326, %v4983
        %v5065 = vadd.f32 %v4327, %v4985
        %v5066 = vadd.f32 %v4328, %v4988
        %v5067 = vadd.f32 %v4329, %v4990
        %v5068 = vadd.f32 %v4330, %v4993
        %v5069 = vadd.f32 %v4331, %v4995
        %v5070 = vadd.f32 %v4332, %v4998
        %v5071 = vadd.f32 %v4333, %v5000
        %v5072 = vadd.f32 %v4334, %v5003
        %v5073 = vadd.f32 %v4335, %v5005
        %v5074 = vadd.f32 %v4336, %v5008
        %v5075 = vadd.f32 %v4337, %v5010
        %s5076 = sadd.s32 %s266, 2
        %s5077 = smul.u32 %s5076, 5
        %s5078 = smul.addr %s5077, 4
        %s5079 = scalar_lea.vmem %s263, %s5078
        %v5080 = vld [vmem:[%s5079] sm:$0xf]
        %v5081 = vld [vmem:[%s5079 + $0x4] sm:$0xf]
        %v5082 = vld [vmem:[%s5079 + $0x8] sm:$0xf]
        %v5083 = vld [vmem:[%s5079 + $0xc] sm:$0xf]
        %v5084 = vld [vmem:[%s5079 + $0x14] sm:$0xf]
        %v5085 = vld [vmem:[%s5079 + $0x18] sm:$0xf]
        %v5086 = vld [vmem:[%s5079 + $0x1c] sm:$0xf]
        %v5087 = vld [vmem:[%s5079 + $0x20] sm:$0xf]
        %v5088 = vld [vmem:[%s5079 + $0x28] sm:$0xf]
        %v5089 = vld [vmem:[%s5079 + $0x2c] sm:$0xf]
        %v5090 = vld [vmem:[%s5079 + $0x30] sm:$0xf]
        %v5091 = vld [vmem:[%s5079 + $0x34] sm:$0xf]
        %v5092 = vld [vmem:[%s5079 + $0x3c] sm:$0xf]
        %v5093 = vld [vmem:[%s5079 + $0x40] sm:$0xf]
        %v5094 = vld [vmem:[%s5079 + $0x44] sm:$0xf]
        %v5095 = vld [vmem:[%s5079 + $0x48] sm:$0xf]
        %v5096 = vld [vmem:[%s5079 + $0x50] sm:$0xf]
        %v5097 = vld [vmem:[%s5079 + $0x54] sm:$0xf]
        %v5098 = vld [vmem:[%s5079 + $0x58] sm:$0xf]
        %v5099 = vld [vmem:[%s5079 + $0x5c] sm:$0xf]
        %v5100 = vld [vmem:[%s5079 + $0x64] sm:$0xf]
        %v5101 = vld [vmem:[%s5079 + $0x68] sm:$0xf]
        %v5102 = vld [vmem:[%s5079 + $0x6c] sm:$0xf]
        %v5103 = vld [vmem:[%s5079 + $0x70] sm:$0xf]
        %v5104 = vld [vmem:[%s5079 + $0x78] sm:$0xf]
        %v5105 = vld [vmem:[%s5079 + $0x7c] sm:$0xf]
        %v5106 = vld [vmem:[%s5079 + $0x80] sm:$0xf]
        %v5107 = vld [vmem:[%s5079 + $0x84] sm:$0xf]
        %v5108 = vld [vmem:[%s5079 + $0x8c] sm:$0xf]
        %v5109 = vld [vmem:[%s5079 + $0x90] sm:$0xf]
        %v5110 = vld [vmem:[%s5079 + $0x94] sm:$0xf]
        %v5111 = vld [vmem:[%s5079 + $0x98] sm:$0xf]
        %v5112 = vld [vmem:[%s5079 + $0xa0] sm:$0xf]
        %v5113 = vld [vmem:[%s5079 + $0xa4] sm:$0xf]
        %v5114 = vld [vmem:[%s5079 + $0xa8] sm:$0xf]
        %v5115 = vld [vmem:[%s5079 + $0xac] sm:$0xf]
        %v5116 = vld [vmem:[%s5079 + $0xb4] sm:$0xf]
        %v5117 = vld [vmem:[%s5079 + $0xb8] sm:$0xf]
        %v5118 = vld [vmem:[%s5079 + $0xbc] sm:$0xf]
        %v5119 = vld [vmem:[%s5079 + $0xc0] sm:$0xf]
        %v5120 = vld [vmem:[%s5079 + $0xc8] sm:$0xf]
        %v5121 = vld [vmem:[%s5079 + $0xcc] sm:$0xf]
        %v5122 = vld [vmem:[%s5079 + $0xd0] sm:$0xf]
        %v5123 = vld [vmem:[%s5079 + $0xd4] sm:$0xf]
        %v5124 = vld [vmem:[%s5079 + $0xdc] sm:$0xf]
        %v5125 = vld [vmem:[%s5079 + $0xe0] sm:$0xf]
        %v5126 = vld [vmem:[%s5079 + $0xe4] sm:$0xf]
        %v5127 = vld [vmem:[%s5079 + $0xe8] sm:$0xf]
        %v5128 = vld [vmem:[%s5079 + $0xf0] sm:$0xf]
        %v5129 = vld [vmem:[%s5079 + $0xf4] sm:$0xf]
        %v5130 = vld [vmem:[%s5079 + $0xf8] sm:$0xf]
        %v5131 = vld [vmem:[%s5079 + $0xfc] sm:$0xf]
        %v5132 = vld [vmem:[%s5079 + $0x104] sm:$0xf]
        %v5133 = vld [vmem:[%s5079 + $0x108] sm:$0xf]
        %v5134 = vld [vmem:[%s5079 + $0x10c] sm:$0xf]
        %v5135 = vld [vmem:[%s5079 + $0x110] sm:$0xf]
        %v5136 = vld [vmem:[%s5079 + $0x118] sm:$0xf]
        %v5137 = vld [vmem:[%s5079 + $0x11c] sm:$0xf]
        %v5138 = vld [vmem:[%s5079 + $0x120] sm:$0xf]
        %v5139 = vld [vmem:[%s5079 + $0x124] sm:$0xf]
        %v5140 = vld [vmem:[%s5079 + $0x12c] sm:$0xf]
        %v5141 = vld [vmem:[%s5079 + $0x130] sm:$0xf]
        %v5142 = vld [vmem:[%s5079 + $0x134] sm:$0xf]
        %v5143 = vld [vmem:[%s5079 + $0x138] sm:$0xf]
        %s5144 = scalar_lea.vmem %s1, 48
        %v5145 = vld [vmem:[%s5144] sm:$0xf]
        %v5146 = vld [vmem:[%s5144 + $0x4] sm:$0xf]
        %v5211 = vunpack.c.l.b16 %v5080
        %v5212 = vunpack.c.l.b16 %v5081
        %v5213 = vunpack.c.l.b16 %v5082
        %v5214 = vunpack.c.l.b16 %v5083
        %v5215 = vunpack.c.l.b16 %v5084
        %v5216 = vunpack.c.l.b16 %v5085
        %v5217 = vunpack.c.l.b16 %v5086
        %v5218 = vunpack.c.l.b16 %v5087
        %v5219 = vunpack.c.l.b16 %v5088
        %v5220 = vunpack.c.l.b16 %v5089
        %v5221 = vunpack.c.l.b16 %v5090
        %v5222 = vunpack.c.l.b16 %v5091
        %v5223 = vunpack.c.l.b16 %v5092
        %v5224 = vunpack.c.l.b16 %v5093
        %v5225 = vunpack.c.l.b16 %v5094
        %v5226 = vunpack.c.l.b16 %v5095
        %v5227 = vunpack.c.l.b16 %v5096
        %v5228 = vunpack.c.l.b16 %v5097
        %v5229 = vunpack.c.l.b16 %v5098
        %v5230 = vunpack.c.l.b16 %v5099
        %v5231 = vunpack.c.l.b16 %v5100
        %v5232 = vunpack.c.l.b16 %v5101
        %v5233 = vunpack.c.l.b16 %v5102
        %v5234 = vunpack.c.l.b16 %v5103
        %v5235 = vunpack.c.l.b16 %v5104
        %v5236 = vunpack.c.l.b16 %v5105
        %v5237 = vunpack.c.l.b16 %v5106
        %v5238 = vunpack.c.l.b16 %v5107
        %v5239 = vunpack.c.l.b16 %v5108
        %v5240 = vunpack.c.l.b16 %v5109
        %v5241 = vunpack.c.l.b16 %v5110
        %v5242 = vunpack.c.l.b16 %v5111
        %v5243 = vunpack.c.l.b16 %v5112
        %v5244 = vunpack.c.l.b16 %v5113
        %v5245 = vunpack.c.l.b16 %v5114
        %v5246 = vunpack.c.l.b16 %v5115
        %v5247 = vunpack.c.l.b16 %v5116
        %v5248 = vunpack.c.l.b16 %v5117
        %v5249 = vunpack.c.l.b16 %v5118
        %v5250 = vunpack.c.l.b16 %v5119
        %v5251 = vunpack.c.l.b16 %v5120
        %v5252 = vunpack.c.l.b16 %v5121
        %v5253 = vunpack.c.l.b16 %v5122
        %v5254 = vunpack.c.l.b16 %v5123
        %v5255 = vunpack.c.l.b16 %v5124
        %v5256 = vunpack.c.l.b16 %v5125
        %v5257 = vunpack.c.l.b16 %v5126
        %v5258 = vunpack.c.l.b16 %v5127
        %v5259 = vunpack.c.l.b16 %v5128
        %v5260 = vunpack.c.l.b16 %v5129
        %v5261 = vunpack.c.l.b16 %v5130
        %v5262 = vunpack.c.l.b16 %v5131
        %v5263 = vunpack.c.l.b16 %v5132
        %v5264 = vunpack.c.l.b16 %v5133
        %v5265 = vunpack.c.l.b16 %v5134
        %v5266 = vunpack.c.l.b16 %v5135
        %v5267 = vunpack.c.l.b16 %v5136
        %v5268 = vunpack.c.l.b16 %v5137
        %v5269 = vunpack.c.l.b16 %v5138
        %v5270 = vunpack.c.l.b16 %v5139
        %v5271 = vunpack.c.l.b16 %v5140
        %v5272 = vunpack.c.l.b16 %v5141
        %v5273 = vunpack.c.l.b16 %v5142
        %v5274 = vunpack.c.l.b16 %v5143
        %v5275 = vpack.c.b16 %v5212, %v5211
        %v5276 = vpack.c.b16 %v5214, %v5213
        %v5277 = vpack.c.b16 %v5216, %v5215
        %v5278 = vpack.c.b16 %v5218, %v5217
        %v5279 = vpack.c.b16 %v5220, %v5219
        %v5280 = vpack.c.b16 %v5222, %v5221
        %v5281 = vpack.c.b16 %v5224, %v5223
        %v5282 = vpack.c.b16 %v5226, %v5225
        %v5283 = vpack.c.b16 %v5228, %v5227
        %v5284 = vpack.c.b16 %v5230, %v5229
        %v5285 = vpack.c.b16 %v5232, %v5231
        %v5286 = vpack.c.b16 %v5234, %v5233
        %v5287 = vpack.c.b16 %v5236, %v5235
        %v5288 = vpack.c.b16 %v5238, %v5237
        %v5289 = vpack.c.b16 %v5240, %v5239
        %v5290 = vpack.c.b16 %v5242, %v5241
        %v5291 = vpack.c.b16 %v5244, %v5243
        %v5292 = vpack.c.b16 %v5246, %v5245
        %v5293 = vpack.c.b16 %v5248, %v5247
        %v5294 = vpack.c.b16 %v5250, %v5249
        %v5295 = vpack.c.b16 %v5252, %v5251
        %v5296 = vpack.c.b16 %v5254, %v5253
        %v5297 = vpack.c.b16 %v5256, %v5255
        %v5298 = vpack.c.b16 %v5258, %v5257
        %v5299 = vpack.c.b16 %v5260, %v5259
        %v5300 = vpack.c.b16 %v5262, %v5261
        %v5301 = vpack.c.b16 %v5264, %v5263
        %v5302 = vpack.c.b16 %v5266, %v5265
        %v5303 = vpack.c.b16 %v5268, %v5267
        %v5304 = vpack.c.b16 %v5270, %v5269
        %v5305 = vpack.c.b16 %v5272, %v5271
        %v5306 = vpack.c.b16 %v5274, %v5273
        %v5309 = vunpack.c.l.b16 %v5145
        %v5310 = vunpack.c.l.b16 %v5146
        %v5311 = vpack.c.b16 %v5310, %v5309
        %v5314 = vsel %vm1164, %v5275, 0
        %v5317 = vsel %vm1164, %v5276, 0
        %v5320 = vsel %vm1164, %v5277, 0
        %v5323 = vsel %vm1164, %v5278, 0
        %v5326 = vsel %vm1164, %v5279, 0
        %v5329 = vsel %vm1164, %v5280, 0
        %v5332 = vsel %vm1164, %v5281, 0
        %v5335 = vsel %vm1164, %v5282, 0
        %v5338 = vsel %vm1164, %v5283, 0
        %v5341 = vsel %vm1164, %v5284, 0
        %v5344 = vsel %vm1164, %v5285, 0
        %v5347 = vsel %vm1164, %v5286, 0
        %v5350 = vsel %vm1164, %v5287, 0
        %v5353 = vsel %vm1164, %v5288, 0
        %v5356 = vsel %vm1164, %v5289, 0
        %v5359 = vsel %vm1164, %v5290, 0
        %v5362 = vsel %vm1164, %v5291, 0
        %v5365 = vsel %vm1164, %v5292, 0
        %v5368 = vsel %vm1164, %v5293, 0
        %v5371 = vsel %vm1164, %v5294, 0
        %v5374 = vsel %vm1164, %v5295, 0
        %v5377 = vsel %vm1164, %v5296, 0
        %v5380 = vsel %vm1164, %v5297, 0
        %v5383 = vsel %vm1164, %v5298, 0
        %v5386 = vsel %vm1164, %v5299, 0
        %v5389 = vsel %vm1164, %v5300, 0
        %v5392 = vsel %vm1164, %v5301, 0
        %v5395 = vsel %vm1164, %v5302, 0
        %v5398 = vsel %vm1164, %v5303, 0
        %v5401 = vsel %vm1164, %v5304, 0
        %v5404 = vsel %vm1164, %v5305, 0
        %v5407 = vsel %vm1164, %v5306, 0
        %5409 = vmatpush.bf16.msra.mxu0 0
        %5410 = vmatpush.bf16.msra.mxu0 0
        %5411 = vmatpush.bf16.msra.mxu0 0
        %5412 = vmatpush.bf16.msra.mxu0 0
        %5413 = vmatpush.bf16.msra.mxu0 0
        %5414 = vmatpush.bf16.msra.mxu0 0
        %5415 = vmatpush.bf16.msra.mxu0 0
        %5416 = vmatpush.bf16.msra.mxu0 %v5311
        %5417 = vmatmul.bf16.gmra.mxu0 %v5314
        %v5418 = vpop.f32.mrf.mxu0
        %v5419 = vadd.f32 0.0, %v5418
        %v5420 = vpop.f32.mrf.mxu0
        %v5421 = vadd.f32 0.0, %v5420
        %5422 = vmatmul.bf16.gmra.mxu0 %v5317
        %v5423 = vpop.f32.mrf.mxu0
        %v5424 = vadd.f32 0.0, %v5423
        %v5425 = vpop.f32.mrf.mxu0
        %v5426 = vadd.f32 0.0, %v5425
        %5427 = vmatmul.bf16.gmra.mxu0 %v5320
        %v5428 = vpop.f32.mrf.mxu0
        %v5429 = vadd.f32 0.0, %v5428
        %v5430 = vpop.f32.mrf.mxu0
        %v5431 = vadd.f32 0.0, %v5430
        %5432 = vmatmul.bf16.gmra.mxu0 %v5323
        %v5433 = vpop.f32.mrf.mxu0
        %v5434 = vadd.f32 0.0, %v5433
        %v5435 = vpop.f32.mrf.mxu0
        %v5436 = vadd.f32 0.0, %v5435
        %5437 = vmatmul.bf16.gmra.mxu0 %v5326
        %v5438 = vpop.f32.mrf.mxu0
        %v5439 = vadd.f32 0.0, %v5438
        %v5440 = vpop.f32.mrf.mxu0
        %v5441 = vadd.f32 0.0, %v5440
        %5442 = vmatmul.bf16.gmra.mxu0 %v5329
        %v5443 = vpop.f32.mrf.mxu0
        %v5444 = vadd.f32 0.0, %v5443
        %v5445 = vpop.f32.mrf.mxu0
        %v5446 = vadd.f32 0.0, %v5445
        %5447 = vmatmul.bf16.gmra.mxu0 %v5332
        %v5448 = vpop.f32.mrf.mxu0
        %v5449 = vadd.f32 0.0, %v5448
        %v5450 = vpop.f32.mrf.mxu0
        %v5451 = vadd.f32 0.0, %v5450
        %5452 = vmatmul.bf16.gmra.mxu0 %v5335
        %v5453 = vpop.f32.mrf.mxu0
        %v5454 = vadd.f32 0.0, %v5453
        %v5455 = vpop.f32.mrf.mxu0
        %v5456 = vadd.f32 0.0, %v5455
        %5457 = vmatmul.bf16.gmra.mxu0 %v5338
        %v5458 = vpop.f32.mrf.mxu0
        %v5459 = vadd.f32 0.0, %v5458
        %v5460 = vpop.f32.mrf.mxu0
        %v5461 = vadd.f32 0.0, %v5460
        %5462 = vmatmul.bf16.gmra.mxu0 %v5341
        %v5463 = vpop.f32.mrf.mxu0
        %v5464 = vadd.f32 0.0, %v5463
        %v5465 = vpop.f32.mrf.mxu0
        %v5466 = vadd.f32 0.0, %v5465
        %5467 = vmatmul.bf16.gmra.mxu0 %v5344
        %v5468 = vpop.f32.mrf.mxu0
        %v5469 = vadd.f32 0.0, %v5468
        %v5470 = vpop.f32.mrf.mxu0
        %v5471 = vadd.f32 0.0, %v5470
        %5472 = vmatmul.bf16.gmra.mxu0 %v5347
        %v5473 = vpop.f32.mrf.mxu0
        %v5474 = vadd.f32 0.0, %v5473
        %v5475 = vpop.f32.mrf.mxu0
        %v5476 = vadd.f32 0.0, %v5475
        %5477 = vmatmul.bf16.gmra.mxu0 %v5350
        %v5478 = vpop.f32.mrf.mxu0
        %v5479 = vadd.f32 0.0, %v5478
        %v5480 = vpop.f32.mrf.mxu0
        %v5481 = vadd.f32 0.0, %v5480
        %5482 = vmatmul.bf16.gmra.mxu0 %v5353
        %v5483 = vpop.f32.mrf.mxu0
        %v5484 = vadd.f32 0.0, %v5483
        %v5485 = vpop.f32.mrf.mxu0
        %v5486 = vadd.f32 0.0, %v5485
        %5487 = vmatmul.bf16.gmra.mxu0 %v5356
        %v5488 = vpop.f32.mrf.mxu0
        %v5489 = vadd.f32 0.0, %v5488
        %v5490 = vpop.f32.mrf.mxu0
        %v5491 = vadd.f32 0.0, %v5490
        %5492 = vmatmul.bf16.gmra.mxu0 %v5359
        %v5493 = vpop.f32.mrf.mxu0
        %v5494 = vadd.f32 0.0, %v5493
        %v5495 = vpop.f32.mrf.mxu0
        %v5496 = vadd.f32 0.0, %v5495
        %5497 = vmatmul.bf16.gmra.mxu0 %v5362
        %v5498 = vpop.f32.mrf.mxu0
        %v5499 = vadd.f32 0.0, %v5498
        %v5500 = vpop.f32.mrf.mxu0
        %v5501 = vadd.f32 0.0, %v5500
        %5502 = vmatmul.bf16.gmra.mxu0 %v5365
        %v5503 = vpop.f32.mrf.mxu0
        %v5504 = vadd.f32 0.0, %v5503
        %v5505 = vpop.f32.mrf.mxu0
        %v5506 = vadd.f32 0.0, %v5505
        %5507 = vmatmul.bf16.gmra.mxu0 %v5368
        %v5508 = vpop.f32.mrf.mxu0
        %v5509 = vadd.f32 0.0, %v5508
        %v5510 = vpop.f32.mrf.mxu0
        %v5511 = vadd.f32 0.0, %v5510
        %5512 = vmatmul.bf16.gmra.mxu0 %v5371
        %v5513 = vpop.f32.mrf.mxu0
        %v5514 = vadd.f32 0.0, %v5513
        %v5515 = vpop.f32.mrf.mxu0
        %v5516 = vadd.f32 0.0, %v5515
        %5517 = vmatmul.bf16.gmra.mxu0 %v5374
        %v5518 = vpop.f32.mrf.mxu0
        %v5519 = vadd.f32 0.0, %v5518
        %v5520 = vpop.f32.mrf.mxu0
        %v5521 = vadd.f32 0.0, %v5520
        %5522 = vmatmul.bf16.gmra.mxu0 %v5377
        %v5523 = vpop.f32.mrf.mxu0
        %v5524 = vadd.f32 0.0, %v5523
        %v5525 = vpop.f32.mrf.mxu0
        %v5526 = vadd.f32 0.0, %v5525
        %5527 = vmatmul.bf16.gmra.mxu0 %v5380
        %v5528 = vpop.f32.mrf.mxu0
        %v5529 = vadd.f32 0.0, %v5528
        %v5530 = vpop.f32.mrf.mxu0
        %v5531 = vadd.f32 0.0, %v5530
        %5532 = vmatmul.bf16.gmra.mxu0 %v5383
        %v5533 = vpop.f32.mrf.mxu0
        %v5534 = vadd.f32 0.0, %v5533
        %v5535 = vpop.f32.mrf.mxu0
        %v5536 = vadd.f32 0.0, %v5535
        %5537 = vmatmul.bf16.gmra.mxu0 %v5386
        %v5538 = vpop.f32.mrf.mxu0
        %v5539 = vadd.f32 0.0, %v5538
        %v5540 = vpop.f32.mrf.mxu0
        %v5541 = vadd.f32 0.0, %v5540
        %5542 = vmatmul.bf16.gmra.mxu0 %v5389
        %v5543 = vpop.f32.mrf.mxu0
        %v5544 = vadd.f32 0.0, %v5543
        %v5545 = vpop.f32.mrf.mxu0
        %v5546 = vadd.f32 0.0, %v5545
        %5547 = vmatmul.bf16.gmra.mxu0 %v5392
        %v5548 = vpop.f32.mrf.mxu0
        %v5549 = vadd.f32 0.0, %v5548
        %v5550 = vpop.f32.mrf.mxu0
        %v5551 = vadd.f32 0.0, %v5550
        %5552 = vmatmul.bf16.gmra.mxu0 %v5395
        %v5553 = vpop.f32.mrf.mxu0
        %v5554 = vadd.f32 0.0, %v5553
        %v5555 = vpop.f32.mrf.mxu0
        %v5556 = vadd.f32 0.0, %v5555
        %5557 = vmatmul.bf16.gmra.mxu0 %v5398
        %v5558 = vpop.f32.mrf.mxu0
        %v5559 = vadd.f32 0.0, %v5558
        %v5560 = vpop.f32.mrf.mxu0
        %v5561 = vadd.f32 0.0, %v5560
        %5562 = vmatmul.bf16.gmra.mxu0 %v5401
        %v5563 = vpop.f32.mrf.mxu0
        %v5564 = vadd.f32 0.0, %v5563
        %v5565 = vpop.f32.mrf.mxu0
        %v5566 = vadd.f32 0.0, %v5565
        %5567 = vmatmul.bf16.gmra.mxu0 %v5404
        %v5568 = vpop.f32.mrf.mxu0
        %v5569 = vadd.f32 0.0, %v5568
        %v5570 = vpop.f32.mrf.mxu0
        %v5571 = vadd.f32 0.0, %v5570
        %5572 = vmatmul.bf16.gmra.mxu0 %v5407
        %v5573 = vpop.f32.mrf.mxu0
        %v5574 = vadd.f32 0.0, %v5573
        %v5575 = vpop.f32.mrf.mxu0
        %v5576 = vadd.f32 0.0, %v5575
        %5577 = vdwg.mxu0
        %v5578 = vadd.f32 %v5012, %v5419
        %v5579 = vadd.f32 %v5013, %v5421
        %v5580 = vadd.f32 %v5014, %v5424
        %v5581 = vadd.f32 %v5015, %v5426
        %v5582 = vadd.f32 %v5016, %v5429
        %v5583 = vadd.f32 %v5017, %v5431
        %v5584 = vadd.f32 %v5018, %v5434
        %v5585 = vadd.f32 %v5019, %v5436
        %v5586 = vadd.f32 %v5020, %v5439
        %v5587 = vadd.f32 %v5021, %v5441
        %v5588 = vadd.f32 %v5022, %v5444
        %v5589 = vadd.f32 %v5023, %v5446
        %v5590 = vadd.f32 %v5024, %v5449
        %v5591 = vadd.f32 %v5025, %v5451
        %v5592 = vadd.f32 %v5026, %v5454
        %v5593 = vadd.f32 %v5027, %v5456
        %v5594 = vadd.f32 %v5028, %v5459
        %v5595 = vadd.f32 %v5029, %v5461
        %v5596 = vadd.f32 %v5030, %v5464
        %v5597 = vadd.f32 %v5031, %v5466
        %v5598 = vadd.f32 %v5032, %v5469
        %v5599 = vadd.f32 %v5033, %v5471
        %v5600 = vadd.f32 %v5034, %v5474
        %v5601 = vadd.f32 %v5035, %v5476
        %v5602 = vadd.f32 %v5036, %v5479
        %v5603 = vadd.f32 %v5037, %v5481
        %v5604 = vadd.f32 %v5038, %v5484
        %v5605 = vadd.f32 %v5039, %v5486
        %v5606 = vadd.f32 %v5040, %v5489
        %v5607 = vadd.f32 %v5041, %v5491
        %v5608 = vadd.f32 %v5042, %v5494
        %v5609 = vadd.f32 %v5043, %v5496
        %v5610 = vadd.f32 %v5044, %v5499
        %v5611 = vadd.f32 %v5045, %v5501
        %v5612 = vadd.f32 %v5046, %v5504
        %v5613 = vadd.f32 %v5047, %v5506
        %v5614 = vadd.f32 %v5048, %v5509
        %v5615 = vadd.f32 %v5049, %v5511
        %v5616 = vadd.f32 %v5050, %v5514
        %v5617 = vadd.f32 %v5051, %v5516
        %v5618 = vadd.f32 %v5052, %v5519
        %v5619 = vadd.f32 %v5053, %v5521
        %v5620 = vadd.f32 %v5054, %v5524
        %v5621 = vadd.f32 %v5055, %v5526
        %v5622 = vadd.f32 %v5056, %v5529
        %v5623 = vadd.f32 %v5057, %v5531
        %v5624 = vadd.f32 %v5058, %v5534
        %v5625 = vadd.f32 %v5059, %v5536
        %v5626 = vadd.f32 %v5060, %v5539
        %v5627 = vadd.f32 %v5061, %v5541
        %v5628 = vadd.f32 %v5062, %v5544
        %v5629 = vadd.f32 %v5063, %v5546
        %v5630 = vadd.f32 %v5064, %v5549
        %v5631 = vadd.f32 %v5065, %v5551
        %v5632 = vadd.f32 %v5066, %v5554
        %v5633 = vadd.f32 %v5067, %v5556
        %v5634 = vadd.f32 %v5068, %v5559
        %v5635 = vadd.f32 %v5069, %v5561
        %v5636 = vadd.f32 %v5070, %v5564
        %v5637 = vadd.f32 %v5071, %v5566
        %v5638 = vadd.f32 %v5072, %v5569
        %v5639 = vadd.f32 %v5073, %v5571
        %v5640 = vadd.f32 %v5074, %v5574
        %v5641 = vadd.f32 %v5075, %v5576
        %v5642 = vld [vmem:[%s5079] sm:$0xf]
        %v5643 = vld [vmem:[%s5079 + $0x4] sm:$0xf]
        %v5644 = vld [vmem:[%s5079 + $0x8] sm:$0xf]
        %v5645 = vld [vmem:[%s5079 + $0xc] sm:$0xf]
        %v5646 = vld [vmem:[%s5079 + $0x10] sm:$0x1]
        %v5647 = vld [vmem:[%s5079 + $0x14] sm:$0xf]
        %v5648 = vld [vmem:[%s5079 + $0x18] sm:$0xf]
        %v5649 = vld [vmem:[%s5079 + $0x1c] sm:$0xf]
        %v5650 = vld [vmem:[%s5079 + $0x20] sm:$0xf]
        %v5651 = vld [vmem:[%s5079 + $0x24] sm:$0x1]
        %v5652 = vld [vmem:[%s5079 + $0x28] sm:$0xf]
        %v5653 = vld [vmem:[%s5079 + $0x2c] sm:$0xf]
        %v5654 = vld [vmem:[%s5079 + $0x30] sm:$0xf]
        %v5655 = vld [vmem:[%s5079 + $0x34] sm:$0xf]
        %v5656 = vld [vmem:[%s5079 + $0x38] sm:$0x1]
        %v5657 = vld [vmem:[%s5079 + $0x3c] sm:$0xf]
        %v5658 = vld [vmem:[%s5079 + $0x40] sm:$0xf]
        %v5659 = vld [vmem:[%s5079 + $0x44] sm:$0xf]
        %v5660 = vld [vmem:[%s5079 + $0x48] sm:$0xf]
        %v5661 = vld [vmem:[%s5079 + $0x4c] sm:$0x1]
        %v5662 = vld [vmem:[%s5079 + $0x50] sm:$0xf]
        %v5663 = vld [vmem:[%s5079 + $0x54] sm:$0xf]
        %v5664 = vld [vmem:[%s5079 + $0x58] sm:$0xf]
        %v5665 = vld [vmem:[%s5079 + $0x5c] sm:$0xf]
        %v5666 = vld [vmem:[%s5079 + $0x60] sm:$0x1]
        %v5667 = vld [vmem:[%s5079 + $0x64] sm:$0xf]
        %v5668 = vld [vmem:[%s5079 + $0x68] sm:$0xf]
        %v5669 = vld [vmem:[%s5079 + $0x6c] sm:$0xf]
        %v5670 = vld [vmem:[%s5079 + $0x70] sm:$0xf]
        %v5671 = vld [vmem:[%s5079 + $0x74] sm:$0x1]
        %v5672 = vld [vmem:[%s5079 + $0x78] sm:$0xf]
        %v5673 = vld [vmem:[%s5079 + $0x7c] sm:$0xf]
        %v5674 = vld [vmem:[%s5079 + $0x80] sm:$0xf]
        %v5675 = vld [vmem:[%s5079 + $0x84] sm:$0xf]
        %v5676 = vld [vmem:[%s5079 + $0x88] sm:$0x1]
        %v5677 = vld [vmem:[%s5079 + $0x8c] sm:$0xf]
        %v5678 = vld [vmem:[%s5079 + $0x90] sm:$0xf]
        %v5679 = vld [vmem:[%s5079 + $0x94] sm:$0xf]
        %v5680 = vld [vmem:[%s5079 + $0x98] sm:$0xf]
        %v5681 = vld [vmem:[%s5079 + $0x9c] sm:$0x1]
        %v5682 = vld [vmem:[%s5079 + $0xa0] sm:$0xf]
        %v5683 = vld [vmem:[%s5079 + $0xa4] sm:$0xf]
        %v5684 = vld [vmem:[%s5079 + $0xa8] sm:$0xf]
        %v5685 = vld [vmem:[%s5079 + $0xac] sm:$0xf]
        %v5686 = vld [vmem:[%s5079 + $0xb0] sm:$0x1]
        %v5687 = vld [vmem:[%s5079 + $0xb4] sm:$0xf]
        %v5688 = vld [vmem:[%s5079 + $0xb8] sm:$0xf]
        %v5689 = vld [vmem:[%s5079 + $0xbc] sm:$0xf]
        %v5690 = vld [vmem:[%s5079 + $0xc0] sm:$0xf]
        %v5691 = vld [vmem:[%s5079 + $0xc4] sm:$0x1]
        %v5692 = vld [vmem:[%s5079 + $0xc8] sm:$0xf]
        %v5693 = vld [vmem:[%s5079 + $0xcc] sm:$0xf]
        %v5694 = vld [vmem:[%s5079 + $0xd0] sm:$0xf]
        %v5695 = vld [vmem:[%s5079 + $0xd4] sm:$0xf]
        %v5696 = vld [vmem:[%s5079 + $0xd8] sm:$0x1]
        %v5697 = vld [vmem:[%s5079 + $0xdc] sm:$0xf]
        %v5698 = vld [vmem:[%s5079 + $0xe0] sm:$0xf]
        %v5699 = vld [vmem:[%s5079 + $0xe4] sm:$0xf]
        %v5700 = vld [vmem:[%s5079 + $0xe8] sm:$0xf]
        %v5701 = vld [vmem:[%s5079 + $0xec] sm:$0x1]
        %v5702 = vld [vmem:[%s5079 + $0xf0] sm:$0xf]
        %v5703 = vld [vmem:[%s5079 + $0xf4] sm:$0xf]
        %v5704 = vld [vmem:[%s5079 + $0xf8] sm:$0xf]
        %v5705 = vld [vmem:[%s5079 + $0xfc] sm:$0xf]
        %v5706 = vld [vmem:[%s5079 + $0x100] sm:$0x1]
        %v5707 = vld [vmem:[%s5079 + $0x104] sm:$0xf]
        %v5708 = vld [vmem:[%s5079 + $0x108] sm:$0xf]
        %v5709 = vld [vmem:[%s5079 + $0x10c] sm:$0xf]
        %v5710 = vld [vmem:[%s5079 + $0x110] sm:$0xf]
        %v5711 = vld [vmem:[%s5079 + $0x114] sm:$0x1]
        %v5712 = vld [vmem:[%s5079 + $0x118] sm:$0xf]
        %v5713 = vld [vmem:[%s5079 + $0x11c] sm:$0xf]
        %v5714 = vld [vmem:[%s5079 + $0x120] sm:$0xf]
        %v5715 = vld [vmem:[%s5079 + $0x124] sm:$0xf]
        %v5716 = vld [vmem:[%s5079 + $0x128] sm:$0x1]
        %v5717 = vld [vmem:[%s5079 + $0x12c] sm:$0xf]
        %v5718 = vld [vmem:[%s5079 + $0x130] sm:$0xf]
        %v5719 = vld [vmem:[%s5079 + $0x134] sm:$0xf]
        %v5720 = vld [vmem:[%s5079 + $0x138] sm:$0xf]
        %v5721 = vld [vmem:[%s5079 + $0x13c] sm:$0x1]
        %v5723 = vshrl.u32 %v5642, 16
        %v5725 = vrot.slane %v5723, 4
        %v5726 = vshll.u32 %v5642, 16
        %v5728 = vrot.slane %v5726, 5
        %v5729 = vor.u32 %v5725, %v5728
        %v5730 = vrot.slane %v5729, 4
        %v5732 = vshll.u32 %v5643, 16
        %v5734 = vrot.slane %v5732, 5
        %v5735 = vsel %vm354, %v5730, %v5734
        %v5736 = vshrl.u32 %v5643, 16
        %v5738 = vrot.slane %v5736, 4
        %v5739 = vor.u32 %v5738, %v5734
        %v5740 = vrot.slane %v5739, 4
        %v5742 = vshll.u32 %v5644, 16
        %v5744 = vrot.slane %v5742, 5
        %v5745 = vsel %vm354, %v5740, %v5744
        %v5746 = vshrl.u32 %v5644, 16
        %v5748 = vrot.slane %v5746, 4
        %v5749 = vor.u32 %v5748, %v5744
        %v5750 = vrot.slane %v5749, 4
        %v5752 = vshll.u32 %v5645, 16
        %v5754 = vrot.slane %v5752, 5
        %v5755 = vsel %vm354, %v5750, %v5754
        %v5756 = vshrl.u32 %v5645, 16
        %v5758 = vrot.slane %v5756, 4
        %v5759 = vor.u32 %v5758, %v5754
        %v5760 = vrot.slane %v5759, 4
        %v5762 = vshll.u32 %v5646, 16
        %v5764 = vrot.slane %v5762, 5
        %v5765 = vsel %vm354, %v5760, %v5764
        %v5767 = vshrl.u32 %v5647, 16
        %v5769 = vrot.slane %v5767, 4
        %v5770 = vshll.u32 %v5647, 16
        %v5772 = vrot.slane %v5770, 5
        %v5773 = vor.u32 %v5769, %v5772
        %v5774 = vrot.slane %v5773, 4
        %v5776 = vshll.u32 %v5648, 16
        %v5778 = vrot.slane %v5776, 5
        %v5779 = vsel %vm354, %v5774, %v5778
        %v5780 = vshrl.u32 %v5648, 16
        %v5782 = vrot.slane %v5780, 4
        %v5783 = vor.u32 %v5782, %v5778
        %v5784 = vrot.slane %v5783, 4
        %v5786 = vshll.u32 %v5649, 16
        %v5788 = vrot.slane %v5786, 5
        %v5789 = vsel %vm354, %v5784, %v5788
        %v5790 = vshrl.u32 %v5649, 16
        %v5792 = vrot.slane %v5790, 4
        %v5793 = vor.u32 %v5792, %v5788
        %v5794 = vrot.slane %v5793, 4
        %v5796 = vshll.u32 %v5650, 16
        %v5798 = vrot.slane %v5796, 5
        %v5799 = vsel %vm354, %v5794, %v5798
        %v5800 = vshrl.u32 %v5650, 16
        %v5802 = vrot.slane %v5800, 4
        %v5803 = vor.u32 %v5802, %v5798
        %v5804 = vrot.slane %v5803, 4
        %v5806 = vshll.u32 %v5651, 16
        %v5808 = vrot.slane %v5806, 5
        %v5809 = vsel %vm354, %v5804, %v5808
        %v5811 = vshrl.u32 %v5652, 16
        %v5813 = vrot.slane %v5811, 4
        %v5814 = vshll.u32 %v5652, 16
        %v5816 = vrot.slane %v5814, 5
        %v5817 = vor.u32 %v5813, %v5816
        %v5818 = vrot.slane %v5817, 4
        %v5820 = vshll.u32 %v5653, 16
        %v5822 = vrot.slane %v5820, 5
        %v5823 = vsel %vm354, %v5818, %v5822
        %v5824 = vshrl.u32 %v5653, 16
        %v5826 = vrot.slane %v5824, 4
        %v5827 = vor.u32 %v5826, %v5822
        %v5828 = vrot.slane %v5827, 4
        %v5830 = vshll.u32 %v5654, 16
        %v5832 = vrot.slane %v5830, 5
        %v5833 = vsel %vm354, %v5828, %v5832
        %v5834 = vshrl.u32 %v5654, 16
        %v5836 = vrot.slane %v5834, 4
        %v5837 = vor.u32 %v5836, %v5832
        %v5838 = vrot.slane %v5837, 4
        %v5840 = vshll.u32 %v5655, 16
        %v5842 = vrot.slane %v5840, 5
        %v5843 = vsel %vm354, %v5838, %v5842
        %v5844 = vshrl.u32 %v5655, 16
        %v5846 = vrot.slane %v5844, 4
        %v5847 = vor.u32 %v5846, %v5842
        %v5848 = vrot.slane %v5847, 4
        %v5850 = vshll.u32 %v5656, 16
        %v5852 = vrot.slane %v5850, 5
        %v5853 = vsel %vm354, %v5848, %v5852
        %v5855 = vshrl.u32 %v5657, 16
        %v5857 = vrot.slane %v5855, 4
        %v5858 = vshll.u32 %v5657, 16
        %v5860 = vrot.slane %v5858, 5
        %v5861 = vor.u32 %v5857, %v5860
        %v5862 = vrot.slane %v5861, 4
        %v5864 = vshll.u32 %v5658, 16
        %v5866 = vrot.slane %v5864, 5
        %v5867 = vsel %vm354, %v5862, %v5866
        %v5868 = vshrl.u32 %v5658, 16
        %v5870 = vrot.slane %v5868, 4
        %v5871 = vor.u32 %v5870, %v5866
        %v5872 = vrot.slane %v5871, 4
        %v5874 = vshll.u32 %v5659, 16
        %v5876 = vrot.slane %v5874, 5
        %v5877 = vsel %vm354, %v5872, %v5876
        %v5878 = vshrl.u32 %v5659, 16
        %v5880 = vrot.slane %v5878, 4
        %v5881 = vor.u32 %v5880, %v5876
        %v5882 = vrot.slane %v5881, 4
        %v5884 = vshll.u32 %v5660, 16
        %v5886 = vrot.slane %v5884, 5
        %v5887 = vsel %vm354, %v5882, %v5886
        %v5888 = vshrl.u32 %v5660, 16
        %v5890 = vrot.slane %v5888, 4
        %v5891 = vor.u32 %v5890, %v5886
        %v5892 = vrot.slane %v5891, 4
        %v5894 = vshll.u32 %v5661, 16
        %v5896 = vrot.slane %v5894, 5
        %v5897 = vsel %vm354, %v5892, %v5896
        %v5899 = vshrl.u32 %v5662, 16
        %v5901 = vrot.slane %v5899, 4
        %v5902 = vshll.u32 %v5662, 16
        %v5904 = vrot.slane %v5902, 5
        %v5905 = vor.u32 %v5901, %v5904
        %v5906 = vrot.slane %v5905, 4
        %v5908 = vshll.u32 %v5663, 16
        %v5910 = vrot.slane %v5908, 5
        %v5911 = vsel %vm354, %v5906, %v5910
        %v5912 = vshrl.u32 %v5663, 16
        %v5914 = vrot.slane %v5912, 4
        %v5915 = vor.u32 %v5914, %v5910
        %v5916 = vrot.slane %v5915, 4
        %v5918 = vshll.u32 %v5664, 16
        %v5920 = vrot.slane %v5918, 5
        %v5921 = vsel %vm354, %v5916, %v5920
        %v5922 = vshrl.u32 %v5664, 16
        %v5924 = vrot.slane %v5922, 4
        %v5925 = vor.u32 %v5924, %v5920
        %v5926 = vrot.slane %v5925, 4
        %v5928 = vshll.u32 %v5665, 16
        %v5930 = vrot.slane %v5928, 5
        %v5931 = vsel %vm354, %v5926, %v5930
        %v5932 = vshrl.u32 %v5665, 16
        %v5934 = vrot.slane %v5932, 4
        %v5935 = vor.u32 %v5934, %v5930
        %v5936 = vrot.slane %v5935, 4
        %v5938 = vshll.u32 %v5666, 16
        %v5940 = vrot.slane %v5938, 5
        %v5941 = vsel %vm354, %v5936, %v5940
        %v5943 = vshrl.u32 %v5667, 16
        %v5945 = vrot.slane %v5943, 4
        %v5946 = vshll.u32 %v5667, 16
        %v5948 = vrot.slane %v5946, 5
        %v5949 = vor.u32 %v5945, %v5948
        %v5950 = vrot.slane %v5949, 4
        %v5952 = vshll.u32 %v5668, 16
        %v5954 = vrot.slane %v5952, 5
        %v5955 = vsel %vm354, %v5950, %v5954
        %v5956 = vshrl.u32 %v5668, 16
        %v5958 = vrot.slane %v5956, 4
        %v5959 = vor.u32 %v5958, %v5954
        %v5960 = vrot.slane %v5959, 4
        %v5962 = vshll.u32 %v5669, 16
        %v5964 = vrot.slane %v5962, 5
        %v5965 = vsel %vm354, %v5960, %v5964
        %v5966 = vshrl.u32 %v5669, 16
        %v5968 = vrot.slane %v5966, 4
        %v5969 = vor.u32 %v5968, %v5964
        %v5970 = vrot.slane %v5969, 4
        %v5972 = vshll.u32 %v5670, 16
        %v5974 = vrot.slane %v5972, 5
        %v5975 = vsel %vm354, %v5970, %v5974
        %v5976 = vshrl.u32 %v5670, 16
        %v5978 = vrot.slane %v5976, 4
        %v5979 = vor.u32 %v5978, %v5974
        %v5980 = vrot.slane %v5979, 4
        %v5982 = vshll.u32 %v5671, 16
        %v5984 = vrot.slane %v5982, 5
        %v5985 = vsel %vm354, %v5980, %v5984
        %v5987 = vshrl.u32 %v5672, 16
        %v5989 = vrot.slane %v5987, 4
        %v5990 = vshll.u32 %v5672, 16
        %v5992 = vrot.slane %v5990, 5
        %v5993 = vor.u32 %v5989, %v5992
        %v5994 = vrot.slane %v5993, 4
        %v5996 = vshll.u32 %v5673, 16
        %v5998 = vrot.slane %v5996, 5
        %v5999 = vsel %vm354, %v5994, %v5998
        %v6000 = vshrl.u32 %v5673, 16
        %v6002 = vrot.slane %v6000, 4
        %v6003 = vor.u32 %v6002, %v5998
        %v6004 = vrot.slane %v6003, 4
        %v6006 = vshll.u32 %v5674, 16
        %v6008 = vrot.slane %v6006, 5
        %v6009 = vsel %vm354, %v6004, %v6008
        %v6010 = vshrl.u32 %v5674, 16
        %v6012 = vrot.slane %v6010, 4
        %v6013 = vor.u32 %v6012, %v6008
        %v6014 = vrot.slane %v6013, 4
        %v6016 = vshll.u32 %v5675, 16
        %v6018 = vrot.slane %v6016, 5
        %v6019 = vsel %vm354, %v6014, %v6018
        %v6020 = vshrl.u32 %v5675, 16
        %v6022 = vrot.slane %v6020, 4
        %v6023 = vor.u32 %v6022, %v6018
        %v6024 = vrot.slane %v6023, 4
        %v6026 = vshll.u32 %v5676, 16
        %v6028 = vrot.slane %v6026, 5
        %v6029 = vsel %vm354, %v6024, %v6028
        %v6031 = vshrl.u32 %v5677, 16
        %v6033 = vrot.slane %v6031, 4
        %v6034 = vshll.u32 %v5677, 16
        %v6036 = vrot.slane %v6034, 5
        %v6037 = vor.u32 %v6033, %v6036
        %v6038 = vrot.slane %v6037, 4
        %v6040 = vshll.u32 %v5678, 16
        %v6042 = vrot.slane %v6040, 5
        %v6043 = vsel %vm354, %v6038, %v6042
        %v6044 = vshrl.u32 %v5678, 16
        %v6046 = vrot.slane %v6044, 4
        %v6047 = vor.u32 %v6046, %v6042
        %v6048 = vrot.slane %v6047, 4
        %v6050 = vshll.u32 %v5679, 16
        %v6052 = vrot.slane %v6050, 5
        %v6053 = vsel %vm354, %v6048, %v6052
        %v6054 = vshrl.u32 %v5679, 16
        %v6056 = vrot.slane %v6054, 4
        %v6057 = vor.u32 %v6056, %v6052
        %v6058 = vrot.slane %v6057, 4
        %v6060 = vshll.u32 %v5680, 16
        %v6062 = vrot.slane %v6060, 5
        %v6063 = vsel %vm354, %v6058, %v6062
        %v6064 = vshrl.u32 %v5680, 16
        %v6066 = vrot.slane %v6064, 4
        %v6067 = vor.u32 %v6066, %v6062
        %v6068 = vrot.slane %v6067, 4
        %v6070 = vshll.u32 %v5681, 16
        %v6072 = vrot.slane %v6070, 5
        %v6073 = vsel %vm354, %v6068, %v6072
        %v6075 = vshrl.u32 %v5682, 16
        %v6077 = vrot.slane %v6075, 4
        %v6078 = vshll.u32 %v5682, 16
        %v6080 = vrot.slane %v6078, 5
        %v6081 = vor.u32 %v6077, %v6080
        %v6082 = vrot.slane %v6081, 4
        %v6084 = vshll.u32 %v5683, 16
        %v6086 = vrot.slane %v6084, 5
        %v6087 = vsel %vm354, %v6082, %v6086
        %v6088 = vshrl.u32 %v5683, 16
        %v6090 = vrot.slane %v6088, 4
        %v6091 = vor.u32 %v6090, %v6086
        %v6092 = vrot.slane %v6091, 4
        %v6094 = vshll.u32 %v5684, 16
        %v6096 = vrot.slane %v6094, 5
        %v6097 = vsel %vm354, %v6092, %v6096
        %v6098 = vshrl.u32 %v5684, 16
        %v6100 = vrot.slane %v6098, 4
        %v6101 = vor.u32 %v6100, %v6096
        %v6102 = vrot.slane %v6101, 4
        %v6104 = vshll.u32 %v5685, 16
        %v6106 = vrot.slane %v6104, 5
        %v6107 = vsel %vm354, %v6102, %v6106
        %v6108 = vshrl.u32 %v5685, 16
        %v6110 = vrot.slane %v6108, 4
        %v6111 = vor.u32 %v6110, %v6106
        %v6112 = vrot.slane %v6111, 4
        %v6114 = vshll.u32 %v5686, 16
        %v6116 = vrot.slane %v6114, 5
        %v6117 = vsel %vm354, %v6112, %v6116
        %v6119 = vshrl.u32 %v5687, 16
        %v6121 = vrot.slane %v6119, 4
        %v6122 = vshll.u32 %v5687, 16
        %v6124 = vrot.slane %v6122, 5
        %v6125 = vor.u32 %v6121, %v6124
        %v6126 = vrot.slane %v6125, 4
        %v6128 = vshll.u32 %v5688, 16
        %v6130 = vrot.slane %v6128, 5
        %v6131 = vsel %vm354, %v6126, %v6130
        %v6132 = vshrl.u32 %v5688, 16
        %v6134 = vrot.slane %v6132, 4
        %v6135 = vor.u32 %v6134, %v6130
        %v6136 = vrot.slane %v6135, 4
        %v6138 = vshll.u32 %v5689, 16
        %v6140 = vrot.slane %v6138, 5
        %v6141 = vsel %vm354, %v6136, %v6140
        %v6142 = vshrl.u32 %v5689, 16
        %v6144 = vrot.slane %v6142, 4
        %v6145 = vor.u32 %v6144, %v6140
        %v6146 = vrot.slane %v6145, 4
        %v6148 = vshll.u32 %v5690, 16
        %v6150 = vrot.slane %v6148, 5
        %v6151 = vsel %vm354, %v6146, %v6150
        %v6152 = vshrl.u32 %v5690, 16
        %v6154 = vrot.slane %v6152, 4
        %v6155 = vor.u32 %v6154, %v6150
        %v6156 = vrot.slane %v6155, 4
        %v6158 = vshll.u32 %v5691, 16
        %v6160 = vrot.slane %v6158, 5
        %v6161 = vsel %vm354, %v6156, %v6160
        %v6163 = vshrl.u32 %v5692, 16
        %v6165 = vrot.slane %v6163, 4
        %v6166 = vshll.u32 %v5692, 16
        %v6168 = vrot.slane %v6166, 5
        %v6169 = vor.u32 %v6165, %v6168
        %v6170 = vrot.slane %v6169, 4
        %v6172 = vshll.u32 %v5693, 16
        %v6174 = vrot.slane %v6172, 5
        %v6175 = vsel %vm354, %v6170, %v6174
        %v6176 = vshrl.u32 %v5693, 16
        %v6178 = vrot.slane %v6176, 4
        %v6179 = vor.u32 %v6178, %v6174
        %v6180 = vrot.slane %v6179, 4
        %v6182 = vshll.u32 %v5694, 16
        %v6184 = vrot.slane %v6182, 5
        %v6185 = vsel %vm354, %v6180, %v6184
        %v6186 = vshrl.u32 %v5694, 16
        %v6188 = vrot.slane %v6186, 4
        %v6189 = vor.u32 %v6188, %v6184
        %v6190 = vrot.slane %v6189, 4
        %v6192 = vshll.u32 %v5695, 16
        %v6194 = vrot.slane %v6192, 5
        %v6195 = vsel %vm354, %v6190, %v6194
        %v6196 = vshrl.u32 %v5695, 16
        %v6198 = vrot.slane %v6196, 4
        %v6199 = vor.u32 %v6198, %v6194
        %v6200 = vrot.slane %v6199, 4
        %v6202 = vshll.u32 %v5696, 16
        %v6204 = vrot.slane %v6202, 5
        %v6205 = vsel %vm354, %v6200, %v6204
        %v6207 = vshrl.u32 %v5697, 16
        %v6209 = vrot.slane %v6207, 4
        %v6210 = vshll.u32 %v5697, 16
        %v6212 = vrot.slane %v6210, 5
        %v6213 = vor.u32 %v6209, %v6212
        %v6214 = vrot.slane %v6213, 4
        %v6216 = vshll.u32 %v5698, 16
        %v6218 = vrot.slane %v6216, 5
        %v6219 = vsel %vm354, %v6214, %v6218
        %v6220 = vshrl.u32 %v5698, 16
        %v6222 = vrot.slane %v6220, 4
        %v6223 = vor.u32 %v6222, %v6218
        %v6224 = vrot.slane %v6223, 4
        %v6226 = vshll.u32 %v5699, 16
        %v6228 = vrot.slane %v6226, 5
        %v6229 = vsel %vm354, %v6224, %v6228
        %v6230 = vshrl.u32 %v5699, 16
        %v6232 = vrot.slane %v6230, 4
        %v6233 = vor.u32 %v6232, %v6228
        %v6234 = vrot.slane %v6233, 4
        %v6236 = vshll.u32 %v5700, 16
        %v6238 = vrot.slane %v6236, 5
        %v6239 = vsel %vm354, %v6234, %v6238
        %v6240 = vshrl.u32 %v5700, 16
        %v6242 = vrot.slane %v6240, 4
        %v6243 = vor.u32 %v6242, %v6238
        %v6244 = vrot.slane %v6243, 4
        %v6246 = vshll.u32 %v5701, 16
        %v6248 = vrot.slane %v6246, 5
        %v6249 = vsel %vm354, %v6244, %v6248
        %v6251 = vshrl.u32 %v5702, 16
        %v6253 = vrot.slane %v6251, 4
        %v6254 = vshll.u32 %v5702, 16
        %v6256 = vrot.slane %v6254, 5
        %v6257 = vor.u32 %v6253, %v6256
        %v6258 = vrot.slane %v6257, 4
        %v6260 = vshll.u32 %v5703, 16
        %v6262 = vrot.slane %v6260, 5
        %v6263 = vsel %vm354, %v6258, %v6262
        %v6264 = vshrl.u32 %v5703, 16
        %v6266 = vrot.slane %v6264, 4
        %v6267 = vor.u32 %v6266, %v6262
        %v6268 = vrot.slane %v6267, 4
        %v6270 = vshll.u32 %v5704, 16
        %v6272 = vrot.slane %v6270, 5
        %v6273 = vsel %vm354, %v6268, %v6272
        %v6274 = vshrl.u32 %v5704, 16
        %v6276 = vrot.slane %v6274, 4
        %v6277 = vor.u32 %v6276, %v6272
        %v6278 = vrot.slane %v6277, 4
        %v6280 = vshll.u32 %v5705, 16
        %v6282 = vrot.slane %v6280, 5
        %v6283 = vsel %vm354, %v6278, %v6282
        %v6284 = vshrl.u32 %v5705, 16
        %v6286 = vrot.slane %v6284, 4
        %v6287 = vor.u32 %v6286, %v6282
        %v6288 = vrot.slane %v6287, 4
        %v6290 = vshll.u32 %v5706, 16
        %v6292 = vrot.slane %v6290, 5
        %v6293 = vsel %vm354, %v6288, %v6292
        %v6295 = vshrl.u32 %v5707, 16
        %v6297 = vrot.slane %v6295, 4
        %v6298 = vshll.u32 %v5707, 16
        %v6300 = vrot.slane %v6298, 5
        %v6301 = vor.u32 %v6297, %v6300
        %v6302 = vrot.slane %v6301, 4
        %v6304 = vshll.u32 %v5708, 16
        %v6306 = vrot.slane %v6304, 5
        %v6307 = vsel %vm354, %v6302, %v6306
        %v6308 = vshrl.u32 %v5708, 16
        %v6310 = vrot.slane %v6308, 4
        %v6311 = vor.u32 %v6310, %v6306
        %v6312 = vrot.slane %v6311, 4
        %v6314 = vshll.u32 %v5709, 16
        %v6316 = vrot.slane %v6314, 5
        %v6317 = vsel %vm354, %v6312, %v6316
        %v6318 = vshrl.u32 %v5709, 16
        %v6320 = vrot.slane %v6318, 4
        %v6321 = vor.u32 %v6320, %v6316
        %v6322 = vrot.slane %v6321, 4
        %v6324 = vshll.u32 %v5710, 16
        %v6326 = vrot.slane %v6324, 5
        %v6327 = vsel %vm354, %v6322, %v6326
        %v6328 = vshrl.u32 %v5710, 16
        %v6330 = vrot.slane %v6328, 4
        %v6331 = vor.u32 %v6330, %v6326
        %v6332 = vrot.slane %v6331, 4
        %v6334 = vshll.u32 %v5711, 16
        %v6336 = vrot.slane %v6334, 5
        %v6337 = vsel %vm354, %v6332, %v6336
        %v6339 = vshrl.u32 %v5712, 16
        %v6341 = vrot.slane %v6339, 4
        %v6342 = vshll.u32 %v5712, 16
        %v6344 = vrot.slane %v6342, 5
        %v6345 = vor.u32 %v6341, %v6344
        %v6346 = vrot.slane %v6345, 4
        %v6348 = vshll.u32 %v5713, 16
        %v6350 = vrot.slane %v6348, 5
        %v6351 = vsel %vm354, %v6346, %v6350
        %v6352 = vshrl.u32 %v5713, 16
        %v6354 = vrot.slane %v6352, 4
        %v6355 = vor.u32 %v6354, %v6350
        %v6356 = vrot.slane %v6355, 4
        %v6358 = vshll.u32 %v5714, 16
        %v6360 = vrot.slane %v6358, 5
        %v6361 = vsel %vm354, %v6356, %v6360
        %v6362 = vshrl.u32 %v5714, 16
        %v6364 = vrot.slane %v6362, 4
        %v6365 = vor.u32 %v6364, %v6360
        %v6366 = vrot.slane %v6365, 4
        %v6368 = vshll.u32 %v5715, 16
        %v6370 = vrot.slane %v6368, 5
        %v6371 = vsel %vm354, %v6366, %v6370
        %v6372 = vshrl.u32 %v5715, 16
        %v6374 = vrot.slane %v6372, 4
        %v6375 = vor.u32 %v6374, %v6370
        %v6376 = vrot.slane %v6375, 4
        %v6378 = vshll.u32 %v5716, 16
        %v6380 = vrot.slane %v6378, 5
        %v6381 = vsel %vm354, %v6376, %v6380
        %v6383 = vshrl.u32 %v5717, 16
        %v6385 = vrot.slane %v6383, 4
        %v6386 = vshll.u32 %v5717, 16
        %v6388 = vrot.slane %v6386, 5
        %v6389 = vor.u32 %v6385, %v6388
        %v6390 = vrot.slane %v6389, 4
        %v6392 = vshll.u32 %v5718, 16
        %v6394 = vrot.slane %v6392, 5
        %v6395 = vsel %vm354, %v6390, %v6394
        %v6396 = vshrl.u32 %v5718, 16
        %v6398 = vrot.slane %v6396, 4
        %v6399 = vor.u32 %v6398, %v6394
        %v6400 = vrot.slane %v6399, 4
        %v6402 = vshll.u32 %v5719, 16
        %v6404 = vrot.slane %v6402, 5
        %v6405 = vsel %vm354, %v6400, %v6404
        %v6406 = vshrl.u32 %v5719, 16
        %v6408 = vrot.slane %v6406, 4
        %v6409 = vor.u32 %v6408, %v6404
        %v6410 = vrot.slane %v6409, 4
        %v6412 = vshll.u32 %v5720, 16
        %v6414 = vrot.slane %v6412, 5
        %v6415 = vsel %vm354, %v6410, %v6414
        %v6416 = vshrl.u32 %v5720, 16
        %v6418 = vrot.slane %v6416, 4
        %v6419 = vor.u32 %v6418, %v6414
        %v6420 = vrot.slane %v6419, 4
        %v6422 = vshll.u32 %v5721, 16
        %v6424 = vrot.slane %v6422, 5
        %v6425 = vsel %vm354, %v6420, %v6424
        %s6426 = scalar_lea.vmem %s1, 56
        %v6427 = vld [vmem:[%s6426] sm:$0xf]
        %v6428 = vld [vmem:[%s6426 + $0x4] sm:$0xf]
        %v6429 = vunpack.c.l.b16 %v5735
        %v6430 = vunpack.c.l.b16 %v5745
        %v6431 = vunpack.c.l.b16 %v5755
        %v6432 = vunpack.c.l.b16 %v5765
        %v6433 = vunpack.c.l.b16 %v5779
        %v6434 = vunpack.c.l.b16 %v5789
        %v6435 = vunpack.c.l.b16 %v5799
        %v6436 = vunpack.c.l.b16 %v5809
        %v6437 = vunpack.c.l.b16 %v5823
        %v6438 = vunpack.c.l.b16 %v5833
        %v6439 = vunpack.c.l.b16 %v5843
        %v6440 = vunpack.c.l.b16 %v5853
        %v6441 = vunpack.c.l.b16 %v5867
        %v6442 = vunpack.c.l.b16 %v5877
        %v6443 = vunpack.c.l.b16 %v5887
        %v6444 = vunpack.c.l.b16 %v5897
        %v6445 = vunpack.c.l.b16 %v5911
        %v6446 = vunpack.c.l.b16 %v5921
        %v6447 = vunpack.c.l.b16 %v5931
        %v6448 = vunpack.c.l.b16 %v5941
        %v6449 = vunpack.c.l.b16 %v5955
        %v6450 = vunpack.c.l.b16 %v5965
        %v6451 = vunpack.c.l.b16 %v5975
        %v6452 = vunpack.c.l.b16 %v5985
        %v6453 = vunpack.c.l.b16 %v5999
        %v6454 = vunpack.c.l.b16 %v6009
        %v6455 = vunpack.c.l.b16 %v6019
        %v6456 = vunpack.c.l.b16 %v6029
        %v6457 = vunpack.c.l.b16 %v6043
        %v6458 = vunpack.c.l.b16 %v6053
        %v6459 = vunpack.c.l.b16 %v6063
        %v6460 = vunpack.c.l.b16 %v6073
        %v6461 = vunpack.c.l.b16 %v6087
        %v6462 = vunpack.c.l.b16 %v6097
        %v6463 = vunpack.c.l.b16 %v6107
        %v6464 = vunpack.c.l.b16 %v6117
        %v6465 = vunpack.c.l.b16 %v6131
        %v6466 = vunpack.c.l.b16 %v6141
        %v6467 = vunpack.c.l.b16 %v6151
        %v6468 = vunpack.c.l.b16 %v6161
        %v6469 = vunpack.c.l.b16 %v6175
        %v6470 = vunpack.c.l.b16 %v6185
        %v6471 = vunpack.c.l.b16 %v6195
        %v6472 = vunpack.c.l.b16 %v6205
        %v6473 = vunpack.c.l.b16 %v6219
        %v6474 = vunpack.c.l.b16 %v6229
        %v6475 = vunpack.c.l.b16 %v6239
        %v6476 = vunpack.c.l.b16 %v6249
        %v6477 = vunpack.c.l.b16 %v6263
        %v6478 = vunpack.c.l.b16 %v6273
        %v6479 = vunpack.c.l.b16 %v6283
        %v6480 = vunpack.c.l.b16 %v6293
        %v6481 = vunpack.c.l.b16 %v6307
        %v6482 = vunpack.c.l.b16 %v6317
        %v6483 = vunpack.c.l.b16 %v6327
        %v6484 = vunpack.c.l.b16 %v6337
        %v6485 = vunpack.c.l.b16 %v6351
        %v6486 = vunpack.c.l.b16 %v6361
        %v6487 = vunpack.c.l.b16 %v6371
        %v6488 = vunpack.c.l.b16 %v6381
        %v6489 = vunpack.c.l.b16 %v6395
        %v6490 = vunpack.c.l.b16 %v6405
        %v6491 = vunpack.c.l.b16 %v6415
        %v6492 = vunpack.c.l.b16 %v6425
        %v6493 = vpack.c.b16 %v6430, %v6429
        %v6494 = vpack.c.b16 %v6432, %v6431
        %v6495 = vpack.c.b16 %v6434, %v6433
        %v6496 = vpack.c.b16 %v6436, %v6435
        %v6497 = vpack.c.b16 %v6438, %v6437
        %v6498 = vpack.c.b16 %v6440, %v6439
        %v6499 = vpack.c.b16 %v6442, %v6441
        %v6500 = vpack.c.b16 %v6444, %v6443
        %v6501 = vpack.c.b16 %v6446, %v6445
        %v6502 = vpack.c.b16 %v6448, %v6447
        %v6503 = vpack.c.b16 %v6450, %v6449
        %v6504 = vpack.c.b16 %v6452, %v6451
        %v6505 = vpack.c.b16 %v6454, %v6453
        %v6506 = vpack.c.b16 %v6456, %v6455
        %v6507 = vpack.c.b16 %v6458, %v6457
        %v6508 = vpack.c.b16 %v6460, %v6459
        %v6509 = vpack.c.b16 %v6462, %v6461
        %v6510 = vpack.c.b16 %v6464, %v6463
        %v6511 = vpack.c.b16 %v6466, %v6465
        %v6512 = vpack.c.b16 %v6468, %v6467
        %v6513 = vpack.c.b16 %v6470, %v6469
        %v6514 = vpack.c.b16 %v6472, %v6471
        %v6515 = vpack.c.b16 %v6474, %v6473
        %v6516 = vpack.c.b16 %v6476, %v6475
        %v6517 = vpack.c.b16 %v6478, %v6477
        %v6518 = vpack.c.b16 %v6480, %v6479
        %v6519 = vpack.c.b16 %v6482, %v6481
        %v6520 = vpack.c.b16 %v6484, %v6483
        %v6521 = vpack.c.b16 %v6486, %v6485
        %v6522 = vpack.c.b16 %v6488, %v6487
        %v6523 = vpack.c.b16 %v6490, %v6489
        %v6524 = vpack.c.b16 %v6492, %v6491
        %v6527 = vunpack.c.l.b16 %v6427
        %v6528 = vunpack.c.l.b16 %v6428
        %v6529 = vpack.c.b16 %v6528, %v6527
        %v6532 = vsel %vm1164, %v6493, 0
        %v6535 = vsel %vm1164, %v6494, 0
        %v6538 = vsel %vm1164, %v6495, 0
        %v6541 = vsel %vm1164, %v6496, 0
        %v6544 = vsel %vm1164, %v6497, 0
        %v6547 = vsel %vm1164, %v6498, 0
        %v6550 = vsel %vm1164, %v6499, 0
        %v6553 = vsel %vm1164, %v6500, 0
        %v6556 = vsel %vm1164, %v6501, 0
        %v6559 = vsel %vm1164, %v6502, 0
        %v6562 = vsel %vm1164, %v6503, 0
        %v6565 = vsel %vm1164, %v6504, 0
        %v6568 = vsel %vm1164, %v6505, 0
        %v6571 = vsel %vm1164, %v6506, 0
        %v6574 = vsel %vm1164, %v6507, 0
        %v6577 = vsel %vm1164, %v6508, 0
        %v6580 = vsel %vm1164, %v6509, 0
        %v6583 = vsel %vm1164, %v6510, 0
        %v6586 = vsel %vm1164, %v6511, 0
        %v6589 = vsel %vm1164, %v6512, 0
        %v6592 = vsel %vm1164, %v6513, 0
        %v6595 = vsel %vm1164, %v6514, 0
        %v6598 = vsel %vm1164, %v6515, 0
        %v6601 = vsel %vm1164, %v6516, 0
        %v6604 = vsel %vm1164, %v6517, 0
        %v6607 = vsel %vm1164, %v6518, 0
        %v6610 = vsel %vm1164, %v6519, 0
        %v6613 = vsel %vm1164, %v6520, 0
        %v6616 = vsel %vm1164, %v6521, 0
        %v6619 = vsel %vm1164, %v6522, 0
        %v6622 = vsel %vm1164, %v6523, 0
        %v6625 = vsel %vm1164, %v6524, 0
        %6627 = vmatpush.bf16.msra.mxu0 0
        %6628 = vmatpush.bf16.msra.mxu0 0
        %6629 = vmatpush.bf16.msra.mxu0 0
        %6630 = vmatpush.bf16.msra.mxu0 0
        %6631 = vmatpush.bf16.msra.mxu0 0
        %6632 = vmatpush.bf16.msra.mxu0 0
        %6633 = vmatpush.bf16.msra.mxu0 0
        %6634 = vmatpush.bf16.msra.mxu0 %v6529
        %6635 = vmatmul.bf16.gmra.mxu0 %v6532
        %v6636 = vpop.f32.mrf.mxu0
        %v6637 = vadd.f32 0.0, %v6636
        %v6638 = vpop.f32.mrf.mxu0
        %v6639 = vadd.f32 0.0, %v6638
        %6640 = vmatmul.bf16.gmra.mxu0 %v6535
        %v6641 = vpop.f32.mrf.mxu0
        %v6642 = vadd.f32 0.0, %v6641
        %v6643 = vpop.f32.mrf.mxu0
        %v6644 = vadd.f32 0.0, %v6643
        %6645 = vmatmul.bf16.gmra.mxu0 %v6538
        %v6646 = vpop.f32.mrf.mxu0
        %v6647 = vadd.f32 0.0, %v6646
        %v6648 = vpop.f32.mrf.mxu0
        %v6649 = vadd.f32 0.0, %v6648
        %6650 = vmatmul.bf16.gmra.mxu0 %v6541
        %v6651 = vpop.f32.mrf.mxu0
        %v6652 = vadd.f32 0.0, %v6651
        %v6653 = vpop.f32.mrf.mxu0
        %v6654 = vadd.f32 0.0, %v6653
        %6655 = vmatmul.bf16.gmra.mxu0 %v6544
        %v6656 = vpop.f32.mrf.mxu0
        %v6657 = vadd.f32 0.0, %v6656
        %v6658 = vpop.f32.mrf.mxu0
        %v6659 = vadd.f32 0.0, %v6658
        %6660 = vmatmul.bf16.gmra.mxu0 %v6547
        %v6661 = vpop.f32.mrf.mxu0
        %v6662 = vadd.f32 0.0, %v6661
        %v6663 = vpop.f32.mrf.mxu0
        %v6664 = vadd.f32 0.0, %v6663
        %6665 = vmatmul.bf16.gmra.mxu0 %v6550
        %v6666 = vpop.f32.mrf.mxu0
        %v6667 = vadd.f32 0.0, %v6666
        %v6668 = vpop.f32.mrf.mxu0
        %v6669 = vadd.f32 0.0, %v6668
        %6670 = vmatmul.bf16.gmra.mxu0 %v6553
        %v6671 = vpop.f32.mrf.mxu0
        %v6672 = vadd.f32 0.0, %v6671
        %v6673 = vpop.f32.mrf.mxu0
        %v6674 = vadd.f32 0.0, %v6673
        %6675 = vmatmul.bf16.gmra.mxu0 %v6556
        %v6676 = vpop.f32.mrf.mxu0
        %v6677 = vadd.f32 0.0, %v6676
        %v6678 = vpop.f32.mrf.mxu0
        %v6679 = vadd.f32 0.0, %v6678
        %6680 = vmatmul.bf16.gmra.mxu0 %v6559
        %v6681 = vpop.f32.mrf.mxu0
        %v6682 = vadd.f32 0.0, %v6681
        %v6683 = vpop.f32.mrf.mxu0
        %v6684 = vadd.f32 0.0, %v6683
        %6685 = vmatmul.bf16.gmra.mxu0 %v6562
        %v6686 = vpop.f32.mrf.mxu0
        %v6687 = vadd.f32 0.0, %v6686
        %v6688 = vpop.f32.mrf.mxu0
        %v6689 = vadd.f32 0.0, %v6688
        %6690 = vmatmul.bf16.gmra.mxu0 %v6565
        %v6691 = vpop.f32.mrf.mxu0
        %v6692 = vadd.f32 0.0, %v6691
        %v6693 = vpop.f32.mrf.mxu0
        %v6694 = vadd.f32 0.0, %v6693
        %6695 = vmatmul.bf16.gmra.mxu0 %v6568
        %v6696 = vpop.f32.mrf.mxu0
        %v6697 = vadd.f32 0.0, %v6696
        %v6698 = vpop.f32.mrf.mxu0
        %v6699 = vadd.f32 0.0, %v6698
        %6700 = vmatmul.bf16.gmra.mxu0 %v6571
        %v6701 = vpop.f32.mrf.mxu0
        %v6702 = vadd.f32 0.0, %v6701
        %v6703 = vpop.f32.mrf.mxu0
        %v6704 = vadd.f32 0.0, %v6703
        %6705 = vmatmul.bf16.gmra.mxu0 %v6574
        %v6706 = vpop.f32.mrf.mxu0
        %v6707 = vadd.f32 0.0, %v6706
        %v6708 = vpop.f32.mrf.mxu0
        %v6709 = vadd.f32 0.0, %v6708
        %6710 = vmatmul.bf16.gmra.mxu0 %v6577
        %v6711 = vpop.f32.mrf.mxu0
        %v6712 = vadd.f32 0.0, %v6711
        %v6713 = vpop.f32.mrf.mxu0
        %v6714 = vadd.f32 0.0, %v6713
        %6715 = vmatmul.bf16.gmra.mxu0 %v6580
        %v6716 = vpop.f32.mrf.mxu0
        %v6717 = vadd.f32 0.0, %v6716
        %v6718 = vpop.f32.mrf.mxu0
        %v6719 = vadd.f32 0.0, %v6718
        %6720 = vmatmul.bf16.gmra.mxu0 %v6583
        %v6721 = vpop.f32.mrf.mxu0
        %v6722 = vadd.f32 0.0, %v6721
        %v6723 = vpop.f32.mrf.mxu0
        %v6724 = vadd.f32 0.0, %v6723
        %6725 = vmatmul.bf16.gmra.mxu0 %v6586
        %v6726 = vpop.f32.mrf.mxu0
        %v6727 = vadd.f32 0.0, %v6726
        %v6728 = vpop.f32.mrf.mxu0
        %v6729 = vadd.f32 0.0, %v6728
        %6730 = vmatmul.bf16.gmra.mxu0 %v6589
        %v6731 = vpop.f32.mrf.mxu0
        %v6732 = vadd.f32 0.0, %v6731
        %v6733 = vpop.f32.mrf.mxu0
        %v6734 = vadd.f32 0.0, %v6733
        %6735 = vmatmul.bf16.gmra.mxu0 %v6592
        %v6736 = vpop.f32.mrf.mxu0
        %v6737 = vadd.f32 0.0, %v6736
        %v6738 = vpop.f32.mrf.mxu0
        %v6739 = vadd.f32 0.0, %v6738
        %6740 = vmatmul.bf16.gmra.mxu0 %v6595
        %v6741 = vpop.f32.mrf.mxu0
        %v6742 = vadd.f32 0.0, %v6741
        %v6743 = vpop.f32.mrf.mxu0
        %v6744 = vadd.f32 0.0, %v6743
        %6745 = vmatmul.bf16.gmra.mxu0 %v6598
        %v6746 = vpop.f32.mrf.mxu0
        %v6747 = vadd.f32 0.0, %v6746
        %v6748 = vpop.f32.mrf.mxu0
        %v6749 = vadd.f32 0.0, %v6748
        %6750 = vmatmul.bf16.gmra.mxu0 %v6601
        %v6751 = vpop.f32.mrf.mxu0
        %v6752 = vadd.f32 0.0, %v6751
        %v6753 = vpop.f32.mrf.mxu0
        %v6754 = vadd.f32 0.0, %v6753
        %6755 = vmatmul.bf16.gmra.mxu0 %v6604
        %v6756 = vpop.f32.mrf.mxu0
        %v6757 = vadd.f32 0.0, %v6756
        %v6758 = vpop.f32.mrf.mxu0
        %v6759 = vadd.f32 0.0, %v6758
        %6760 = vmatmul.bf16.gmra.mxu0 %v6607
        %v6761 = vpop.f32.mrf.mxu0
        %v6762 = vadd.f32 0.0, %v6761
        %v6763 = vpop.f32.mrf.mxu0
        %v6764 = vadd.f32 0.0, %v6763
        %6765 = vmatmul.bf16.gmra.mxu0 %v6610
        %v6766 = vpop.f32.mrf.mxu0
        %v6767 = vadd.f32 0.0, %v6766
        %v6768 = vpop.f32.mrf.mxu0
        %v6769 = vadd.f32 0.0, %v6768
        %6770 = vmatmul.bf16.gmra.mxu0 %v6613
        %v6771 = vpop.f32.mrf.mxu0
        %v6772 = vadd.f32 0.0, %v6771
        %v6773 = vpop.f32.mrf.mxu0
        %v6774 = vadd.f32 0.0, %v6773
        %6775 = vmatmul.bf16.gmra.mxu0 %v6616
        %v6776 = vpop.f32.mrf.mxu0
        %v6777 = vadd.f32 0.0, %v6776
        %v6778 = vpop.f32.mrf.mxu0
        %v6779 = vadd.f32 0.0, %v6778
        %6780 = vmatmul.bf16.gmra.mxu0 %v6619
        %v6781 = vpop.f32.mrf.mxu0
        %v6782 = vadd.f32 0.0, %v6781
        %v6783 = vpop.f32.mrf.mxu0
        %v6784 = vadd.f32 0.0, %v6783
        %6785 = vmatmul.bf16.gmra.mxu0 %v6622
        %v6786 = vpop.f32.mrf.mxu0
        %v6787 = vadd.f32 0.0, %v6786
        %v6788 = vpop.f32.mrf.mxu0
        %v6789 = vadd.f32 0.0, %v6788
        %6790 = vmatmul.bf16.gmra.mxu0 %v6625
        %v6791 = vpop.f32.mrf.mxu0
        %v6792 = vadd.f32 0.0, %v6791
        %v6793 = vpop.f32.mrf.mxu0
        %v6794 = vadd.f32 0.0, %v6793
        %6795 = vdwg.mxu0
        %v6796 = vadd.f32 %v5578, %v6637
        %v6797 = vadd.f32 %v5579, %v6639
        %v6798 = vadd.f32 %v5580, %v6642
        %v6799 = vadd.f32 %v5581, %v6644
        %v6800 = vadd.f32 %v5582, %v6647
        %v6801 = vadd.f32 %v5583, %v6649
        %v6802 = vadd.f32 %v5584, %v6652
        %v6803 = vadd.f32 %v5585, %v6654
        %v6804 = vadd.f32 %v5586, %v6657
        %v6805 = vadd.f32 %v5587, %v6659
        %v6806 = vadd.f32 %v5588, %v6662
        %v6807 = vadd.f32 %v5589, %v6664
        %v6808 = vadd.f32 %v5590, %v6667
        %v6809 = vadd.f32 %v5591, %v6669
        %v6810 = vadd.f32 %v5592, %v6672
        %v6811 = vadd.f32 %v5593, %v6674
        %v6812 = vadd.f32 %v5594, %v6677
        %v6813 = vadd.f32 %v5595, %v6679
        %v6814 = vadd.f32 %v5596, %v6682
        %v6815 = vadd.f32 %v5597, %v6684
        %v6816 = vadd.f32 %v5598, %v6687
        %v6817 = vadd.f32 %v5599, %v6689
        %v6818 = vadd.f32 %v5600, %v6692
        %v6819 = vadd.f32 %v5601, %v6694
        %v6820 = vadd.f32 %v5602, %v6697
        %v6821 = vadd.f32 %v5603, %v6699
        %v6822 = vadd.f32 %v5604, %v6702
        %v6823 = vadd.f32 %v5605, %v6704
        %v6824 = vadd.f32 %v5606, %v6707
        %v6825 = vadd.f32 %v5607, %v6709
        %v6826 = vadd.f32 %v5608, %v6712
        %v6827 = vadd.f32 %v5609, %v6714
        %v6828 = vadd.f32 %v5610, %v6717
        %v6829 = vadd.f32 %v5611, %v6719
        %v6830 = vadd.f32 %v5612, %v6722
        %v6831 = vadd.f32 %v5613, %v6724
        %v6832 = vadd.f32 %v5614, %v6727
        %v6833 = vadd.f32 %v5615, %v6729
        %v6834 = vadd.f32 %v5616, %v6732
        %v6835 = vadd.f32 %v5617, %v6734
        %v6836 = vadd.f32 %v5618, %v6737
        %v6837 = vadd.f32 %v5619, %v6739
        %v6838 = vadd.f32 %v5620, %v6742
        %v6839 = vadd.f32 %v5621, %v6744
        %v6840 = vadd.f32 %v5622, %v6747
        %v6841 = vadd.f32 %v5623, %v6749
        %v6842 = vadd.f32 %v5624, %v6752
        %v6843 = vadd.f32 %v5625, %v6754
        %v6844 = vadd.f32 %v5626, %v6757
        %v6845 = vadd.f32 %v5627, %v6759
        %v6846 = vadd.f32 %v5628, %v6762
        %v6847 = vadd.f32 %v5629, %v6764
        %v6848 = vadd.f32 %v5630, %v6767
        %v6849 = vadd.f32 %v5631, %v6769
        %v6850 = vadd.f32 %v5632, %v6772
        %v6851 = vadd.f32 %v5633, %v6774
        %v6852 = vadd.f32 %v5634, %v6777
        %v6853 = vadd.f32 %v5635, %v6779
        %v6854 = vadd.f32 %v5636, %v6782
        %v6855 = vadd.f32 %v5637, %v6784
        %v6856 = vadd.f32 %v5638, %v6787
        %v6857 = vadd.f32 %v5639, %v6789
        %v6858 = vadd.f32 %v5640, %v6792
        %v6859 = vadd.f32 %v5641, %v6794
        %v6860 = vld [vmem:[%s5079] sm:$0xe]
        %v6861 = vld [vmem:[%s5079 + $0x14] sm:$0xe]
        %v6862 = vld [vmem:[%s5079 + $0x28] sm:$0xe]
        %v6863 = vld [vmem:[%s5079 + $0x3c] sm:$0xe]
        %v6864 = vld [vmem:[%s5079 + $0x50] sm:$0xe]
        %v6865 = vld [vmem:[%s5079 + $0x64] sm:$0xe]
        %v6866 = vld [vmem:[%s5079 + $0x78] sm:$0xe]
        %v6867 = vld [vmem:[%s5079 + $0x8c] sm:$0xe]
        %v6868 = vld [vmem:[%s5079 + $0xa0] sm:$0xe]
        %v6869 = vld [vmem:[%s5079 + $0xb4] sm:$0xe]
        %v6870 = vld [vmem:[%s5079 + $0xc8] sm:$0xe]
        %v6871 = vld [vmem:[%s5079 + $0xdc] sm:$0xe]
        %v6872 = vld [vmem:[%s5079 + $0xf0] sm:$0xe]
        %v6873 = vld [vmem:[%s5079 + $0x104] sm:$0xe]
        %v6874 = vld [vmem:[%s5079 + $0x118] sm:$0xe]
        %v6875 = vld [vmem:[%s5079 + $0x12c] sm:$0xe]
        %v6956 = vrot.slane %v6860, 5
        %v6957 = vrot.slane %v6956, 4
        %v6958 = vrot.slane %v5643, 5
        %v6959 = vsel %vm1911, %v6957, %v6958
        %v6960 = vrot.slane %v6958, 4
        %v6961 = vrot.slane %v5644, 5
        %v6962 = vsel %vm1911, %v6960, %v6961
        %v6963 = vrot.slane %v6961, 4
        %v6964 = vrot.slane %v5645, 5
        %v6965 = vsel %vm1911, %v6963, %v6964
        %v6966 = vrot.slane %v6964, 4
        %v6967 = vrot.slane %v5646, 5
        %v6968 = vsel %vm1911, %v6966, %v6967
        %v6969 = vrot.slane %v6861, 5
        %v6970 = vrot.slane %v6969, 4
        %v6971 = vrot.slane %v5648, 5
        %v6972 = vsel %vm1911, %v6970, %v6971
        %v6973 = vrot.slane %v6971, 4
        %v6974 = vrot.slane %v5649, 5
        %v6975 = vsel %vm1911, %v6973, %v6974
        %v6976 = vrot.slane %v6974, 4
        %v6977 = vrot.slane %v5650, 5
        %v6978 = vsel %vm1911, %v6976, %v6977
        %v6979 = vrot.slane %v6977, 4
        %v6980 = vrot.slane %v5651, 5
        %v6981 = vsel %vm1911, %v6979, %v6980
        %v6982 = vrot.slane %v6862, 5
        %v6983 = vrot.slane %v6982, 4
        %v6984 = vrot.slane %v5653, 5
        %v6985 = vsel %vm1911, %v6983, %v6984
        %v6986 = vrot.slane %v6984, 4
        %v6987 = vrot.slane %v5654, 5
        %v6988 = vsel %vm1911, %v6986, %v6987
        %v6989 = vrot.slane %v6987, 4
        %v6990 = vrot.slane %v5655, 5
        %v6991 = vsel %vm1911, %v6989, %v6990
        %v6992 = vrot.slane %v6990, 4
        %v6993 = vrot.slane %v5656, 5
        %v6994 = vsel %vm1911, %v6992, %v6993
        %v6995 = vrot.slane %v6863, 5
        %v6996 = vrot.slane %v6995, 4
        %v6997 = vrot.slane %v5658, 5
        %v6998 = vsel %vm1911, %v6996, %v6997
        %v6999 = vrot.slane %v6997, 4
        %v7000 = vrot.slane %v5659, 5
        %v7001 = vsel %vm1911, %v6999, %v7000
        %v7002 = vrot.slane %v7000, 4
        %v7003 = vrot.slane %v5660, 5
        %v7004 = vsel %vm1911, %v7002, %v7003
        %v7005 = vrot.slane %v7003, 4
        %v7006 = vrot.slane %v5661, 5
        %v7007 = vsel %vm1911, %v7005, %v7006
        %v7008 = vrot.slane %v6864, 5
        %v7009 = vrot.slane %v7008, 4
        %v7010 = vrot.slane %v5663, 5
        %v7011 = vsel %vm1911, %v7009, %v7010
        %v7012 = vrot.slane %v7010, 4
        %v7013 = vrot.slane %v5664, 5
        %v7014 = vsel %vm1911, %v7012, %v7013
        %v7015 = vrot.slane %v7013, 4
        %v7016 = vrot.slane %v5665, 5
        %v7017 = vsel %vm1911, %v7015, %v7016
        %v7018 = vrot.slane %v7016, 4
        %v7019 = vrot.slane %v5666, 5
        %v7020 = vsel %vm1911, %v7018, %v7019
        %v7021 = vrot.slane %v6865, 5
        %v7022 = vrot.slane %v7021, 4
        %v7023 = vrot.slane %v5668, 5
        %v7024 = vsel %vm1911, %v7022, %v7023
        %v7025 = vrot.slane %v7023, 4
        %v7026 = vrot.slane %v5669, 5
        %v7027 = vsel %vm1911, %v7025, %v7026
        %v7028 = vrot.slane %v7026, 4
        %v7029 = vrot.slane %v5670, 5
        %v7030 = vsel %vm1911, %v7028, %v7029
        %v7031 = vrot.slane %v7029, 4
        %v7032 = vrot.slane %v5671, 5
        %v7033 = vsel %vm1911, %v7031, %v7032
        %v7034 = vrot.slane %v6866, 5
        %v7035 = vrot.slane %v7034, 4
        %v7036 = vrot.slane %v5673, 5
        %v7037 = vsel %vm1911, %v7035, %v7036
        %v7038 = vrot.slane %v7036, 4
        %v7039 = vrot.slane %v5674, 5
        %v7040 = vsel %vm1911, %v7038, %v7039
        %v7041 = vrot.slane %v7039, 4
        %v7042 = vrot.slane %v5675, 5
        %v7043 = vsel %vm1911, %v7041, %v7042
        %v7044 = vrot.slane %v7042, 4
        %v7045 = vrot.slane %v5676, 5
        %v7046 = vsel %vm1911, %v7044, %v7045
        %v7047 = vrot.slane %v6867, 5
        %v7048 = vrot.slane %v7047, 4
        %v7049 = vrot.slane %v5678, 5
        %v7050 = vsel %vm1911, %v7048, %v7049
        %v7051 = vrot.slane %v7049, 4
        %v7052 = vrot.slane %v5679, 5
        %v7053 = vsel %vm1911, %v7051, %v7052
        %v7054 = vrot.slane %v7052, 4
        %v7055 = vrot.slane %v5680, 5
        %v7056 = vsel %vm1911, %v7054, %v7055
        %v7057 = vrot.slane %v7055, 4
        %v7058 = vrot.slane %v5681, 5
        %v7059 = vsel %vm1911, %v7057, %v7058
        %v7060 = vrot.slane %v6868, 5
        %v7061 = vrot.slane %v7060, 4
        %v7062 = vrot.slane %v5683, 5
        %v7063 = vsel %vm1911, %v7061, %v7062
        %v7064 = vrot.slane %v7062, 4
        %v7065 = vrot.slane %v5684, 5
        %v7066 = vsel %vm1911, %v7064, %v7065
        %v7067 = vrot.slane %v7065, 4
        %v7068 = vrot.slane %v5685, 5
        %v7069 = vsel %vm1911, %v7067, %v7068
        %v7070 = vrot.slane %v7068, 4
        %v7071 = vrot.slane %v5686, 5
        %v7072 = vsel %vm1911, %v7070, %v7071
        %v7073 = vrot.slane %v6869, 5
        %v7074 = vrot.slane %v7073, 4
        %v7075 = vrot.slane %v5688, 5
        %v7076 = vsel %vm1911, %v7074, %v7075
        %v7077 = vrot.slane %v7075, 4
        %v7078 = vrot.slane %v5689, 5
        %v7079 = vsel %vm1911, %v7077, %v7078
        %v7080 = vrot.slane %v7078, 4
        %v7081 = vrot.slane %v5690, 5
        %v7082 = vsel %vm1911, %v7080, %v7081
        %v7083 = vrot.slane %v7081, 4
        %v7084 = vrot.slane %v5691, 5
        %v7085 = vsel %vm1911, %v7083, %v7084
        %v7086 = vrot.slane %v6870, 5
        %v7087 = vrot.slane %v7086, 4
        %v7088 = vrot.slane %v5693, 5
        %v7089 = vsel %vm1911, %v7087, %v7088
        %v7090 = vrot.slane %v7088, 4
        %v7091 = vrot.slane %v5694, 5
        %v7092 = vsel %vm1911, %v7090, %v7091
        %v7093 = vrot.slane %v7091, 4
        %v7094 = vrot.slane %v5695, 5
        %v7095 = vsel %vm1911, %v7093, %v7094
        %v7096 = vrot.slane %v7094, 4
        %v7097 = vrot.slane %v5696, 5
        %v7098 = vsel %vm1911, %v7096, %v7097
        %v7099 = vrot.slane %v6871, 5
        %v7100 = vrot.slane %v7099, 4
        %v7101 = vrot.slane %v5698, 5
        %v7102 = vsel %vm1911, %v7100, %v7101
        %v7103 = vrot.slane %v7101, 4
        %v7104 = vrot.slane %v5699, 5
        %v7105 = vsel %vm1911, %v7103, %v7104
        %v7106 = vrot.slane %v7104, 4
        %v7107 = vrot.slane %v5700, 5
        %v7108 = vsel %vm1911, %v7106, %v7107
        %v7109 = vrot.slane %v7107, 4
        %v7110 = vrot.slane %v5701, 5
        %v7111 = vsel %vm1911, %v7109, %v7110
        %v7112 = vrot.slane %v6872, 5
        %v7113 = vrot.slane %v7112, 4
        %v7114 = vrot.slane %v5703, 5
        %v7115 = vsel %vm1911, %v7113, %v7114
        %v7116 = vrot.slane %v7114, 4
        %v7117 = vrot.slane %v5704, 5
        %v7118 = vsel %vm1911, %v7116, %v7117
        %v7119 = vrot.slane %v7117, 4
        %v7120 = vrot.slane %v5705, 5
        %v7121 = vsel %vm1911, %v7119, %v7120
        %v7122 = vrot.slane %v7120, 4
        %v7123 = vrot.slane %v5706, 5
        %v7124 = vsel %vm1911, %v7122, %v7123
        %v7125 = vrot.slane %v6873, 5
        %v7126 = vrot.slane %v7125, 4
        %v7127 = vrot.slane %v5708, 5
        %v7128 = vsel %vm1911, %v7126, %v7127
        %v7129 = vrot.slane %v7127, 4
        %v7130 = vrot.slane %v5709, 5
        %v7131 = vsel %vm1911, %v7129, %v7130
        %v7132 = vrot.slane %v7130, 4
        %v7133 = vrot.slane %v5710, 5
        %v7134 = vsel %vm1911, %v7132, %v7133
        %v7135 = vrot.slane %v7133, 4
        %v7136 = vrot.slane %v5711, 5
        %v7137 = vsel %vm1911, %v7135, %v7136
        %v7138 = vrot.slane %v6874, 5
        %v7139 = vrot.slane %v7138, 4
        %v7140 = vrot.slane %v5713, 5
        %v7141 = vsel %vm1911, %v7139, %v7140
        %v7142 = vrot.slane %v7140, 4
        %v7143 = vrot.slane %v5714, 5
        %v7144 = vsel %vm1911, %v7142, %v7143
        %v7145 = vrot.slane %v7143, 4
        %v7146 = vrot.slane %v5715, 5
        %v7147 = vsel %vm1911, %v7145, %v7146
        %v7148 = vrot.slane %v7146, 4
        %v7149 = vrot.slane %v5716, 5
        %v7150 = vsel %vm1911, %v7148, %v7149
        %v7151 = vrot.slane %v6875, 5
        %v7152 = vrot.slane %v7151, 4
        %v7153 = vrot.slane %v5718, 5
        %v7154 = vsel %vm1911, %v7152, %v7153
        %v7155 = vrot.slane %v7153, 4
        %v7156 = vrot.slane %v5719, 5
        %v7157 = vsel %vm1911, %v7155, %v7156
        %v7158 = vrot.slane %v7156, 4
        %v7159 = vrot.slane %v5720, 5
        %v7160 = vsel %vm1911, %v7158, %v7159
        %v7161 = vrot.slane %v7159, 4
        %v7162 = vrot.slane %v5721, 5
        %v7163 = vsel %vm1911, %v7161, %v7162
        %s7164 = scalar_lea.vmem %s1, 64
        %v7165 = vld [vmem:[%s7164] sm:$0xf]
        %v7166 = vld [vmem:[%s7164 + $0x4] sm:$0xf]
        %v7167 = vunpack.c.l.b16 %v6959
        %v7168 = vunpack.c.l.b16 %v6962
        %v7169 = vunpack.c.l.b16 %v6965
        %v7170 = vunpack.c.l.b16 %v6968
        %v7171 = vunpack.c.l.b16 %v6972
        %v7172 = vunpack.c.l.b16 %v6975
        %v7173 = vunpack.c.l.b16 %v6978
        %v7174 = vunpack.c.l.b16 %v6981
        %v7175 = vunpack.c.l.b16 %v6985
        %v7176 = vunpack.c.l.b16 %v6988
        %v7177 = vunpack.c.l.b16 %v6991
        %v7178 = vunpack.c.l.b16 %v6994
        %v7179 = vunpack.c.l.b16 %v6998
        %v7180 = vunpack.c.l.b16 %v7001
        %v7181 = vunpack.c.l.b16 %v7004
        %v7182 = vunpack.c.l.b16 %v7007
        %v7183 = vunpack.c.l.b16 %v7011
        %v7184 = vunpack.c.l.b16 %v7014
        %v7185 = vunpack.c.l.b16 %v7017
        %v7186 = vunpack.c.l.b16 %v7020
        %v7187 = vunpack.c.l.b16 %v7024
        %v7188 = vunpack.c.l.b16 %v7027
        %v7189 = vunpack.c.l.b16 %v7030
        %v7190 = vunpack.c.l.b16 %v7033
        %v7191 = vunpack.c.l.b16 %v7037
        %v7192 = vunpack.c.l.b16 %v7040
        %v7193 = vunpack.c.l.b16 %v7043
        %v7194 = vunpack.c.l.b16 %v7046
        %v7195 = vunpack.c.l.b16 %v7050
        %v7196 = vunpack.c.l.b16 %v7053
        %v7197 = vunpack.c.l.b16 %v7056
        %v7198 = vunpack.c.l.b16 %v7059
        %v7199 = vunpack.c.l.b16 %v7063
        %v7200 = vunpack.c.l.b16 %v7066
        %v7201 = vunpack.c.l.b16 %v7069
        %v7202 = vunpack.c.l.b16 %v7072
        %v7203 = vunpack.c.l.b16 %v7076
        %v7204 = vunpack.c.l.b16 %v7079
        %v7205 = vunpack.c.l.b16 %v7082
        %v7206 = vunpack.c.l.b16 %v7085
        %v7207 = vunpack.c.l.b16 %v7089
        %v7208 = vunpack.c.l.b16 %v7092
        %v7209 = vunpack.c.l.b16 %v7095
        %v7210 = vunpack.c.l.b16 %v7098
        %v7211 = vunpack.c.l.b16 %v7102
        %v7212 = vunpack.c.l.b16 %v7105
        %v7213 = vunpack.c.l.b16 %v7108
        %v7214 = vunpack.c.l.b16 %v7111
        %v7215 = vunpack.c.l.b16 %v7115
        %v7216 = vunpack.c.l.b16 %v7118
        %v7217 = vunpack.c.l.b16 %v7121
        %v7218 = vunpack.c.l.b16 %v7124
        %v7219 = vunpack.c.l.b16 %v7128
        %v7220 = vunpack.c.l.b16 %v7131
        %v7221 = vunpack.c.l.b16 %v7134
        %v7222 = vunpack.c.l.b16 %v7137
        %v7223 = vunpack.c.l.b16 %v7141
        %v7224 = vunpack.c.l.b16 %v7144
        %v7225 = vunpack.c.l.b16 %v7147
        %v7226 = vunpack.c.l.b16 %v7150
        %v7227 = vunpack.c.l.b16 %v7154
        %v7228 = vunpack.c.l.b16 %v7157
        %v7229 = vunpack.c.l.b16 %v7160
        %v7230 = vunpack.c.l.b16 %v7163
        %v7231 = vpack.c.b16 %v7168, %v7167
        %v7232 = vpack.c.b16 %v7170, %v7169
        %v7233 = vpack.c.b16 %v7172, %v7171
        %v7234 = vpack.c.b16 %v7174, %v7173
        %v7235 = vpack.c.b16 %v7176, %v7175
        %v7236 = vpack.c.b16 %v7178, %v7177
        %v7237 = vpack.c.b16 %v7180, %v7179
        %v7238 = vpack.c.b16 %v7182, %v7181
        %v7239 = vpack.c.b16 %v7184, %v7183
        %v7240 = vpack.c.b16 %v7186, %v7185
        %v7241 = vpack.c.b16 %v7188, %v7187
        %v7242 = vpack.c.b16 %v7190, %v7189
        %v7243 = vpack.c.b16 %v7192, %v7191
        %v7244 = vpack.c.b16 %v7194, %v7193
        %v7245 = vpack.c.b16 %v7196, %v7195
        %v7246 = vpack.c.b16 %v7198, %v7197
        %v7247 = vpack.c.b16 %v7200, %v7199
        %v7248 = vpack.c.b16 %v7202, %v7201
        %v7249 = vpack.c.b16 %v7204, %v7203
        %v7250 = vpack.c.b16 %v7206, %v7205
        %v7251 = vpack.c.b16 %v7208, %v7207
        %v7252 = vpack.c.b16 %v7210, %v7209
        %v7253 = vpack.c.b16 %v7212, %v7211
        %v7254 = vpack.c.b16 %v7214, %v7213
        %v7255 = vpack.c.b16 %v7216, %v7215
        %v7256 = vpack.c.b16 %v7218, %v7217
        %v7257 = vpack.c.b16 %v7220, %v7219
        %v7258 = vpack.c.b16 %v7222, %v7221
        %v7259 = vpack.c.b16 %v7224, %v7223
        %v7260 = vpack.c.b16 %v7226, %v7225
        %v7261 = vpack.c.b16 %v7228, %v7227
        %v7262 = vpack.c.b16 %v7230, %v7229
        %v7265 = vunpack.c.l.b16 %v7165
        %v7266 = vunpack.c.l.b16 %v7166
        %v7267 = vpack.c.b16 %v7266, %v7265
        %v7270 = vsel %vm1164, %v7231, 0
        %v7273 = vsel %vm1164, %v7232, 0
        %v7276 = vsel %vm1164, %v7233, 0
        %v7279 = vsel %vm1164, %v7234, 0
        %v7282 = vsel %vm1164, %v7235, 0
        %v7285 = vsel %vm1164, %v7236, 0
        %v7288 = vsel %vm1164, %v7237, 0
        %v7291 = vsel %vm1164, %v7238, 0
        %v7294 = vsel %vm1164, %v7239, 0
        %v7297 = vsel %vm1164, %v7240, 0
        %v7300 = vsel %vm1164, %v7241, 0
        %v7303 = vsel %vm1164, %v7242, 0
        %v7306 = vsel %vm1164, %v7243, 0
        %v7309 = vsel %vm1164, %v7244, 0
        %v7312 = vsel %vm1164, %v7245, 0
        %v7315 = vsel %vm1164, %v7246, 0
        %v7318 = vsel %vm1164, %v7247, 0
        %v7321 = vsel %vm1164, %v7248, 0
        %v7324 = vsel %vm1164, %v7249, 0
        %v7327 = vsel %vm1164, %v7250, 0
        %v7330 = vsel %vm1164, %v7251, 0
        %v7333 = vsel %vm1164, %v7252, 0
        %v7336 = vsel %vm1164, %v7253, 0
        %v7339 = vsel %vm1164, %v7254, 0
        %v7342 = vsel %vm1164, %v7255, 0
        %v7345 = vsel %vm1164, %v7256, 0
        %v7348 = vsel %vm1164, %v7257, 0
        %v7351 = vsel %vm1164, %v7258, 0
        %v7354 = vsel %vm1164, %v7259, 0
        %v7357 = vsel %vm1164, %v7260, 0
        %v7360 = vsel %vm1164, %v7261, 0
        %v7363 = vsel %vm1164, %v7262, 0
        %7365 = vmatpush.bf16.msra.mxu0 0
        %7366 = vmatpush.bf16.msra.mxu0 0
        %7367 = vmatpush.bf16.msra.mxu0 0
        %7368 = vmatpush.bf16.msra.mxu0 0
        %7369 = vmatpush.bf16.msra.mxu0 0
        %7370 = vmatpush.bf16.msra.mxu0 0
        %7371 = vmatpush.bf16.msra.mxu0 0
        %7372 = vmatpush.bf16.msra.mxu0 %v7267
        %7373 = vmatmul.bf16.gmra.mxu0 %v7270
        %v7374 = vpop.f32.mrf.mxu0
        %v7375 = vadd.f32 0.0, %v7374
        %v7376 = vpop.f32.mrf.mxu0
        %v7377 = vadd.f32 0.0, %v7376
        %7378 = vmatmul.bf16.gmra.mxu0 %v7273
        %v7379 = vpop.f32.mrf.mxu0
        %v7380 = vadd.f32 0.0, %v7379
        %v7381 = vpop.f32.mrf.mxu0
        %v7382 = vadd.f32 0.0, %v7381
        %7383 = vmatmul.bf16.gmra.mxu0 %v7276
        %v7384 = vpop.f32.mrf.mxu0
        %v7385 = vadd.f32 0.0, %v7384
        %v7386 = vpop.f32.mrf.mxu0
        %v7387 = vadd.f32 0.0, %v7386
        %7388 = vmatmul.bf16.gmra.mxu0 %v7279
        %v7389 = vpop.f32.mrf.mxu0
        %v7390 = vadd.f32 0.0, %v7389
        %v7391 = vpop.f32.mrf.mxu0
        %v7392 = vadd.f32 0.0, %v7391
        %7393 = vmatmul.bf16.gmra.mxu0 %v7282
        %v7394 = vpop.f32.mrf.mxu0
        %v7395 = vadd.f32 0.0, %v7394
        %v7396 = vpop.f32.mrf.mxu0
        %v7397 = vadd.f32 0.0, %v7396
        %7398 = vmatmul.bf16.gmra.mxu0 %v7285
        %v7399 = vpop.f32.mrf.mxu0
        %v7400 = vadd.f32 0.0, %v7399
        %v7401 = vpop.f32.mrf.mxu0
        %v7402 = vadd.f32 0.0, %v7401
        %7403 = vmatmul.bf16.gmra.mxu0 %v7288
        %v7404 = vpop.f32.mrf.mxu0
        %v7405 = vadd.f32 0.0, %v7404
        %v7406 = vpop.f32.mrf.mxu0
        %v7407 = vadd.f32 0.0, %v7406
        %7408 = vmatmul.bf16.gmra.mxu0 %v7291
        %v7409 = vpop.f32.mrf.mxu0
        %v7410 = vadd.f32 0.0, %v7409
        %v7411 = vpop.f32.mrf.mxu0
        %v7412 = vadd.f32 0.0, %v7411
        %7413 = vmatmul.bf16.gmra.mxu0 %v7294
        %v7414 = vpop.f32.mrf.mxu0
        %v7415 = vadd.f32 0.0, %v7414
        %v7416 = vpop.f32.mrf.mxu0
        %v7417 = vadd.f32 0.0, %v7416
        %7418 = vmatmul.bf16.gmra.mxu0 %v7297
        %v7419 = vpop.f32.mrf.mxu0
        %v7420 = vadd.f32 0.0, %v7419
        %v7421 = vpop.f32.mrf.mxu0
        %v7422 = vadd.f32 0.0, %v7421
        %7423 = vmatmul.bf16.gmra.mxu0 %v7300
        %v7424 = vpop.f32.mrf.mxu0
        %v7425 = vadd.f32 0.0, %v7424
        %v7426 = vpop.f32.mrf.mxu0
        %v7427 = vadd.f32 0.0, %v7426
        %7428 = vmatmul.bf16.gmra.mxu0 %v7303
        %v7429 = vpop.f32.mrf.mxu0
        %v7430 = vadd.f32 0.0, %v7429
        %v7431 = vpop.f32.mrf.mxu0
        %v7432 = vadd.f32 0.0, %v7431
        %7433 = vmatmul.bf16.gmra.mxu0 %v7306
        %v7434 = vpop.f32.mrf.mxu0
        %v7435 = vadd.f32 0.0, %v7434
        %v7436 = vpop.f32.mrf.mxu0
        %v7437 = vadd.f32 0.0, %v7436
        %7438 = vmatmul.bf16.gmra.mxu0 %v7309
        %v7439 = vpop.f32.mrf.mxu0
        %v7440 = vadd.f32 0.0, %v7439
        %v7441 = vpop.f32.mrf.mxu0
        %v7442 = vadd.f32 0.0, %v7441
        %7443 = vmatmul.bf16.gmra.mxu0 %v7312
        %v7444 = vpop.f32.mrf.mxu0
        %v7445 = vadd.f32 0.0, %v7444
        %v7446 = vpop.f32.mrf.mxu0
        %v7447 = vadd.f32 0.0, %v7446
        %7448 = vmatmul.bf16.gmra.mxu0 %v7315
        %v7449 = vpop.f32.mrf.mxu0
        %v7450 = vadd.f32 0.0, %v7449
        %v7451 = vpop.f32.mrf.mxu0
        %v7452 = vadd.f32 0.0, %v7451
        %7453 = vmatmul.bf16.gmra.mxu0 %v7318
        %v7454 = vpop.f32.mrf.mxu0
        %v7455 = vadd.f32 0.0, %v7454
        %v7456 = vpop.f32.mrf.mxu0
        %v7457 = vadd.f32 0.0, %v7456
        %7458 = vmatmul.bf16.gmra.mxu0 %v7321
        %v7459 = vpop.f32.mrf.mxu0
        %v7460 = vadd.f32 0.0, %v7459
        %v7461 = vpop.f32.mrf.mxu0
        %v7462 = vadd.f32 0.0, %v7461
        %7463 = vmatmul.bf16.gmra.mxu0 %v7324
        %v7464 = vpop.f32.mrf.mxu0
        %v7465 = vadd.f32 0.0, %v7464
        %v7466 = vpop.f32.mrf.mxu0
        %v7467 = vadd.f32 0.0, %v7466
        %7468 = vmatmul.bf16.gmra.mxu0 %v7327
        %v7469 = vpop.f32.mrf.mxu0
        %v7470 = vadd.f32 0.0, %v7469
        %v7471 = vpop.f32.mrf.mxu0
        %v7472 = vadd.f32 0.0, %v7471
        %7473 = vmatmul.bf16.gmra.mxu0 %v7330
        %v7474 = vpop.f32.mrf.mxu0
        %v7475 = vadd.f32 0.0, %v7474
        %v7476 = vpop.f32.mrf.mxu0
        %v7477 = vadd.f32 0.0, %v7476
        %7478 = vmatmul.bf16.gmra.mxu0 %v7333
        %v7479 = vpop.f32.mrf.mxu0
        %v7480 = vadd.f32 0.0, %v7479
        %v7481 = vpop.f32.mrf.mxu0
        %v7482 = vadd.f32 0.0, %v7481
        %7483 = vmatmul.bf16.gmra.mxu0 %v7336
        %v7484 = vpop.f32.mrf.mxu0
        %v7485 = vadd.f32 0.0, %v7484
        %v7486 = vpop.f32.mrf.mxu0
        %v7487 = vadd.f32 0.0, %v7486
        %7488 = vmatmul.bf16.gmra.mxu0 %v7339
        %v7489 = vpop.f32.mrf.mxu0
        %v7490 = vadd.f32 0.0, %v7489
        %v7491 = vpop.f32.mrf.mxu0
        %v7492 = vadd.f32 0.0, %v7491
        %7493 = vmatmul.bf16.gmra.mxu0 %v7342
        %v7494 = vpop.f32.mrf.mxu0
        %v7495 = vadd.f32 0.0, %v7494
        %v7496 = vpop.f32.mrf.mxu0
        %v7497 = vadd.f32 0.0, %v7496
        %7498 = vmatmul.bf16.gmra.mxu0 %v7345
        %v7499 = vpop.f32.mrf.mxu0
        %v7500 = vadd.f32 0.0, %v7499
        %v7501 = vpop.f32.mrf.mxu0
        %v7502 = vadd.f32 0.0, %v7501
        %7503 = vmatmul.bf16.gmra.mxu0 %v7348
        %v7504 = vpop.f32.mrf.mxu0
        %v7505 = vadd.f32 0.0, %v7504
        %v7506 = vpop.f32.mrf.mxu0
        %v7507 = vadd.f32 0.0, %v7506
        %7508 = vmatmul.bf16.gmra.mxu0 %v7351
        %v7509 = vpop.f32.mrf.mxu0
        %v7510 = vadd.f32 0.0, %v7509
        %v7511 = vpop.f32.mrf.mxu0
        %v7512 = vadd.f32 0.0, %v7511
        %7513 = vmatmul.bf16.gmra.mxu0 %v7354
        %v7514 = vpop.f32.mrf.mxu0
        %v7515 = vadd.f32 0.0, %v7514
        %v7516 = vpop.f32.mrf.mxu0
        %v7517 = vadd.f32 0.0, %v7516
        %7518 = vmatmul.bf16.gmra.mxu0 %v7357
        %v7519 = vpop.f32.mrf.mxu0
        %v7520 = vadd.f32 0.0, %v7519
        %v7521 = vpop.f32.mrf.mxu0
        %v7522 = vadd.f32 0.0, %v7521
        %7523 = vmatmul.bf16.gmra.mxu0 %v7360
        %v7524 = vpop.f32.mrf.mxu0
        %v7525 = vadd.f32 0.0, %v7524
        %v7526 = vpop.f32.mrf.mxu0
        %v7527 = vadd.f32 0.0, %v7526
        %7528 = vmatmul.bf16.gmra.mxu0 %v7363
        %v7529 = vpop.f32.mrf.mxu0
        %v7530 = vadd.f32 0.0, %v7529
        %v7531 = vpop.f32.mrf.mxu0
        %v7532 = vadd.f32 0.0, %v7531
        %7533 = vdwg.mxu0
        %v7534 = vadd.f32 %v6796, %v7375
        %v7535 = vadd.f32 %v6797, %v7377
        %v7536 = vadd.f32 %v6798, %v7380
        %v7537 = vadd.f32 %v6799, %v7382
        %v7538 = vadd.f32 %v6800, %v7385
        %v7539 = vadd.f32 %v6801, %v7387
        %v7540 = vadd.f32 %v6802, %v7390
        %v7541 = vadd.f32 %v6803, %v7392
        %v7542 = vadd.f32 %v6804, %v7395
        %v7543 = vadd.f32 %v6805, %v7397
        %v7544 = vadd.f32 %v6806, %v7400
        %v7545 = vadd.f32 %v6807, %v7402
        %v7546 = vadd.f32 %v6808, %v7405
        %v7547 = vadd.f32 %v6809, %v7407
        %v7548 = vadd.f32 %v6810, %v7410
        %v7549 = vadd.f32 %v6811, %v7412
        %v7550 = vadd.f32 %v6812, %v7415
        %v7551 = vadd.f32 %v6813, %v7417
        %v7552 = vadd.f32 %v6814, %v7420
        %v7553 = vadd.f32 %v6815, %v7422
        %v7554 = vadd.f32 %v6816, %v7425
        %v7555 = vadd.f32 %v6817, %v7427
        %v7556 = vadd.f32 %v6818, %v7430
        %v7557 = vadd.f32 %v6819, %v7432
        %v7558 = vadd.f32 %v6820, %v7435
        %v7559 = vadd.f32 %v6821, %v7437
        %v7560 = vadd.f32 %v6822, %v7440
        %v7561 = vadd.f32 %v6823, %v7442
        %v7562 = vadd.f32 %v6824, %v7445
        %v7563 = vadd.f32 %v6825, %v7447
        %v7564 = vadd.f32 %v6826, %v7450
        %v7565 = vadd.f32 %v6827, %v7452
        %v7566 = vadd.f32 %v6828, %v7455
        %v7567 = vadd.f32 %v6829, %v7457
        %v7568 = vadd.f32 %v6830, %v7460
        %v7569 = vadd.f32 %v6831, %v7462
        %v7570 = vadd.f32 %v6832, %v7465
        %v7571 = vadd.f32 %v6833, %v7467
        %v7572 = vadd.f32 %v6834, %v7470
        %v7573 = vadd.f32 %v6835, %v7472
        %v7574 = vadd.f32 %v6836, %v7475
        %v7575 = vadd.f32 %v6837, %v7477
        %v7576 = vadd.f32 %v6838, %v7480
        %v7577 = vadd.f32 %v6839, %v7482
        %v7578 = vadd.f32 %v6840, %v7485
        %v7579 = vadd.f32 %v6841, %v7487
        %v7580 = vadd.f32 %v6842, %v7490
        %v7581 = vadd.f32 %v6843, %v7492
        %v7582 = vadd.f32 %v6844, %v7495
        %v7583 = vadd.f32 %v6845, %v7497
        %v7584 = vadd.f32 %v6846, %v7500
        %v7585 = vadd.f32 %v6847, %v7502
        %v7586 = vadd.f32 %v6848, %v7505
        %v7587 = vadd.f32 %v6849, %v7507
        %v7588 = vadd.f32 %v6850, %v7510
        %v7589 = vadd.f32 %v6851, %v7512
        %v7590 = vadd.f32 %v6852, %v7515
        %v7591 = vadd.f32 %v6853, %v7517
        %v7592 = vadd.f32 %v6854, %v7520
        %v7593 = vadd.f32 %v6855, %v7522
        %v7594 = vadd.f32 %v6856, %v7525
        %v7595 = vadd.f32 %v6857, %v7527
        %v7596 = vadd.f32 %v6858, %v7530
        %v7597 = vadd.f32 %v6859, %v7532
        %v7598 = vld [vmem:[%s2] sm:$0x1]
        %v7600 = vperm.slane %v7598, 0
        %v7602 = vadd.f32 %v7534, %v7600
        %v7603 = vadd.f32 %v7535, %v7600
        %v7604 = vadd.f32 %v7536, %v7600
        %v7605 = vadd.f32 %v7537, %v7600
        %v7606 = vadd.f32 %v7538, %v7600
        %v7607 = vadd.f32 %v7539, %v7600
        %v7608 = vadd.f32 %v7540, %v7600
        %v7609 = vadd.f32 %v7541, %v7600
        %v7610 = vadd.f32 %v7542, %v7600
        %v7611 = vadd.f32 %v7543, %v7600
        %v7612 = vadd.f32 %v7544, %v7600
        %v7613 = vadd.f32 %v7545, %v7600
        %v7614 = vadd.f32 %v7546, %v7600
        %v7615 = vadd.f32 %v7547, %v7600
        %v7616 = vadd.f32 %v7548, %v7600
        %v7617 = vadd.f32 %v7549, %v7600
        %v7618 = vadd.f32 %v7550, %v7600
        %v7619 = vadd.f32 %v7551, %v7600
        %v7620 = vadd.f32 %v7552, %v7600
        %v7621 = vadd.f32 %v7553, %v7600
        %v7622 = vadd.f32 %v7554, %v7600
        %v7623 = vadd.f32 %v7555, %v7600
        %v7624 = vadd.f32 %v7556, %v7600
        %v7625 = vadd.f32 %v7557, %v7600
        %v7626 = vadd.f32 %v7558, %v7600
        %v7627 = vadd.f32 %v7559, %v7600
        %v7628 = vadd.f32 %v7560, %v7600
        %v7629 = vadd.f32 %v7561, %v7600
        %v7630 = vadd.f32 %v7562, %v7600
        %v7631 = vadd.f32 %v7563, %v7600
        %v7632 = vadd.f32 %v7564, %v7600
        %v7633 = vadd.f32 %v7565, %v7600
        %v7634 = vadd.f32 %v7566, %v7600
        %v7635 = vadd.f32 %v7567, %v7600
        %v7636 = vadd.f32 %v7568, %v7600
        %v7637 = vadd.f32 %v7569, %v7600
        %v7638 = vadd.f32 %v7570, %v7600
        %v7639 = vadd.f32 %v7571, %v7600
        %v7640 = vadd.f32 %v7572, %v7600
        %v7641 = vadd.f32 %v7573, %v7600
        %v7642 = vadd.f32 %v7574, %v7600
        %v7643 = vadd.f32 %v7575, %v7600
        %v7644 = vadd.f32 %v7576, %v7600
        %v7645 = vadd.f32 %v7577, %v7600
        %v7646 = vadd.f32 %v7578, %v7600
        %v7647 = vadd.f32 %v7579, %v7600
        %v7648 = vadd.f32 %v7580, %v7600
        %v7649 = vadd.f32 %v7581, %v7600
        %v7650 = vadd.f32 %v7582, %v7600
        %v7651 = vadd.f32 %v7583, %v7600
        %v7652 = vadd.f32 %v7584, %v7600
        %v7653 = vadd.f32 %v7585, %v7600
        %v7654 = vadd.f32 %v7586, %v7600
        %v7655 = vadd.f32 %v7587, %v7600
        %v7656 = vadd.f32 %v7588, %v7600
        %v7657 = vadd.f32 %v7589, %v7600
        %v7658 = vadd.f32 %v7590, %v7600
        %v7659 = vadd.f32 %v7591, %v7600
        %v7660 = vadd.f32 %v7592, %v7600
        %v7661 = vadd.f32 %v7593, %v7600
        %v7662 = vadd.f32 %v7594, %v7600
        %v7663 = vadd.f32 %v7595, %v7600
        %v7664 = vadd.f32 %v7596, %v7600
        %v7665 = vadd.f32 %v7597, %v7600
        %v7666 = vmul.f32 %v7602, 0.01
        %v7667 = vmul.f32 %v7603, 0.01
        %v7668 = vmul.f32 %v7604, 0.01
        %v7669 = vmul.f32 %v7605, 0.01
        %v7670 = vmul.f32 %v7606, 0.01
        %v7671 = vmul.f32 %v7607, 0.01
        %v7672 = vmul.f32 %v7608, 0.01
        %v7673 = vmul.f32 %v7609, 0.01
        %v7674 = vmul.f32 %v7610, 0.01
        %v7675 = vmul.f32 %v7611, 0.01
        %v7676 = vmul.f32 %v7612, 0.01
        %v7677 = vmul.f32 %v7613, 0.01
        %v7678 = vmul.f32 %v7614, 0.01
        %v7679 = vmul.f32 %v7615, 0.01
        %v7680 = vmul.f32 %v7616, 0.01
        %v7681 = vmul.f32 %v7617, 0.01
        %v7682 = vmul.f32 %v7618, 0.01
        %v7683 = vmul.f32 %v7619, 0.01
        %v7684 = vmul.f32 %v7620, 0.01
        %v7685 = vmul.f32 %v7621, 0.01
        %v7686 = vmul.f32 %v7622, 0.01
        %v7687 = vmul.f32 %v7623, 0.01
        %v7688 = vmul.f32 %v7624, 0.01
        %v7689 = vmul.f32 %v7625, 0.01
        %v7690 = vmul.f32 %v7626, 0.01
        %v7691 = vmul.f32 %v7627, 0.01
        %v7692 = vmul.f32 %v7628, 0.01
        %v7693 = vmul.f32 %v7629, 0.01
        %v7694 = vmul.f32 %v7630, 0.01
        %v7695 = vmul.f32 %v7631, 0.01
        %v7696 = vmul.f32 %v7632, 0.01
        %v7697 = vmul.f32 %v7633, 0.01
        %v7698 = vmul.f32 %v7634, 0.01
        %v7699 = vmul.f32 %v7635, 0.01
        %v7700 = vmul.f32 %v7636, 0.01
        %v7701 = vmul.f32 %v7637, 0.01
        %v7702 = vmul.f32 %v7638, 0.01
        %v7703 = vmul.f32 %v7639, 0.01
        %v7704 = vmul.f32 %v7640, 0.01
        %v7705 = vmul.f32 %v7641, 0.01
        %v7706 = vmul.f32 %v7642, 0.01
        %v7707 = vmul.f32 %v7643, 0.01
        %v7708 = vmul.f32 %v7644, 0.01
        %v7709 = vmul.f32 %v7645, 0.01
        %v7710 = vmul.f32 %v7646, 0.01
        %v7711 = vmul.f32 %v7647, 0.01
        %v7712 = vmul.f32 %v7648, 0.01
        %v7713 = vmul.f32 %v7649, 0.01
        %v7714 = vmul.f32 %v7650, 0.01
        %v7715 = vmul.f32 %v7651, 0.01
        %v7716 = vmul.f32 %v7652, 0.01
        %v7717 = vmul.f32 %v7653, 0.01
        %v7718 = vmul.f32 %v7654, 0.01
        %v7719 = vmul.f32 %v7655, 0.01
        %v7720 = vmul.f32 %v7656, 0.01
        %v7721 = vmul.f32 %v7657, 0.01
        %v7722 = vmul.f32 %v7658, 0.01
        %v7723 = vmul.f32 %v7659, 0.01
        %v7724 = vmul.f32 %v7660, 0.01
        %v7725 = vmul.f32 %v7661, 0.01
        %v7726 = vmul.f32 %v7662, 0.01
        %v7727 = vmul.f32 %v7663, 0.01
        %v7728 = vmul.f32 %v7664, 0.01
        %v7729 = vmul.f32 %v7665, 0.01
        %v7730 = vmax.f32 %v7602, %v7666
        %v7731 = vmax.f32 %v7603, %v7667
        %v7732 = vmax.f32 %v7604, %v7668
        %v7733 = vmax.f32 %v7605, %v7669
        %v7734 = vmax.f32 %v7606, %v7670
        %v7735 = vmax.f32 %v7607, %v7671
        %v7736 = vmax.f32 %v7608, %v7672
        %v7737 = vmax.f32 %v7609, %v7673
        %v7738 = vmax.f32 %v7610, %v7674
        %v7739 = vmax.f32 %v7611, %v7675
        %v7740 = vmax.f32 %v7612, %v7676
        %v7741 = vmax.f32 %v7613, %v7677
        %v7742 = vmax.f32 %v7614, %v7678
        %v7743 = vmax.f32 %v7615, %v7679
        %v7744 = vmax.f32 %v7616, %v7680
        %v7745 = vmax.f32 %v7617, %v7681
        %v7746 = vmax.f32 %v7618, %v7682
        %v7747 = vmax.f32 %v7619, %v7683
        %v7748 = vmax.f32 %v7620, %v7684
        %v7749 = vmax.f32 %v7621, %v7685
        %v7750 = vmax.f32 %v7622, %v7686
        %v7751 = vmax.f32 %v7623, %v7687
        %v7752 = vmax.f32 %v7624, %v7688
        %v7753 = vmax.f32 %v7625, %v7689
        %v7754 = vmax.f32 %v7626, %v7690
        %v7755 = vmax.f32 %v7627, %v7691
        %v7756 = vmax.f32 %v7628, %v7692
        %v7757 = vmax.f32 %v7629, %v7693
        %v7758 = vmax.f32 %v7630, %v7694
        %v7759 = vmax.f32 %v7631, %v7695
        %v7760 = vmax.f32 %v7632, %v7696
        %v7761 = vmax.f32 %v7633, %v7697
        %v7762 = vmax.f32 %v7634, %v7698
        %v7763 = vmax.f32 %v7635, %v7699
        %v7764 = vmax.f32 %v7636, %v7700
        %v7765 = vmax.f32 %v7637, %v7701
        %v7766 = vmax.f32 %v7638, %v7702
        %v7767 = vmax.f32 %v7639, %v7703
        %v7768 = vmax.f32 %v7640, %v7704
        %v7769 = vmax.f32 %v7641, %v7705
        %v7770 = vmax.f32 %v7642, %v7706
        %v7771 = vmax.f32 %v7643, %v7707
        %v7772 = vmax.f32 %v7644, %v7708
        %v7773 = vmax.f32 %v7645, %v7709
        %v7774 = vmax.f32 %v7646, %v7710
        %v7775 = vmax.f32 %v7647, %v7711
        %v7776 = vmax.f32 %v7648, %v7712
        %v7777 = vmax.f32 %v7649, %v7713
        %v7778 = vmax.f32 %v7650, %v7714
        %v7779 = vmax.f32 %v7651, %v7715
        %v7780 = vmax.f32 %v7652, %v7716
        %v7781 = vmax.f32 %v7653, %v7717
        %v7782 = vmax.f32 %v7654, %v7718
        %v7783 = vmax.f32 %v7655, %v7719
        %v7784 = vmax.f32 %v7656, %v7720
        %v7785 = vmax.f32 %v7657, %v7721
        %v7786 = vmax.f32 %v7658, %v7722
        %v7787 = vmax.f32 %v7659, %v7723
        %v7788 = vmax.f32 %v7660, %v7724
        %v7789 = vmax.f32 %v7661, %v7725
        %v7790 = vmax.f32 %v7662, %v7726
        %v7791 = vmax.f32 %v7663, %v7727
        %v7792 = vmax.f32 %v7664, %v7728
        %v7793 = vmax.f32 %v7665, %v7729
        %v7794 = vpack.c.bf16 %v7731, %v7730
        %v7795 = vpack.c.bf16 %v7733, %v7732
        %v7796 = vpack.c.bf16 %v7735, %v7734
        %v7797 = vpack.c.bf16 %v7737, %v7736
        %v7798 = vpack.c.bf16 %v7739, %v7738
        %v7799 = vpack.c.bf16 %v7741, %v7740
        %v7800 = vpack.c.bf16 %v7743, %v7742
        %v7801 = vpack.c.bf16 %v7745, %v7744
        %v7802 = vpack.c.bf16 %v7747, %v7746
        %v7803 = vpack.c.bf16 %v7749, %v7748
        %v7804 = vpack.c.bf16 %v7751, %v7750
        %v7805 = vpack.c.bf16 %v7753, %v7752
        %v7806 = vpack.c.bf16 %v7755, %v7754
        %v7807 = vpack.c.bf16 %v7757, %v7756
        %v7808 = vpack.c.bf16 %v7759, %v7758
        %v7809 = vpack.c.bf16 %v7761, %v7760
        %v7810 = vpack.c.bf16 %v7763, %v7762
        %v7811 = vpack.c.bf16 %v7765, %v7764
        %v7812 = vpack.c.bf16 %v7767, %v7766
        %v7813 = vpack.c.bf16 %v7769, %v7768
        %v7814 = vpack.c.bf16 %v7771, %v7770
        %v7815 = vpack.c.bf16 %v7773, %v7772
        %v7816 = vpack.c.bf16 %v7775, %v7774
        %v7817 = vpack.c.bf16 %v7777, %v7776
        %v7818 = vpack.c.bf16 %v7779, %v7778
        %v7819 = vpack.c.bf16 %v7781, %v7780
        %v7820 = vpack.c.bf16 %v7783, %v7782
        %v7821 = vpack.c.bf16 %v7785, %v7784
        %v7822 = vpack.c.bf16 %v7787, %v7786
        %v7823 = vpack.c.bf16 %v7789, %v7788
        %v7824 = vpack.c.bf16 %v7791, %v7790
        %v7825 = vpack.c.bf16 %v7793, %v7792
        %v7826 = vld [vmem:[%s3] sm:$0xf]
        %v7827 = vld [vmem:[%s3 + $0x4] sm:$0xf]
        %v7828 = vld [vmem:[%s3 + $0x8] sm:$0xf]
        %v7829 = vld [vmem:[%s3 + $0xc] sm:$0xf]
        %v7830 = vld [vmem:[%s4] sm:$0x1]
        %v7832 = vperm.slane %v7830, 0
        %v7838 = vunpack.c.l.b16 %v7826
        %v7839 = vunpack.c.l.b16 %v7827
        %v7840 = vunpack.c.l.b16 %v7828
        %v7841 = vunpack.c.l.b16 %v7829
        %v7842 = vpack.c.b16 %v7839, %v7838
        %v7843 = vpack.c.b16 %v7841, %v7840
        %vm7846 = vcmask 261120
        %v7848 = vsel %vm7846, %v7794, 0
        %v7851 = vsel %vm7846, %v7795, 0
        %v7854 = vsel %vm7846, %v7796, 0
        %v7857 = vsel %vm7846, %v7797, 0
        %v7860 = vsel %vm7846, %v7798, 0
        %v7863 = vsel %vm7846, %v7799, 0
        %v7866 = vsel %vm7846, %v7800, 0
        %v7869 = vsel %vm7846, %v7801, 0
        %v7872 = vsel %vm7846, %v7802, 0
        %v7875 = vsel %vm7846, %v7803, 0
        %v7878 = vsel %vm7846, %v7804, 0
        %v7881 = vsel %vm7846, %v7805, 0
        %v7884 = vsel %vm7846, %v7806, 0
        %v7887 = vsel %vm7846, %v7807, 0
        %v7890 = vsel %vm7846, %v7808, 0
        %v7893 = vsel %vm7846, %v7809, 0
        %v7896 = vsel %vm7846, %v7810, 0
        %v7899 = vsel %vm7846, %v7811, 0
        %v7902 = vsel %vm7846, %v7812, 0
        %v7905 = vsel %vm7846, %v7813, 0
        %v7908 = vsel %vm7846, %v7814, 0
        %v7911 = vsel %vm7846, %v7815, 0
        %v7914 = vsel %vm7846, %v7816, 0
        %v7917 = vsel %vm7846, %v7817, 0
        %v7920 = vsel %vm7846, %v7818, 0
        %v7923 = vsel %vm7846, %v7819, 0
        %v7926 = vsel %vm7846, %v7820, 0
        %v7929 = vsel %vm7846, %v7821, 0
        %v7932 = vsel %vm7846, %v7822, 0
        %v7935 = vsel %vm7846, %v7823, 0
        %v7938 = vsel %vm7846, %v7824, 0
        %v7941 = vsel %vm7846, %v7825, 0
        %7943 = vmatpush.bf16.msra.mxu0 0
        %7944 = vmatpush.bf16.msra.mxu0 0
        %7945 = vmatpush.bf16.msra.mxu0 0
        %7946 = vmatpush.bf16.msra.mxu0 0
        %7947 = vmatpush.bf16.msra.mxu0 0
        %7948 = vmatpush.bf16.msra.mxu0 0
        %7949 = vmatpush.bf16.msra.mxu0 %v7843
        %7950 = vmatpush.bf16.msra.mxu0 %v7842
        %7951 = vmatmul.bf16.gmra.mxu0 %v7848
        %v7952 = vpop.f32.mrf.mxu0
        %v7953 = vadd.f32 %v7832, %v7952
        %v7954 = vpop.f32.mrf.mxu0
        %v7955 = vadd.f32 %v7832, %v7954
        %7956 = vmatmul.bf16.gmra.mxu0 %v7851
        %v7957 = vpop.f32.mrf.mxu0
        %v7958 = vadd.f32 %v7832, %v7957
        %v7959 = vpop.f32.mrf.mxu0
        %v7960 = vadd.f32 %v7832, %v7959
        %7961 = vmatmul.bf16.gmra.mxu0 %v7854
        %v7962 = vpop.f32.mrf.mxu0
        %v7963 = vadd.f32 %v7832, %v7962
        %v7964 = vpop.f32.mrf.mxu0
        %v7965 = vadd.f32 %v7832, %v7964
        %7966 = vmatmul.bf16.gmra.mxu0 %v7857
        %v7967 = vpop.f32.mrf.mxu0
        %v7968 = vadd.f32 %v7832, %v7967
        %v7969 = vpop.f32.mrf.mxu0
        %v7970 = vadd.f32 %v7832, %v7969
        %7971 = vmatmul.bf16.gmra.mxu0 %v7860
        %v7972 = vpop.f32.mrf.mxu0
        %v7973 = vadd.f32 %v7832, %v7972
        %v7974 = vpop.f32.mrf.mxu0
        %v7975 = vadd.f32 %v7832, %v7974
        %7976 = vmatmul.bf16.gmra.mxu0 %v7863
        %v7977 = vpop.f32.mrf.mxu0
        %v7978 = vadd.f32 %v7832, %v7977
        %v7979 = vpop.f32.mrf.mxu0
        %v7980 = vadd.f32 %v7832, %v7979
        %7981 = vmatmul.bf16.gmra.mxu0 %v7866
        %v7982 = vpop.f32.mrf.mxu0
        %v7983 = vadd.f32 %v7832, %v7982
        %v7984 = vpop.f32.mrf.mxu0
        %v7985 = vadd.f32 %v7832, %v7984
        %7986 = vmatmul.bf16.gmra.mxu0 %v7869
        %v7987 = vpop.f32.mrf.mxu0
        %v7988 = vadd.f32 %v7832, %v7987
        %v7989 = vpop.f32.mrf.mxu0
        %v7990 = vadd.f32 %v7832, %v7989
        %7991 = vmatmul.bf16.gmra.mxu0 %v7872
        %v7992 = vpop.f32.mrf.mxu0
        %v7993 = vadd.f32 %v7832, %v7992
        %v7994 = vpop.f32.mrf.mxu0
        %v7995 = vadd.f32 %v7832, %v7994
        %7996 = vmatmul.bf16.gmra.mxu0 %v7875
        %v7997 = vpop.f32.mrf.mxu0
        %v7998 = vadd.f32 %v7832, %v7997
        %v7999 = vpop.f32.mrf.mxu0
        %v8000 = vadd.f32 %v7832, %v7999
        %8001 = vmatmul.bf16.gmra.mxu0 %v7878
        %v8002 = vpop.f32.mrf.mxu0
        %v8003 = vadd.f32 %v7832, %v8002
        %v8004 = vpop.f32.mrf.mxu0
        %v8005 = vadd.f32 %v7832, %v8004
        %8006 = vmatmul.bf16.gmra.mxu0 %v7881
        %v8007 = vpop.f32.mrf.mxu0
        %v8008 = vadd.f32 %v7832, %v8007
        %v8009 = vpop.f32.mrf.mxu0
        %v8010 = vadd.f32 %v7832, %v8009
        %8011 = vmatmul.bf16.gmra.mxu0 %v7884
        %v8012 = vpop.f32.mrf.mxu0
        %v8013 = vadd.f32 %v7832, %v8012
        %v8014 = vpop.f32.mrf.mxu0
        %v8015 = vadd.f32 %v7832, %v8014
        %8016 = vmatmul.bf16.gmra.mxu0 %v7887
        %v8017 = vpop.f32.mrf.mxu0
        %v8018 = vadd.f32 %v7832, %v8017
        %v8019 = vpop.f32.mrf.mxu0
        %v8020 = vadd.f32 %v7832, %v8019
        %8021 = vmatmul.bf16.gmra.mxu0 %v7890
        %v8022 = vpop.f32.mrf.mxu0
        %v8023 = vadd.f32 %v7832, %v8022
        %v8024 = vpop.f32.mrf.mxu0
        %v8025 = vadd.f32 %v7832, %v8024
        %8026 = vmatmul.bf16.gmra.mxu0 %v7893
        %v8027 = vpop.f32.mrf.mxu0
        %v8028 = vadd.f32 %v7832, %v8027
        %v8029 = vpop.f32.mrf.mxu0
        %v8030 = vadd.f32 %v7832, %v8029
        %8031 = vmatmul.bf16.gmra.mxu0 %v7896
        %v8032 = vpop.f32.mrf.mxu0
        %v8033 = vadd.f32 %v7832, %v8032
        %v8034 = vpop.f32.mrf.mxu0
        %v8035 = vadd.f32 %v7832, %v8034
        %8036 = vmatmul.bf16.gmra.mxu0 %v7899
        %v8037 = vpop.f32.mrf.mxu0
        %v8038 = vadd.f32 %v7832, %v8037
        %v8039 = vpop.f32.mrf.mxu0
        %v8040 = vadd.f32 %v7832, %v8039
        %8041 = vmatmul.bf16.gmra.mxu0 %v7902
        %v8042 = vpop.f32.mrf.mxu0
        %v8043 = vadd.f32 %v7832, %v8042
        %v8044 = vpop.f32.mrf.mxu0
        %v8045 = vadd.f32 %v7832, %v8044
        %8046 = vmatmul.bf16.gmra.mxu0 %v7905
        %v8047 = vpop.f32.mrf.mxu0
        %v8048 = vadd.f32 %v7832, %v8047
        %v8049 = vpop.f32.mrf.mxu0
        %v8050 = vadd.f32 %v7832, %v8049
        %8051 = vmatmul.bf16.gmra.mxu0 %v7908
        %v8052 = vpop.f32.mrf.mxu0
        %v8053 = vadd.f32 %v7832, %v8052
        %v8054 = vpop.f32.mrf.mxu0
        %v8055 = vadd.f32 %v7832, %v8054
        %8056 = vmatmul.bf16.gmra.mxu0 %v7911
        %v8057 = vpop.f32.mrf.mxu0
        %v8058 = vadd.f32 %v7832, %v8057
        %v8059 = vpop.f32.mrf.mxu0
        %v8060 = vadd.f32 %v7832, %v8059
        %8061 = vmatmul.bf16.gmra.mxu0 %v7914
        %v8062 = vpop.f32.mrf.mxu0
        %v8063 = vadd.f32 %v7832, %v8062
        %v8064 = vpop.f32.mrf.mxu0
        %v8065 = vadd.f32 %v7832, %v8064
        %8066 = vmatmul.bf16.gmra.mxu0 %v7917
        %v8067 = vpop.f32.mrf.mxu0
        %v8068 = vadd.f32 %v7832, %v8067
        %v8069 = vpop.f32.mrf.mxu0
        %v8070 = vadd.f32 %v7832, %v8069
        %8071 = vmatmul.bf16.gmra.mxu0 %v7920
        %v8072 = vpop.f32.mrf.mxu0
        %v8073 = vadd.f32 %v7832, %v8072
        %v8074 = vpop.f32.mrf.mxu0
        %v8075 = vadd.f32 %v7832, %v8074
        %8076 = vmatmul.bf16.gmra.mxu0 %v7923
        %v8077 = vpop.f32.mrf.mxu0
        %v8078 = vadd.f32 %v7832, %v8077
        %v8079 = vpop.f32.mrf.mxu0
        %v8080 = vadd.f32 %v7832, %v8079
        %8081 = vmatmul.bf16.gmra.mxu0 %v7926
        %v8082 = vpop.f32.mrf.mxu0
        %v8083 = vadd.f32 %v7832, %v8082
        %v8084 = vpop.f32.mrf.mxu0
        %v8085 = vadd.f32 %v7832, %v8084
        %8086 = vmatmul.bf16.gmra.mxu0 %v7929
        %v8087 = vpop.f32.mrf.mxu0
        %v8088 = vadd.f32 %v7832, %v8087
        %v8089 = vpop.f32.mrf.mxu0
        %v8090 = vadd.f32 %v7832, %v8089
        %8091 = vmatmul.bf16.gmra.mxu0 %v7932
        %v8092 = vpop.f32.mrf.mxu0
        %v8093 = vadd.f32 %v7832, %v8092
        %v8094 = vpop.f32.mrf.mxu0
        %v8095 = vadd.f32 %v7832, %v8094
        %8096 = vmatmul.bf16.gmra.mxu0 %v7935
        %v8097 = vpop.f32.mrf.mxu0
        %v8098 = vadd.f32 %v7832, %v8097
        %v8099 = vpop.f32.mrf.mxu0
        %v8100 = vadd.f32 %v7832, %v8099
        %8101 = vmatmul.bf16.gmra.mxu0 %v7938
        %v8102 = vpop.f32.mrf.mxu0
        %v8103 = vadd.f32 %v7832, %v8102
        %v8104 = vpop.f32.mrf.mxu0
        %v8105 = vadd.f32 %v7832, %v8104
        %8106 = vmatmul.bf16.gmra.mxu0 %v7941
        %v8107 = vpop.f32.mrf.mxu0
        %v8108 = vadd.f32 %v7832, %v8107
        %v8109 = vpop.f32.mrf.mxu0
        %v8110 = vadd.f32 %v7832, %v8109
        %8111 = vdwg.mxu0
        %v8112 = vld [vmem:[%s5] sm:$0x1]
        %v8114 = vperm.slane %v8112, 0
        %v8116 = vmul.f32 %v7953, %v8114
        %v8117 = vmul.f32 %v7955, %v8114
        %v8118 = vmul.f32 %v7958, %v8114
        %v8119 = vmul.f32 %v7960, %v8114
        %v8120 = vmul.f32 %v7963, %v8114
        %v8121 = vmul.f32 %v7965, %v8114
        %v8122 = vmul.f32 %v7968, %v8114
        %v8123 = vmul.f32 %v7970, %v8114
        %v8124 = vmul.f32 %v7973, %v8114
        %v8125 = vmul.f32 %v7975, %v8114
        %v8126 = vmul.f32 %v7978, %v8114
        %v8127 = vmul.f32 %v7980, %v8114
        %v8128 = vmul.f32 %v7983, %v8114
        %v8129 = vmul.f32 %v7985, %v8114
        %v8130 = vmul.f32 %v7988, %v8114
        %v8131 = vmul.f32 %v7990, %v8114
        %v8132 = vmul.f32 %v7993, %v8114
        %v8133 = vmul.f32 %v7995, %v8114
        %v8134 = vmul.f32 %v7998, %v8114
        %v8135 = vmul.f32 %v8000, %v8114
        %v8136 = vmul.f32 %v8003, %v8114
        %v8137 = vmul.f32 %v8005, %v8114
        %v8138 = vmul.f32 %v8008, %v8114
        %v8139 = vmul.f32 %v8010, %v8114
        %v8140 = vmul.f32 %v8013, %v8114
        %v8141 = vmul.f32 %v8015, %v8114
        %v8142 = vmul.f32 %v8018, %v8114
        %v8143 = vmul.f32 %v8020, %v8114
        %v8144 = vmul.f32 %v8023, %v8114
        %v8145 = vmul.f32 %v8025, %v8114
        %v8146 = vmul.f32 %v8028, %v8114
        %v8147 = vmul.f32 %v8030, %v8114
        %v8148 = vmul.f32 %v8033, %v8114
        %v8149 = vmul.f32 %v8035, %v8114
        %v8150 = vmul.f32 %v8038, %v8114
        %v8151 = vmul.f32 %v8040, %v8114
        %v8152 = vmul.f32 %v8043, %v8114
        %v8153 = vmul.f32 %v8045, %v8114
        %v8154 = vmul.f32 %v8048, %v8114
        %v8155 = vmul.f32 %v8050, %v8114
        %v8156 = vmul.f32 %v8053, %v8114
        %v8157 = vmul.f32 %v8055, %v8114
        %v8158 = vmul.f32 %v8058, %v8114
        %v8159 = vmul.f32 %v8060, %v8114
        %v8160 = vmul.f32 %v8063, %v8114
        %v8161 = vmul.f32 %v8065, %v8114
        %v8162 = vmul.f32 %v8068, %v8114
        %v8163 = vmul.f32 %v8070, %v8114
        %v8164 = vmul.f32 %v8073, %v8114
        %v8165 = vmul.f32 %v8075, %v8114
        %v8166 = vmul.f32 %v8078, %v8114
        %v8167 = vmul.f32 %v8080, %v8114
        %v8168 = vmul.f32 %v8083, %v8114
        %v8169 = vmul.f32 %v8085, %v8114
        %v8170 = vmul.f32 %v8088, %v8114
        %v8171 = vmul.f32 %v8090, %v8114
        %v8172 = vmul.f32 %v8093, %v8114
        %v8173 = vmul.f32 %v8095, %v8114
        %v8174 = vmul.f32 %v8098, %v8114
        %v8175 = vmul.f32 %v8100, %v8114
        %v8176 = vmul.f32 %v8103, %v8114
        %v8177 = vmul.f32 %v8105, %v8114
        %v8178 = vmul.f32 %v8108, %v8114
        %v8179 = vmul.f32 %v8110, %v8114
        %v8180 = vsub.f32 0.0, %v8116
        %v8181 = vsub.f32 0.0, %v8117
        %v8182 = vsub.f32 0.0, %v8118
        %v8183 = vsub.f32 0.0, %v8119
        %v8184 = vsub.f32 0.0, %v8120
        %v8185 = vsub.f32 0.0, %v8121
        %v8186 = vsub.f32 0.0, %v8122
        %v8187 = vsub.f32 0.0, %v8123
        %v8188 = vsub.f32 0.0, %v8124
        %v8189 = vsub.f32 0.0, %v8125
        %v8190 = vsub.f32 0.0, %v8126
        %v8191 = vsub.f32 0.0, %v8127
        %v8192 = vsub.f32 0.0, %v8128
        %v8193 = vsub.f32 0.0, %v8129
        %v8194 = vsub.f32 0.0, %v8130
        %v8195 = vsub.f32 0.0, %v8131
        %v8196 = vsub.f32 0.0, %v8132
        %v8197 = vsub.f32 0.0, %v8133
        %v8198 = vsub.f32 0.0, %v8134
        %v8199 = vsub.f32 0.0, %v8135
        %v8200 = vsub.f32 0.0, %v8136
        %v8201 = vsub.f32 0.0, %v8137
        %v8202 = vsub.f32 0.0, %v8138
        %v8203 = vsub.f32 0.0, %v8139
        %v8204 = vsub.f32 0.0, %v8140
        %v8205 = vsub.f32 0.0, %v8141
        %v8206 = vsub.f32 0.0, %v8142
        %v8207 = vsub.f32 0.0, %v8143
        %v8208 = vsub.f32 0.0, %v8144
        %v8209 = vsub.f32 0.0, %v8145
        %v8210 = vsub.f32 0.0, %v8146
        %v8211 = vsub.f32 0.0, %v8147
        %v8212 = vsub.f32 0.0, %v8148
        %v8213 = vsub.f32 0.0, %v8149
        %v8214 = vsub.f32 0.0, %v8150
        %v8215 = vsub.f32 0.0, %v8151
        %v8216 = vsub.f32 0.0, %v8152
        %v8217 = vsub.f32 0.0, %v8153
        %v8218 = vsub.f32 0.0, %v8154
        %v8219 = vsub.f32 0.0, %v8155
        %v8220 = vsub.f32 0.0, %v8156
        %v8221 = vsub.f32 0.0, %v8157
        %v8222 = vsub.f32 0.0, %v8158
        %v8223 = vsub.f32 0.0, %v8159
        %v8224 = vsub.f32 0.0, %v8160
        %v8225 = vsub.f32 0.0, %v8161
        %v8226 = vsub.f32 0.0, %v8162
        %v8227 = vsub.f32 0.0, %v8163
        %v8228 = vsub.f32 0.0, %v8164
        %v8229 = vsub.f32 0.0, %v8165
        %v8230 = vsub.f32 0.0, %v8166
        %v8231 = vsub.f32 0.0, %v8167
        %v8232 = vsub.f32 0.0, %v8168
        %v8233 = vsub.f32 0.0, %v8169
        %v8234 = vsub.f32 0.0, %v8170
        %v8235 = vsub.f32 0.0, %v8171
        %v8236 = vsub.f32 0.0, %v8172
        %v8237 = vsub.f32 0.0, %v8173
        %v8238 = vsub.f32 0.0, %v8174
        %v8239 = vsub.f32 0.0, %v8175
        %v8240 = vsub.f32 0.0, %v8176
        %v8241 = vsub.f32 0.0, %v8177
        %v8242 = vsub.f32 0.0, %v8178
        %v8243 = vsub.f32 0.0, %v8179
        %v8244 = vmul.f32 %v8180, 1.442695
        %v8245 = vpow.pop %v8244
        %v8246 = vmul.f32 %v8181, 1.442695
        %v8247 = vpow.pop %v8246
        %v8248 = vmul.f32 %v8182, 1.442695
        %v8249 = vpow.pop %v8248
        %v8250 = vmul.f32 %v8183, 1.442695
        %v8251 = vpow.pop %v8250
        %v8252 = vmul.f32 %v8184, 1.442695
        %v8253 = vpow.pop %v8252
        %v8254 = vmul.f32 %v8185, 1.442695
        %v8255 = vpow.pop %v8254
        %v8256 = vmul.f32 %v8186, 1.442695
        %v8257 = vpow.pop %v8256
        %v8258 = vmul.f32 %v8187, 1.442695
        %v8259 = vpow.pop %v8258
        %v8260 = vmul.f32 %v8188, 1.442695
        %v8261 = vpow.pop %v8260
        %v8262 = vmul.f32 %v8189, 1.442695
        %v8263 = vpow.pop %v8262
        %v8264 = vmul.f32 %v8190, 1.442695
        %v8265 = vpow.pop %v8264
        %v8266 = vmul.f32 %v8191, 1.442695
        %v8267 = vpow.pop %v8266
        %v8268 = vmul.f32 %v8192, 1.442695
        %v8269 = vpow.pop %v8268
        %v8270 = vmul.f32 %v8193, 1.442695
        %v8271 = vpow.pop %v8270
        %v8272 = vmul.f32 %v8194, 1.442695
        %v8273 = vpow.pop %v8272
        %v8274 = vmul.f32 %v8195, 1.442695
        %v8275 = vpow.pop %v8274
        %v8276 = vmul.f32 %v8196, 1.442695
        %v8277 = vpow.pop %v8276
        %v8278 = vmul.f32 %v8197, 1.442695
        %v8279 = vpow.pop %v8278
        %v8280 = vmul.f32 %v8198, 1.442695
        %v8281 = vpow.pop %v8280
        %v8282 = vmul.f32 %v8199, 1.442695
        %v8283 = vpow.pop %v8282
        %v8284 = vmul.f32 %v8200, 1.442695
        %v8285 = vpow.pop %v8284
        %v8286 = vmul.f32 %v8201, 1.442695
        %v8287 = vpow.pop %v8286
        %v8288 = vmul.f32 %v8202, 1.442695
        %v8289 = vpow.pop %v8288
        %v8290 = vmul.f32 %v8203, 1.442695
        %v8291 = vpow.pop %v8290
        %v8292 = vmul.f32 %v8204, 1.442695
        %v8293 = vpow.pop %v8292
        %v8294 = vmul.f32 %v8205, 1.442695
        %v8295 = vpow.pop %v8294
        %v8296 = vmul.f32 %v8206, 1.442695
        %v8297 = vpow.pop %v8296
        %v8298 = vmul.f32 %v8207, 1.442695
        %v8299 = vpow.pop %v8298
        %v8300 = vmul.f32 %v8208, 1.442695
        %v8301 = vpow.pop %v8300
        %v8302 = vmul.f32 %v8209, 1.442695
        %v8303 = vpow.pop %v8302
        %v8304 = vmul.f32 %v8210, 1.442695
        %v8305 = vpow.pop %v8304
        %v8306 = vmul.f32 %v8211, 1.442695
        %v8307 = vpow.pop %v8306
        %v8308 = vmul.f32 %v8212, 1.442695
        %v8309 = vpow.pop %v8308
        %v8310 = vmul.f32 %v8213, 1.442695
        %v8311 = vpow.pop %v8310
        %v8312 = vmul.f32 %v8214, 1.442695
        %v8313 = vpow.pop %v8312
        %v8314 = vmul.f32 %v8215, 1.442695
        %v8315 = vpow.pop %v8314
        %v8316 = vmul.f32 %v8216, 1.442695
        %v8317 = vpow.pop %v8316
        %v8318 = vmul.f32 %v8217, 1.442695
        %v8319 = vpow.pop %v8318
        %v8320 = vmul.f32 %v8218, 1.442695
        %v8321 = vpow.pop %v8320
        %v8322 = vmul.f32 %v8219, 1.442695
        %v8323 = vpow.pop %v8322
        %v8324 = vmul.f32 %v8220, 1.442695
        %v8325 = vpow.pop %v8324
        %v8326 = vmul.f32 %v8221, 1.442695
        %v8327 = vpow.pop %v8326
        %v8328 = vmul.f32 %v8222, 1.442695
        %v8329 = vpow.pop %v8328
        %v8330 = vmul.f32 %v8223, 1.442695
        %v8331 = vpow.pop %v8330
        %v8332 = vmul.f32 %v8224, 1.442695
        %v8333 = vpow.pop %v8332
        %v8334 = vmul.f32 %v8225, 1.442695
        %v8335 = vpow.pop %v8334
        %v8336 = vmul.f32 %v8226, 1.442695
        %v8337 = vpow.pop %v8336
        %v8338 = vmul.f32 %v8227, 1.442695
        %v8339 = vpow.pop %v8338
        %v8340 = vmul.f32 %v8228, 1.442695
        %v8341 = vpow.pop %v8340
        %v8342 = vmul.f32 %v8229, 1.442695
        %v8343 = vpow.pop %v8342
        %v8344 = vmul.f32 %v8230, 1.442695
        %v8345 = vpow.pop %v8344
        %v8346 = vmul.f32 %v8231, 1.442695
        %v8347 = vpow.pop %v8346
        %v8348 = vmul.f32 %v8232, 1.442695
        %v8349 = vpow.pop %v8348
        %v8350 = vmul.f32 %v8233, 1.442695
        %v8351 = vpow.pop %v8350
        %v8352 = vmul.f32 %v8234, 1.442695
        %v8353 = vpow.pop %v8352
        %v8354 = vmul.f32 %v8235, 1.442695
        %v8355 = vpow.pop %v8354
        %v8356 = vmul.f32 %v8236, 1.442695
        %v8357 = vpow.pop %v8356
        %v8358 = vmul.f32 %v8237, 1.442695
        %v8359 = vpow.pop %v8358
        %v8360 = vmul.f32 %v8238, 1.442695
        %v8361 = vpow.pop %v8360
        %v8362 = vmul.f32 %v8239, 1.442695
        %v8363 = vpow.pop %v8362
        %v8364 = vmul.f32 %v8240, 1.442695
        %v8365 = vpow.pop %v8364
        %v8366 = vmul.f32 %v8241, 1.442695
        %v8367 = vpow.pop %v8366
        %v8368 = vmul.f32 %v8242, 1.442695
        %v8369 = vpow.pop %v8368
        %v8370 = vmul.f32 %v8243, 1.442695
        %v8371 = vpow.pop %v8370
        %v8372 = vadd.f32 %v8245, 1.0
        %v8373 = vadd.f32 %v8247, 1.0
        %v8374 = vadd.f32 %v8249, 1.0
        %v8375 = vadd.f32 %v8251, 1.0
        %v8376 = vadd.f32 %v8253, 1.0
        %v8377 = vadd.f32 %v8255, 1.0
        %v8378 = vadd.f32 %v8257, 1.0
        %v8379 = vadd.f32 %v8259, 1.0
        %v8380 = vadd.f32 %v8261, 1.0
        %v8381 = vadd.f32 %v8263, 1.0
        %v8382 = vadd.f32 %v8265, 1.0
        %v8383 = vadd.f32 %v8267, 1.0
        %v8384 = vadd.f32 %v8269, 1.0
        %v8385 = vadd.f32 %v8271, 1.0
        %v8386 = vadd.f32 %v8273, 1.0
        %v8387 = vadd.f32 %v8275, 1.0
        %v8388 = vadd.f32 %v8277, 1.0
        %v8389 = vadd.f32 %v8279, 1.0
        %v8390 = vadd.f32 %v8281, 1.0
        %v8391 = vadd.f32 %v8283, 1.0
        %v8392 = vadd.f32 %v8285, 1.0
        %v8393 = vadd.f32 %v8287, 1.0
        %v8394 = vadd.f32 %v8289, 1.0
        %v8395 = vadd.f32 %v8291, 1.0
        %v8396 = vadd.f32 %v8293, 1.0
        %v8397 = vadd.f32 %v8295, 1.0
        %v8398 = vadd.f32 %v8297, 1.0
        %v8399 = vadd.f32 %v8299, 1.0
        %v8400 = vadd.f32 %v8301, 1.0
        %v8401 = vadd.f32 %v8303, 1.0
        %v8402 = vadd.f32 %v8305, 1.0
        %v8403 = vadd.f32 %v8307, 1.0
        %v8404 = vadd.f32 %v8309, 1.0
        %v8405 = vadd.f32 %v8311, 1.0
        %v8406 = vadd.f32 %v8313, 1.0
        %v8407 = vadd.f32 %v8315, 1.0
        %v8408 = vadd.f32 %v8317, 1.0
        %v8409 = vadd.f32 %v8319, 1.0
        %v8410 = vadd.f32 %v8321, 1.0
        %v8411 = vadd.f32 %v8323, 1.0
        %v8412 = vadd.f32 %v8325, 1.0
        %v8413 = vadd.f32 %v8327, 1.0
        %v8414 = vadd.f32 %v8329, 1.0
        %v8415 = vadd.f32 %v8331, 1.0
        %v8416 = vadd.f32 %v8333, 1.0
        %v8417 = vadd.f32 %v8335, 1.0
        %v8418 = vadd.f32 %v8337, 1.0
        %v8419 = vadd.f32 %v8339, 1.0
        %v8420 = vadd.f32 %v8341, 1.0
        %v8421 = vadd.f32 %v8343, 1.0
        %v8422 = vadd.f32 %v8345, 1.0
        %v8423 = vadd.f32 %v8347, 1.0
        %v8424 = vadd.f32 %v8349, 1.0
        %v8425 = vadd.f32 %v8351, 1.0
        %v8426 = vadd.f32 %v8353, 1.0
        %v8427 = vadd.f32 %v8355, 1.0
        %v8428 = vadd.f32 %v8357, 1.0
        %v8429 = vadd.f32 %v8359, 1.0
        %v8430 = vadd.f32 %v8361, 1.0
        %v8431 = vadd.f32 %v8363, 1.0
        %v8432 = vadd.f32 %v8365, 1.0
        %v8433 = vadd.f32 %v8367, 1.0
        %v8434 = vadd.f32 %v8369, 1.0
        %v8435 = vadd.f32 %v8371, 1.0
        %v8436 = vrcp.pop %v8372
        %v8437 = vrcp.pop %v8373
        %v8438 = vrcp.pop %v8374
        %v8439 = vrcp.pop %v8375
        %v8440 = vrcp.pop %v8376
        %v8441 = vrcp.pop %v8377
        %v8442 = vrcp.pop %v8378
        %v8443 = vrcp.pop %v8379
        %v8444 = vrcp.pop %v8380
        %v8445 = vrcp.pop %v8381
        %v8446 = vrcp.pop %v8382
        %v8447 = vrcp.pop %v8383
        %v8448 = vrcp.pop %v8384
        %v8449 = vrcp.pop %v8385
        %v8450 = vrcp.pop %v8386
        %v8451 = vrcp.pop %v8387
        %v8452 = vrcp.pop %v8388
        %v8453 = vrcp.pop %v8389
        %v8454 = vrcp.pop %v8390
        %v8455 = vrcp.pop %v8391
        %v8456 = vrcp.pop %v8392
        %v8457 = vrcp.pop %v8393
        %v8458 = vrcp.pop %v8394
        %v8459 = vrcp.pop %v8395
        %v8460 = vrcp.pop %v8396
        %v8461 = vrcp.pop %v8397
        %v8462 = vrcp.pop %v8398
        %v8463 = vrcp.pop %v8399
        %v8464 = vrcp.pop %v8400
        %v8465 = vrcp.pop %v8401
        %v8466 = vrcp.pop %v8402
        %v8467 = vrcp.pop %v8403
        %v8468 = vrcp.pop %v8404
        %v8469 = vrcp.pop %v8405
        %v8470 = vrcp.pop %v8406
        %v8471 = vrcp.pop %v8407
        %v8472 = vrcp.pop %v8408
        %v8473 = vrcp.pop %v8409
        %v8474 = vrcp.pop %v8410
        %v8475 = vrcp.pop %v8411
        %v8476 = vrcp.pop %v8412
        %v8477 = vrcp.pop %v8413
        %v8478 = vrcp.pop %v8414
        %v8479 = vrcp.pop %v8415
        %v8480 = vrcp.pop %v8416
        %v8481 = vrcp.pop %v8417
        %v8482 = vrcp.pop %v8418
        %v8483 = vrcp.pop %v8419
        %v8484 = vrcp.pop %v8420
        %v8485 = vrcp.pop %v8421
        %v8486 = vrcp.pop %v8422
        %v8487 = vrcp.pop %v8423
        %v8488 = vrcp.pop %v8424
        %v8489 = vrcp.pop %v8425
        %v8490 = vrcp.pop %v8426
        %v8491 = vrcp.pop %v8427
        %v8492 = vrcp.pop %v8428
        %v8493 = vrcp.pop %v8429
        %v8494 = vrcp.pop %v8430
        %v8495 = vrcp.pop %v8431
        %v8496 = vrcp.pop %v8432
        %v8497 = vrcp.pop %v8433
        %v8498 = vrcp.pop %v8434
        %v8499 = vrcp.pop %v8435
        %v8500 = vsub.f32 %v8436, %v7953
        %v8501 = vsub.f32 %v8437, %v7955
        %v8502 = vsub.f32 %v8438, %v7958
        %v8503 = vsub.f32 %v8439, %v7960
        %v8504 = vsub.f32 %v8440, %v7963
        %v8505 = vsub.f32 %v8441, %v7965
        %v8506 = vsub.f32 %v8442, %v7968
        %v8507 = vsub.f32 %v8443, %v7970
        %v8508 = vsub.f32 %v8444, %v7973
        %v8509 = vsub.f32 %v8445, %v7975
        %v8510 = vsub.f32 %v8446, %v7978
        %v8511 = vsub.f32 %v8447, %v7980
        %v8512 = vsub.f32 %v8448, %v7983
        %v8513 = vsub.f32 %v8449, %v7985
        %v8514 = vsub.f32 %v8450, %v7988
        %v8515 = vsub.f32 %v8451, %v7990
        %v8516 = vsub.f32 %v8452, %v7993
        %v8517 = vsub.f32 %v8453, %v7995
        %v8518 = vsub.f32 %v8454, %v7998
        %v8519 = vsub.f32 %v8455, %v8000
        %v8520 = vsub.f32 %v8456, %v8003
        %v8521 = vsub.f32 %v8457, %v8005
        %v8522 = vsub.f32 %v8458, %v8008
        %v8523 = vsub.f32 %v8459, %v8010
        %v8524 = vsub.f32 %v8460, %v8013
        %v8525 = vsub.f32 %v8461, %v8015
        %v8526 = vsub.f32 %v8462, %v8018
        %v8527 = vsub.f32 %v8463, %v8020
        %v8528 = vsub.f32 %v8464, %v8023
        %v8529 = vsub.f32 %v8465, %v8025
        %v8530 = vsub.f32 %v8466, %v8028
        %v8531 = vsub.f32 %v8467, %v8030
        %v8532 = vsub.f32 %v8468, %v8033
        %v8533 = vsub.f32 %v8469, %v8035
        %v8534 = vsub.f32 %v8470, %v8038
        %v8535 = vsub.f32 %v8471, %v8040
        %v8536 = vsub.f32 %v8472, %v8043
        %v8537 = vsub.f32 %v8473, %v8045
        %v8538 = vsub.f32 %v8474, %v8048
        %v8539 = vsub.f32 %v8475, %v8050
        %v8540 = vsub.f32 %v8476, %v8053
        %v8541 = vsub.f32 %v8477, %v8055
        %v8542 = vsub.f32 %v8478, %v8058
        %v8543 = vsub.f32 %v8479, %v8060
        %v8544 = vsub.f32 %v8480, %v8063
        %v8545 = vsub.f32 %v8481, %v8065
        %v8546 = vsub.f32 %v8482, %v8068
        %v8547 = vsub.f32 %v8483, %v8070
        %v8548 = vsub.f32 %v8484, %v8073
        %v8549 = vsub.f32 %v8485, %v8075
        %v8550 = vsub.f32 %v8486, %v8078
        %v8551 = vsub.f32 %v8487, %v8080
        %v8552 = vsub.f32 %v8488, %v8083
        %v8553 = vsub.f32 %v8489, %v8085
        %v8554 = vsub.f32 %v8490, %v8088
        %v8555 = vsub.f32 %v8491, %v8090
        %v8556 = vsub.f32 %v8492, %v8093
        %v8557 = vsub.f32 %v8493, %v8095
        %v8558 = vsub.f32 %v8494, %v8098
        %v8559 = vsub.f32 %v8495, %v8100
        %v8560 = vsub.f32 %v8496, %v8103
        %v8561 = vsub.f32 %v8497, %v8105
        %v8562 = vsub.f32 %v8498, %v8108
        %v8563 = vsub.f32 %v8499, %v8110
        %v8564 = vmul.f32 %v8114, %v8500
        %v8565 = vmul.f32 %v8114, %v8501
        %v8566 = vmul.f32 %v8114, %v8502
        %v8567 = vmul.f32 %v8114, %v8503
        %v8568 = vmul.f32 %v8114, %v8504
        %v8569 = vmul.f32 %v8114, %v8505
        %v8570 = vmul.f32 %v8114, %v8506
        %v8571 = vmul.f32 %v8114, %v8507
        %v8572 = vmul.f32 %v8114, %v8508
        %v8573 = vmul.f32 %v8114, %v8509
        %v8574 = vmul.f32 %v8114, %v8510
        %v8575 = vmul.f32 %v8114, %v8511
        %v8576 = vmul.f32 %v8114, %v8512
        %v8577 = vmul.f32 %v8114, %v8513
        %v8578 = vmul.f32 %v8114, %v8514
        %v8579 = vmul.f32 %v8114, %v8515
        %v8580 = vmul.f32 %v8114, %v8516
        %v8581 = vmul.f32 %v8114, %v8517
        %v8582 = vmul.f32 %v8114, %v8518
        %v8583 = vmul.f32 %v8114, %v8519
        %v8584 = vmul.f32 %v8114, %v8520
        %v8585 = vmul.f32 %v8114, %v8521
        %v8586 = vmul.f32 %v8114, %v8522
        %v8587 = vmul.f32 %v8114, %v8523
        %v8588 = vmul.f32 %v8114, %v8524
        %v8589 = vmul.f32 %v8114, %v8525
        %v8590 = vmul.f32 %v8114, %v8526
        %v8591 = vmul.f32 %v8114, %v8527
        %v8592 = vmul.f32 %v8114, %v8528
        %v8593 = vmul.f32 %v8114, %v8529
        %v8594 = vmul.f32 %v8114, %v8530
        %v8595 = vmul.f32 %v8114, %v8531
        %v8596 = vmul.f32 %v8114, %v8532
        %v8597 = vmul.f32 %v8114, %v8533
        %v8598 = vmul.f32 %v8114, %v8534
        %v8599 = vmul.f32 %v8114, %v8535
        %v8600 = vmul.f32 %v8114, %v8536
        %v8601 = vmul.f32 %v8114, %v8537
        %v8602 = vmul.f32 %v8114, %v8538
        %v8603 = vmul.f32 %v8114, %v8539
        %v8604 = vmul.f32 %v8114, %v8540
        %v8605 = vmul.f32 %v8114, %v8541
        %v8606 = vmul.f32 %v8114, %v8542
        %v8607 = vmul.f32 %v8114, %v8543
        %v8608 = vmul.f32 %v8114, %v8544
        %v8609 = vmul.f32 %v8114, %v8545
        %v8610 = vmul.f32 %v8114, %v8546
        %v8611 = vmul.f32 %v8114, %v8547
        %v8612 = vmul.f32 %v8114, %v8548
        %v8613 = vmul.f32 %v8114, %v8549
        %v8614 = vmul.f32 %v8114, %v8550
        %v8615 = vmul.f32 %v8114, %v8551
        %v8616 = vmul.f32 %v8114, %v8552
        %v8617 = vmul.f32 %v8114, %v8553
        %v8618 = vmul.f32 %v8114, %v8554
        %v8619 = vmul.f32 %v8114, %v8555
        %v8620 = vmul.f32 %v8114, %v8556
        %v8621 = vmul.f32 %v8114, %v8557
        %v8622 = vmul.f32 %v8114, %v8558
        %v8623 = vmul.f32 %v8114, %v8559
        %v8624 = vmul.f32 %v8114, %v8560
        %v8625 = vmul.f32 %v8114, %v8561
        %v8626 = vmul.f32 %v8114, %v8562
        %v8627 = vmul.f32 %v8114, %v8563
        %v8628 = vadd.f32 %v7953, %v8564
        %v8629 = vadd.f32 %v7955, %v8565
        %v8630 = vadd.f32 %v7958, %v8566
        %v8631 = vadd.f32 %v7960, %v8567
        %v8632 = vadd.f32 %v7963, %v8568
        %v8633 = vadd.f32 %v7965, %v8569
        %v8634 = vadd.f32 %v7968, %v8570
        %v8635 = vadd.f32 %v7970, %v8571
        %v8636 = vadd.f32 %v7973, %v8572
        %v8637 = vadd.f32 %v7975, %v8573
        %v8638 = vadd.f32 %v7978, %v8574
        %v8639 = vadd.f32 %v7980, %v8575
        %v8640 = vadd.f32 %v7983, %v8576
        %v8641 = vadd.f32 %v7985, %v8577
        %v8642 = vadd.f32 %v7988, %v8578
        %v8643 = vadd.f32 %v7990, %v8579
        %v8644 = vadd.f32 %v7993, %v8580
        %v8645 = vadd.f32 %v7995, %v8581
        %v8646 = vadd.f32 %v7998, %v8582
        %v8647 = vadd.f32 %v8000, %v8583
        %v8648 = vadd.f32 %v8003, %v8584
        %v8649 = vadd.f32 %v8005, %v8585
        %v8650 = vadd.f32 %v8008, %v8586
        %v8651 = vadd.f32 %v8010, %v8587
        %v8652 = vadd.f32 %v8013, %v8588
        %v8653 = vadd.f32 %v8015, %v8589
        %v8654 = vadd.f32 %v8018, %v8590
        %v8655 = vadd.f32 %v8020, %v8591
        %v8656 = vadd.f32 %v8023, %v8592
        %v8657 = vadd.f32 %v8025, %v8593
        %v8658 = vadd.f32 %v8028, %v8594
        %v8659 = vadd.f32 %v8030, %v8595
        %v8660 = vadd.f32 %v8033, %v8596
        %v8661 = vadd.f32 %v8035, %v8597
        %v8662 = vadd.f32 %v8038, %v8598
        %v8663 = vadd.f32 %v8040, %v8599
        %v8664 = vadd.f32 %v8043, %v8600
        %v8665 = vadd.f32 %v8045, %v8601
        %v8666 = vadd.f32 %v8048, %v8602
        %v8667 = vadd.f32 %v8050, %v8603
        %v8668 = vadd.f32 %v8053, %v8604
        %v8669 = vadd.f32 %v8055, %v8605
        %v8670 = vadd.f32 %v8058, %v8606
        %v8671 = vadd.f32 %v8060, %v8607
        %v8672 = vadd.f32 %v8063, %v8608
        %v8673 = vadd.f32 %v8065, %v8609
        %v8674 = vadd.f32 %v8068, %v8610
        %v8675 = vadd.f32 %v8070, %v8611
        %v8676 = vadd.f32 %v8073, %v8612
        %v8677 = vadd.f32 %v8075, %v8613
        %v8678 = vadd.f32 %v8078, %v8614
        %v8679 = vadd.f32 %v8080, %v8615
        %v8680 = vadd.f32 %v8083, %v8616
        %v8681 = vadd.f32 %v8085, %v8617
        %v8682 = vadd.f32 %v8088, %v8618
        %v8683 = vadd.f32 %v8090, %v8619
        %v8684 = vadd.f32 %v8093, %v8620
        %v8685 = vadd.f32 %v8095, %v8621
        %v8686 = vadd.f32 %v8098, %v8622
        %v8687 = vadd.f32 %v8100, %v8623
        %v8688 = vadd.f32 %v8103, %v8624
        %v8689 = vadd.f32 %v8105, %v8625
        %v8690 = vadd.f32 %v8108, %v8626
        %v8691 = vadd.f32 %v8110, %v8627
        %8692 = vst [vmem:[%s258] sm:$0xff] %v8628
        %8693 = vst [vmem:[%s258 + $0x8] sm:$0xff] %v8629
        %8694 = vst [vmem:[%s258 + $0x10] sm:$0xff] %v8630
        %8695 = vst [vmem:[%s258 + $0x18] sm:$0xff] %v8631
        %8696 = vst [vmem:[%s258 + $0x20] sm:$0xff] %v8632
        %8697 = vst [vmem:[%s258 + $0x28] sm:$0xff] %v8633
        %8698 = vst [vmem:[%s258 + $0x30] sm:$0xff] %v8634
        %8699 = vst [vmem:[%s258 + $0x38] sm:$0xff] %v8635
        %8700 = vst [vmem:[%s258 + $0x40] sm:$0xff] %v8636
        %8701 = vst [vmem:[%s258 + $0x48] sm:$0xff] %v8637
        %8702 = vst [vmem:[%s258 + $0x50] sm:$0xff] %v8638
        %8703 = vst [vmem:[%s258 + $0x58] sm:$0xff] %v8639
        %8704 = vst [vmem:[%s258 + $0x60] sm:$0xff] %v8640
        %8705 = vst [vmem:[%s258 + $0x68] sm:$0xff] %v8641
        %8706 = vst [vmem:[%s258 + $0x70] sm:$0xff] %v8642
        %8707 = vst [vmem:[%s258 + $0x78] sm:$0xff] %v8643
        %8708 = vst [vmem:[%s258 + $0x80] sm:$0xff] %v8644
        %8709 = vst [vmem:[%s258 + $0x88] sm:$0xff] %v8645
        %8710 = vst [vmem:[%s258 + $0x90] sm:$0xff] %v8646
        %8711 = vst [vmem:[%s258 + $0x98] sm:$0xff] %v8647
        %8712 = vst [vmem:[%s258 + $0xa0] sm:$0xff] %v8648
        %8713 = vst [vmem:[%s258 + $0xa8] sm:$0xff] %v8649
        %8714 = vst [vmem:[%s258 + $0xb0] sm:$0xff] %v8650
        %8715 = vst [vmem:[%s258 + $0xb8] sm:$0xff] %v8651
        %8716 = vst [vmem:[%s258 + $0xc0] sm:$0xff] %v8652
        %8717 = vst [vmem:[%s258 + $0xc8] sm:$0xff] %v8653
        %8718 = vst [vmem:[%s258 + $0xd0] sm:$0xff] %v8654
        %8719 = vst [vmem:[%s258 + $0xd8] sm:$0xff] %v8655
        %8720 = vst [vmem:[%s258 + $0xe0] sm:$0xff] %v8656
        %8721 = vst [vmem:[%s258 + $0xe8] sm:$0xff] %v8657
        %8722 = vst [vmem:[%s258 + $0xf0] sm:$0xff] %v8658
        %8723 = vst [vmem:[%s258 + $0xf8] sm:$0xff] %v8659
        %8724 = vst [vmem:[%s258 + $0x100] sm:$0xff] %v8660
        %8725 = vst [vmem:[%s258 + $0x108] sm:$0xff] %v8661
        %8726 = vst [vmem:[%s258 + $0x110] sm:$0xff] %v8662
        %8727 = vst [vmem:[%s258 + $0x118] sm:$0xff] %v8663
        %8728 = vst [vmem:[%s258 + $0x120] sm:$0xff] %v8664
        %8729 = vst [vmem:[%s258 + $0x128] sm:$0xff] %v8665
        %8730 = vst [vmem:[%s258 + $0x130] sm:$0xff] %v8666
        %8731 = vst [vmem:[%s258 + $0x138] sm:$0xff] %v8667
        %8732 = vst [vmem:[%s258 + $0x140] sm:$0xff] %v8668
        %8733 = vst [vmem:[%s258 + $0x148] sm:$0xff] %v8669
        %8734 = vst [vmem:[%s258 + $0x150] sm:$0xff] %v8670
        %8735 = vst [vmem:[%s258 + $0x158] sm:$0xff] %v8671
        %8736 = vst [vmem:[%s258 + $0x160] sm:$0xff] %v8672
        %8737 = vst [vmem:[%s258 + $0x168] sm:$0xff] %v8673
        %8738 = vst [vmem:[%s258 + $0x170] sm:$0xff] %v8674
        %8739 = vst [vmem:[%s258 + $0x178] sm:$0xff] %v8675
        %8740 = vst [vmem:[%s258 + $0x180] sm:$0xff] %v8676
        %8741 = vst [vmem:[%s258 + $0x188] sm:$0xff] %v8677
        %8742 = vst [vmem:[%s258 + $0x190] sm:$0xff] %v8678
        %8743 = vst [vmem:[%s258 + $0x198] sm:$0xff] %v8679
        %8744 = vst [vmem:[%s258 + $0x1a0] sm:$0xff] %v8680
        %8745 = vst [vmem:[%s258 + $0x1a8] sm:$0xff] %v8681
        %8746 = vst [vmem:[%s258 + $0x1b0] sm:$0xff] %v8682
        %8747 = vst [vmem:[%s258 + $0x1b8] sm:$0xff] %v8683
        %8748 = vst [vmem:[%s258 + $0x1c0] sm:$0xff] %v8684
        %8749 = vst [vmem:[%s258 + $0x1c8] sm:$0xff] %v8685
        %8750 = vst [vmem:[%s258 + $0x1d0] sm:$0xff] %v8686
        %8751 = vst [vmem:[%s258 + $0x1d8] sm:$0xff] %v8687
        %8752 = vst [vmem:[%s258 + $0x1e0] sm:$0xff] %v8688
        %8753 = vst [vmem:[%s258 + $0x1e8] sm:$0xff] %v8689
        %8754 = vst [vmem:[%s258 + $0x1f0] sm:$0xff] %v8690
        %8755 = vst [vmem:[%s258 + $0x1f8] sm:$0xff] %v8691
        %s8756 = sand.u32 %s173, 1
        %s8757 = scalar_lea.sflag [#allocation3], %s8756
        %s8758 = sand.u32 %s173, 1
        %s8759 = smul.addr %s8758, 512
        %s8760 = scalar_lea.vmem [#allocation2], %s8759
        // Predicated region
        $region45: #{tpu_custom_call.1} parent=43 // pred_check
          %p8761 = pneg %p183
        $region46: #{tpu_custom_call.1} parent=43 // pred_check_branch
          %8763 = sbr.rel (%p8761) target = $region48
        $region47: #{tpu_custom_call.1} parent=43 // pred_region
          %s8764 = smul.u32 64, %s25
          %8766 = vsyncadd %s8757, 0
          %s8767 = smul.addr %s24, 128
          %s8768 = sadd.s32 %s8764, %s8767
          %s8769 = smul.addr %s8768, 8
          %s8770 = scalar_lea.hbm %s6, %s8769
          %s8771 = sshll.u32 %s8760, 4
          %s8772 = int_to_ptr.vmem [resolvable:$true] %s8771
          %s8773 = sshll.u32 %s8770, 4
          %s8774 = int_to_ptr.hbm [resolvable:$true] %s8773
          %8779 = dma.vmem_to_hbm [thread:$0]  %s8772, 8192, %s8774, %s8757, 128, 128, 8
        $region48: #{tpu_custom_call.1} parent=43 // pred_fallthru
          _
      $region44: #{tpu_custom_call.1} parent=5 // pred_fallthru
        _
      %p8780 = scmp.le.s32.totalorder 2, %s15
      // Predicated region
      $region49: #{tpu_custom_call.1} parent=5 // pred_check
        %p8781 = pneg %p8780
      $region50: #{tpu_custom_call.1} parent=5 // pred_check_branch
        %8783 = sbr.rel (%p8781) target = $region52
      $region51: #{tpu_custom_call.1} parent=5 // pred_region
        %s8784 = ssub.s32 %s15, 2
        // Predicated region
        $region53: #{tpu_custom_call.1} parent=51 // pred_check
          %p8785 = pneg %p189
        $region54: #{tpu_custom_call.1} parent=51 // pred_check_branch
          %8787 = sbr.rel (%p8785) target = $region56
        $region55: #{tpu_custom_call.1} parent=51 // pred_region
          %s8788 = sand.u32 %s174, 1
          %s8789 = scalar_lea.sflag [#allocation3], %s8788
          %s8790 = sand.u32 %s174, 1
          %s8791 = smul.addr %s8790, 512
          %s8792 = scalar_lea.vmem [#allocation2], %s8791
          %8794 = dma.done %s8789, 8192
        $region56: #{tpu_custom_call.1} parent=51 // pred_fallthru
          _
      $region52: #{tpu_custom_call.1} parent=5 // pred_fallthru
        _
    $region6: #{tpu_custom_call.1} parent=1 // loop_footer
      %s19 = sadd.s32 1, %s15
    $region7: #{tpu_custom_call.1} parent=1 // loop_footer_branch
      %14 = sbr.rel target = $region3
    $region8: #{tpu_custom_call.1} parent=1 // loop_exit
      _
    %8795 = vsyncpa [#allocation3], 1
    %s8796 = scalar_lea.sflag [#allocation3], 1
    %8797 = vsyncpa %s8796, 1

</llo_original>
